<compile_context>
chip_gen: v5e
topology: v5e:2x2
jax: 0.10.0
libtpu: 0.0.40
codegen_flags: <defaults>
</compile_context>

<pallas_src>
import functools

import jax
import jax.numpy as jnp
import numpy as np
from jax.experimental import pallas as pl
from jax.experimental.pallas import tpu as pltpu

HIDDEN = 256
IN_FEATURES = 6
IN_FEATURES_PAD = 8  # pad 6 -> 8 so the stem matmul's K dim is sublane-aligned


# ----------------------------------------------------------------------------
# Fused Pallas kernel: batched MLP stem -> batched wih projections -> 2 LSTM
# recurrences with only h@W_hh on the per-step critical path.
# ----------------------------------------------------------------------------
def _encoder_kernel(x_ref, w1_ref, b1_ref, w2_ref, b2_ref, w3_ref, b3_ref,
                    wih0_ref, whh0_ref, bg0_ref,
                    wih1_ref, whh1_ref, bg1_ref,
                    h_out_ref, c_out_ref,
                    h0_all_ref, *, seq_len, batch, hidden):
    f32 = jnp.float32
    bf16 = jnp.bfloat16

    def sigmoid(z):
        # Single EUP tanh instead of exp + f32 divide on the serial path.
        return 0.5 * (jnp.tanh(0.5 * z) + 1.0)

    # ---------------- Batched MLP stem over all T*B rows -------------------
    x_all = x_ref[...].astype(bf16)                                  # (T*B, 8)
    a = jnp.maximum(
        jnp.dot(x_all, w1_ref[...], preferred_element_type=f32) + b1_ref[...],
        0.0)
    a = jnp.maximum(
        jnp.dot(a.astype(bf16), w2_ref[...], preferred_element_type=f32)
        + b2_ref[...], 0.0)
    a = jnp.maximum(
        jnp.dot(a.astype(bf16), w3_ref[...], preferred_element_type=f32)
        + b3_ref[...], 0.0)
    a = a.astype(bf16)                                               # (T*B, 256)

    # ---- Layer-0 input projection (+bias) for all timesteps at once -------
    gates_x0 = (jnp.dot(a, wih0_ref[...], preferred_element_type=f32)
                + bg0_ref[...])                                      # (T*B, 4H)

    whh0 = whh0_ref[...]
    whh1 = whh1_ref[...]

    def cell_step(gx, h_prev, c_prev, whh, first):
        # Only the recurrent h_prev @ W_hh matmul sits on the serial path.
        if first:
            gates = gx                                   # h_prev == 0
        else:
            gates = gx + jnp.dot(h_prev.astype(bf16), whh,
                                 preferred_element_type=f32)
        i_g = sigmoid(gates[:, 0 * hidden:1 * hidden])
        g_g = jnp.tanh(gates[:, 2 * hidden:3 * hidden])
        o_g = sigmoid(gates[:, 3 * hidden:4 * hidden])
        if first:
            c_new = i_g * g_g                            # c_prev == 0
        else:
            f_g = sigmoid(gates[:, 1 * hidden:2 * hidden])
            c_new = f_g * c_prev + i_g * g_g
        h_new = o_g * jnp.tanh(c_new)
        return h_new, c_new

    # --------------------------- Layer-0 recurrence ------------------------
    h0 = c0 = None
    for t in range(seq_len):                             # statically unrolled
        gx = gates_x0[t * batch:(t + 1) * batch, :]
        h0, c0 = cell_step(gx, h0, c0, whh0, first=(t == 0))
        h0_all_ref[pl.ds(t * batch, batch), :] = h0      # stash for layer 1

    # ---- Layer-1 input projection (+bias) for all timesteps at once -------
    gates_x1 = (jnp.dot(h0_all_ref[...].astype(bf16), wih1_ref[...],
                        preferred_element_type=f32)
                + bg1_ref[...])                                      # (T*B, 4H)

    # --------------------------- Layer-1 recurrence ------------------------
    h1 = c1 = None
    for t in range(seq_len):
        gx = gates_x1[t * batch:(t + 1) * batch, :]
        h1, c1 = cell_step(gx, h1, c1, whh1, first=(t == 0))

    # h_n / c_n: (num_layers=2, B, hidden)
    h_out_ref[0] = h0
    h_out_ref[1] = h1
    c_out_ref[0] = c0
    c_out_ref[1] = c1


# ----------------------------------------------------------------------------
# Wrapper
# ----------------------------------------------------------------------------
def encoder_forward(x, params):
    """x: (B, T, 6) float32 (batch_first, like PyTorch). Returns (h_n, c_n)."""
    B, T, din = x.shape
    # Time-major flatten (row = t*B + b) so per-step slices are contiguous,
    # and pad the 6 input features to 8.
    x_flat = jnp.transpose(x.astype(jnp.float32), (1, 0, 2)).reshape(T * B, din)
    x_flat = jnp.pad(x_flat, ((0, 0), (0, IN_FEATURES_PAD - din)))

    def full_spec(shape):
        zeros = (0,) * len(shape)
        return pl.BlockSpec(shape, lambda i, _z=zeros: _z)

    inputs = (
        x_flat,
        params["w1"], params["b1"],
        params["w2"], params["b2"],
        params["w3"], params["b3"],
        params["wih0"], params["whh0"], params["bg0"],
        params["wih1"], params["whh1"], params["bg1"],
    )

    out_shape = (jax.ShapeDtypeStruct((2, B, HIDDEN), jnp.float32),
                 jax.ShapeDtypeStruct((2, B, HIDDEN), jnp.float32))

    h_n, c_n = pl.pallas_call(
        functools.partial(_encoder_kernel, seq_len=T, batch=B, hidden=HIDDEN),
        out_shape=out_shape,
        grid=(1,),
        in_specs=[full_spec(a.shape) for a in inputs],
        out_specs=(full_spec((2, B, HIDDEN)), full_spec((2, B, HIDDEN))),
        scratch_shapes=[pltpu.VMEM((T * B, HIDDEN), jnp.float32)],
        compiler_params=pltpu.CompilerParams(
            dimension_semantics=("arbitrary",)),
    )(*inputs)
    return h_n, c_n


# ----------------------------------------------------------------------------
# Pure-JAX f32 reference (same bf16-stored weights; differences vs the kernel
# come only from bf16 matmul-operand rounding inside the kernel).
# ----------------------------------------------------------------------------
def encoder_reference(x, params):
    f32 = jnp.float32
    B, T, din = x.shape
    xp = jnp.pad(x.astype(f32), ((0, 0), (0, 0), (0, IN_FEATURES_PAD - din)))
    a = jax.nn.relu(xp @ params["w1"].astype(f32) + params["b1"])
    a = jax.nn.relu(a @ params["w2"].astype(f32) + params["b2"])
    a = jax.nn.relu(a @ params["w3"].astype(f32) + params["b3"])   # (B, T, H)

    def lstm_layer(inp, wih, whh, bg):
        wih = wih.astype(f32)
        whh = whh.astype(f32)
        h = jnp.zeros((B, HIDDEN), f32)
        c = jnp.zeros((B, HIDDEN), f32)
        hs = []
        for t in range(T):
            gates = inp[:, t, :] @ wih + h @ whh + bg
            i = jax.nn.sigmoid(gates[:, :HIDDEN])
            f = jax.nn.sigmoid(gates[:, HIDDEN:2 * HIDDEN])
            g = jnp.tanh(gates[:, 2 * HIDDEN:3 * HIDDEN])
            o = jax.nn.sigmoid(gates[:, 3 * HIDDEN:])
            c = f * c + i * g
            h = o * jnp.tanh(c)
            hs.append(h)
        return jnp.stack(hs, axis=1), h, c

    h0_seq, h0, c0 = lstm_layer(a, params["wih0"], params["whh0"], params["bg0"])
    _, h1, c1 = lstm_layer(h0_seq, params["wih1"], params["whh1"], params["bg1"])
    return jnp.stack([h0, h1], axis=0), jnp.stack([c0, c1], axis=0)


# ----------------------------------------------------------------------------
# Deterministic parameters (PyTorch-style uniform init, bf16 matmul operands)
# ----------------------------------------------------------------------------
def _uniform(key, shape, bound):
    return jax.random.uniform(key, shape, jnp.float32, -bound, bound)


def make_params(key):
    k = iter(jax.random.split(key, 32))

    def linear(fin, fout, pad_to=None):
        bound = 1.0 / np.sqrt(fin)
        w = _uniform(next(k), (fin, fout), bound)
        b = _uniform(next(k), (1, fout), bound)
        if pad_to is not None and pad_to > fin:
            w = jnp.pad(w, ((0, pad_to - fin), (0, 0)))
        return w.astype(jnp.bfloat16), b  # weights bf16, bias stays f32

    def lstm_layer(fin, hidden):
        bound = 1.0 / np.sqrt(hidden)
        wih = _uniform(next(k), (fin, 4 * hidden), bound)     # (in, 4H) = W_ih^T
        whh = _uniform(next(k), (hidden, 4 * hidden), bound)  # (H, 4H)  = W_hh^T
        bih = _uniform(next(k), (1, 4 * hidden), bound)
        bhh = _uniform(next(k), (1, 4 * hidden), bound)
        return (wih.astype(jnp.bfloat16), whh.astype(jnp.bfloat16),
                (bih + bhh))  # biases pre-summed, f32

    p = {}
    p["w1"], p["b1"] = linear(IN_FEATURES, HIDDEN, pad_to=IN_FEATURES_PAD)
    p["w2"], p["b2"] = linear(HIDDEN, HIDDEN)
    p["w3"], p["b3"] = linear(HIDDEN, HIDDEN)
    p["wih0"], p["whh0"], p["bg0"] = lstm_layer(HIDDEN, HIDDEN)
    p["wih1"], p["whh1"], p["bg1"] = lstm_layer(HIDDEN, HIDDEN)
    return p


if __name__ == "__main__":
    key = jax.random.PRNGKey(0)
    kp, kx = jax.random.split(key)
    params = make_params(kp)

    B, T = 2, 8
    x = jax.random.normal(kx, (B, T, IN_FEATURES), jnp.float32)

    fwd = jax.jit(encoder_forward)
    h_n, c_n = fwd(x, params)
    h_n, c_n = jax.block_until_ready((h_n, c_n))

    assert h_n.shape == (2, B, HIDDEN) and h_n.dtype == jnp.float32
    assert c_n.shape == (2, B, HIDDEN) and c_n.dtype == jnp.float32
    assert bool(jnp.all(jnp.isfinite(h_n))) and bool(jnp.all(jnp.isfinite(c_n)))

    # Explicit-tolerance correctness check against the f32 reference
    # (kernel uses bf16 matmul operands -> small, bounded deviations).
    h_ref, c_ref = encoder_reference(x, params)
    max_err_h = float(jnp.max(jnp.abs(h_n - h_ref)))
    max_err_c = float(jnp.max(jnp.abs(c_n - c_ref)))
    assert max_err_h < 7.5e-2, f"h_n max abs err {max_err_h}"
    assert max_err_c < 7.5e-2, f"c_n max abs err {max_err_c}"

    print("KERNEL_OK")
</pallas_src>

<mosaic_0001>
module attributes {stable_mosaic.version = 11 : i64} {
  func.func @_encoder_kernel(%arg0: i32, %arg1: memref<16x8xf32, #tpu.memory_space<vmem>>, %arg2: memref<8x256xbf16, #tpu.memory_space<vmem>>, %arg3: memref<1x256xf32, #tpu.memory_space<vmem>>, %arg4: memref<256x256xbf16, #tpu.memory_space<vmem>>, %arg5: memref<1x256xf32, #tpu.memory_space<vmem>>, %arg6: memref<256x256xbf16, #tpu.memory_space<vmem>>, %arg7: memref<1x256xf32, #tpu.memory_space<vmem>>, %arg8: memref<256x1024xbf16, #tpu.memory_space<vmem>>, %arg9: memref<256x1024xbf16, #tpu.memory_space<vmem>>, %arg10: memref<1x1024xf32, #tpu.memory_space<vmem>>, %arg11: memref<256x1024xbf16, #tpu.memory_space<vmem>>, %arg12: memref<256x1024xbf16, #tpu.memory_space<vmem>>, %arg13: memref<1x1024xf32, #tpu.memory_space<vmem>>, %arg14: memref<2x2x256xf32, #tpu.memory_space<vmem>>, %arg15: memref<2x2x256xf32, #tpu.memory_space<vmem>>, %arg16: memref<16x256xf32, #tpu.memory_space<vmem>>) attributes {dimension_semantics = [#tpu.dimension_semantics<arbitrary>], iteration_bounds = array<i64: 1>, scalar_prefetch = 0 : i64, scratch_operands = 1 : i64, tpu.core_type = #tpu.core_type<tc>, window_params = [{pipeline_mode = #tpu.pipeline_mode<synchronous>, transform_indices = @transform_0, window_bounds = array<i64: 16, 8>}, {pipeline_mode = #tpu.pipeline_mode<synchronous>, transform_indices = @transform_1, window_bounds = array<i64: 8, 256>}, {pipeline_mode = #tpu.pipeline_mode<synchronous>, transform_indices = @transform_2, window_bounds = array<i64: 1, 256>}, {pipeline_mode = #tpu.pipeline_mode<synchronous>, transform_indices = @transform_3, window_bounds = array<i64: 256, 256>}, {pipeline_mode = #tpu.pipeline_mode<synchronous>, transform_indices = @transform_4, window_bounds = array<i64: 1, 256>}, {pipeline_mode = #tpu.pipeline_mode<synchronous>, transform_indices = @transform_5, window_bounds = array<i64: 256, 256>}, {pipeline_mode = #tpu.pipeline_mode<synchronous>, transform_indices = @transform_6, window_bounds = array<i64: 1, 256>}, {pipeline_mode = #tpu.pipeline_mode<synchronous>, transform_indices = @transform_7, window_bounds = array<i64: 256, 1024>}, {pipeline_mode = #tpu.pipeline_mode<synchronous>, transform_indices = @transform_8, window_bounds = array<i64: 256, 1024>}, {pipeline_mode = #tpu.pipeline_mode<synchronous>, transform_indices = @transform_9, window_bounds = array<i64: 1, 1024>}, {pipeline_mode = #tpu.pipeline_mode<synchronous>, transform_indices = @transform_10, window_bounds = array<i64: 256, 1024>}, {pipeline_mode = #tpu.pipeline_mode<synchronous>, transform_indices = @transform_11, window_bounds = array<i64: 256, 1024>}, {pipeline_mode = #tpu.pipeline_mode<synchronous>, transform_indices = @transform_12, window_bounds = array<i64: 1, 1024>}, {pipeline_mode = #tpu.pipeline_mode<synchronous>, transform_indices = @transform_13, window_bounds = array<i64: 2, 2, 256>}, {pipeline_mode = #tpu.pipeline_mode<synchronous>, transform_indices = @transform_14, window_bounds = array<i64: 2, 2, 256>}]} {
    %c0 = arith.constant 0 : index
    %c0_0 = arith.constant 0 : index
    %0 = vector.load %arg1[%c0, %c0_0] : memref<16x8xf32, #tpu.memory_space<vmem>>, vector<16x8xf32>
    %1 = arith.truncf %0 : vector<16x8xf32> to vector<16x8xbf16>
    %c0_1 = arith.constant 0 : index
    %c0_2 = arith.constant 0 : index
    %2 = vector.load %arg2[%c0_1, %c0_2] : memref<8x256xbf16, #tpu.memory_space<vmem>>, vector<8x256xbf16>
    %cst = arith.constant dense<0.000000e+00> : vector<16x256xf32>
    %3 = tpu.matmul %1, %2, %cst {dimension_numbers = #tpu.dot_dimension_numbers<[1], [0], [0], [1], [0, 0, 1, 1], [], []>} : vector<16x8xbf16>, vector<8x256xbf16>, vector<16x256xf32> -> vector<16x256xf32>
    %c0_3 = arith.constant 0 : index
    %c0_4 = arith.constant 0 : index
    %4 = vector.load %arg3[%c0_3, %c0_4] : memref<1x256xf32, #tpu.memory_space<vmem>>, vector<1x256xf32>
    %5 = vector.broadcast %4 : vector<1x256xf32> to vector<16x256xf32>
    %6 = arith.addf %3, %5 : vector<16x256xf32>
    %cst_5 = arith.constant 0.000000e+00 : f32
    %7 = vector.broadcast %cst_5 : f32 to vector<16x256xf32>
    %8 = arith.maximumf %6, %7 : vector<16x256xf32>
    %9 = arith.truncf %8 : vector<16x256xf32> to vector<16x256xbf16>
    %c0_6 = arith.constant 0 : index
    %c0_7 = arith.constant 0 : index
    %10 = vector.load %arg4[%c0_6, %c0_7] : memref<256x256xbf16, #tpu.memory_space<vmem>>, vector<256x256xbf16>
    %cst_8 = arith.constant dense<0.000000e+00> : vector<16x256xf32>
    %11 = tpu.matmul %9, %10, %cst_8 {dimension_numbers = #tpu.dot_dimension_numbers<[1], [0], [0], [1], [0, 0, 1, 1], [], []>} : vector<16x256xbf16>, vector<256x256xbf16>, vector<16x256xf32> -> vector<16x256xf32>
    %c0_9 = arith.constant 0 : index
    %c0_10 = arith.constant 0 : index
    %12 = vector.load %arg5[%c0_9, %c0_10] : memref<1x256xf32, #tpu.memory_space<vmem>>, vector<1x256xf32>
    %13 = vector.broadcast %12 : vector<1x256xf32> to vector<16x256xf32>
    %14 = arith.addf %11, %13 : vector<16x256xf32>
    %cst_11 = arith.constant 0.000000e+00 : f32
    %15 = vector.broadcast %cst_11 : f32 to vector<16x256xf32>
    %16 = arith.maximumf %14, %15 : vector<16x256xf32>
    %17 = arith.truncf %16 : vector<16x256xf32> to vector<16x256xbf16>
    %c0_12 = arith.constant 0 : index
    %c0_13 = arith.constant 0 : index
    %18 = vector.load %arg6[%c0_12, %c0_13] : memref<256x256xbf16, #tpu.memory_space<vmem>>, vector<256x256xbf16>
    %cst_14 = arith.constant dense<0.000000e+00> : vector<16x256xf32>
    %19 = tpu.matmul %17, %18, %cst_14 {dimension_numbers = #tpu.dot_dimension_numbers<[1], [0], [0], [1], [0, 0, 1, 1], [], []>} : vector<16x256xbf16>, vector<256x256xbf16>, vector<16x256xf32> -> vector<16x256xf32>
    %c0_15 = arith.constant 0 : index
    %c0_16 = arith.constant 0 : index
    %20 = vector.load %arg7[%c0_15, %c0_16] : memref<1x256xf32, #tpu.memory_space<vmem>>, vector<1x256xf32>
    %21 = vector.broadcast %20 : vector<1x256xf32> to vector<16x256xf32>
    %22 = arith.addf %19, %21 : vector<16x256xf32>
    %cst_17 = arith.constant 0.000000e+00 : f32
    %23 = vector.broadcast %cst_17 : f32 to vector<16x256xf32>
    %24 = arith.maximumf %22, %23 : vector<16x256xf32>
    %25 = arith.truncf %24 : vector<16x256xf32> to vector<16x256xbf16>
    %c0_18 = arith.constant 0 : index
    %c0_19 = arith.constant 0 : index
    %26 = vector.load %arg8[%c0_18, %c0_19] : memref<256x1024xbf16, #tpu.memory_space<vmem>>, vector<256x1024xbf16>
    %cst_20 = arith.constant dense<0.000000e+00> : vector<16x1024xf32>
    %27 = tpu.matmul %25, %26, %cst_20 {dimension_numbers = #tpu.dot_dimension_numbers<[1], [0], [0], [1], [0, 0, 1, 1], [], []>} : vector<16x256xbf16>, vector<256x1024xbf16>, vector<16x1024xf32> -> vector<16x1024xf32>
    %c0_21 = arith.constant 0 : index
    %c0_22 = arith.constant 0 : index
    %28 = vector.load %arg10[%c0_21, %c0_22] : memref<1x1024xf32, #tpu.memory_space<vmem>>, vector<1x1024xf32>
    %29 = vector.broadcast %28 : vector<1x1024xf32> to vector<16x1024xf32>
    %30 = arith.addf %27, %29 : vector<16x1024xf32>
    %c0_23 = arith.constant 0 : index
    %c0_24 = arith.constant 0 : index
    %31 = vector.load %arg9[%c0_23, %c0_24] : memref<256x1024xbf16, #tpu.memory_space<vmem>>, vector<256x1024xbf16>
    %c0_25 = arith.constant 0 : index
    %c0_26 = arith.constant 0 : index
    %32 = vector.load %arg12[%c0_25, %c0_26] : memref<256x1024xbf16, #tpu.memory_space<vmem>>, vector<256x1024xbf16>
    %33 = vector.extract_strided_slice %30 {offsets = [0, 0], sizes = [2, 1024], strides = [1, 1]} : vector<16x1024xf32> to vector<2x1024xf32>
    %34 = vector.extract_strided_slice %33 {offsets = [0, 0], sizes = [2, 256], strides = [1, 1]} : vector<2x1024xf32> to vector<2x256xf32>
    %cst_27 = arith.constant 5.000000e-01 : f32
    %35 = vector.broadcast %cst_27 : f32 to vector<2x256xf32>
    %36 = arith.mulf %35, %34 : vector<2x256xf32>
    %37 = math.tanh %36 : vector<2x256xf32>
    %cst_28 = arith.constant 1.000000e+00 : f32
    %38 = vector.broadcast %cst_28 : f32 to vector<2x256xf32>
    %39 = arith.addf %37, %38 : vector<2x256xf32>
    %cst_29 = arith.constant 5.000000e-01 : f32
    %40 = vector.broadcast %cst_29 : f32 to vector<2x256xf32>
    %41 = arith.mulf %40, %39 : vector<2x256xf32>
    %42 = vector.extract_strided_slice %33 {offsets = [0, 512], sizes = [2, 256], strides = [1, 1]} : vector<2x1024xf32> to vector<2x256xf32>
    %43 = math.tanh %42 : vector<2x256xf32>
    %44 = vector.extract_strided_slice %33 {offsets = [0, 768], sizes = [2, 256], strides = [1, 1]} : vector<2x1024xf32> to vector<2x256xf32>
    %cst_30 = arith.constant 5.000000e-01 : f32
    %45 = vector.broadcast %cst_30 : f32 to vector<2x256xf32>
    %46 = arith.mulf %45, %44 : vector<2x256xf32>
    %47 = math.tanh %46 : vector<2x256xf32>
    %cst_31 = arith.constant 1.000000e+00 : f32
    %48 = vector.broadcast %cst_31 : f32 to vector<2x256xf32>
    %49 = arith.addf %47, %48 : vector<2x256xf32>
    %cst_32 = arith.constant 5.000000e-01 : f32
    %50 = vector.broadcast %cst_32 : f32 to vector<2x256xf32>
    %51 = arith.mulf %50, %49 : vector<2x256xf32>
    %52 = arith.mulf %41, %43 : vector<2x256xf32>
    %53 = math.tanh %52 : vector<2x256xf32>
    %54 = arith.mulf %51, %53 : vector<2x256xf32>
    %c0_33 = arith.constant 0 : index
    %c0_34 = arith.constant 0 : index
    %55 = vector.load %arg16[%c0_33, %c0_34] : memref<16x256xf32, #tpu.memory_space<vmem>>, vector<2x256xf32>
    tpu.vector_store %arg16[%c0_33, %c0_34], %54 {strides = array<i32>} : memref<16x256xf32, #tpu.memory_space<vmem>>, vector<2x256xf32>,
    %56 = vector.extract_strided_slice %30 {offsets = [2, 0], sizes = [2, 1024], strides = [1, 1]} : vector<16x1024xf32> to vector<2x1024xf32>
    %57 = arith.truncf %54 : vector<2x256xf32> to vector<2x256xbf16>
    %cst_35 = arith.constant dense<0.000000e+00> : vector<2x1024xf32>
    %58 = tpu.matmul %57, %31, %cst_35 {dimension_numbers = #tpu.dot_dimension_numbers<[1], [0], [0], [1], [0, 0, 1, 1], [], []>} : vector<2x256xbf16>, vector<256x1024xbf16>, vector<2x1024xf32> -> vector<2x1024xf32>
    %59 = arith.addf %56, %58 : vector<2x1024xf32>
    %60 = vector.extract_strided_slice %59 {offsets = [0, 0], sizes = [2, 256], strides = [1, 1]} : vector<2x1024xf32> to vector<2x256xf32>
    %cst_36 = arith.constant 5.000000e-01 : f32
    %61 = vector.broadcast %cst_36 : f32 to vector<2x256xf32>
    %62 = arith.mulf %61, %60 : vector<2x256xf32>
    %63 = math.tanh %62 : vector<2x256xf32>
    %cst_37 = arith.constant 1.000000e+00 : f32
    %64 = vector.broadcast %cst_37 : f32 to vector<2x256xf32>
    %65 = arith.addf %63, %64 : vector<2x256xf32>
    %cst_38 = arith.constant 5.000000e-01 : f32
    %66 = vector.broadcast %cst_38 : f32 to vector<2x256xf32>
    %67 = arith.mulf %66, %65 : vector<2x256xf32>
    %68 = vector.extract_strided_slice %59 {offsets = [0, 512], sizes = [2, 256], strides = [1, 1]} : vector<2x1024xf32> to vector<2x256xf32>
    %69 = math.tanh %68 : vector<2x256xf32>
    %70 = vector.extract_strided_slice %59 {offsets = [0, 768], sizes = [2, 256], strides = [1, 1]} : vector<2x1024xf32> to vector<2x256xf32>
    %cst_39 = arith.constant 5.000000e-01 : f32
    %71 = vector.broadcast %cst_39 : f32 to vector<2x256xf32>
    %72 = arith.mulf %71, %70 : vector<2x256xf32>
    %73 = math.tanh %72 : vector<2x256xf32>
    %cst_40 = arith.constant 1.000000e+00 : f32
    %74 = vector.broadcast %cst_40 : f32 to vector<2x256xf32>
    %75 = arith.addf %73, %74 : vector<2x256xf32>
    %cst_41 = arith.constant 5.000000e-01 : f32
    %76 = vector.broadcast %cst_41 : f32 to vector<2x256xf32>
    %77 = arith.mulf %76, %75 : vector<2x256xf32>
    %78 = vector.extract_strided_slice %59 {offsets = [0, 256], sizes = [2, 256], strides = [1, 1]} : vector<2x1024xf32> to vector<2x256xf32>
    %cst_42 = arith.constant 5.000000e-01 : f32
    %79 = vector.broadcast %cst_42 : f32 to vector<2x256xf32>
    %80 = arith.mulf %79, %78 : vector<2x256xf32>
    %81 = math.tanh %80 : vector<2x256xf32>
    %cst_43 = arith.constant 1.000000e+00 : f32
    %82 = vector.broadcast %cst_43 : f32 to vector<2x256xf32>
    %83 = arith.addf %81, %82 : vector<2x256xf32>
    %cst_44 = arith.constant 5.000000e-01 : f32
    %84 = vector.broadcast %cst_44 : f32 to vector<2x256xf32>
    %85 = arith.mulf %84, %83 : vector<2x256xf32>
    %86 = arith.mulf %85, %52 : vector<2x256xf32>
    %87 = arith.mulf %67, %69 : vector<2x256xf32>
    %88 = arith.addf %86, %87 : vector<2x256xf32>
    %89 = math.tanh %88 : vector<2x256xf32>
    %90 = arith.mulf %77, %89 : vector<2x256xf32>
    %c2 = arith.constant 2 : index
    %c0_45 = arith.constant 0 : index
    %91 = vector.load %arg16[%c2, %c0_45] : memref<16x256xf32, #tpu.memory_space<vmem>>, vector<2x256xf32>
    tpu.vector_store %arg16[%c2, %c0_45], %90 {strides = array<i32>} : memref<16x256xf32, #tpu.memory_space<vmem>>, vector<2x256xf32>,
    %92 = vector.extract_strided_slice %30 {offsets = [4, 0], sizes = [2, 1024], strides = [1, 1]} : vector<16x1024xf32> to vector<2x1024xf32>
    %93 = arith.truncf %90 : vector<2x256xf32> to vector<2x256xbf16>
    %cst_46 = arith.constant dense<0.000000e+00> : vector<2x1024xf32>
    %94 = tpu.matmul %93, %31, %cst_46 {dimension_numbers = #tpu.dot_dimension_numbers<[1], [0], [0], [1], [0, 0, 1, 1], [], []>} : vector<2x256xbf16>, vector<256x1024xbf16>, vector<2x1024xf32> -> vector<2x1024xf32>
    %95 = arith.addf %92, %94 : vector<2x1024xf32>
    %96 = vector.extract_strided_slice %95 {offsets = [0, 0], sizes = [2, 256], strides = [1, 1]} : vector<2x1024xf32> to vector<2x256xf32>
    %cst_47 = arith.constant 5.000000e-01 : f32
    %97 = vector.broadcast %cst_47 : f32 to vector<2x256xf32>
    %98 = arith.mulf %97, %96 : vector<2x256xf32>
    %99 = math.tanh %98 : vector<2x256xf32>
    %cst_48 = arith.constant 1.000000e+00 : f32
    %100 = vector.broadcast %cst_48 : f32 to vector<2x256xf32>
    %101 = arith.addf %99, %100 : vector<2x256xf32>
    %cst_49 = arith.constant 5.000000e-01 : f32
    %102 = vector.broadcast %cst_49 : f32 to vector<2x256xf32>
    %103 = arith.mulf %102, %101 : vector<2x256xf32>
    %104 = vector.extract_strided_slice %95 {offsets = [0, 512], sizes = [2, 256], strides = [1, 1]} : vector<2x1024xf32> to vector<2x256xf32>
    %105 = math.tanh %104 : vector<2x256xf32>
    %106 = vector.extract_strided_slice %95 {offsets = [0, 768], sizes = [2, 256], strides = [1, 1]} : vector<2x1024xf32> to vector<2x256xf32>
    %cst_50 = arith.constant 5.000000e-01 : f32
    %107 = vector.broadcast %cst_50 : f32 to vector<2x256xf32>
    %108 = arith.mulf %107, %106 : vector<2x256xf32>
    %109 = math.tanh %108 : vector<2x256xf32>
    %cst_51 = arith.constant 1.000000e+00 : f32
    %110 = vector.broadcast %cst_51 : f32 to vector<2x256xf32>
    %111 = arith.addf %109, %110 : vector<2x256xf32>
    %cst_52 = arith.constant 5.000000e-01 : f32
    %112 = vector.broadcast %cst_52 : f32 to vector<2x256xf32>
    %113 = arith.mulf %112, %111 : vector<2x256xf32>
    %114 = vector.extract_strided_slice %95 {offsets = [0, 256], sizes = [2, 256], strides = [1, 1]} : vector<2x1024xf32> to vector<2x256xf32>
    %cst_53 = arith.constant 5.000000e-01 : f32
    %115 = vector.broadcast %cst_53 : f32 to vector<2x256xf32>
    %116 = arith.mulf %115, %114 : vector<2x256xf32>
    %117 = math.tanh %116 : vector<2x256xf32>
    %cst_54 = arith.constant 1.000000e+00 : f32
    %118 = vector.broadcast %cst_54 : f32 to vector<2x256xf32>
    %119 = arith.addf %117, %118 : vector<2x256xf32>
    %cst_55 = arith.constant 5.000000e-01 : f32
    %120 = vector.broadcast %cst_55 : f32 to vector<2x256xf32>
    %121 = arith.mulf %120, %119 : vector<2x256xf32>
    %122 = arith.mulf %121, %88 : vector<2x256xf32>
    %123 = arith.mulf %103, %105 : vector<2x256xf32>
    %124 = arith.addf %122, %123 : vector<2x256xf32>
    %125 = math.tanh %124 : vector<2x256xf32>
    %126 = arith.mulf %113, %125 : vector<2x256xf32>
    %c4 = arith.constant 4 : index
    %c0_56 = arith.constant 0 : index
    %127 = vector.load %arg16[%c4, %c0_56] : memref<16x256xf32, #tpu.memory_space<vmem>>, vector<2x256xf32>
    tpu.vector_store %arg16[%c4, %c0_56], %126 {strides = array<i32>} : memref<16x256xf32, #tpu.memory_space<vmem>>, vector<2x256xf32>,
    %128 = vector.extract_strided_slice %30 {offsets = [6, 0], sizes = [2, 1024], strides = [1, 1]} : vector<16x1024xf32> to vector<2x1024xf32>
    %129 = arith.truncf %126 : vector<2x256xf32> to vector<2x256xbf16>
    %cst_57 = arith.constant dense<0.000000e+00> : vector<2x1024xf32>
    %130 = tpu.matmul %129, %31, %cst_57 {dimension_numbers = #tpu.dot_dimension_numbers<[1], [0], [0], [1], [0, 0, 1, 1], [], []>} : vector<2x256xbf16>, vector<256x1024xbf16>, vector<2x1024xf32> -> vector<2x1024xf32>
    %131 = arith.addf %128, %130 : vector<2x1024xf32>
    %132 = vector.extract_strided_slice %131 {offsets = [0, 0], sizes = [2, 256], strides = [1, 1]} : vector<2x1024xf32> to vector<2x256xf32>
    %cst_58 = arith.constant 5.000000e-01 : f32
    %133 = vector.broadcast %cst_58 : f32 to vector<2x256xf32>
    %134 = arith.mulf %133, %132 : vector<2x256xf32>
    %135 = math.tanh %134 : vector<2x256xf32>
    %cst_59 = arith.constant 1.000000e+00 : f32
    %136 = vector.broadcast %cst_59 : f32 to vector<2x256xf32>
    %137 = arith.addf %135, %136 : vector<2x256xf32>
    %cst_60 = arith.constant 5.000000e-01 : f32
    %138 = vector.broadcast %cst_60 : f32 to vector<2x256xf32>
    %139 = arith.mulf %138, %137 : vector<2x256xf32>
    %140 = vector.extract_strided_slice %131 {offsets = [0, 512], sizes = [2, 256], strides = [1, 1]} : vector<2x1024xf32> to vector<2x256xf32>
    %141 = math.tanh %140 : vector<2x256xf32>
    %142 = vector.extract_strided_slice %131 {offsets = [0, 768], sizes = [2, 256], strides = [1, 1]} : vector<2x1024xf32> to vector<2x256xf32>
    %cst_61 = arith.constant 5.000000e-01 : f32
    %143 = vector.broadcast %cst_61 : f32 to vector<2x256xf32>
    %144 = arith.mulf %143, %142 : vector<2x256xf32>
    %145 = math.tanh %144 : vector<2x256xf32>
    %cst_62 = arith.constant 1.000000e+00 : f32
    %146 = vector.broadcast %cst_62 : f32 to vector<2x256xf32>
    %147 = arith.addf %145, %146 : vector<2x256xf32>
    %cst_63 = arith.constant 5.000000e-01 : f32
    %148 = vector.broadcast %cst_63 : f32 to vector<2x256xf32>
    %149 = arith.mulf %148, %147 : vector<2x256xf32>
    %150 = vector.extract_strided_slice %131 {offsets = [0, 256], sizes = [2, 256], strides = [1, 1]} : vector<2x1024xf32> to vector<2x256xf32>
    %cst_64 = arith.constant 5.000000e-01 : f32
    %151 = vector.broadcast %cst_64 : f32 to vector<2x256xf32>
    %152 = arith.mulf %151, %150 : vector<2x256xf32>
    %153 = math.tanh %152 : vector<2x256xf32>
    %cst_65 = arith.constant 1.000000e+00 : f32
    %154 = vector.broadcast %cst_65 : f32 to vector<2x256xf32>
    %155 = arith.addf %153, %154 : vector<2x256xf32>
    %cst_66 = arith.constant 5.000000e-01 : f32
    %156 = vector.broadcast %cst_66 : f32 to vector<2x256xf32>
    %157 = arith.mulf %156, %155 : vector<2x256xf32>
    %158 = arith.mulf %157, %124 : vector<2x256xf32>
    %159 = arith.mulf %139, %141 : vector<2x256xf32>
    %160 = arith.addf %158, %159 : vector<2x256xf32>
    %161 = math.tanh %160 : vector<2x256xf32>
    %162 = arith.mulf %149, %161 : vector<2x256xf32>
    %c6 = arith.constant 6 : index
    %c0_67 = arith.constant 0 : index
    %163 = vector.load %arg16[%c6, %c0_67] : memref<16x256xf32, #tpu.memory_space<vmem>>, vector<2x256xf32>
    tpu.vector_store %arg16[%c6, %c0_67], %162 {strides = array<i32>} : memref<16x256xf32, #tpu.memory_space<vmem>>, vector<2x256xf32>,
    %164 = vector.extract_strided_slice %30 {offsets = [8, 0], sizes = [2, 1024], strides = [1, 1]} : vector<16x1024xf32> to vector<2x1024xf32>
    %165 = arith.truncf %162 : vector<2x256xf32> to vector<2x256xbf16>
    %cst_68 = arith.constant dense<0.000000e+00> : vector<2x1024xf32>
    %166 = tpu.matmul %165, %31, %cst_68 {dimension_numbers = #tpu.dot_dimension_numbers<[1], [0], [0], [1], [0, 0, 1, 1], [], []>} : vector<2x256xbf16>, vector<256x1024xbf16>, vector<2x1024xf32> -> vector<2x1024xf32>
    %167 = arith.addf %164, %166 : vector<2x1024xf32>
    %168 = vector.extract_strided_slice %167 {offsets = [0, 0], sizes = [2, 256], strides = [1, 1]} : vector<2x1024xf32> to vector<2x256xf32>
    %cst_69 = arith.constant 5.000000e-01 : f32
    %169 = vector.broadcast %cst_69 : f32 to vector<2x256xf32>
    %170 = arith.mulf %169, %168 : vector<2x256xf32>
    %171 = math.tanh %170 : vector<2x256xf32>
    %cst_70 = arith.constant 1.000000e+00 : f32
    %172 = vector.broadcast %cst_70 : f32 to vector<2x256xf32>
    %173 = arith.addf %171, %172 : vector<2x256xf32>
    %cst_71 = arith.constant 5.000000e-01 : f32
    %174 = vector.broadcast %cst_71 : f32 to vector<2x256xf32>
    %175 = arith.mulf %174, %173 : vector<2x256xf32>
    %176 = vector.extract_strided_slice %167 {offsets = [0, 512], sizes = [2, 256], strides = [1, 1]} : vector<2x1024xf32> to vector<2x256xf32>
    %177 = math.tanh %176 : vector<2x256xf32>
    %178 = vector.extract_strided_slice %167 {offsets = [0, 768], sizes = [2, 256], strides = [1, 1]} : vector<2x1024xf32> to vector<2x256xf32>
    %cst_72 = arith.constant 5.000000e-01 : f32
    %179 = vector.broadcast %cst_72 : f32 to vector<2x256xf32>
    %180 = arith.mulf %179, %178 : vector<2x256xf32>
    %181 = math.tanh %180 : vector<2x256xf32>
    %cst_73 = arith.constant 1.000000e+00 : f32
    %182 = vector.broadcast %cst_73 : f32 to vector<2x256xf32>
    %183 = arith.addf %181, %182 : vector<2x256xf32>
    %cst_74 = arith.constant 5.000000e-01 : f32
    %184 = vector.broadcast %cst_74 : f32 to vector<2x256xf32>
    %185 = arith.mulf %184, %183 : vector<2x256xf32>
    %186 = vector.extract_strided_slice %167 {offsets = [0, 256], sizes = [2, 256], strides = [1, 1]} : vector<2x1024xf32> to vector<2x256xf32>
    %cst_75 = arith.constant 5.000000e-01 : f32
    %187 = vector.broadcast %cst_75 : f32 to vector<2x256xf32>
    %188 = arith.mulf %187, %186 : vector<2x256xf32>
    %189 = math.tanh %188 : vector<2x256xf32>
    %cst_76 = arith.constant 1.000000e+00 : f32
    %190 = vector.broadcast %cst_76 : f32 to vector<2x256xf32>
    %191 = arith.addf %189, %190 : vector<2x256xf32>
    %cst_77 = arith.constant 5.000000e-01 : f32
    %192 = vector.broadcast %cst_77 : f32 to vector<2x256xf32>
    %193 = arith.mulf %192, %191 : vector<2x256xf32>
    %194 = arith.mulf %193, %160 : vector<2x256xf32>
    %195 = arith.mulf %175, %177 : vector<2x256xf32>
    %196 = arith.addf %194, %195 : vector<2x256xf32>
    %197 = math.tanh %196 : vector<2x256xf32>
    %198 = arith.mulf %185, %197 : vector<2x256xf32>
    %c8 = arith.constant 8 : index
    %c0_78 = arith.constant 0 : index
    %199 = vector.load %arg16[%c8, %c0_78] : memref<16x256xf32, #tpu.memory_space<vmem>>, vector<2x256xf32>
    tpu.vector_store %arg16[%c8, %c0_78], %198 {strides = array<i32>} : memref<16x256xf32, #tpu.memory_space<vmem>>, vector<2x256xf32>,
    %200 = vector.extract_strided_slice %30 {offsets = [10, 0], sizes = [2, 1024], strides = [1, 1]} : vector<16x1024xf32> to vector<2x1024xf32>
    %201 = arith.truncf %198 : vector<2x256xf32> to vector<2x256xbf16>
    %cst_79 = arith.constant dense<0.000000e+00> : vector<2x1024xf32>
    %202 = tpu.matmul %201, %31, %cst_79 {dimension_numbers = #tpu.dot_dimension_numbers<[1], [0], [0], [1], [0, 0, 1, 1], [], []>} : vector<2x256xbf16>, vector<256x1024xbf16>, vector<2x1024xf32> -> vector<2x1024xf32>
    %203 = arith.addf %200, %202 : vector<2x1024xf32>
    %204 = vector.extract_strided_slice %203 {offsets = [0, 0], sizes = [2, 256], strides = [1, 1]} : vector<2x1024xf32> to vector<2x256xf32>
    %cst_80 = arith.constant 5.000000e-01 : f32
    %205 = vector.broadcast %cst_80 : f32 to vector<2x256xf32>
    %206 = arith.mulf %205, %204 : vector<2x256xf32>
    %207 = math.tanh %206 : vector<2x256xf32>
    %cst_81 = arith.constant 1.000000e+00 : f32
    %208 = vector.broadcast %cst_81 : f32 to vector<2x256xf32>
    %209 = arith.addf %207, %208 : vector<2x256xf32>
    %cst_82 = arith.constant 5.000000e-01 : f32
    %210 = vector.broadcast %cst_82 : f32 to vector<2x256xf32>
    %211 = arith.mulf %210, %209 : vector<2x256xf32>
    %212 = vector.extract_strided_slice %203 {offsets = [0, 512], sizes = [2, 256], strides = [1, 1]} : vector<2x1024xf32> to vector<2x256xf32>
    %213 = math.tanh %212 : vector<2x256xf32>
    %214 = vector.extract_strided_slice %203 {offsets = [0, 768], sizes = [2, 256], strides = [1, 1]} : vector<2x1024xf32> to vector<2x256xf32>
    %cst_83 = arith.constant 5.000000e-01 : f32
    %215 = vector.broadcast %cst_83 : f32 to vector<2x256xf32>
    %216 = arith.mulf %215, %214 : vector<2x256xf32>
    %217 = math.tanh %216 : vector<2x256xf32>
    %cst_84 = arith.constant 1.000000e+00 : f32
    %218 = vector.broadcast %cst_84 : f32 to vector<2x256xf32>
    %219 = arith.addf %217, %218 : vector<2x256xf32>
    %cst_85 = arith.constant 5.000000e-01 : f32
    %220 = vector.broadcast %cst_85 : f32 to vector<2x256xf32>
    %221 = arith.mulf %220, %219 : vector<2x256xf32>
    %222 = vector.extract_strided_slice %203 {offsets = [0, 256], sizes = [2, 256], strides = [1, 1]} : vector<2x1024xf32> to vector<2x256xf32>
    %cst_86 = arith.constant 5.000000e-01 : f32
    %223 = vector.broadcast %cst_86 : f32 to vector<2x256xf32>
    %224 = arith.mulf %223, %222 : vector<2x256xf32>
    %225 = math.tanh %224 : vector<2x256xf32>
    %cst_87 = arith.constant 1.000000e+00 : f32
    %226 = vector.broadcast %cst_87 : f32 to vector<2x256xf32>
    %227 = arith.addf %225, %226 : vector<2x256xf32>
    %cst_88 = arith.constant 5.000000e-01 : f32
    %228 = vector.broadcast %cst_88 : f32 to vector<2x256xf32>
    %229 = arith.mulf %228, %227 : vector<2x256xf32>
    %230 = arith.mulf %229, %196 : vector<2x256xf32>
    %231 = arith.mulf %211, %213 : vector<2x256xf32>
    %232 = arith.addf %230, %231 : vector<2x256xf32>
    %233 = math.tanh %232 : vector<2x256xf32>
    %234 = arith.mulf %221, %233 : vector<2x256xf32>
    %c10 = arith.constant 10 : index
    %c0_89 = arith.constant 0 : index
    %235 = vector.load %arg16[%c10, %c0_89] : memref<16x256xf32, #tpu.memory_space<vmem>>, vector<2x256xf32>
    tpu.vector_store %arg16[%c10, %c0_89], %234 {strides = array<i32>} : memref<16x256xf32, #tpu.memory_space<vmem>>, vector<2x256xf32>,
    %236 = vector.extract_strided_slice %30 {offsets = [12, 0], sizes = [2, 1024], strides = [1, 1]} : vector<16x1024xf32> to vector<2x1024xf32>
    %237 = arith.truncf %234 : vector<2x256xf32> to vector<2x256xbf16>
    %cst_90 = arith.constant dense<0.000000e+00> : vector<2x1024xf32>
    %238 = tpu.matmul %237, %31, %cst_90 {dimension_numbers = #tpu.dot_dimension_numbers<[1], [0], [0], [1], [0, 0, 1, 1], [], []>} : vector<2x256xbf16>, vector<256x1024xbf16>, vector<2x1024xf32> -> vector<2x1024xf32>
    %239 = arith.addf %236, %238 : vector<2x1024xf32>
    %240 = vector.extract_strided_slice %239 {offsets = [0, 0], sizes = [2, 256], strides = [1, 1]} : vector<2x1024xf32> to vector<2x256xf32>
    %cst_91 = arith.constant 5.000000e-01 : f32
    %241 = vector.broadcast %cst_91 : f32 to vector<2x256xf32>
    %242 = arith.mulf %241, %240 : vector<2x256xf32>
    %243 = math.tanh %242 : vector<2x256xf32>
    %cst_92 = arith.constant 1.000000e+00 : f32
    %244 = vector.broadcast %cst_92 : f32 to vector<2x256xf32>
    %245 = arith.addf %243, %244 : vector<2x256xf32>
    %cst_93 = arith.constant 5.000000e-01 : f32
    %246 = vector.broadcast %cst_93 : f32 to vector<2x256xf32>
    %247 = arith.mulf %246, %245 : vector<2x256xf32>
    %248 = vector.extract_strided_slice %239 {offsets = [0, 512], sizes = [2, 256], strides = [1, 1]} : vector<2x1024xf32> to vector<2x256xf32>
    %249 = math.tanh %248 : vector<2x256xf32>
    %250 = vector.extract_strided_slice %239 {offsets = [0, 768], sizes = [2, 256], strides = [1, 1]} : vector<2x1024xf32> to vector<2x256xf32>
    %cst_94 = arith.constant 5.000000e-01 : f32
    %251 = vector.broadcast %cst_94 : f32 to vector<2x256xf32>
    %252 = arith.mulf %251, %250 : vector<2x256xf32>
    %253 = math.tanh %252 : vector<2x256xf32>
    %cst_95 = arith.constant 1.000000e+00 : f32
    %254 = vector.broadcast %cst_95 : f32 to vector<2x256xf32>
    %255 = arith.addf %253, %254 : vector<2x256xf32>
    %cst_96 = arith.constant 5.000000e-01 : f32
    %256 = vector.broadcast %cst_96 : f32 to vector<2x256xf32>
    %257 = arith.mulf %256, %255 : vector<2x256xf32>
    %258 = vector.extract_strided_slice %239 {offsets = [0, 256], sizes = [2, 256], strides = [1, 1]} : vector<2x1024xf32> to vector<2x256xf32>
    %cst_97 = arith.constant 5.000000e-01 : f32
    %259 = vector.broadcast %cst_97 : f32 to vector<2x256xf32>
    %260 = arith.mulf %259, %258 : vector<2x256xf32>
    %261 = math.tanh %260 : vector<2x256xf32>
    %cst_98 = arith.constant 1.000000e+00 : f32
    %262 = vector.broadcast %cst_98 : f32 to vector<2x256xf32>
    %263 = arith.addf %261, %262 : vector<2x256xf32>
    %cst_99 = arith.constant 5.000000e-01 : f32
    %264 = vector.broadcast %cst_99 : f32 to vector<2x256xf32>
    %265 = arith.mulf %264, %263 : vector<2x256xf32>
    %266 = arith.mulf %265, %232 : vector<2x256xf32>
    %267 = arith.mulf %247, %249 : vector<2x256xf32>
    %268 = arith.addf %266, %267 : vector<2x256xf32>
    %269 = math.tanh %268 : vector<2x256xf32>
    %270 = arith.mulf %257, %269 : vector<2x256xf32>
    %c12 = arith.constant 12 : index
    %c0_100 = arith.constant 0 : index
    %271 = vector.load %arg16[%c12, %c0_100] : memref<16x256xf32, #tpu.memory_space<vmem>>, vector<2x256xf32>
    tpu.vector_store %arg16[%c12, %c0_100], %270 {strides = array<i32>} : memref<16x256xf32, #tpu.memory_space<vmem>>, vector<2x256xf32>,
    %272 = vector.extract_strided_slice %30 {offsets = [14, 0], sizes = [2, 1024], strides = [1, 1]} : vector<16x1024xf32> to vector<2x1024xf32>
    %273 = arith.truncf %270 : vector<2x256xf32> to vector<2x256xbf16>
    %cst_101 = arith.constant dense<0.000000e+00> : vector<2x1024xf32>
    %274 = tpu.matmul %273, %31, %cst_101 {dimension_numbers = #tpu.dot_dimension_numbers<[1], [0], [0], [1], [0, 0, 1, 1], [], []>} : vector<2x256xbf16>, vector<256x1024xbf16>, vector<2x1024xf32> -> vector<2x1024xf32>
    %275 = arith.addf %272, %274 : vector<2x1024xf32>
    %276 = vector.extract_strided_slice %275 {offsets = [0, 0], sizes = [2, 256], strides = [1, 1]} : vector<2x1024xf32> to vector<2x256xf32>
    %cst_102 = arith.constant 5.000000e-01 : f32
    %277 = vector.broadcast %cst_102 : f32 to vector<2x256xf32>
    %278 = arith.mulf %277, %276 : vector<2x256xf32>
    %279 = math.tanh %278 : vector<2x256xf32>
    %cst_103 = arith.constant 1.000000e+00 : f32
    %280 = vector.broadcast %cst_103 : f32 to vector<2x256xf32>
    %281 = arith.addf %279, %280 : vector<2x256xf32>
    %cst_104 = arith.constant 5.000000e-01 : f32
    %282 = vector.broadcast %cst_104 : f32 to vector<2x256xf32>
    %283 = arith.mulf %282, %281 : vector<2x256xf32>
    %284 = vector.extract_strided_slice %275 {offsets = [0, 512], sizes = [2, 256], strides = [1, 1]} : vector<2x1024xf32> to vector<2x256xf32>
    %285 = math.tanh %284 : vector<2x256xf32>
    %286 = vector.extract_strided_slice %275 {offsets = [0, 768], sizes = [2, 256], strides = [1, 1]} : vector<2x1024xf32> to vector<2x256xf32>
    %cst_105 = arith.constant 5.000000e-01 : f32
    %287 = vector.broadcast %cst_105 : f32 to vector<2x256xf32>
    %288 = arith.mulf %287, %286 : vector<2x256xf32>
    %289 = math.tanh %288 : vector<2x256xf32>
    %cst_106 = arith.constant 1.000000e+00 : f32
    %290 = vector.broadcast %cst_106 : f32 to vector<2x256xf32>
    %291 = arith.addf %289, %290 : vector<2x256xf32>
    %cst_107 = arith.constant 5.000000e-01 : f32
    %292 = vector.broadcast %cst_107 : f32 to vector<2x256xf32>
    %293 = arith.mulf %292, %291 : vector<2x256xf32>
    %294 = vector.extract_strided_slice %275 {offsets = [0, 256], sizes = [2, 256], strides = [1, 1]} : vector<2x1024xf32> to vector<2x256xf32>
    %cst_108 = arith.constant 5.000000e-01 : f32
    %295 = vector.broadcast %cst_108 : f32 to vector<2x256xf32>
    %296 = arith.mulf %295, %294 : vector<2x256xf32>
    %297 = math.tanh %296 : vector<2x256xf32>
    %cst_109 = arith.constant 1.000000e+00 : f32
    %298 = vector.broadcast %cst_109 : f32 to vector<2x256xf32>
    %299 = arith.addf %297, %298 : vector<2x256xf32>
    %cst_110 = arith.constant 5.000000e-01 : f32
    %300 = vector.broadcast %cst_110 : f32 to vector<2x256xf32>
    %301 = arith.mulf %300, %299 : vector<2x256xf32>
    %302 = arith.mulf %301, %268 : vector<2x256xf32>
    %303 = arith.mulf %283, %285 : vector<2x256xf32>
    %304 = arith.addf %302, %303 : vector<2x256xf32>
    %305 = math.tanh %304 : vector<2x256xf32>
    %306 = arith.mulf %293, %305 : vector<2x256xf32>
    %c14 = arith.constant 14 : index
    %c0_111 = arith.constant 0 : index
    %307 = vector.load %arg16[%c14, %c0_111] : memref<16x256xf32, #tpu.memory_space<vmem>>, vector<2x256xf32>
    tpu.vector_store %arg16[%c14, %c0_111], %306 {strides = array<i32>} : memref<16x256xf32, #tpu.memory_space<vmem>>, vector<2x256xf32>,
    %c0_112 = arith.constant 0 : index
    %c0_113 = arith.constant 0 : index
    %308 = vector.load %arg16[%c0_112, %c0_113] : memref<16x256xf32, #tpu.memory_space<vmem>>, vector<16x256xf32>
    %309 = arith.truncf %308 : vector<16x256xf32> to vector<16x256xbf16>
    %c0_114 = arith.constant 0 : index
    %c0_115 = arith.constant 0 : index
    %310 = vector.load %arg11[%c0_114, %c0_115] : memref<256x1024xbf16, #tpu.memory_space<vmem>>, vector<256x1024xbf16>
    %cst_116 = arith.constant dense<0.000000e+00> : vector<16x1024xf32>
    %311 = tpu.matmul %309, %310, %cst_116 {dimension_numbers = #tpu.dot_dimension_numbers<[1], [0], [0], [1], [0, 0, 1, 1], [], []>} : vector<16x256xbf16>, vector<256x1024xbf16>, vector<16x1024xf32> -> vector<16x1024xf32>
    %c0_117 = arith.constant 0 : index
    %c0_118 = arith.constant 0 : index
    %312 = vector.load %arg13[%c0_117, %c0_118] : memref<1x1024xf32, #tpu.memory_space<vmem>>, vector<1x1024xf32>
    %313 = vector.broadcast %312 : vector<1x1024xf32> to vector<16x1024xf32>
    %314 = arith.addf %311, %313 : vector<16x1024xf32>
    %315 = vector.extract_strided_slice %314 {offsets = [0, 0], sizes = [2, 1024], strides = [1, 1]} : vector<16x1024xf32> to vector<2x1024xf32>
    %316 = vector.extract_strided_slice %315 {offsets = [0, 0], sizes = [2, 256], strides = [1, 1]} : vector<2x1024xf32> to vector<2x256xf32>
    %cst_119 = arith.constant 5.000000e-01 : f32
    %317 = vector.broadcast %cst_119 : f32 to vector<2x256xf32>
    %318 = arith.mulf %317, %316 : vector<2x256xf32>
    %319 = math.tanh %318 : vector<2x256xf32>
    %cst_120 = arith.constant 1.000000e+00 : f32
    %320 = vector.broadcast %cst_120 : f32 to vector<2x256xf32>
    %321 = arith.addf %319, %320 : vector<2x256xf32>
    %cst_121 = arith.constant 5.000000e-01 : f32
    %322 = vector.broadcast %cst_121 : f32 to vector<2x256xf32>
    %323 = arith.mulf %322, %321 : vector<2x256xf32>
    %324 = vector.extract_strided_slice %315 {offsets = [0, 512], sizes = [2, 256], strides = [1, 1]} : vector<2x1024xf32> to vector<2x256xf32>
    %325 = math.tanh %324 : vector<2x256xf32>
    %326 = vector.extract_strided_slice %315 {offsets = [0, 768], sizes = [2, 256], strides = [1, 1]} : vector<2x1024xf32> to vector<2x256xf32>
    %cst_122 = arith.constant 5.000000e-01 : f32
    %327 = vector.broadcast %cst_122 : f32 to vector<2x256xf32>
    %328 = arith.mulf %327, %326 : vector<2x256xf32>
    %329 = math.tanh %328 : vector<2x256xf32>
    %cst_123 = arith.constant 1.000000e+00 : f32
    %330 = vector.broadcast %cst_123 : f32 to vector<2x256xf32>
    %331 = arith.addf %329, %330 : vector<2x256xf32>
    %cst_124 = arith.constant 5.000000e-01 : f32
    %332 = vector.broadcast %cst_124 : f32 to vector<2x256xf32>
    %333 = arith.mulf %332, %331 : vector<2x256xf32>
    %334 = arith.mulf %323, %325 : vector<2x256xf32>
    %335 = math.tanh %334 : vector<2x256xf32>
    %336 = arith.mulf %333, %335 : vector<2x256xf32>
    %337 = vector.extract_strided_slice %314 {offsets = [2, 0], sizes = [2, 1024], strides = [1, 1]} : vector<16x1024xf32> to vector<2x1024xf32>
    %338 = arith.truncf %336 : vector<2x256xf32> to vector<2x256xbf16>
    %cst_125 = arith.constant dense<0.000000e+00> : vector<2x1024xf32>
    %339 = tpu.matmul %338, %32, %cst_125 {dimension_numbers = #tpu.dot_dimension_numbers<[1], [0], [0], [1], [0, 0, 1, 1], [], []>} : vector<2x256xbf16>, vector<256x1024xbf16>, vector<2x1024xf32> -> vector<2x1024xf32>
    %340 = arith.addf %337, %339 : vector<2x1024xf32>
    %341 = vector.extract_strided_slice %340 {offsets = [0, 0], sizes = [2, 256], strides = [1, 1]} : vector<2x1024xf32> to vector<2x256xf32>
    %cst_126 = arith.constant 5.000000e-01 : f32
    %342 = vector.broadcast %cst_126 : f32 to vector<2x256xf32>
    %343 = arith.mulf %342, %341 : vector<2x256xf32>
    %344 = math.tanh %343 : vector<2x256xf32>
    %cst_127 = arith.constant 1.000000e+00 : f32
    %345 = vector.broadcast %cst_127 : f32 to vector<2x256xf32>
    %346 = arith.addf %344, %345 : vector<2x256xf32>
    %cst_128 = arith.constant 5.000000e-01 : f32
    %347 = vector.broadcast %cst_128 : f32 to vector<2x256xf32>
    %348 = arith.mulf %347, %346 : vector<2x256xf32>
    %349 = vector.extract_strided_slice %340 {offsets = [0, 512], sizes = [2, 256], strides = [1, 1]} : vector<2x1024xf32> to vector<2x256xf32>
    %350 = math.tanh %349 : vector<2x256xf32>
    %351 = vector.extract_strided_slice %340 {offsets = [0, 768], sizes = [2, 256], strides = [1, 1]} : vector<2x1024xf32> to vector<2x256xf32>
    %cst_129 = arith.constant 5.000000e-01 : f32
    %352 = vector.broadcast %cst_129 : f32 to vector<2x256xf32>
    %353 = arith.mulf %352, %351 : vector<2x256xf32>
    %354 = math.tanh %353 : vector<2x256xf32>
    %cst_130 = arith.constant 1.000000e+00 : f32
    %355 = vector.broadcast %cst_130 : f32 to vector<2x256xf32>
    %356 = arith.addf %354, %355 : vector<2x256xf32>
    %cst_131 = arith.constant 5.000000e-01 : f32
    %357 = vector.broadcast %cst_131 : f32 to vector<2x256xf32>
    %358 = arith.mulf %357, %356 : vector<2x256xf32>
    %359 = vector.extract_strided_slice %340 {offsets = [0, 256], sizes = [2, 256], strides = [1, 1]} : vector<2x1024xf32> to vector<2x256xf32>
    %cst_132 = arith.constant 5.000000e-01 : f32
    %360 = vector.broadcast %cst_132 : f32 to vector<2x256xf32>
    %361 = arith.mulf %360, %359 : vector<2x256xf32>
    %362 = math.tanh %361 : vector<2x256xf32>
    %cst_133 = arith.constant 1.000000e+00 : f32
    %363 = vector.broadcast %cst_133 : f32 to vector<2x256xf32>
    %364 = arith.addf %362, %363 : vector<2x256xf32>
    %cst_134 = arith.constant 5.000000e-01 : f32
    %365 = vector.broadcast %cst_134 : f32 to vector<2x256xf32>
    %366 = arith.mulf %365, %364 : vector<2x256xf32>
    %367 = arith.mulf %366, %334 : vector<2x256xf32>
    %368 = arith.mulf %348, %350 : vector<2x256xf32>
    %369 = arith.addf %367, %368 : vector<2x256xf32>
    %370 = math.tanh %369 : vector<2x256xf32>
    %371 = arith.mulf %358, %370 : vector<2x256xf32>
    %372 = vector.extract_strided_slice %314 {offsets = [4, 0], sizes = [2, 1024], strides = [1, 1]} : vector<16x1024xf32> to vector<2x1024xf32>
    %373 = arith.truncf %371 : vector<2x256xf32> to vector<2x256xbf16>
    %cst_135 = arith.constant dense<0.000000e+00> : vector<2x1024xf32>
    %374 = tpu.matmul %373, %32, %cst_135 {dimension_numbers = #tpu.dot_dimension_numbers<[1], [0], [0], [1], [0, 0, 1, 1], [], []>} : vector<2x256xbf16>, vector<256x1024xbf16>, vector<2x1024xf32> -> vector<2x1024xf32>
    %375 = arith.addf %372, %374 : vector<2x1024xf32>
    %376 = vector.extract_strided_slice %375 {offsets = [0, 0], sizes = [2, 256], strides = [1, 1]} : vector<2x1024xf32> to vector<2x256xf32>
    %cst_136 = arith.constant 5.000000e-01 : f32
    %377 = vector.broadcast %cst_136 : f32 to vector<2x256xf32>
    %378 = arith.mulf %377, %376 : vector<2x256xf32>
    %379 = math.tanh %378 : vector<2x256xf32>
    %cst_137 = arith.constant 1.000000e+00 : f32
    %380 = vector.broadcast %cst_137 : f32 to vector<2x256xf32>
    %381 = arith.addf %379, %380 : vector<2x256xf32>
    %cst_138 = arith.constant 5.000000e-01 : f32
    %382 = vector.broadcast %cst_138 : f32 to vector<2x256xf32>
    %383 = arith.mulf %382, %381 : vector<2x256xf32>
    %384 = vector.extract_strided_slice %375 {offsets = [0, 512], sizes = [2, 256], strides = [1, 1]} : vector<2x1024xf32> to vector<2x256xf32>
    %385 = math.tanh %384 : vector<2x256xf32>
    %386 = vector.extract_strided_slice %375 {offsets = [0, 768], sizes = [2, 256], strides = [1, 1]} : vector<2x1024xf32> to vector<2x256xf32>
    %cst_139 = arith.constant 5.000000e-01 : f32
    %387 = vector.broadcast %cst_139 : f32 to vector<2x256xf32>
    %388 = arith.mulf %387, %386 : vector<2x256xf32>
    %389 = math.tanh %388 : vector<2x256xf32>
    %cst_140 = arith.constant 1.000000e+00 : f32
    %390 = vector.broadcast %cst_140 : f32 to vector<2x256xf32>
    %391 = arith.addf %389, %390 : vector<2x256xf32>
    %cst_141 = arith.constant 5.000000e-01 : f32
    %392 = vector.broadcast %cst_141 : f32 to vector<2x256xf32>
    %393 = arith.mulf %392, %391 : vector<2x256xf32>
    %394 = vector.extract_strided_slice %375 {offsets = [0, 256], sizes = [2, 256], strides = [1, 1]} : vector<2x1024xf32> to vector<2x256xf32>
    %cst_142 = arith.constant 5.000000e-01 : f32
    %395 = vector.broadcast %cst_142 : f32 to vector<2x256xf32>
    %396 = arith.mulf %395, %394 : vector<2x256xf32>
    %397 = math.tanh %396 : vector<2x256xf32>
    %cst_143 = arith.constant 1.000000e+00 : f32
    %398 = vector.broadcast %cst_143 : f32 to vector<2x256xf32>
    %399 = arith.addf %397, %398 : vector<2x256xf32>
    %cst_144 = arith.constant 5.000000e-01 : f32
    %400 = vector.broadcast %cst_144 : f32 to vector<2x256xf32>
    %401 = arith.mulf %400, %399 : vector<2x256xf32>
    %402 = arith.mulf %401, %369 : vector<2x256xf32>
    %403 = arith.mulf %383, %385 : vector<2x256xf32>
    %404 = arith.addf %402, %403 : vector<2x256xf32>
    %405 = math.tanh %404 : vector<2x256xf32>
    %406 = arith.mulf %393, %405 : vector<2x256xf32>
    %407 = vector.extract_strided_slice %314 {offsets = [6, 0], sizes = [2, 1024], strides = [1, 1]} : vector<16x1024xf32> to vector<2x1024xf32>
    %408 = arith.truncf %406 : vector<2x256xf32> to vector<2x256xbf16>
    %cst_145 = arith.constant dense<0.000000e+00> : vector<2x1024xf32>
    %409 = tpu.matmul %408, %32, %cst_145 {dimension_numbers = #tpu.dot_dimension_numbers<[1], [0], [0], [1], [0, 0, 1, 1], [], []>} : vector<2x256xbf16>, vector<256x1024xbf16>, vector<2x1024xf32> -> vector<2x1024xf32>
    %410 = arith.addf %407, %409 : vector<2x1024xf32>
    %411 = vector.extract_strided_slice %410 {offsets = [0, 0], sizes = [2, 256], strides = [1, 1]} : vector<2x1024xf32> to vector<2x256xf32>
    %cst_146 = arith.constant 5.000000e-01 : f32
    %412 = vector.broadcast %cst_146 : f32 to vector<2x256xf32>
    %413 = arith.mulf %412, %411 : vector<2x256xf32>
    %414 = math.tanh %413 : vector<2x256xf32>
    %cst_147 = arith.constant 1.000000e+00 : f32
    %415 = vector.broadcast %cst_147 : f32 to vector<2x256xf32>
    %416 = arith.addf %414, %415 : vector<2x256xf32>
    %cst_148 = arith.constant 5.000000e-01 : f32
    %417 = vector.broadcast %cst_148 : f32 to vector<2x256xf32>
    %418 = arith.mulf %417, %416 : vector<2x256xf32>
    %419 = vector.extract_strided_slice %410 {offsets = [0, 512], sizes = [2, 256], strides = [1, 1]} : vector<2x1024xf32> to vector<2x256xf32>
    %420 = math.tanh %419 : vector<2x256xf32>
    %421 = vector.extract_strided_slice %410 {offsets = [0, 768], sizes = [2, 256], strides = [1, 1]} : vector<2x1024xf32> to vector<2x256xf32>
    %cst_149 = arith.constant 5.000000e-01 : f32
    %422 = vector.broadcast %cst_149 : f32 to vector<2x256xf32>
    %423 = arith.mulf %422, %421 : vector<2x256xf32>
    %424 = math.tanh %423 : vector<2x256xf32>
    %cst_150 = arith.constant 1.000000e+00 : f32
    %425 = vector.broadcast %cst_150 : f32 to vector<2x256xf32>
    %426 = arith.addf %424, %425 : vector<2x256xf32>
    %cst_151 = arith.constant 5.000000e-01 : f32
    %427 = vector.broadcast %cst_151 : f32 to vector<2x256xf32>
    %428 = arith.mulf %427, %426 : vector<2x256xf32>
    %429 = vector.extract_strided_slice %410 {offsets = [0, 256], sizes = [2, 256], strides = [1, 1]} : vector<2x1024xf32> to vector<2x256xf32>
    %cst_152 = arith.constant 5.000000e-01 : f32
    %430 = vector.broadcast %cst_152 : f32 to vector<2x256xf32>
    %431 = arith.mulf %430, %429 : vector<2x256xf32>
    %432 = math.tanh %431 : vector<2x256xf32>
    %cst_153 = arith.constant 1.000000e+00 : f32
    %433 = vector.broadcast %cst_153 : f32 to vector<2x256xf32>
    %434 = arith.addf %432, %433 : vector<2x256xf32>
    %cst_154 = arith.constant 5.000000e-01 : f32
    %435 = vector.broadcast %cst_154 : f32 to vector<2x256xf32>
    %436 = arith.mulf %435, %434 : vector<2x256xf32>
    %437 = arith.mulf %436, %404 : vector<2x256xf32>
    %438 = arith.mulf %418, %420 : vector<2x256xf32>
    %439 = arith.addf %437, %438 : vector<2x256xf32>
    %440 = math.tanh %439 : vector<2x256xf32>
    %441 = arith.mulf %428, %440 : vector<2x256xf32>
    %442 = vector.extract_strided_slice %314 {offsets = [8, 0], sizes = [2, 1024], strides = [1, 1]} : vector<16x1024xf32> to vector<2x1024xf32>
    %443 = arith.truncf %441 : vector<2x256xf32> to vector<2x256xbf16>
    %cst_155 = arith.constant dense<0.000000e+00> : vector<2x1024xf32>
    %444 = tpu.matmul %443, %32, %cst_155 {dimension_numbers = #tpu.dot_dimension_numbers<[1], [0], [0], [1], [0, 0, 1, 1], [], []>} : vector<2x256xbf16>, vector<256x1024xbf16>, vector<2x1024xf32> -> vector<2x1024xf32>
    %445 = arith.addf %442, %444 : vector<2x1024xf32>
    %446 = vector.extract_strided_slice %445 {offsets = [0, 0], sizes = [2, 256], strides = [1, 1]} : vector<2x1024xf32> to vector<2x256xf32>
    %cst_156 = arith.constant 5.000000e-01 : f32
    %447 = vector.broadcast %cst_156 : f32 to vector<2x256xf32>
    %448 = arith.mulf %447, %446 : vector<2x256xf32>
    %449 = math.tanh %448 : vector<2x256xf32>
    %cst_157 = arith.constant 1.000000e+00 : f32
    %450 = vector.broadcast %cst_157 : f32 to vector<2x256xf32>
    %451 = arith.addf %449, %450 : vector<2x256xf32>
    %cst_158 = arith.constant 5.000000e-01 : f32
    %452 = vector.broadcast %cst_158 : f32 to vector<2x256xf32>
    %453 = arith.mulf %452, %451 : vector<2x256xf32>
    %454 = vector.extract_strided_slice %445 {offsets = [0, 512], sizes = [2, 256], strides = [1, 1]} : vector<2x1024xf32> to vector<2x256xf32>
    %455 = math.tanh %454 : vector<2x256xf32>
    %456 = vector.extract_strided_slice %445 {offsets = [0, 768], sizes = [2, 256], strides = [1, 1]} : vector<2x1024xf32> to vector<2x256xf32>
    %cst_159 = arith.constant 5.000000e-01 : f32
    %457 = vector.broadcast %cst_159 : f32 to vector<2x256xf32>
    %458 = arith.mulf %457, %456 : vector<2x256xf32>
    %459 = math.tanh %458 : vector<2x256xf32>
    %cst_160 = arith.constant 1.000000e+00 : f32
    %460 = vector.broadcast %cst_160 : f32 to vector<2x256xf32>
    %461 = arith.addf %459, %460 : vector<2x256xf32>
    %cst_161 = arith.constant 5.000000e-01 : f32
    %462 = vector.broadcast %cst_161 : f32 to vector<2x256xf32>
    %463 = arith.mulf %462, %461 : vector<2x256xf32>
    %464 = vector.extract_strided_slice %445 {offsets = [0, 256], sizes = [2, 256], strides = [1, 1]} : vector<2x1024xf32> to vector<2x256xf32>
    %cst_162 = arith.constant 5.000000e-01 : f32
    %465 = vector.broadcast %cst_162 : f32 to vector<2x256xf32>
    %466 = arith.mulf %465, %464 : vector<2x256xf32>
    %467 = math.tanh %466 : vector<2x256xf32>
    %cst_163 = arith.constant 1.000000e+00 : f32
    %468 = vector.broadcast %cst_163 : f32 to vector<2x256xf32>
    %469 = arith.addf %467, %468 : vector<2x256xf32>
    %cst_164 = arith.constant 5.000000e-01 : f32
    %470 = vector.broadcast %cst_164 : f32 to vector<2x256xf32>
    %471 = arith.mulf %470, %469 : vector<2x256xf32>
    %472 = arith.mulf %471, %439 : vector<2x256xf32>
    %473 = arith.mulf %453, %455 : vector<2x256xf32>
    %474 = arith.addf %472, %473 : vector<2x256xf32>
    %475 = math.tanh %474 : vector<2x256xf32>
    %476 = arith.mulf %463, %475 : vector<2x256xf32>
    %477 = vector.extract_strided_slice %314 {offsets = [10, 0], sizes = [2, 1024], strides = [1, 1]} : vector<16x1024xf32> to vector<2x1024xf32>
    %478 = arith.truncf %476 : vector<2x256xf32> to vector<2x256xbf16>
    %cst_165 = arith.constant dense<0.000000e+00> : vector<2x1024xf32>
    %479 = tpu.matmul %478, %32, %cst_165 {dimension_numbers = #tpu.dot_dimension_numbers<[1], [0], [0], [1], [0, 0, 1, 1], [], []>} : vector<2x256xbf16>, vector<256x1024xbf16>, vector<2x1024xf32> -> vector<2x1024xf32>
    %480 = arith.addf %477, %479 : vector<2x1024xf32>
    %481 = vector.extract_strided_slice %480 {offsets = [0, 0], sizes = [2, 256], strides = [1, 1]} : vector<2x1024xf32> to vector<2x256xf32>
    %cst_166 = arith.constant 5.000000e-01 : f32
    %482 = vector.broadcast %cst_166 : f32 to vector<2x256xf32>
    %483 = arith.mulf %482, %481 : vector<2x256xf32>
    %484 = math.tanh %483 : vector<2x256xf32>
    %cst_167 = arith.constant 1.000000e+00 : f32
    %485 = vector.broadcast %cst_167 : f32 to vector<2x256xf32>
    %486 = arith.addf %484, %485 : vector<2x256xf32>
    %cst_168 = arith.constant 5.000000e-01 : f32
    %487 = vector.broadcast %cst_168 : f32 to vector<2x256xf32>
    %488 = arith.mulf %487, %486 : vector<2x256xf32>
    %489 = vector.extract_strided_slice %480 {offsets = [0, 512], sizes = [2, 256], strides = [1, 1]} : vector<2x1024xf32> to vector<2x256xf32>
    %490 = math.tanh %489 : vector<2x256xf32>
    %491 = vector.extract_strided_slice %480 {offsets = [0, 768], sizes = [2, 256], strides = [1, 1]} : vector<2x1024xf32> to vector<2x256xf32>
    %cst_169 = arith.constant 5.000000e-01 : f32
    %492 = vector.broadcast %cst_169 : f32 to vector<2x256xf32>
    %493 = arith.mulf %492, %491 : vector<2x256xf32>
    %494 = math.tanh %493 : vector<2x256xf32>
    %cst_170 = arith.constant 1.000000e+00 : f32
    %495 = vector.broadcast %cst_170 : f32 to vector<2x256xf32>
    %496 = arith.addf %494, %495 : vector<2x256xf32>
    %cst_171 = arith.constant 5.000000e-01 : f32
    %497 = vector.broadcast %cst_171 : f32 to vector<2x256xf32>
    %498 = arith.mulf %497, %496 : vector<2x256xf32>
    %499 = vector.extract_strided_slice %480 {offsets = [0, 256], sizes = [2, 256], strides = [1, 1]} : vector<2x1024xf32> to vector<2x256xf32>
    %cst_172 = arith.constant 5.000000e-01 : f32
    %500 = vector.broadcast %cst_172 : f32 to vector<2x256xf32>
    %501 = arith.mulf %500, %499 : vector<2x256xf32>
    %502 = math.tanh %501 : vector<2x256xf32>
    %cst_173 = arith.constant 1.000000e+00 : f32
    %503 = vector.broadcast %cst_173 : f32 to vector<2x256xf32>
    %504 = arith.addf %502, %503 : vector<2x256xf32>
    %cst_174 = arith.constant 5.000000e-01 : f32
    %505 = vector.broadcast %cst_174 : f32 to vector<2x256xf32>
    %506 = arith.mulf %505, %504 : vector<2x256xf32>
    %507 = arith.mulf %506, %474 : vector<2x256xf32>
    %508 = arith.mulf %488, %490 : vector<2x256xf32>
    %509 = arith.addf %507, %508 : vector<2x256xf32>
    %510 = math.tanh %509 : vector<2x256xf32>
    %511 = arith.mulf %498, %510 : vector<2x256xf32>
    %512 = vector.extract_strided_slice %314 {offsets = [12, 0], sizes = [2, 1024], strides = [1, 1]} : vector<16x1024xf32> to vector<2x1024xf32>
    %513 = arith.truncf %511 : vector<2x256xf32> to vector<2x256xbf16>
    %cst_175 = arith.constant dense<0.000000e+00> : vector<2x1024xf32>
    %514 = tpu.matmul %513, %32, %cst_175 {dimension_numbers = #tpu.dot_dimension_numbers<[1], [0], [0], [1], [0, 0, 1, 1], [], []>} : vector<2x256xbf16>, vector<256x1024xbf16>, vector<2x1024xf32> -> vector<2x1024xf32>
    %515 = arith.addf %512, %514 : vector<2x1024xf32>
    %516 = vector.extract_strided_slice %515 {offsets = [0, 0], sizes = [2, 256], strides = [1, 1]} : vector<2x1024xf32> to vector<2x256xf32>
    %cst_176 = arith.constant 5.000000e-01 : f32
    %517 = vector.broadcast %cst_176 : f32 to vector<2x256xf32>
    %518 = arith.mulf %517, %516 : vector<2x256xf32>
    %519 = math.tanh %518 : vector<2x256xf32>
    %cst_177 = arith.constant 1.000000e+00 : f32
    %520 = vector.broadcast %cst_177 : f32 to vector<2x256xf32>
    %521 = arith.addf %519, %520 : vector<2x256xf32>
    %cst_178 = arith.constant 5.000000e-01 : f32
    %522 = vector.broadcast %cst_178 : f32 to vector<2x256xf32>
    %523 = arith.mulf %522, %521 : vector<2x256xf32>
    %524 = vector.extract_strided_slice %515 {offsets = [0, 512], sizes = [2, 256], strides = [1, 1]} : vector<2x1024xf32> to vector<2x256xf32>
    %525 = math.tanh %524 : vector<2x256xf32>
    %526 = vector.extract_strided_slice %515 {offsets = [0, 768], sizes = [2, 256], strides = [1, 1]} : vector<2x1024xf32> to vector<2x256xf32>
    %cst_179 = arith.constant 5.000000e-01 : f32
    %527 = vector.broadcast %cst_179 : f32 to vector<2x256xf32>
    %528 = arith.mulf %527, %526 : vector<2x256xf32>
    %529 = math.tanh %528 : vector<2x256xf32>
    %cst_180 = arith.constant 1.000000e+00 : f32
    %530 = vector.broadcast %cst_180 : f32 to vector<2x256xf32>
    %531 = arith.addf %529, %530 : vector<2x256xf32>
    %cst_181 = arith.constant 5.000000e-01 : f32
    %532 = vector.broadcast %cst_181 : f32 to vector<2x256xf32>
    %533 = arith.mulf %532, %531 : vector<2x256xf32>
    %534 = vector.extract_strided_slice %515 {offsets = [0, 256], sizes = [2, 256], strides = [1, 1]} : vector<2x1024xf32> to vector<2x256xf32>
    %cst_182 = arith.constant 5.000000e-01 : f32
    %535 = vector.broadcast %cst_182 : f32 to vector<2x256xf32>
    %536 = arith.mulf %535, %534 : vector<2x256xf32>
    %537 = math.tanh %536 : vector<2x256xf32>
    %cst_183 = arith.constant 1.000000e+00 : f32
    %538 = vector.broadcast %cst_183 : f32 to vector<2x256xf32>
    %539 = arith.addf %537, %538 : vector<2x256xf32>
    %cst_184 = arith.constant 5.000000e-01 : f32
    %540 = vector.broadcast %cst_184 : f32 to vector<2x256xf32>
    %541 = arith.mulf %540, %539 : vector<2x256xf32>
    %542 = arith.mulf %541, %509 : vector<2x256xf32>
    %543 = arith.mulf %523, %525 : vector<2x256xf32>
    %544 = arith.addf %542, %543 : vector<2x256xf32>
    %545 = math.tanh %544 : vector<2x256xf32>
    %546 = arith.mulf %533, %545 : vector<2x256xf32>
    %547 = vector.extract_strided_slice %314 {offsets = [14, 0], sizes = [2, 1024], strides = [1, 1]} : vector<16x1024xf32> to vector<2x1024xf32>
    %548 = arith.truncf %546 : vector<2x256xf32> to vector<2x256xbf16>
    %cst_185 = arith.constant dense<0.000000e+00> : vector<2x1024xf32>
    %549 = tpu.matmul %548, %32, %cst_185 {dimension_numbers = #tpu.dot_dimension_numbers<[1], [0], [0], [1], [0, 0, 1, 1], [], []>} : vector<2x256xbf16>, vector<256x1024xbf16>, vector<2x1024xf32> -> vector<2x1024xf32>
    %550 = arith.addf %547, %549 : vector<2x1024xf32>
    %551 = vector.extract_strided_slice %550 {offsets = [0, 0], sizes = [2, 256], strides = [1, 1]} : vector<2x1024xf32> to vector<2x256xf32>
    %cst_186 = arith.constant 5.000000e-01 : f32
    %552 = vector.broadcast %cst_186 : f32 to vector<2x256xf32>
    %553 = arith.mulf %552, %551 : vector<2x256xf32>
    %554 = math.tanh %553 : vector<2x256xf32>
    %cst_187 = arith.constant 1.000000e+00 : f32
    %555 = vector.broadcast %cst_187 : f32 to vector<2x256xf32>
    %556 = arith.addf %554, %555 : vector<2x256xf32>
    %cst_188 = arith.constant 5.000000e-01 : f32
    %557 = vector.broadcast %cst_188 : f32 to vector<2x256xf32>
    %558 = arith.mulf %557, %556 : vector<2x256xf32>
    %559 = vector.extract_strided_slice %550 {offsets = [0, 512], sizes = [2, 256], strides = [1, 1]} : vector<2x1024xf32> to vector<2x256xf32>
    %560 = math.tanh %559 : vector<2x256xf32>
    %561 = vector.extract_strided_slice %550 {offsets = [0, 768], sizes = [2, 256], strides = [1, 1]} : vector<2x1024xf32> to vector<2x256xf32>
    %cst_189 = arith.constant 5.000000e-01 : f32
    %562 = vector.broadcast %cst_189 : f32 to vector<2x256xf32>
    %563 = arith.mulf %562, %561 : vector<2x256xf32>
    %564 = math.tanh %563 : vector<2x256xf32>
    %cst_190 = arith.constant 1.000000e+00 : f32
    %565 = vector.broadcast %cst_190 : f32 to vector<2x256xf32>
    %566 = arith.addf %564, %565 : vector<2x256xf32>
    %cst_191 = arith.constant 5.000000e-01 : f32
    %567 = vector.broadcast %cst_191 : f32 to vector<2x256xf32>
    %568 = arith.mulf %567, %566 : vector<2x256xf32>
    %569 = vector.extract_strided_slice %550 {offsets = [0, 256], sizes = [2, 256], strides = [1, 1]} : vector<2x1024xf32> to vector<2x256xf32>
    %cst_192 = arith.constant 5.000000e-01 : f32
    %570 = vector.broadcast %cst_192 : f32 to vector<2x256xf32>
    %571 = arith.mulf %570, %569 : vector<2x256xf32>
    %572 = math.tanh %571 : vector<2x256xf32>
    %cst_193 = arith.constant 1.000000e+00 : f32
    %573 = vector.broadcast %cst_193 : f32 to vector<2x256xf32>
    %574 = arith.addf %572, %573 : vector<2x256xf32>
    %cst_194 = arith.constant 5.000000e-01 : f32
    %575 = vector.broadcast %cst_194 : f32 to vector<2x256xf32>
    %576 = arith.mulf %575, %574 : vector<2x256xf32>
    %577 = arith.mulf %576, %544 : vector<2x256xf32>
    %578 = arith.mulf %558, %560 : vector<2x256xf32>
    %579 = arith.addf %577, %578 : vector<2x256xf32>
    %580 = math.tanh %579 : vector<2x256xf32>
    %581 = arith.mulf %568, %580 : vector<2x256xf32>
    %c0_195 = arith.constant 0 : index
    %c0_196 = arith.constant 0 : index
    %c0_197 = arith.constant 0 : index
    %582 = vector.load %arg14[%c0_195, %c0_196, %c0_197] : memref<2x2x256xf32, #tpu.memory_space<vmem>>, vector<1x2x256xf32>
    %583 = vector.shape_cast %582 : vector<1x2x256xf32> to vector<2x256xf32>
    %584 = vector.shape_cast %306 : vector<2x256xf32> to vector<1x2x256xf32>
    tpu.vector_store %arg14[%c0_195, %c0_196, %c0_197], %584 {strides = array<i32>} : memref<2x2x256xf32, #tpu.memory_space<vmem>>, vector<1x2x256xf32>,
    %c1 = arith.constant 1 : index
    %c0_198 = arith.constant 0 : index
    %c0_199 = arith.constant 0 : index
    %585 = vector.load %arg14[%c1, %c0_198, %c0_199] : memref<2x2x256xf32, #tpu.memory_space<vmem>>, vector<1x2x256xf32>
    %586 = vector.shape_cast %585 : vector<1x2x256xf32> to vector<2x256xf32>
    %587 = vector.shape_cast %581 : vector<2x256xf32> to vector<1x2x256xf32>
    tpu.vector_store %arg14[%c1, %c0_198, %c0_199], %587 {strides = array<i32>} : memref<2x2x256xf32, #tpu.memory_space<vmem>>, vector<1x2x256xf32>,
    %c0_200 = arith.constant 0 : index
    %c0_201 = arith.constant 0 : index
    %c0_202 = arith.constant 0 : index
    %588 = vector.load %arg15[%c0_200, %c0_201, %c0_202] : memref<2x2x256xf32, #tpu.memory_space<vmem>>, vector<1x2x256xf32>
    %589 = vector.shape_cast %588 : vector<1x2x256xf32> to vector<2x256xf32>
    %590 = vector.shape_cast %304 : vector<2x256xf32> to vector<1x2x256xf32>
    tpu.vector_store %arg15[%c0_200, %c0_201, %c0_202], %590 {strides = array<i32>} : memref<2x2x256xf32, #tpu.memory_space<vmem>>, vector<1x2x256xf32>,
    %c1_203 = arith.constant 1 : index
    %c0_204 = arith.constant 0 : index
    %c0_205 = arith.constant 0 : index
    %591 = vector.load %arg15[%c1_203, %c0_204, %c0_205] : memref<2x2x256xf32, #tpu.memory_space<vmem>>, vector<1x2x256xf32>
    %592 = vector.shape_cast %591 : vector<1x2x256xf32> to vector<2x256xf32>
    %593 = vector.shape_cast %579 : vector<2x256xf32> to vector<1x2x256xf32>
    tpu.vector_store %arg15[%c1_203, %c0_204, %c0_205], %593 {strides = array<i32>} : memref<2x2x256xf32, #tpu.memory_space<vmem>>, vector<1x2x256xf32>,
    return
  }
  func.func @transform_0(%arg0: i32) -> (i32, i32) {
    %c0_i32 = arith.constant 0 : i32
    %c0_i32_0 = arith.constant 0 : i32
    %c0_i32_1 = arith.constant 0 : i32
    return %c0_i32, %c0_i32_0 : i32, i32
  }
  func.func @transform_1(%arg0: i32) -> (i32, i32) {
    %c0_i32 = arith.constant 0 : i32
    %c0_i32_0 = arith.constant 0 : i32
    %c0_i32_1 = arith.constant 0 : i32
    return %c0_i32, %c0_i32_0 : i32, i32
  }
  func.func @transform_2(%arg0: i32) -> (i32, i32) {
    %c0_i32 = arith.constant 0 : i32
    %c0_i32_0 = arith.constant 0 : i32
    %c0_i32_1 = arith.constant 0 : i32
    return %c0_i32, %c0_i32_0 : i32, i32
  }
  func.func @transform_3(%arg0: i32) -> (i32, i32) {
    %c0_i32 = arith.constant 0 : i32
    %c0_i32_0 = arith.constant 0 : i32
    %c0_i32_1 = arith.constant 0 : i32
    return %c0_i32, %c0_i32_0 : i32, i32
  }
  func.func @transform_4(%arg0: i32) -> (i32, i32) {
    %c0_i32 = arith.constant 0 : i32
    %c0_i32_0 = arith.constant 0 : i32
    %c0_i32_1 = arith.constant 0 : i32
    return %c0_i32, %c0_i32_0 : i32, i32
  }
  func.func @transform_5(%arg0: i32) -> (i32, i32) {
    %c0_i32 = arith.constant 0 : i32
    %c0_i32_0 = arith.constant 0 : i32
    %c0_i32_1 = arith.constant 0 : i32
    return %c0_i32, %c0_i32_0 : i32, i32
  }
  func.func @transform_6(%arg0: i32) -> (i32, i32) {
    %c0_i32 = arith.constant 0 : i32
    %c0_i32_0 = arith.constant 0 : i32
    %c0_i32_1 = arith.constant 0 : i32
    return %c0_i32, %c0_i32_0 : i32, i32
  }
  func.func @transform_7(%arg0: i32) -> (i32, i32) {
    %c0_i32 = arith.constant 0 : i32
    %c0_i32_0 = arith.constant 0 : i32
    %c0_i32_1 = arith.constant 0 : i32
    return %c0_i32, %c0_i32_0 : i32, i32
  }
  func.func @transform_8(%arg0: i32) -> (i32, i32) {
    %c0_i32 = arith.constant 0 : i32
    %c0_i32_0 = arith.constant 0 : i32
    %c0_i32_1 = arith.constant 0 : i32
    return %c0_i32, %c0_i32_0 : i32, i32
  }
  func.func @transform_9(%arg0: i32) -> (i32, i32) {
    %c0_i32 = arith.constant 0 : i32
    %c0_i32_0 = arith.constant 0 : i32
    %c0_i32_1 = arith.constant 0 : i32
    return %c0_i32, %c0_i32_0 : i32, i32
  }
  func.func @transform_10(%arg0: i32) -> (i32, i32) {
    %c0_i32 = arith.constant 0 : i32
    %c0_i32_0 = arith.constant 0 : i32
    %c0_i32_1 = arith.constant 0 : i32
    return %c0_i32, %c0_i32_0 : i32, i32
  }
  func.func @transform_11(%arg0: i32) -> (i32, i32) {
    %c0_i32 = arith.constant 0 : i32
    %c0_i32_0 = arith.constant 0 : i32
    %c0_i32_1 = arith.constant 0 : i32
    return %c0_i32, %c0_i32_0 : i32, i32
  }
  func.func @transform_12(%arg0: i32) -> (i32, i32) {
    %c0_i32 = arith.constant 0 : i32
    %c0_i32_0 = arith.constant 0 : i32
    %c0_i32_1 = arith.constant 0 : i32
    return %c0_i32, %c0_i32_0 : i32, i32
  }
  func.func @transform_13(%arg0: i32) -> (i32, i32, i32) {
    %c0_i32 = arith.constant 0 : i32
    %c0_i32_0 = arith.constant 0 : i32
    %c0_i32_1 = arith.constant 0 : i32
    %c0_i32_2 = arith.constant 0 : i32
    return %c0_i32, %c0_i32_0, %c0_i32_1 : i32, i32, i32
  }
  func.func @transform_14(%arg0: i32) -> (i32, i32, i32) {
    %c0_i32 = arith.constant 0 : i32
    %c0_i32_0 = arith.constant 0 : i32
    %c0_i32_1 = arith.constant 0 : i32
    %c0_i32_2 = arith.constant 0 : i32
    return %c0_i32, %c0_i32_0, %c0_i32_1 : i32, i32, i32
  }
}

</mosaic_0001>

<llo_original>
// kernel: encoder_forward.1
$region0: #{encoder_forward.1}
  #allocation0 [shape = 'u32[]', space=smem, size = 0x4, offset = 0x4, fixed_abs, tag = 'smem constant byte address 0x4 - core index']
  #allocation1 [shape = 'u32[72,128]{1,0:T(1,128)}', space=vmem, size = 0x9000, scoped, tag = 'internal scratch']
  #allocation2 [shape = 'f32[16,256]{1,0:T(8,128)}', space=vmem, size = 0x4000, scoped, tag = 'scratch operand']
  %s0 = inlined_call_operand.vmem [shape: f32[16,8], index: 0, kind: input, shape index: {}]
  %s1 = inlined_call_operand.vmem [shape: bf16[8,256], index: 1, kind: input, shape index: {}]
  %s2 = inlined_call_operand.vmem [shape: f32[1,256], index: 2, kind: input, shape index: {}]
  %s3 = inlined_call_operand.hbm [shape: bf16[256,256], index: 3, kind: input, shape index: {}]
  %s4 = inlined_call_operand.vmem [shape: f32[1,256], index: 4, kind: input, shape index: {}]
  %s5 = inlined_call_operand.hbm [shape: bf16[256,256], index: 5, kind: input, shape index: {}]
  %s6 = inlined_call_operand.vmem [shape: f32[1,256], index: 6, kind: input, shape index: {}]
  %s7 = inlined_call_operand.hbm [shape: bf16[256,1024], index: 7, kind: input, shape index: {}]
  %s8 = inlined_call_operand.hbm [shape: bf16[256,1024], index: 8, kind: input, shape index: {}]
  %s9 = inlined_call_operand.vmem [shape: f32[1,1024], index: 9, kind: input, shape index: {}]
  %s10 = inlined_call_operand.hbm [shape: bf16[256,1024], index: 10, kind: input, shape index: {}]
  %s11 = inlined_call_operand.hbm [shape: bf16[256,1024], index: 11, kind: input, shape index: {}]
  %s12 = inlined_call_operand.vmem [shape: f32[1,1024], index: 12, kind: input, shape index: {}]
  %s13 = inlined_call_operand.hbm [shape: f32[2,2,256], index: 13, kind: output, shape index: {0}]
  %s14 = inlined_call_operand.hbm [shape: f32[2,2,256], index: 14, kind: output, shape index: {1}]
  %15 = xla_tuple %s13, %s14
  %s16 = sld [smem:[#allocation0]]
  $region94: #{encoder_forward.1} parent=0
    _
  %s18 = ssub.s32 1, %s16
  %s19 = scalar_select 0, %s18, %s16
  $region1: #{encoder_forward.1} parent=0
    #allocation3 [shape = 'u8[131072]{0}', space=vmem, size = 0x20000, scoped, tag = 'input window, operand 3, single buffered']
    #allocation4 [shape = 's32[1]{0}', space=sflag, size = 0x4, scoped, tag = 'scoped memory for encoder_forward.1']
    #allocation5 [shape = 's32[1]{0}', space=sflag, size = 0x4, scoped, tag = 'scoped memory for encoder_forward.1']
    #allocation6 [shape = 'u8[131072]{0}', space=vmem, size = 0x20000, scoped, tag = 'input window, operand 5, single buffered']
    #allocation7 [shape = 's32[1]{0}', space=sflag, size = 0x4, scoped, tag = 'scoped memory for encoder_forward.1']
    #allocation8 [shape = 'u8[524288]{0}', space=vmem, size = 0x80000, scoped, tag = 'input window, operand 7, single buffered']
    #allocation9 [shape = 'u8[524288]{0}', space=vmem, size = 0x80000, scoped, tag = 'input window, operand 8, single buffered']
    #allocation10 [shape = 's32[1]{0}', space=sflag, size = 0x4, scoped, tag = 'scoped memory for encoder_forward.1']
    #allocation11 [shape = 'u8[524288]{0}', space=vmem, size = 0x80000, scoped, tag = 'input window, operand 10, single buffered']
    #allocation12 [shape = 'u8[524288]{0}', space=vmem, size = 0x80000, scoped, tag = 'input window, operand 11, single buffered']
    #allocation13 [shape = 's32[1]{0}', space=sflag, size = 0x4, scoped, tag = 'scoped memory for encoder_forward.1']
    #allocation14 [shape = 'u8[4096]{0}', space=vmem, size = 0x1000, scoped, tag = 'output window, operand 0, single buffered']
    #allocation15 [shape = 'u8[4096]{0}', space=vmem, size = 0x1000, scoped, tag = 'output window, operand 1, single buffered']
    #allocation16 [shape = 's32[1]{0}', space=sflag, size = 0x4, scoped, tag = 'scoped memory for encoder_forward.1']
    %20 = vsyncpa [#allocation4], 0
    %21 = vsyncpa [#allocation7], 0
    %22 = vsyncpa [#allocation10], 0
    %23 = vsyncpa [#allocation13], 0
    %24 = vsyncpa [#allocation5], 0
    %25 = vsyncpa [#allocation16], 0
    // Predicated region
    $region2: #{encoder_forward.1} parent=1 // pred_check
      _
    $region3: #{encoder_forward.1} parent=1 // pred_check_branch
      %27 = sbr.rel (0) target = $region5
    $region4: #{encoder_forward.1} parent=1 // pred_region
      _
    $region5: #{encoder_forward.1} parent=1 // pred_fallthru
      _
    // Predicated region
    $region6: #{encoder_forward.1} parent=1 // pred_check
      _
    $region7: #{encoder_forward.1} parent=1 // pred_check_branch
      %29 = sbr.rel (0) target = $region9
    $region8: #{encoder_forward.1} parent=1 // pred_region
      _
    $region9: #{encoder_forward.1} parent=1 // pred_fallthru
      _
    // Predicated region
    $region10: #{encoder_forward.1} parent=1 // pred_check
      _
    $region11: #{encoder_forward.1} parent=1 // pred_check_branch
      %31 = sbr.rel (0) target = $region13
    $region12: #{encoder_forward.1} parent=1 // pred_region
      _
    $region13: #{encoder_forward.1} parent=1 // pred_fallthru
      _
    // Predicated region
    $region14: #{encoder_forward.1} parent=1 // pred_check
      _
    $region15: #{encoder_forward.1} parent=1 // pred_check_branch
      %33 = sbr.rel (0) target = $region17
    $region16: #{encoder_forward.1} parent=1 // pred_region
      %35 = vsyncadd [#allocation4], 0
      %s36 = sshll.u32 %s3, 4
      %s37 = int_to_ptr.hbm [resolvable:$true] %s36
      %s38 = sshll.u32 [#allocation3], 4
      %s39 = int_to_ptr.vmem [resolvable:$true] %s38
      %44 = dma.hbm_to_vmem [thread:$0]  %s37, 4096, %s39, [#allocation4], 128, 128, 8
    $region17: #{encoder_forward.1} parent=1 // pred_fallthru
      _
    // Predicated region
    $region18: #{encoder_forward.1} parent=1 // pred_check
      _
    $region19: #{encoder_forward.1} parent=1 // pred_check_branch
      %46 = sbr.rel (0) target = $region21
    $region20: #{encoder_forward.1} parent=1 // pred_region
      _
    $region21: #{encoder_forward.1} parent=1 // pred_fallthru
      _
    // Predicated region
    $region22: #{encoder_forward.1} parent=1 // pred_check
      _
    $region23: #{encoder_forward.1} parent=1 // pred_check_branch
      %48 = sbr.rel (0) target = $region25
    $region24: #{encoder_forward.1} parent=1 // pred_region
      %50 = vsyncadd [#allocation7], 0
      %s51 = sshll.u32 %s5, 4
      %s52 = int_to_ptr.hbm [resolvable:$true] %s51
      %s53 = sshll.u32 [#allocation6], 4
      %s54 = int_to_ptr.vmem [resolvable:$true] %s53
      %59 = dma.hbm_to_vmem [thread:$0]  %s52, 4096, %s54, [#allocation7], 128, 128, 8
    $region25: #{encoder_forward.1} parent=1 // pred_fallthru
      _
    // Predicated region
    $region26: #{encoder_forward.1} parent=1 // pred_check
      _
    $region27: #{encoder_forward.1} parent=1 // pred_check_branch
      %61 = sbr.rel (0) target = $region29
    $region28: #{encoder_forward.1} parent=1 // pred_region
      _
    $region29: #{encoder_forward.1} parent=1 // pred_fallthru
      _
    // Predicated region
    $region30: #{encoder_forward.1} parent=1 // pred_check
      _
    $region31: #{encoder_forward.1} parent=1 // pred_check_branch
      %63 = sbr.rel (0) target = $region33
    $region32: #{encoder_forward.1} parent=1 // pred_region
      %65 = vsyncadd [#allocation7], 0
      %s66 = sshll.u32 %s7, 4
      %s67 = int_to_ptr.hbm [resolvable:$true] %s66
      %s68 = sshll.u32 [#allocation8], 4
      %s69 = int_to_ptr.vmem [resolvable:$true] %s68
      %74 = dma.hbm_to_vmem [thread:$0]  %s67, 16384, %s69, [#allocation7], 512, 512, 32
    $region33: #{encoder_forward.1} parent=1 // pred_fallthru
      _
    // Predicated region
    $region34: #{encoder_forward.1} parent=1 // pred_check
      _
    $region35: #{encoder_forward.1} parent=1 // pred_check_branch
      %76 = sbr.rel (0) target = $region37
    $region36: #{encoder_forward.1} parent=1 // pred_region
      %78 = vsyncadd [#allocation10], 0
      %s79 = sshll.u32 %s8, 4
      %s80 = int_to_ptr.hbm [resolvable:$true] %s79
      %s81 = sshll.u32 [#allocation9], 4
      %s82 = int_to_ptr.vmem [resolvable:$true] %s81
      %87 = dma.hbm_to_vmem [thread:$0]  %s80, 16384, %s82, [#allocation10], 512, 512, 32
    $region37: #{encoder_forward.1} parent=1 // pred_fallthru
      _
    // Predicated region
    $region38: #{encoder_forward.1} parent=1 // pred_check
      _
    $region39: #{encoder_forward.1} parent=1 // pred_check_branch
      %89 = sbr.rel (0) target = $region41
    $region40: #{encoder_forward.1} parent=1 // pred_region
      _
    $region41: #{encoder_forward.1} parent=1 // pred_fallthru
      _
    // Predicated region
    $region42: #{encoder_forward.1} parent=1 // pred_check
      _
    $region43: #{encoder_forward.1} parent=1 // pred_check_branch
      %91 = sbr.rel (0) target = $region45
    $region44: #{encoder_forward.1} parent=1 // pred_region
      %93 = vsyncadd [#allocation10], 0
      %s94 = sshll.u32 %s10, 4
      %s95 = int_to_ptr.hbm [resolvable:$true] %s94
      %s96 = sshll.u32 [#allocation11], 4
      %s97 = int_to_ptr.vmem [resolvable:$true] %s96
      %102 = dma.hbm_to_vmem [thread:$0]  %s95, 16384, %s97, [#allocation10], 512, 512, 32
    $region45: #{encoder_forward.1} parent=1 // pred_fallthru
      _
    // Predicated region
    $region46: #{encoder_forward.1} parent=1 // pred_check
      _
    $region47: #{encoder_forward.1} parent=1 // pred_check_branch
      %104 = sbr.rel (0) target = $region49
    $region48: #{encoder_forward.1} parent=1 // pred_region
      %106 = vsyncadd [#allocation13], 0
      %s107 = sshll.u32 %s11, 4
      %s108 = int_to_ptr.hbm [resolvable:$true] %s107
      %s109 = sshll.u32 [#allocation12], 4
      %s110 = int_to_ptr.vmem [resolvable:$true] %s109
      %115 = dma.hbm_to_vmem [thread:$0]  %s108, 16384, %s110, [#allocation13], 512, 512, 32
    $region49: #{encoder_forward.1} parent=1 // pred_fallthru
      _
    // Predicated region
    $region50: #{encoder_forward.1} parent=1 // pred_check
      _
    $region51: #{encoder_forward.1} parent=1 // pred_check_branch
      %117 = sbr.rel (0) target = $region53
    $region52: #{encoder_forward.1} parent=1 // pred_region
      _
    $region53: #{encoder_forward.1} parent=1 // pred_fallthru
      _
    // Predicated region
    $region54: #{encoder_forward.1} parent=1 // pred_check
      _
    $region55: #{encoder_forward.1} parent=1 // pred_check_branch
      %119 = sbr.rel (0) target = $region57
    $region56: #{encoder_forward.1} parent=1 // pred_region
      %121 = dma.done [#allocation4], 4096
    $region57: #{encoder_forward.1} parent=1 // pred_fallthru
      _
    // Predicated region
    $region58: #{encoder_forward.1} parent=1 // pred_check
      _
    $region59: #{encoder_forward.1} parent=1 // pred_check_branch
      %123 = sbr.rel (0) target = $region61
    $region60: #{encoder_forward.1} parent=1 // pred_region
      %125 = dma.done [#allocation7], 4096
    $region61: #{encoder_forward.1} parent=1 // pred_fallthru
      _
    // Predicated region
    $region62: #{encoder_forward.1} parent=1 // pred_check
      _
    $region63: #{encoder_forward.1} parent=1 // pred_check_branch
      %127 = sbr.rel (0) target = $region65
    $region64: #{encoder_forward.1} parent=1 // pred_region
      %129 = dma.done [#allocation7], 16384
    $region65: #{encoder_forward.1} parent=1 // pred_fallthru
      _
    // Predicated region
    $region66: #{encoder_forward.1} parent=1 // pred_check
      _
    $region67: #{encoder_forward.1} parent=1 // pred_check_branch
      %131 = sbr.rel (0) target = $region69
    $region68: #{encoder_forward.1} parent=1 // pred_region
      %133 = dma.done [#allocation10], 16384
    $region69: #{encoder_forward.1} parent=1 // pred_fallthru
      _
    // Predicated region
    $region70: #{encoder_forward.1} parent=1 // pred_check
      _
    $region71: #{encoder_forward.1} parent=1 // pred_check_branch
      %135 = sbr.rel (0) target = $region73
    $region72: #{encoder_forward.1} parent=1 // pred_region
      %137 = dma.done [#allocation10], 16384
    $region73: #{encoder_forward.1} parent=1 // pred_fallthru
      _
    // Predicated region
    $region74: #{encoder_forward.1} parent=1 // pred_check
      _
    $region75: #{encoder_forward.1} parent=1 // pred_check_branch
      %139 = sbr.rel (0) target = $region77
    $region76: #{encoder_forward.1} parent=1 // pred_region
      %141 = dma.done [#allocation13], 16384
    $region77: #{encoder_forward.1} parent=1 // pred_fallthru
      _
    %v143 = vld [vmem:[%s0] sm:$0xff]
    %v144 = vld [vmem:[%s0 + $0x8] sm:$0xff]
    %v145 = vpack.c.bf16 %v144, %v143
    %v146 = vld [vmem:[%s1] sm:$0xff]
    %v147 = vld [vmem:[%s2] sm:$0x3]
    %v149 = vperm.slane %v147, 0
    %v150 = vperm.slane %v147, 1
    %v154 = vunpack.c.l.b16 %v146
    %v155 = vunpack.c.h.b16 %v146
    %v156 = vpack.c.b16 %v154, %v154
    %v157 = vpack.c.b16 %v155, %v155
    %vm158 = vcmask 64512
    %v160 = vsel %vm158, %v145, 0
    %vm162 = vcmask 1043456
    %v164 = vsel %vm162, %v156, 0
    %v167 = vsel %vm162, %v157, 0
    %169 = vmatpush.bf16.msra.mxu0 0
    %170 = vmatpush.bf16.msra.mxu0 0
    %171 = vmatpush.bf16.msra.mxu0 0
    %172 = vmatpush.bf16.msra.mxu0 0
    %173 = vmatpush.bf16.msra.mxu0 0
    %174 = vmatpush.bf16.msra.mxu0 0
    %175 = vmatpush.bf16.msra.mxu0 0
    %176 = vmatpush.bf16.msra.mxu0 %v164
    %177 = vmatmul.bf16.gmra.mxu0 %v160
    %v178 = vpop.f32.mrf.mxu0
    %v179 = vadd.f32 %v149, %v178
    %v180 = vpop.f32.mrf.mxu0
    %v181 = vadd.f32 %v149, %v180
    %182 = vdwg.mxu0
    %183 = vmatpush.bf16.msra.mxu0 0
    %184 = vmatpush.bf16.msra.mxu0 0
    %185 = vmatpush.bf16.msra.mxu0 0
    %186 = vmatpush.bf16.msra.mxu0 0
    %187 = vmatpush.bf16.msra.mxu0 0
    %188 = vmatpush.bf16.msra.mxu0 0
    %189 = vmatpush.bf16.msra.mxu0 0
    %190 = vmatpush.bf16.msra.mxu0 %v167
    %191 = vmatmul.bf16.gmra.mxu0 %v160
    %v192 = vpop.f32.mrf.mxu0
    %v193 = vadd.f32 %v150, %v192
    %v194 = vpop.f32.mrf.mxu0
    %v195 = vadd.f32 %v150, %v194
    %196 = vdwg.mxu0
    %v197 = vmax.f32 %v179, 0.0
    %v198 = vmax.f32 %v193, 0.0
    %v199 = vmax.f32 %v181, 0.0
    %v200 = vmax.f32 %v195, 0.0
    %v201 = vpack.c.bf16 %v199, %v197
    %v202 = vpack.c.bf16 %v200, %v198
    %v203 = vld [vmem:[#allocation3] sm:$0xff]
    %v204 = vld [vmem:[#allocation3 + $0x8] sm:$0xff]
    %v205 = vld [vmem:[#allocation3 + $0x10] sm:$0xff]
    %v206 = vld [vmem:[#allocation3 + $0x18] sm:$0xff]
    %v207 = vld [vmem:[#allocation3 + $0x20] sm:$0xff]
    %v208 = vld [vmem:[#allocation3 + $0x28] sm:$0xff]
    %v209 = vld [vmem:[#allocation3 + $0x30] sm:$0xff]
    %v210 = vld [vmem:[#allocation3 + $0x38] sm:$0xff]
    %v211 = vld [vmem:[#allocation3 + $0x40] sm:$0xff]
    %v212 = vld [vmem:[#allocation3 + $0x48] sm:$0xff]
    %v213 = vld [vmem:[#allocation3 + $0x50] sm:$0xff]
    %v214 = vld [vmem:[#allocation3 + $0x58] sm:$0xff]
    %v215 = vld [vmem:[#allocation3 + $0x60] sm:$0xff]
    %v216 = vld [vmem:[#allocation3 + $0x68] sm:$0xff]
    %v217 = vld [vmem:[#allocation3 + $0x70] sm:$0xff]
    %v218 = vld [vmem:[#allocation3 + $0x78] sm:$0xff]
    %v219 = vld [vmem:[#allocation3 + $0x80] sm:$0xff]
    %v220 = vld [vmem:[#allocation3 + $0x88] sm:$0xff]
    %v221 = vld [vmem:[#allocation3 + $0x90] sm:$0xff]
    %v222 = vld [vmem:[#allocation3 + $0x98] sm:$0xff]
    %v223 = vld [vmem:[#allocation3 + $0xa0] sm:$0xff]
    %v224 = vld [vmem:[#allocation3 + $0xa8] sm:$0xff]
    %v225 = vld [vmem:[#allocation3 + $0xb0] sm:$0xff]
    %v226 = vld [vmem:[#allocation3 + $0xb8] sm:$0xff]
    %v227 = vld [vmem:[#allocation3 + $0xc0] sm:$0xff]
    %v228 = vld [vmem:[#allocation3 + $0xc8] sm:$0xff]
    %v229 = vld [vmem:[#allocation3 + $0xd0] sm:$0xff]
    %v230 = vld [vmem:[#allocation3 + $0xd8] sm:$0xff]
    %v231 = vld [vmem:[#allocation3 + $0xe0] sm:$0xff]
    %v232 = vld [vmem:[#allocation3 + $0xe8] sm:$0xff]
    %v233 = vld [vmem:[#allocation3 + $0xf0] sm:$0xff]
    %v234 = vld [vmem:[#allocation3 + $0xf8] sm:$0xff]
    %v235 = vld [vmem:[%s4] sm:$0x3]
    %v237 = vperm.slane %v235, 0
    %v238 = vperm.slane %v235, 1
    %v273 = vunpack.c.l.b16 %v203
    %v274 = vunpack.c.h.b16 %v203
    %v275 = vunpack.c.l.b16 %v204
    %v276 = vunpack.c.h.b16 %v204
    %v277 = vunpack.c.l.b16 %v205
    %v278 = vunpack.c.h.b16 %v205
    %v279 = vunpack.c.l.b16 %v206
    %v280 = vunpack.c.h.b16 %v206
    %v281 = vunpack.c.l.b16 %v207
    %v282 = vunpack.c.h.b16 %v207
    %v283 = vunpack.c.l.b16 %v208
    %v284 = vunpack.c.h.b16 %v208
    %v285 = vunpack.c.l.b16 %v209
    %v286 = vunpack.c.h.b16 %v209
    %v287 = vunpack.c.l.b16 %v210
    %v288 = vunpack.c.h.b16 %v210
    %v289 = vunpack.c.l.b16 %v211
    %v290 = vunpack.c.h.b16 %v211
    %v291 = vunpack.c.l.b16 %v212
    %v292 = vunpack.c.h.b16 %v212
    %v293 = vunpack.c.l.b16 %v213
    %v294 = vunpack.c.h.b16 %v213
    %v295 = vunpack.c.l.b16 %v214
    %v296 = vunpack.c.h.b16 %v214
    %v297 = vunpack.c.l.b16 %v215
    %v298 = vunpack.c.h.b16 %v215
    %v299 = vunpack.c.l.b16 %v216
    %v300 = vunpack.c.h.b16 %v216
    %v301 = vunpack.c.l.b16 %v217
    %v302 = vunpack.c.h.b16 %v217
    %v303 = vunpack.c.l.b16 %v218
    %v304 = vunpack.c.h.b16 %v218
    %v305 = vunpack.c.l.b16 %v219
    %v306 = vunpack.c.h.b16 %v219
    %v307 = vunpack.c.l.b16 %v220
    %v308 = vunpack.c.h.b16 %v220
    %v309 = vunpack.c.l.b16 %v221
    %v310 = vunpack.c.h.b16 %v221
    %v311 = vunpack.c.l.b16 %v222
    %v312 = vunpack.c.h.b16 %v222
    %v313 = vunpack.c.l.b16 %v223
    %v314 = vunpack.c.h.b16 %v223
    %v315 = vunpack.c.l.b16 %v224
    %v316 = vunpack.c.h.b16 %v224
    %v317 = vunpack.c.l.b16 %v225
    %v318 = vunpack.c.h.b16 %v225
    %v319 = vunpack.c.l.b16 %v226
    %v320 = vunpack.c.h.b16 %v226
    %v321 = vunpack.c.l.b16 %v227
    %v322 = vunpack.c.h.b16 %v227
    %v323 = vunpack.c.l.b16 %v228
    %v324 = vunpack.c.h.b16 %v228
    %v325 = vunpack.c.l.b16 %v229
    %v326 = vunpack.c.h.b16 %v229
    %v327 = vunpack.c.l.b16 %v230
    %v328 = vunpack.c.h.b16 %v230
    %v329 = vunpack.c.l.b16 %v231
    %v330 = vunpack.c.h.b16 %v231
    %v331 = vunpack.c.l.b16 %v232
    %v332 = vunpack.c.h.b16 %v232
    %v333 = vunpack.c.l.b16 %v233
    %v334 = vunpack.c.h.b16 %v233
    %v335 = vunpack.c.l.b16 %v234
    %v336 = vunpack.c.h.b16 %v234
    %v337 = vpack.c.b16 %v275, %v273
    %v338 = vpack.c.b16 %v276, %v274
    %v339 = vpack.c.b16 %v279, %v277
    %v340 = vpack.c.b16 %v280, %v278
    %v341 = vpack.c.b16 %v283, %v281
    %v342 = vpack.c.b16 %v284, %v282
    %v343 = vpack.c.b16 %v287, %v285
    %v344 = vpack.c.b16 %v288, %v286
    %v345 = vpack.c.b16 %v291, %v289
    %v346 = vpack.c.b16 %v292, %v290
    %v347 = vpack.c.b16 %v295, %v293
    %v348 = vpack.c.b16 %v296, %v294
    %v349 = vpack.c.b16 %v299, %v297
    %v350 = vpack.c.b16 %v300, %v298
    %v351 = vpack.c.b16 %v303, %v301
    %v352 = vpack.c.b16 %v304, %v302
    %v353 = vpack.c.b16 %v307, %v305
    %v354 = vpack.c.b16 %v308, %v306
    %v355 = vpack.c.b16 %v311, %v309
    %v356 = vpack.c.b16 %v312, %v310
    %v357 = vpack.c.b16 %v315, %v313
    %v358 = vpack.c.b16 %v316, %v314
    %v359 = vpack.c.b16 %v319, %v317
    %v360 = vpack.c.b16 %v320, %v318
    %v361 = vpack.c.b16 %v323, %v321
    %v362 = vpack.c.b16 %v324, %v322
    %v363 = vpack.c.b16 %v327, %v325
    %v364 = vpack.c.b16 %v328, %v326
    %v365 = vpack.c.b16 %v331, %v329
    %v366 = vpack.c.b16 %v332, %v330
    %v367 = vpack.c.b16 %v335, %v333
    %v368 = vpack.c.b16 %v336, %v334
    %401 = vmatpush.bf16.msra.mxu0 %v351
    %402 = vmatpush.bf16.msra.mxu0 %v349
    %403 = vmatpush.bf16.msra.mxu0 %v347
    %404 = vmatpush.bf16.msra.mxu0 %v345
    %405 = vmatpush.bf16.msra.mxu0 %v343
    %406 = vmatpush.bf16.msra.mxu0 %v341
    %407 = vmatpush.bf16.msra.mxu0 %v339
    %408 = vmatpush.bf16.msra.mxu0 %v337
    %409 = vmatmul.bf16.gmra.mxu0 %v201
    %v410 = vpop.f32.mrf.mxu0
    %v411 = vadd.f32 %v237, %v410
    %v412 = vpop.f32.mrf.mxu0
    %v413 = vadd.f32 %v237, %v412
    %414 = vdwg.mxu0
    %415 = vmatpush.bf16.msra.mxu0 %v367
    %416 = vmatpush.bf16.msra.mxu0 %v365
    %417 = vmatpush.bf16.msra.mxu0 %v363
    %418 = vmatpush.bf16.msra.mxu0 %v361
    %419 = vmatpush.bf16.msra.mxu0 %v359
    %420 = vmatpush.bf16.msra.mxu0 %v357
    %421 = vmatpush.bf16.msra.mxu0 %v355
    %422 = vmatpush.bf16.msra.mxu0 %v353
    %423 = vmatmul.bf16.gmra.mxu0 %v202
    %v424 = vpop.f32.mrf.mxu0
    %v425 = vadd.f32 %v411, %v424
    %v426 = vpop.f32.mrf.mxu0
    %v427 = vadd.f32 %v413, %v426
    %428 = vdwg.mxu0
    %429 = vmatpush.bf16.msra.mxu0 %v352
    %430 = vmatpush.bf16.msra.mxu0 %v350
    %431 = vmatpush.bf16.msra.mxu0 %v348
    %432 = vmatpush.bf16.msra.mxu0 %v346
    %433 = vmatpush.bf16.msra.mxu0 %v344
    %434 = vmatpush.bf16.msra.mxu0 %v342
    %435 = vmatpush.bf16.msra.mxu0 %v340
    %436 = vmatpush.bf16.msra.mxu0 %v338
    %437 = vmatmul.bf16.gmra.mxu0 %v201
    %v438 = vpop.f32.mrf.mxu0
    %v439 = vadd.f32 %v238, %v438
    %v440 = vpop.f32.mrf.mxu0
    %v441 = vadd.f32 %v238, %v440
    %442 = vdwg.mxu0
    %443 = vmatpush.bf16.msra.mxu0 %v368
    %444 = vmatpush.bf16.msra.mxu0 %v366
    %445 = vmatpush.bf16.msra.mxu0 %v364
    %446 = vmatpush.bf16.msra.mxu0 %v362
    %447 = vmatpush.bf16.msra.mxu0 %v360
    %448 = vmatpush.bf16.msra.mxu0 %v358
    %449 = vmatpush.bf16.msra.mxu0 %v356
    %450 = vmatpush.bf16.msra.mxu0 %v354
    %451 = vmatmul.bf16.gmra.mxu0 %v202
    %v452 = vpop.f32.mrf.mxu0
    %v453 = vadd.f32 %v439, %v452
    %v454 = vpop.f32.mrf.mxu0
    %v455 = vadd.f32 %v441, %v454
    %456 = vdwg.mxu0
    %v457 = vmax.f32 %v425, 0.0
    %v458 = vmax.f32 %v453, 0.0
    %v459 = vmax.f32 %v427, 0.0
    %v460 = vmax.f32 %v455, 0.0
    %v461 = vpack.c.bf16 %v459, %v457
    %v462 = vpack.c.bf16 %v460, %v458
    %v463 = vld [vmem:[#allocation6] sm:$0xff]
    %v464 = vld [vmem:[#allocation6 + $0x8] sm:$0xff]
    %v465 = vld [vmem:[#allocation6 + $0x10] sm:$0xff]
    %v466 = vld [vmem:[#allocation6 + $0x18] sm:$0xff]
    %v467 = vld [vmem:[#allocation6 + $0x20] sm:$0xff]
    %v468 = vld [vmem:[#allocation6 + $0x28] sm:$0xff]
    %v469 = vld [vmem:[#allocation6 + $0x30] sm:$0xff]
    %v470 = vld [vmem:[#allocation6 + $0x38] sm:$0xff]
    %v471 = vld [vmem:[#allocation6 + $0x40] sm:$0xff]
    %v472 = vld [vmem:[#allocation6 + $0x48] sm:$0xff]
    %v473 = vld [vmem:[#allocation6 + $0x50] sm:$0xff]
    %v474 = vld [vmem:[#allocation6 + $0x58] sm:$0xff]
    %v475 = vld [vmem:[#allocation6 + $0x60] sm:$0xff]
    %v476 = vld [vmem:[#allocation6 + $0x68] sm:$0xff]
    %v477 = vld [vmem:[#allocation6 + $0x70] sm:$0xff]
    %v478 = vld [vmem:[#allocation6 + $0x78] sm:$0xff]
    %v479 = vld [vmem:[#allocation6 + $0x80] sm:$0xff]
    %v480 = vld [vmem:[#allocation6 + $0x88] sm:$0xff]
    %v481 = vld [vmem:[#allocation6 + $0x90] sm:$0xff]
    %v482 = vld [vmem:[#allocation6 + $0x98] sm:$0xff]
    %v483 = vld [vmem:[#allocation6 + $0xa0] sm:$0xff]
    %v484 = vld [vmem:[#allocation6 + $0xa8] sm:$0xff]
    %v485 = vld [vmem:[#allocation6 + $0xb0] sm:$0xff]
    %v486 = vld [vmem:[#allocation6 + $0xb8] sm:$0xff]
    %v487 = vld [vmem:[#allocation6 + $0xc0] sm:$0xff]
    %v488 = vld [vmem:[#allocation6 + $0xc8] sm:$0xff]
    %v489 = vld [vmem:[#allocation6 + $0xd0] sm:$0xff]
    %v490 = vld [vmem:[#allocation6 + $0xd8] sm:$0xff]
    %v491 = vld [vmem:[#allocation6 + $0xe0] sm:$0xff]
    %v492 = vld [vmem:[#allocation6 + $0xe8] sm:$0xff]
    %v493 = vld [vmem:[#allocation6 + $0xf0] sm:$0xff]
    %v494 = vld [vmem:[#allocation6 + $0xf8] sm:$0xff]
    %v495 = vld [vmem:[%s6] sm:$0x3]
    %v497 = vperm.slane %v495, 0
    %v498 = vperm.slane %v495, 1
    %v533 = vunpack.c.l.b16 %v463
    %v534 = vunpack.c.h.b16 %v463
    %v535 = vunpack.c.l.b16 %v464
    %v536 = vunpack.c.h.b16 %v464
    %v537 = vunpack.c.l.b16 %v465
    %v538 = vunpack.c.h.b16 %v465
    %v539 = vunpack.c.l.b16 %v466
    %v540 = vunpack.c.h.b16 %v466
    %v541 = vunpack.c.l.b16 %v467
    %v542 = vunpack.c.h.b16 %v467
    %v543 = vunpack.c.l.b16 %v468
    %v544 = vunpack.c.h.b16 %v468
    %v545 = vunpack.c.l.b16 %v469
    %v546 = vunpack.c.h.b16 %v469
    %v547 = vunpack.c.l.b16 %v470
    %v548 = vunpack.c.h.b16 %v470
    %v549 = vunpack.c.l.b16 %v471
    %v550 = vunpack.c.h.b16 %v471
    %v551 = vunpack.c.l.b16 %v472
    %v552 = vunpack.c.h.b16 %v472
    %v553 = vunpack.c.l.b16 %v473
    %v554 = vunpack.c.h.b16 %v473
    %v555 = vunpack.c.l.b16 %v474
    %v556 = vunpack.c.h.b16 %v474
    %v557 = vunpack.c.l.b16 %v475
    %v558 = vunpack.c.h.b16 %v475
    %v559 = vunpack.c.l.b16 %v476
    %v560 = vunpack.c.h.b16 %v476
    %v561 = vunpack.c.l.b16 %v477
    %v562 = vunpack.c.h.b16 %v477
    %v563 = vunpack.c.l.b16 %v478
    %v564 = vunpack.c.h.b16 %v478
    %v565 = vunpack.c.l.b16 %v479
    %v566 = vunpack.c.h.b16 %v479
    %v567 = vunpack.c.l.b16 %v480
    %v568 = vunpack.c.h.b16 %v480
    %v569 = vunpack.c.l.b16 %v481
    %v570 = vunpack.c.h.b16 %v481
    %v571 = vunpack.c.l.b16 %v482
    %v572 = vunpack.c.h.b16 %v482
    %v573 = vunpack.c.l.b16 %v483
    %v574 = vunpack.c.h.b16 %v483
    %v575 = vunpack.c.l.b16 %v484
    %v576 = vunpack.c.h.b16 %v484
    %v577 = vunpack.c.l.b16 %v485
    %v578 = vunpack.c.h.b16 %v485
    %v579 = vunpack.c.l.b16 %v486
    %v580 = vunpack.c.h.b16 %v486
    %v581 = vunpack.c.l.b16 %v487
    %v582 = vunpack.c.h.b16 %v487
    %v583 = vunpack.c.l.b16 %v488
    %v584 = vunpack.c.h.b16 %v488
    %v585 = vunpack.c.l.b16 %v489
    %v586 = vunpack.c.h.b16 %v489
    %v587 = vunpack.c.l.b16 %v490
    %v588 = vunpack.c.h.b16 %v490
    %v589 = vunpack.c.l.b16 %v491
    %v590 = vunpack.c.h.b16 %v491
    %v591 = vunpack.c.l.b16 %v492
    %v592 = vunpack.c.h.b16 %v492
    %v593 = vunpack.c.l.b16 %v493
    %v594 = vunpack.c.h.b16 %v493
    %v595 = vunpack.c.l.b16 %v494
    %v596 = vunpack.c.h.b16 %v494
    %v597 = vpack.c.b16 %v535, %v533
    %v598 = vpack.c.b16 %v536, %v534
    %v599 = vpack.c.b16 %v539, %v537
    %v600 = vpack.c.b16 %v540, %v538
    %v601 = vpack.c.b16 %v543, %v541
    %v602 = vpack.c.b16 %v544, %v542
    %v603 = vpack.c.b16 %v547, %v545
    %v604 = vpack.c.b16 %v548, %v546
    %v605 = vpack.c.b16 %v551, %v549
    %v606 = vpack.c.b16 %v552, %v550
    %v607 = vpack.c.b16 %v555, %v553
    %v608 = vpack.c.b16 %v556, %v554
    %v609 = vpack.c.b16 %v559, %v557
    %v610 = vpack.c.b16 %v560, %v558
    %v611 = vpack.c.b16 %v563, %v561
    %v612 = vpack.c.b16 %v564, %v562
    %v613 = vpack.c.b16 %v567, %v565
    %v614 = vpack.c.b16 %v568, %v566
    %v615 = vpack.c.b16 %v571, %v569
    %v616 = vpack.c.b16 %v572, %v570
    %v617 = vpack.c.b16 %v575, %v573
    %v618 = vpack.c.b16 %v576, %v574
    %v619 = vpack.c.b16 %v579, %v577
    %v620 = vpack.c.b16 %v580, %v578
    %v621 = vpack.c.b16 %v583, %v581
    %v622 = vpack.c.b16 %v584, %v582
    %v623 = vpack.c.b16 %v587, %v585
    %v624 = vpack.c.b16 %v588, %v586
    %v625 = vpack.c.b16 %v591, %v589
    %v626 = vpack.c.b16 %v592, %v590
    %v627 = vpack.c.b16 %v595, %v593
    %v628 = vpack.c.b16 %v596, %v594
    %661 = vmatpush.bf16.msra.mxu0 %v611
    %662 = vmatpush.bf16.msra.mxu0 %v609
    %663 = vmatpush.bf16.msra.mxu0 %v607
    %664 = vmatpush.bf16.msra.mxu0 %v605
    %665 = vmatpush.bf16.msra.mxu0 %v603
    %666 = vmatpush.bf16.msra.mxu0 %v601
    %667 = vmatpush.bf16.msra.mxu0 %v599
    %668 = vmatpush.bf16.msra.mxu0 %v597
    %669 = vmatmul.bf16.gmra.mxu0 %v461
    %v670 = vpop.f32.mrf.mxu0
    %v671 = vadd.f32 %v497, %v670
    %v672 = vpop.f32.mrf.mxu0
    %v673 = vadd.f32 %v497, %v672
    %674 = vdwg.mxu0
    %675 = vmatpush.bf16.msra.mxu0 %v627
    %676 = vmatpush.bf16.msra.mxu0 %v625
    %677 = vmatpush.bf16.msra.mxu0 %v623
    %678 = vmatpush.bf16.msra.mxu0 %v621
    %679 = vmatpush.bf16.msra.mxu0 %v619
    %680 = vmatpush.bf16.msra.mxu0 %v617
    %681 = vmatpush.bf16.msra.mxu0 %v615
    %682 = vmatpush.bf16.msra.mxu0 %v613
    %683 = vmatmul.bf16.gmra.mxu0 %v462
    %v684 = vpop.f32.mrf.mxu0
    %v685 = vadd.f32 %v671, %v684
    %v686 = vpop.f32.mrf.mxu0
    %v687 = vadd.f32 %v673, %v686
    %688 = vdwg.mxu0
    %689 = vmatpush.bf16.msra.mxu0 %v612
    %690 = vmatpush.bf16.msra.mxu0 %v610
    %691 = vmatpush.bf16.msra.mxu0 %v608
    %692 = vmatpush.bf16.msra.mxu0 %v606
    %693 = vmatpush.bf16.msra.mxu0 %v604
    %694 = vmatpush.bf16.msra.mxu0 %v602
    %695 = vmatpush.bf16.msra.mxu0 %v600
    %696 = vmatpush.bf16.msra.mxu0 %v598
    %697 = vmatmul.bf16.gmra.mxu0 %v461
    %v698 = vpop.f32.mrf.mxu0
    %v699 = vadd.f32 %v498, %v698
    %v700 = vpop.f32.mrf.mxu0
    %v701 = vadd.f32 %v498, %v700
    %702 = vdwg.mxu0
    %703 = vmatpush.bf16.msra.mxu0 %v628
    %704 = vmatpush.bf16.msra.mxu0 %v626
    %705 = vmatpush.bf16.msra.mxu0 %v624
    %706 = vmatpush.bf16.msra.mxu0 %v622
    %707 = vmatpush.bf16.msra.mxu0 %v620
    %708 = vmatpush.bf16.msra.mxu0 %v618
    %709 = vmatpush.bf16.msra.mxu0 %v616
    %710 = vmatpush.bf16.msra.mxu0 %v614
    %711 = vmatmul.bf16.gmra.mxu0 %v462
    %v712 = vpop.f32.mrf.mxu0
    %v713 = vadd.f32 %v699, %v712
    %v714 = vpop.f32.mrf.mxu0
    %v715 = vadd.f32 %v701, %v714
    %716 = vdwg.mxu0
    %v717 = vmax.f32 %v685, 0.0
    %v718 = vmax.f32 %v713, 0.0
    %v719 = vmax.f32 %v687, 0.0
    %v720 = vmax.f32 %v715, 0.0
    %v721 = vpack.c.bf16 %v719, %v717
    %v722 = vpack.c.bf16 %v720, %v718
    %v723 = vld [vmem:[#allocation8] sm:$0xff]
    %v724 = vld [vmem:[#allocation8 + $0x8] sm:$0xff]
    %v725 = vld [vmem:[#allocation8 + $0x10] sm:$0xff]
    %v726 = vld [vmem:[#allocation8 + $0x18] sm:$0xff]
    %v727 = vld [vmem:[#allocation8 + $0x20] sm:$0xff]
    %v728 = vld [vmem:[#allocation8 + $0x28] sm:$0xff]
    %v729 = vld [vmem:[#allocation8 + $0x30] sm:$0xff]
    %v730 = vld [vmem:[#allocation8 + $0x38] sm:$0xff]
    %v731 = vld [vmem:[#allocation8 + $0x40] sm:$0xff]
    %v732 = vld [vmem:[#allocation8 + $0x48] sm:$0xff]
    %v733 = vld [vmem:[#allocation8 + $0x50] sm:$0xff]
    %v734 = vld [vmem:[#allocation8 + $0x58] sm:$0xff]
    %v735 = vld [vmem:[#allocation8 + $0x60] sm:$0xff]
    %v736 = vld [vmem:[#allocation8 + $0x68] sm:$0xff]
    %v737 = vld [vmem:[#allocation8 + $0x70] sm:$0xff]
    %v738 = vld [vmem:[#allocation8 + $0x78] sm:$0xff]
    %v739 = vld [vmem:[#allocation8 + $0x80] sm:$0xff]
    %v740 = vld [vmem:[#allocation8 + $0x88] sm:$0xff]
    %v741 = vld [vmem:[#allocation8 + $0x90] sm:$0xff]
    %v742 = vld [vmem:[#allocation8 + $0x98] sm:$0xff]
    %v743 = vld [vmem:[#allocation8 + $0xa0] sm:$0xff]
    %v744 = vld [vmem:[#allocation8 + $0xa8] sm:$0xff]
    %v745 = vld [vmem:[#allocation8 + $0xb0] sm:$0xff]
    %v746 = vld [vmem:[#allocation8 + $0xb8] sm:$0xff]
    %v747 = vld [vmem:[#allocation8 + $0xc0] sm:$0xff]
    %v748 = vld [vmem:[#allocation8 + $0xc8] sm:$0xff]
    %v749 = vld [vmem:[#allocation8 + $0xd0] sm:$0xff]
    %v750 = vld [vmem:[#allocation8 + $0xd8] sm:$0xff]
    %v751 = vld [vmem:[#allocation8 + $0xe0] sm:$0xff]
    %v752 = vld [vmem:[#allocation8 + $0xe8] sm:$0xff]
    %v753 = vld [vmem:[#allocation8 + $0xf0] sm:$0xff]
    %v754 = vld [vmem:[#allocation8 + $0xf8] sm:$0xff]
    %v755 = vld [vmem:[#allocation8 + $0x100] sm:$0xff]
    %v756 = vld [vmem:[#allocation8 + $0x108] sm:$0xff]
    %v757 = vld [vmem:[#allocation8 + $0x110] sm:$0xff]
    %v758 = vld [vmem:[#allocation8 + $0x118] sm:$0xff]
    %v759 = vld [vmem:[#allocation8 + $0x120] sm:$0xff]
    %v760 = vld [vmem:[#allocation8 + $0x128] sm:$0xff]
    %v761 = vld [vmem:[#allocation8 + $0x130] sm:$0xff]
    %v762 = vld [vmem:[#allocation8 + $0x138] sm:$0xff]
    %v763 = vld [vmem:[#allocation8 + $0x140] sm:$0xff]
    %v764 = vld [vmem:[#allocation8 + $0x148] sm:$0xff]
    %v765 = vld [vmem:[#allocation8 + $0x150] sm:$0xff]
    %v766 = vld [vmem:[#allocation8 + $0x158] sm:$0xff]
    %v767 = vld [vmem:[#allocation8 + $0x160] sm:$0xff]
    %v768 = vld [vmem:[#allocation8 + $0x168] sm:$0xff]
    %v769 = vld [vmem:[#allocation8 + $0x170] sm:$0xff]
    %v770 = vld [vmem:[#allocation8 + $0x178] sm:$0xff]
    %v771 = vld [vmem:[#allocation8 + $0x180] sm:$0xff]
    %v772 = vld [vmem:[#allocation8 + $0x188] sm:$0xff]
    %v773 = vld [vmem:[#allocation8 + $0x190] sm:$0xff]
    %v774 = vld [vmem:[#allocation8 + $0x198] sm:$0xff]
    %v775 = vld [vmem:[#allocation8 + $0x1a0] sm:$0xff]
    %v776 = vld [vmem:[#allocation8 + $0x1a8] sm:$0xff]
    %v777 = vld [vmem:[#allocation8 + $0x1b0] sm:$0xff]
    %v778 = vld [vmem:[#allocation8 + $0x1b8] sm:$0xff]
    %v779 = vld [vmem:[#allocation8 + $0x1c0] sm:$0xff]
    %v780 = vld [vmem:[#allocation8 + $0x1c8] sm:$0xff]
    %v781 = vld [vmem:[#allocation8 + $0x1d0] sm:$0xff]
    %v782 = vld [vmem:[#allocation8 + $0x1d8] sm:$0xff]
    %v783 = vld [vmem:[#allocation8 + $0x1e0] sm:$0xff]
    %v784 = vld [vmem:[#allocation8 + $0x1e8] sm:$0xff]
    %v785 = vld [vmem:[#allocation8 + $0x1f0] sm:$0xff]
    %v786 = vld [vmem:[#allocation8 + $0x1f8] sm:$0xff]
    %v787 = vld [vmem:[#allocation8 + $0x200] sm:$0xff]
    %v788 = vld [vmem:[#allocation8 + $0x208] sm:$0xff]
    %v789 = vld [vmem:[#allocation8 + $0x210] sm:$0xff]
    %v790 = vld [vmem:[#allocation8 + $0x218] sm:$0xff]
    %v791 = vld [vmem:[#allocation8 + $0x220] sm:$0xff]
    %v792 = vld [vmem:[#allocation8 + $0x228] sm:$0xff]
    %v793 = vld [vmem:[#allocation8 + $0x230] sm:$0xff]
    %v794 = vld [vmem:[#allocation8 + $0x238] sm:$0xff]
    %v795 = vld [vmem:[#allocation8 + $0x240] sm:$0xff]
    %v796 = vld [vmem:[#allocation8 + $0x248] sm:$0xff]
    %v797 = vld [vmem:[#allocation8 + $0x250] sm:$0xff]
    %v798 = vld [vmem:[#allocation8 + $0x258] sm:$0xff]
    %v799 = vld [vmem:[#allocation8 + $0x260] sm:$0xff]
    %v800 = vld [vmem:[#allocation8 + $0x268] sm:$0xff]
    %v801 = vld [vmem:[#allocation8 + $0x270] sm:$0xff]
    %v802 = vld [vmem:[#allocation8 + $0x278] sm:$0xff]
    %v803 = vld [vmem:[#allocation8 + $0x280] sm:$0xff]
    %v804 = vld [vmem:[#allocation8 + $0x288] sm:$0xff]
    %v805 = vld [vmem:[#allocation8 + $0x290] sm:$0xff]
    %v806 = vld [vmem:[#allocation8 + $0x298] sm:$0xff]
    %v807 = vld [vmem:[#allocation8 + $0x2a0] sm:$0xff]
    %v808 = vld [vmem:[#allocation8 + $0x2a8] sm:$0xff]
    %v809 = vld [vmem:[#allocation8 + $0x2b0] sm:$0xff]
    %v810 = vld [vmem:[#allocation8 + $0x2b8] sm:$0xff]
    %v811 = vld [vmem:[#allocation8 + $0x2c0] sm:$0xff]
    %v812 = vld [vmem:[#allocation8 + $0x2c8] sm:$0xff]
    %v813 = vld [vmem:[#allocation8 + $0x2d0] sm:$0xff]
    %v814 = vld [vmem:[#allocation8 + $0x2d8] sm:$0xff]
    %v815 = vld [vmem:[#allocation8 + $0x2e0] sm:$0xff]
    %v816 = vld [vmem:[#allocation8 + $0x2e8] sm:$0xff]
    %v817 = vld [vmem:[#allocation8 + $0x2f0] sm:$0xff]
    %v818 = vld [vmem:[#allocation8 + $0x2f8] sm:$0xff]
    %v819 = vld [vmem:[#allocation8 + $0x300] sm:$0xff]
    %v820 = vld [vmem:[#allocation8 + $0x308] sm:$0xff]
    %v821 = vld [vmem:[#allocation8 + $0x310] sm:$0xff]
    %v822 = vld [vmem:[#allocation8 + $0x318] sm:$0xff]
    %v823 = vld [vmem:[#allocation8 + $0x320] sm:$0xff]
    %v824 = vld [vmem:[#allocation8 + $0x328] sm:$0xff]
    %v825 = vld [vmem:[#allocation8 + $0x330] sm:$0xff]
    %v826 = vld [vmem:[#allocation8 + $0x338] sm:$0xff]
    %v827 = vld [vmem:[#allocation8 + $0x340] sm:$0xff]
    %v828 = vld [vmem:[#allocation8 + $0x348] sm:$0xff]
    %v829 = vld [vmem:[#allocation8 + $0x350] sm:$0xff]
    %v830 = vld [vmem:[#allocation8 + $0x358] sm:$0xff]
    %v831 = vld [vmem:[#allocation8 + $0x360] sm:$0xff]
    %v832 = vld [vmem:[#allocation8 + $0x368] sm:$0xff]
    %v833 = vld [vmem:[#allocation8 + $0x370] sm:$0xff]
    %v834 = vld [vmem:[#allocation8 + $0x378] sm:$0xff]
    %v835 = vld [vmem:[#allocation8 + $0x380] sm:$0xff]
    %v836 = vld [vmem:[#allocation8 + $0x388] sm:$0xff]
    %v837 = vld [vmem:[#allocation8 + $0x390] sm:$0xff]
    %v838 = vld [vmem:[#allocation8 + $0x398] sm:$0xff]
    %v839 = vld [vmem:[#allocation8 + $0x3a0] sm:$0xff]
    %v840 = vld [vmem:[#allocation8 + $0x3a8] sm:$0xff]
    %v841 = vld [vmem:[#allocation8 + $0x3b0] sm:$0xff]
    %v842 = vld [vmem:[#allocation8 + $0x3b8] sm:$0xff]
    %v843 = vld [vmem:[#allocation8 + $0x3c0] sm:$0xff]
    %v844 = vld [vmem:[#allocation8 + $0x3c8] sm:$0xff]
    %v845 = vld [vmem:[#allocation8 + $0x3d0] sm:$0xff]
    %v846 = vld [vmem:[#allocation8 + $0x3d8] sm:$0xff]
    %v847 = vld [vmem:[#allocation8 + $0x3e0] sm:$0xff]
    %v848 = vld [vmem:[#allocation8 + $0x3e8] sm:$0xff]
    %v849 = vld [vmem:[#allocation8 + $0x3f0] sm:$0xff]
    %v850 = vld [vmem:[#allocation8 + $0x3f8] sm:$0xff]
    %v851 = vld [vmem:[%s9] sm:$0xff]
    %v853 = vperm.slane %v851, 0
    %v854 = vperm.slane %v851, 1
    %v855 = vperm.slane %v851, 2
    %v856 = vperm.slane %v851, 3
    %v857 = vperm.slane %v851, 4
    %v858 = vperm.slane %v851, 5
    %v859 = vperm.slane %v851, 6
    %v860 = vperm.slane %v851, 7
    %v997 = vunpack.c.l.b16 %v723
    %v998 = vunpack.c.h.b16 %v723
    %v999 = vunpack.c.l.b16 %v724
    %v1000 = vunpack.c.h.b16 %v724
    %v1001 = vunpack.c.l.b16 %v725
    %v1002 = vunpack.c.h.b16 %v725
    %v1003 = vunpack.c.l.b16 %v726
    %v1004 = vunpack.c.h.b16 %v726
    %v1005 = vunpack.c.l.b16 %v727
    %v1006 = vunpack.c.h.b16 %v727
    %v1007 = vunpack.c.l.b16 %v728
    %v1008 = vunpack.c.h.b16 %v728
    %v1009 = vunpack.c.l.b16 %v729
    %v1010 = vunpack.c.h.b16 %v729
    %v1011 = vunpack.c.l.b16 %v730
    %v1012 = vunpack.c.h.b16 %v730
    %v1013 = vunpack.c.l.b16 %v731
    %v1014 = vunpack.c.h.b16 %v731
    %v1015 = vunpack.c.l.b16 %v732
    %v1016 = vunpack.c.h.b16 %v732
    %v1017 = vunpack.c.l.b16 %v733
    %v1018 = vunpack.c.h.b16 %v733
    %v1019 = vunpack.c.l.b16 %v734
    %v1020 = vunpack.c.h.b16 %v734
    %v1021 = vunpack.c.l.b16 %v735
    %v1022 = vunpack.c.h.b16 %v735
    %v1023 = vunpack.c.l.b16 %v736
    %v1024 = vunpack.c.h.b16 %v736
    %v1025 = vunpack.c.l.b16 %v737
    %v1026 = vunpack.c.h.b16 %v737
    %v1027 = vunpack.c.l.b16 %v738
    %v1028 = vunpack.c.h.b16 %v738
    %v1029 = vunpack.c.l.b16 %v739
    %v1030 = vunpack.c.h.b16 %v739
    %v1031 = vunpack.c.l.b16 %v740
    %v1032 = vunpack.c.h.b16 %v740
    %v1033 = vunpack.c.l.b16 %v741
    %v1034 = vunpack.c.h.b16 %v741
    %v1035 = vunpack.c.l.b16 %v742
    %v1036 = vunpack.c.h.b16 %v742
    %v1037 = vunpack.c.l.b16 %v743
    %v1038 = vunpack.c.h.b16 %v743
    %v1039 = vunpack.c.l.b16 %v744
    %v1040 = vunpack.c.h.b16 %v744
    %v1041 = vunpack.c.l.b16 %v745
    %v1042 = vunpack.c.h.b16 %v745
    %v1043 = vunpack.c.l.b16 %v746
    %v1044 = vunpack.c.h.b16 %v746
    %v1045 = vunpack.c.l.b16 %v747
    %v1046 = vunpack.c.h.b16 %v747
    %v1047 = vunpack.c.l.b16 %v748
    %v1048 = vunpack.c.h.b16 %v748
    %v1049 = vunpack.c.l.b16 %v749
    %v1050 = vunpack.c.h.b16 %v749
    %v1051 = vunpack.c.l.b16 %v750
    %v1052 = vunpack.c.h.b16 %v750
    %v1053 = vunpack.c.l.b16 %v751
    %v1054 = vunpack.c.h.b16 %v751
    %v1055 = vunpack.c.l.b16 %v752
    %v1056 = vunpack.c.h.b16 %v752
    %v1057 = vunpack.c.l.b16 %v753
    %v1058 = vunpack.c.h.b16 %v753
    %v1059 = vunpack.c.l.b16 %v754
    %v1060 = vunpack.c.h.b16 %v754
    %v1061 = vunpack.c.l.b16 %v755
    %v1062 = vunpack.c.h.b16 %v755
    %v1063 = vunpack.c.l.b16 %v756
    %v1064 = vunpack.c.h.b16 %v756
    %v1065 = vunpack.c.l.b16 %v757
    %v1066 = vunpack.c.h.b16 %v757
    %v1067 = vunpack.c.l.b16 %v758
    %v1068 = vunpack.c.h.b16 %v758
    %v1069 = vunpack.c.l.b16 %v759
    %v1070 = vunpack.c.h.b16 %v759
    %v1071 = vunpack.c.l.b16 %v760
    %v1072 = vunpack.c.h.b16 %v760
    %v1073 = vunpack.c.l.b16 %v761
    %v1074 = vunpack.c.h.b16 %v761
    %v1075 = vunpack.c.l.b16 %v762
    %v1076 = vunpack.c.h.b16 %v762
    %v1077 = vunpack.c.l.b16 %v763
    %v1078 = vunpack.c.h.b16 %v763
    %v1079 = vunpack.c.l.b16 %v764
    %v1080 = vunpack.c.h.b16 %v764
    %v1081 = vunpack.c.l.b16 %v765
    %v1082 = vunpack.c.h.b16 %v765
    %v1083 = vunpack.c.l.b16 %v766
    %v1084 = vunpack.c.h.b16 %v766
    %v1085 = vunpack.c.l.b16 %v767
    %v1086 = vunpack.c.h.b16 %v767
    %v1087 = vunpack.c.l.b16 %v768
    %v1088 = vunpack.c.h.b16 %v768
    %v1089 = vunpack.c.l.b16 %v769
    %v1090 = vunpack.c.h.b16 %v769
    %v1091 = vunpack.c.l.b16 %v770
    %v1092 = vunpack.c.h.b16 %v770
    %v1093 = vunpack.c.l.b16 %v771
    %v1094 = vunpack.c.h.b16 %v771
    %v1095 = vunpack.c.l.b16 %v772
    %v1096 = vunpack.c.h.b16 %v772
    %v1097 = vunpack.c.l.b16 %v773
    %v1098 = vunpack.c.h.b16 %v773
    %v1099 = vunpack.c.l.b16 %v774
    %v1100 = vunpack.c.h.b16 %v774
    %v1101 = vunpack.c.l.b16 %v775
    %v1102 = vunpack.c.h.b16 %v775
    %v1103 = vunpack.c.l.b16 %v776
    %v1104 = vunpack.c.h.b16 %v776
    %v1105 = vunpack.c.l.b16 %v777
    %v1106 = vunpack.c.h.b16 %v777
    %v1107 = vunpack.c.l.b16 %v778
    %v1108 = vunpack.c.h.b16 %v778
    %v1109 = vunpack.c.l.b16 %v779
    %v1110 = vunpack.c.h.b16 %v779
    %v1111 = vunpack.c.l.b16 %v780
    %v1112 = vunpack.c.h.b16 %v780
    %v1113 = vunpack.c.l.b16 %v781
    %v1114 = vunpack.c.h.b16 %v781
    %v1115 = vunpack.c.l.b16 %v782
    %v1116 = vunpack.c.h.b16 %v782
    %v1117 = vunpack.c.l.b16 %v783
    %v1118 = vunpack.c.h.b16 %v783
    %v1119 = vunpack.c.l.b16 %v784
    %v1120 = vunpack.c.h.b16 %v784
    %v1121 = vunpack.c.l.b16 %v785
    %v1122 = vunpack.c.h.b16 %v785
    %v1123 = vunpack.c.l.b16 %v786
    %v1124 = vunpack.c.h.b16 %v786
    %v1125 = vunpack.c.l.b16 %v787
    %v1126 = vunpack.c.h.b16 %v787
    %v1127 = vunpack.c.l.b16 %v788
    %v1128 = vunpack.c.h.b16 %v788
    %v1129 = vunpack.c.l.b16 %v789
    %v1130 = vunpack.c.h.b16 %v789
    %v1131 = vunpack.c.l.b16 %v790
    %v1132 = vunpack.c.h.b16 %v790
    %v1133 = vunpack.c.l.b16 %v791
    %v1134 = vunpack.c.h.b16 %v791
    %v1135 = vunpack.c.l.b16 %v792
    %v1136 = vunpack.c.h.b16 %v792
    %v1137 = vunpack.c.l.b16 %v793
    %v1138 = vunpack.c.h.b16 %v793
    %v1139 = vunpack.c.l.b16 %v794
    %v1140 = vunpack.c.h.b16 %v794
    %v1141 = vunpack.c.l.b16 %v795
    %v1142 = vunpack.c.h.b16 %v795
    %v1143 = vunpack.c.l.b16 %v796
    %v1144 = vunpack.c.h.b16 %v796
    %v1145 = vunpack.c.l.b16 %v797
    %v1146 = vunpack.c.h.b16 %v797
    %v1147 = vunpack.c.l.b16 %v798
    %v1148 = vunpack.c.h.b16 %v798
    %v1149 = vunpack.c.l.b16 %v799
    %v1150 = vunpack.c.h.b16 %v799
    %v1151 = vunpack.c.l.b16 %v800
    %v1152 = vunpack.c.h.b16 %v800
    %v1153 = vunpack.c.l.b16 %v801
    %v1154 = vunpack.c.h.b16 %v801
    %v1155 = vunpack.c.l.b16 %v802
    %v1156 = vunpack.c.h.b16 %v802
    %v1157 = vunpack.c.l.b16 %v803
    %v1158 = vunpack.c.h.b16 %v803
    %v1159 = vunpack.c.l.b16 %v804
    %v1160 = vunpack.c.h.b16 %v804
    %v1161 = vunpack.c.l.b16 %v805
    %v1162 = vunpack.c.h.b16 %v805
    %v1163 = vunpack.c.l.b16 %v806
    %v1164 = vunpack.c.h.b16 %v806
    %v1165 = vunpack.c.l.b16 %v807
    %v1166 = vunpack.c.h.b16 %v807
    %v1167 = vunpack.c.l.b16 %v808
    %v1168 = vunpack.c.h.b16 %v808
    %v1169 = vunpack.c.l.b16 %v809
    %v1170 = vunpack.c.h.b16 %v809
    %v1171 = vunpack.c.l.b16 %v810
    %v1172 = vunpack.c.h.b16 %v810
    %v1173 = vunpack.c.l.b16 %v811
    %v1174 = vunpack.c.h.b16 %v811
    %v1175 = vunpack.c.l.b16 %v812
    %v1176 = vunpack.c.h.b16 %v812
    %v1177 = vunpack.c.l.b16 %v813
    %v1178 = vunpack.c.h.b16 %v813
    %v1179 = vunpack.c.l.b16 %v814
    %v1180 = vunpack.c.h.b16 %v814
    %v1181 = vunpack.c.l.b16 %v815
    %v1182 = vunpack.c.h.b16 %v815
    %v1183 = vunpack.c.l.b16 %v816
    %v1184 = vunpack.c.h.b16 %v816
    %v1185 = vunpack.c.l.b16 %v817
    %v1186 = vunpack.c.h.b16 %v817
    %v1187 = vunpack.c.l.b16 %v818
    %v1188 = vunpack.c.h.b16 %v818
    %v1189 = vunpack.c.l.b16 %v819
    %v1190 = vunpack.c.h.b16 %v819
    %v1191 = vunpack.c.l.b16 %v820
    %v1192 = vunpack.c.h.b16 %v820
    %v1193 = vunpack.c.l.b16 %v821
    %v1194 = vunpack.c.h.b16 %v821
    %v1195 = vunpack.c.l.b16 %v822
    %v1196 = vunpack.c.h.b16 %v822
    %v1197 = vunpack.c.l.b16 %v823
    %v1198 = vunpack.c.h.b16 %v823
    %v1199 = vunpack.c.l.b16 %v824
    %v1200 = vunpack.c.h.b16 %v824
    %v1201 = vunpack.c.l.b16 %v825
    %v1202 = vunpack.c.h.b16 %v825
    %v1203 = vunpack.c.l.b16 %v826
    %v1204 = vunpack.c.h.b16 %v826
    %v1205 = vunpack.c.l.b16 %v827
    %v1206 = vunpack.c.h.b16 %v827
    %v1207 = vunpack.c.l.b16 %v828
    %v1208 = vunpack.c.h.b16 %v828
    %v1209 = vunpack.c.l.b16 %v829
    %v1210 = vunpack.c.h.b16 %v829
    %v1211 = vunpack.c.l.b16 %v830
    %v1212 = vunpack.c.h.b16 %v830
    %v1213 = vunpack.c.l.b16 %v831
    %v1214 = vunpack.c.h.b16 %v831
    %v1215 = vunpack.c.l.b16 %v832
    %v1216 = vunpack.c.h.b16 %v832
    %v1217 = vunpack.c.l.b16 %v833
    %v1218 = vunpack.c.h.b16 %v833
    %v1219 = vunpack.c.l.b16 %v834
    %v1220 = vunpack.c.h.b16 %v834
    %v1221 = vunpack.c.l.b16 %v835
    %v1222 = vunpack.c.h.b16 %v835
    %v1223 = vunpack.c.l.b16 %v836
    %v1224 = vunpack.c.h.b16 %v836
    %v1225 = vunpack.c.l.b16 %v837
    %v1226 = vunpack.c.h.b16 %v837
    %v1227 = vunpack.c.l.b16 %v838
    %v1228 = vunpack.c.h.b16 %v838
    %v1229 = vunpack.c.l.b16 %v839
    %v1230 = vunpack.c.h.b16 %v839
    %v1231 = vunpack.c.l.b16 %v840
    %v1232 = vunpack.c.h.b16 %v840
    %v1233 = vunpack.c.l.b16 %v841
    %v1234 = vunpack.c.h.b16 %v841
    %v1235 = vunpack.c.l.b16 %v842
    %v1236 = vunpack.c.h.b16 %v842
    %v1237 = vunpack.c.l.b16 %v843
    %v1238 = vunpack.c.h.b16 %v843
    %v1239 = vunpack.c.l.b16 %v844
    %v1240 = vunpack.c.h.b16 %v844
    %v1241 = vunpack.c.l.b16 %v845
    %v1242 = vunpack.c.h.b16 %v845
    %v1243 = vunpack.c.l.b16 %v846
    %v1244 = vunpack.c.h.b16 %v846
    %v1245 = vunpack.c.l.b16 %v847
    %v1246 = vunpack.c.h.b16 %v847
    %v1247 = vunpack.c.l.b16 %v848
    %v1248 = vunpack.c.h.b16 %v848
    %v1249 = vunpack.c.l.b16 %v849
    %v1250 = vunpack.c.h.b16 %v849
    %v1251 = vunpack.c.l.b16 %v850
    %v1252 = vunpack.c.h.b16 %v850
    %v1253 = vpack.c.b16 %v1005, %v997
    %v1254 = vpack.c.b16 %v1006, %v998
    %v1255 = vpack.c.b16 %v1007, %v999
    %v1256 = vpack.c.b16 %v1008, %v1000
    %v1257 = vpack.c.b16 %v1009, %v1001
    %v1258 = vpack.c.b16 %v1010, %v1002
    %v1259 = vpack.c.b16 %v1011, %v1003
    %v1260 = vpack.c.b16 %v1012, %v1004
    %v1261 = vpack.c.b16 %v1021, %v1013
    %v1262 = vpack.c.b16 %v1022, %v1014
    %v1263 = vpack.c.b16 %v1023, %v1015
    %v1264 = vpack.c.b16 %v1024, %v1016
    %v1265 = vpack.c.b16 %v1025, %v1017
    %v1266 = vpack.c.b16 %v1026, %v1018
    %v1267 = vpack.c.b16 %v1027, %v1019
    %v1268 = vpack.c.b16 %v1028, %v1020
    %v1269 = vpack.c.b16 %v1037, %v1029
    %v1270 = vpack.c.b16 %v1038, %v1030
    %v1271 = vpack.c.b16 %v1039, %v1031
    %v1272 = vpack.c.b16 %v1040, %v1032
    %v1273 = vpack.c.b16 %v1041, %v1033
    %v1274 = vpack.c.b16 %v1042, %v1034
    %v1275 = vpack.c.b16 %v1043, %v1035
    %v1276 = vpack.c.b16 %v1044, %v1036
    %v1277 = vpack.c.b16 %v1053, %v1045
    %v1278 = vpack.c.b16 %v1054, %v1046
    %v1279 = vpack.c.b16 %v1055, %v1047
    %v1280 = vpack.c.b16 %v1056, %v1048
    %v1281 = vpack.c.b16 %v1057, %v1049
    %v1282 = vpack.c.b16 %v1058, %v1050
    %v1283 = vpack.c.b16 %v1059, %v1051
    %v1284 = vpack.c.b16 %v1060, %v1052
    %v1285 = vpack.c.b16 %v1069, %v1061
    %v1286 = vpack.c.b16 %v1070, %v1062
    %v1287 = vpack.c.b16 %v1071, %v1063
    %v1288 = vpack.c.b16 %v1072, %v1064
    %v1289 = vpack.c.b16 %v1073, %v1065
    %v1290 = vpack.c.b16 %v1074, %v1066
    %v1291 = vpack.c.b16 %v1075, %v1067
    %v1292 = vpack.c.b16 %v1076, %v1068
    %v1293 = vpack.c.b16 %v1085, %v1077
    %v1294 = vpack.c.b16 %v1086, %v1078
    %v1295 = vpack.c.b16 %v1087, %v1079
    %v1296 = vpack.c.b16 %v1088, %v1080
    %v1297 = vpack.c.b16 %v1089, %v1081
    %v1298 = vpack.c.b16 %v1090, %v1082
    %v1299 = vpack.c.b16 %v1091, %v1083
    %v1300 = vpack.c.b16 %v1092, %v1084
    %v1301 = vpack.c.b16 %v1101, %v1093
    %v1302 = vpack.c.b16 %v1102, %v1094
    %v1303 = vpack.c.b16 %v1103, %v1095
    %v1304 = vpack.c.b16 %v1104, %v1096
    %v1305 = vpack.c.b16 %v1105, %v1097
    %v1306 = vpack.c.b16 %v1106, %v1098
    %v1307 = vpack.c.b16 %v1107, %v1099
    %v1308 = vpack.c.b16 %v1108, %v1100
    %v1309 = vpack.c.b16 %v1117, %v1109
    %v1310 = vpack.c.b16 %v1118, %v1110
    %v1311 = vpack.c.b16 %v1119, %v1111
    %v1312 = vpack.c.b16 %v1120, %v1112
    %v1313 = vpack.c.b16 %v1121, %v1113
    %v1314 = vpack.c.b16 %v1122, %v1114
    %v1315 = vpack.c.b16 %v1123, %v1115
    %v1316 = vpack.c.b16 %v1124, %v1116
    %v1317 = vpack.c.b16 %v1133, %v1125
    %v1318 = vpack.c.b16 %v1134, %v1126
    %v1319 = vpack.c.b16 %v1135, %v1127
    %v1320 = vpack.c.b16 %v1136, %v1128
    %v1321 = vpack.c.b16 %v1137, %v1129
    %v1322 = vpack.c.b16 %v1138, %v1130
    %v1323 = vpack.c.b16 %v1139, %v1131
    %v1324 = vpack.c.b16 %v1140, %v1132
    %v1325 = vpack.c.b16 %v1149, %v1141
    %v1326 = vpack.c.b16 %v1150, %v1142
    %v1327 = vpack.c.b16 %v1151, %v1143
    %v1328 = vpack.c.b16 %v1152, %v1144
    %v1329 = vpack.c.b16 %v1153, %v1145
    %v1330 = vpack.c.b16 %v1154, %v1146
    %v1331 = vpack.c.b16 %v1155, %v1147
    %v1332 = vpack.c.b16 %v1156, %v1148
    %v1333 = vpack.c.b16 %v1165, %v1157
    %v1334 = vpack.c.b16 %v1166, %v1158
    %v1335 = vpack.c.b16 %v1167, %v1159
    %v1336 = vpack.c.b16 %v1168, %v1160
    %v1337 = vpack.c.b16 %v1169, %v1161
    %v1338 = vpack.c.b16 %v1170, %v1162
    %v1339 = vpack.c.b16 %v1171, %v1163
    %v1340 = vpack.c.b16 %v1172, %v1164
    %v1341 = vpack.c.b16 %v1181, %v1173
    %v1342 = vpack.c.b16 %v1182, %v1174
    %v1343 = vpack.c.b16 %v1183, %v1175
    %v1344 = vpack.c.b16 %v1184, %v1176
    %v1345 = vpack.c.b16 %v1185, %v1177
    %v1346 = vpack.c.b16 %v1186, %v1178
    %v1347 = vpack.c.b16 %v1187, %v1179
    %v1348 = vpack.c.b16 %v1188, %v1180
    %v1349 = vpack.c.b16 %v1197, %v1189
    %v1350 = vpack.c.b16 %v1198, %v1190
    %v1351 = vpack.c.b16 %v1199, %v1191
    %v1352 = vpack.c.b16 %v1200, %v1192
    %v1353 = vpack.c.b16 %v1201, %v1193
    %v1354 = vpack.c.b16 %v1202, %v1194
    %v1355 = vpack.c.b16 %v1203, %v1195
    %v1356 = vpack.c.b16 %v1204, %v1196
    %v1357 = vpack.c.b16 %v1213, %v1205
    %v1358 = vpack.c.b16 %v1214, %v1206
    %v1359 = vpack.c.b16 %v1215, %v1207
    %v1360 = vpack.c.b16 %v1216, %v1208
    %v1361 = vpack.c.b16 %v1217, %v1209
    %v1362 = vpack.c.b16 %v1218, %v1210
    %v1363 = vpack.c.b16 %v1219, %v1211
    %v1364 = vpack.c.b16 %v1220, %v1212
    %v1365 = vpack.c.b16 %v1229, %v1221
    %v1366 = vpack.c.b16 %v1230, %v1222
    %v1367 = vpack.c.b16 %v1231, %v1223
    %v1368 = vpack.c.b16 %v1232, %v1224
    %v1369 = vpack.c.b16 %v1233, %v1225
    %v1370 = vpack.c.b16 %v1234, %v1226
    %v1371 = vpack.c.b16 %v1235, %v1227
    %v1372 = vpack.c.b16 %v1236, %v1228
    %v1373 = vpack.c.b16 %v1245, %v1237
    %v1374 = vpack.c.b16 %v1246, %v1238
    %v1375 = vpack.c.b16 %v1247, %v1239
    %v1376 = vpack.c.b16 %v1248, %v1240
    %v1377 = vpack.c.b16 %v1249, %v1241
    %v1378 = vpack.c.b16 %v1250, %v1242
    %v1379 = vpack.c.b16 %v1251, %v1243
    %v1380 = vpack.c.b16 %v1252, %v1244
    %1509 = vmatpush.bf16.msra.mxu0 %v1309
    %1510 = vmatpush.bf16.msra.mxu0 %v1301
    %1511 = vmatpush.bf16.msra.mxu0 %v1293
    %1512 = vmatpush.bf16.msra.mxu0 %v1285
    %1513 = vmatpush.bf16.msra.mxu0 %v1277
    %1514 = vmatpush.bf16.msra.mxu0 %v1269
    %1515 = vmatpush.bf16.msra.mxu0 %v1261
    %1516 = vmatpush.bf16.msra.mxu0 %v1253
    %1517 = vmatmul.bf16.gmra.mxu0 %v721
    %v1518 = vpop.f32.mrf.mxu0
    %v1519 = vadd.f32 %v853, %v1518
    %v1520 = vpop.f32.mrf.mxu0
    %v1521 = vadd.f32 %v853, %v1520
    %1522 = vdwg.mxu0
    %1523 = vmatpush.bf16.msra.mxu0 %v1373
    %1524 = vmatpush.bf16.msra.mxu0 %v1365
    %1525 = vmatpush.bf16.msra.mxu0 %v1357
    %1526 = vmatpush.bf16.msra.mxu0 %v1349
    %1527 = vmatpush.bf16.msra.mxu0 %v1341
    %1528 = vmatpush.bf16.msra.mxu0 %v1333
    %1529 = vmatpush.bf16.msra.mxu0 %v1325
    %1530 = vmatpush.bf16.msra.mxu0 %v1317
    %1531 = vmatmul.bf16.gmra.mxu0 %v722
    %v1532 = vpop.f32.mrf.mxu0
    %v1533 = vadd.f32 %v1519, %v1532
    %v1534 = vpop.f32.mrf.mxu0
    %v1535 = vadd.f32 %v1521, %v1534
    %1536 = vdwg.mxu0
    %1537 = vmatpush.bf16.msra.mxu0 %v1310
    %1538 = vmatpush.bf16.msra.mxu0 %v1302
    %1539 = vmatpush.bf16.msra.mxu0 %v1294
    %1540 = vmatpush.bf16.msra.mxu0 %v1286
    %1541 = vmatpush.bf16.msra.mxu0 %v1278
    %1542 = vmatpush.bf16.msra.mxu0 %v1270
    %1543 = vmatpush.bf16.msra.mxu0 %v1262
    %1544 = vmatpush.bf16.msra.mxu0 %v1254
    %1545 = vmatmul.bf16.gmra.mxu0 %v721
    %v1546 = vpop.f32.mrf.mxu0
    %v1547 = vadd.f32 %v854, %v1546
    %v1548 = vpop.f32.mrf.mxu0
    %v1549 = vadd.f32 %v854, %v1548
    %1550 = vdwg.mxu0
    %1551 = vmatpush.bf16.msra.mxu0 %v1374
    %1552 = vmatpush.bf16.msra.mxu0 %v1366
    %1553 = vmatpush.bf16.msra.mxu0 %v1358
    %1554 = vmatpush.bf16.msra.mxu0 %v1350
    %1555 = vmatpush.bf16.msra.mxu0 %v1342
    %1556 = vmatpush.bf16.msra.mxu0 %v1334
    %1557 = vmatpush.bf16.msra.mxu0 %v1326
    %1558 = vmatpush.bf16.msra.mxu0 %v1318
    %1559 = vmatmul.bf16.gmra.mxu0 %v722
    %v1560 = vpop.f32.mrf.mxu0
    %v1561 = vadd.f32 %v1547, %v1560
    %v1562 = vpop.f32.mrf.mxu0
    %v1563 = vadd.f32 %v1549, %v1562
    %1564 = vdwg.mxu0
    %1565 = vmatpush.bf16.msra.mxu0 %v1311
    %1566 = vmatpush.bf16.msra.mxu0 %v1303
    %1567 = vmatpush.bf16.msra.mxu0 %v1295
    %1568 = vmatpush.bf16.msra.mxu0 %v1287
    %1569 = vmatpush.bf16.msra.mxu0 %v1279
    %1570 = vmatpush.bf16.msra.mxu0 %v1271
    %1571 = vmatpush.bf16.msra.mxu0 %v1263
    %1572 = vmatpush.bf16.msra.mxu0 %v1255
    %1573 = vmatmul.bf16.gmra.mxu0 %v721
    %v1574 = vpop.f32.mrf.mxu0
    %v1575 = vadd.f32 %v855, %v1574
    %v1576 = vpop.f32.mrf.mxu0
    %v1577 = vadd.f32 %v855, %v1576
    %1578 = vdwg.mxu0
    %1579 = vmatpush.bf16.msra.mxu0 %v1375
    %1580 = vmatpush.bf16.msra.mxu0 %v1367
    %1581 = vmatpush.bf16.msra.mxu0 %v1359
    %1582 = vmatpush.bf16.msra.mxu0 %v1351
    %1583 = vmatpush.bf16.msra.mxu0 %v1343
    %1584 = vmatpush.bf16.msra.mxu0 %v1335
    %1585 = vmatpush.bf16.msra.mxu0 %v1327
    %1586 = vmatpush.bf16.msra.mxu0 %v1319
    %1587 = vmatmul.bf16.gmra.mxu0 %v722
    %v1588 = vpop.f32.mrf.mxu0
    %v1589 = vadd.f32 %v1575, %v1588
    %v1590 = vpop.f32.mrf.mxu0
    %v1591 = vadd.f32 %v1577, %v1590
    %1592 = vdwg.mxu0
    %1593 = vmatpush.bf16.msra.mxu0 %v1312
    %1594 = vmatpush.bf16.msra.mxu0 %v1304
    %1595 = vmatpush.bf16.msra.mxu0 %v1296
    %1596 = vmatpush.bf16.msra.mxu0 %v1288
    %1597 = vmatpush.bf16.msra.mxu0 %v1280
    %1598 = vmatpush.bf16.msra.mxu0 %v1272
    %1599 = vmatpush.bf16.msra.mxu0 %v1264
    %1600 = vmatpush.bf16.msra.mxu0 %v1256
    %1601 = vmatmul.bf16.gmra.mxu0 %v721
    %v1602 = vpop.f32.mrf.mxu0
    %v1603 = vadd.f32 %v856, %v1602
    %v1604 = vpop.f32.mrf.mxu0
    %v1605 = vadd.f32 %v856, %v1604
    %1606 = vdwg.mxu0
    %1607 = vmatpush.bf16.msra.mxu0 %v1376
    %1608 = vmatpush.bf16.msra.mxu0 %v1368
    %1609 = vmatpush.bf16.msra.mxu0 %v1360
    %1610 = vmatpush.bf16.msra.mxu0 %v1352
    %1611 = vmatpush.bf16.msra.mxu0 %v1344
    %1612 = vmatpush.bf16.msra.mxu0 %v1336
    %1613 = vmatpush.bf16.msra.mxu0 %v1328
    %1614 = vmatpush.bf16.msra.mxu0 %v1320
    %1615 = vmatmul.bf16.gmra.mxu0 %v722
    %v1616 = vpop.f32.mrf.mxu0
    %v1617 = vadd.f32 %v1603, %v1616
    %v1618 = vpop.f32.mrf.mxu0
    %v1619 = vadd.f32 %v1605, %v1618
    %1620 = vdwg.mxu0
    %1621 = vmatpush.bf16.msra.mxu0 %v1313
    %1622 = vmatpush.bf16.msra.mxu0 %v1305
    %1623 = vmatpush.bf16.msra.mxu0 %v1297
    %1624 = vmatpush.bf16.msra.mxu0 %v1289
    %1625 = vmatpush.bf16.msra.mxu0 %v1281
    %1626 = vmatpush.bf16.msra.mxu0 %v1273
    %1627 = vmatpush.bf16.msra.mxu0 %v1265
    %1628 = vmatpush.bf16.msra.mxu0 %v1257
    %1629 = vmatmul.bf16.gmra.mxu0 %v721
    %v1630 = vpop.f32.mrf.mxu0
    %v1631 = vadd.f32 %v857, %v1630
    %v1632 = vpop.f32.mrf.mxu0
    %v1633 = vadd.f32 %v857, %v1632
    %1634 = vdwg.mxu0
    %1635 = vmatpush.bf16.msra.mxu0 %v1377
    %1636 = vmatpush.bf16.msra.mxu0 %v1369
    %1637 = vmatpush.bf16.msra.mxu0 %v1361
    %1638 = vmatpush.bf16.msra.mxu0 %v1353
    %1639 = vmatpush.bf16.msra.mxu0 %v1345
    %1640 = vmatpush.bf16.msra.mxu0 %v1337
    %1641 = vmatpush.bf16.msra.mxu0 %v1329
    %1642 = vmatpush.bf16.msra.mxu0 %v1321
    %1643 = vmatmul.bf16.gmra.mxu0 %v722
    %v1644 = vpop.f32.mrf.mxu0
    %v1645 = vadd.f32 %v1631, %v1644
    %v1646 = vpop.f32.mrf.mxu0
    %v1647 = vadd.f32 %v1633, %v1646
    %1648 = vdwg.mxu0
    %1649 = vmatpush.bf16.msra.mxu0 %v1314
    %1650 = vmatpush.bf16.msra.mxu0 %v1306
    %1651 = vmatpush.bf16.msra.mxu0 %v1298
    %1652 = vmatpush.bf16.msra.mxu0 %v1290
    %1653 = vmatpush.bf16.msra.mxu0 %v1282
    %1654 = vmatpush.bf16.msra.mxu0 %v1274
    %1655 = vmatpush.bf16.msra.mxu0 %v1266
    %1656 = vmatpush.bf16.msra.mxu0 %v1258
    %1657 = vmatmul.bf16.gmra.mxu0 %v721
    %v1658 = vpop.f32.mrf.mxu0
    %v1659 = vadd.f32 %v858, %v1658
    %v1660 = vpop.f32.mrf.mxu0
    %v1661 = vadd.f32 %v858, %v1660
    %1662 = vdwg.mxu0
    %1663 = vmatpush.bf16.msra.mxu0 %v1378
    %1664 = vmatpush.bf16.msra.mxu0 %v1370
    %1665 = vmatpush.bf16.msra.mxu0 %v1362
    %1666 = vmatpush.bf16.msra.mxu0 %v1354
    %1667 = vmatpush.bf16.msra.mxu0 %v1346
    %1668 = vmatpush.bf16.msra.mxu0 %v1338
    %1669 = vmatpush.bf16.msra.mxu0 %v1330
    %1670 = vmatpush.bf16.msra.mxu0 %v1322
    %1671 = vmatmul.bf16.gmra.mxu0 %v722
    %v1672 = vpop.f32.mrf.mxu0
    %v1673 = vadd.f32 %v1659, %v1672
    %v1674 = vpop.f32.mrf.mxu0
    %v1675 = vadd.f32 %v1661, %v1674
    %1676 = vdwg.mxu0
    %1677 = vmatpush.bf16.msra.mxu0 %v1315
    %1678 = vmatpush.bf16.msra.mxu0 %v1307
    %1679 = vmatpush.bf16.msra.mxu0 %v1299
    %1680 = vmatpush.bf16.msra.mxu0 %v1291
    %1681 = vmatpush.bf16.msra.mxu0 %v1283
    %1682 = vmatpush.bf16.msra.mxu0 %v1275
    %1683 = vmatpush.bf16.msra.mxu0 %v1267
    %1684 = vmatpush.bf16.msra.mxu0 %v1259
    %1685 = vmatmul.bf16.gmra.mxu0 %v721
    %v1686 = vpop.f32.mrf.mxu0
    %v1687 = vadd.f32 %v859, %v1686
    %v1688 = vpop.f32.mrf.mxu0
    %v1689 = vadd.f32 %v859, %v1688
    %1690 = vdwg.mxu0
    %1691 = vmatpush.bf16.msra.mxu0 %v1379
    %1692 = vmatpush.bf16.msra.mxu0 %v1371
    %1693 = vmatpush.bf16.msra.mxu0 %v1363
    %1694 = vmatpush.bf16.msra.mxu0 %v1355
    %1695 = vmatpush.bf16.msra.mxu0 %v1347
    %1696 = vmatpush.bf16.msra.mxu0 %v1339
    %1697 = vmatpush.bf16.msra.mxu0 %v1331
    %1698 = vmatpush.bf16.msra.mxu0 %v1323
    %1699 = vmatmul.bf16.gmra.mxu0 %v722
    %v1700 = vpop.f32.mrf.mxu0
    %v1701 = vadd.f32 %v1687, %v1700
    %v1702 = vpop.f32.mrf.mxu0
    %v1703 = vadd.f32 %v1689, %v1702
    %1704 = vdwg.mxu0
    %1705 = vmatpush.bf16.msra.mxu0 %v1316
    %1706 = vmatpush.bf16.msra.mxu0 %v1308
    %1707 = vmatpush.bf16.msra.mxu0 %v1300
    %1708 = vmatpush.bf16.msra.mxu0 %v1292
    %1709 = vmatpush.bf16.msra.mxu0 %v1284
    %1710 = vmatpush.bf16.msra.mxu0 %v1276
    %1711 = vmatpush.bf16.msra.mxu0 %v1268
    %1712 = vmatpush.bf16.msra.mxu0 %v1260
    %1713 = vmatmul.bf16.gmra.mxu0 %v721
    %v1714 = vpop.f32.mrf.mxu0
    %v1715 = vadd.f32 %v860, %v1714
    %v1716 = vpop.f32.mrf.mxu0
    %v1717 = vadd.f32 %v860, %v1716
    %1718 = vdwg.mxu0
    %1719 = vmatpush.bf16.msra.mxu0 %v1380
    %1720 = vmatpush.bf16.msra.mxu0 %v1372
    %1721 = vmatpush.bf16.msra.mxu0 %v1364
    %1722 = vmatpush.bf16.msra.mxu0 %v1356
    %1723 = vmatpush.bf16.msra.mxu0 %v1348
    %1724 = vmatpush.bf16.msra.mxu0 %v1340
    %1725 = vmatpush.bf16.msra.mxu0 %v1332
    %1726 = vmatpush.bf16.msra.mxu0 %v1324
    %1727 = vmatmul.bf16.gmra.mxu0 %v722
    %v1728 = vpop.f32.mrf.mxu0
    %v1729 = vadd.f32 %v1715, %v1728
    %v1730 = vpop.f32.mrf.mxu0
    %v1731 = vadd.f32 %v1717, %v1730
    %1732 = vdwg.mxu0
    %v1733 = vld [vmem:[#allocation9] sm:$0xff]
    %v1734 = vld [vmem:[#allocation9 + $0x8] sm:$0xff]
    %v1735 = vld [vmem:[#allocation9 + $0x10] sm:$0xff]
    %v1736 = vld [vmem:[#allocation9 + $0x18] sm:$0xff]
    %v1737 = vld [vmem:[#allocation9 + $0x20] sm:$0xff]
    %v1738 = vld [vmem:[#allocation9 + $0x28] sm:$0xff]
    %v1739 = vld [vmem:[#allocation9 + $0x30] sm:$0xff]
    %v1740 = vld [vmem:[#allocation9 + $0x38] sm:$0xff]
    %v1741 = vld [vmem:[#allocation9 + $0x40] sm:$0xff]
    %v1742 = vld [vmem:[#allocation9 + $0x48] sm:$0xff]
    %v1743 = vld [vmem:[#allocation9 + $0x50] sm:$0xff]
    %v1744 = vld [vmem:[#allocation9 + $0x58] sm:$0xff]
    %v1745 = vld [vmem:[#allocation9 + $0x60] sm:$0xff]
    %v1746 = vld [vmem:[#allocation9 + $0x68] sm:$0xff]
    %v1747 = vld [vmem:[#allocation9 + $0x70] sm:$0xff]
    %v1748 = vld [vmem:[#allocation9 + $0x78] sm:$0xff]
    %v1749 = vld [vmem:[#allocation9 + $0x80] sm:$0xff]
    %v1750 = vld [vmem:[#allocation9 + $0x88] sm:$0xff]
    %v1751 = vld [vmem:[#allocation9 + $0x90] sm:$0xff]
    %v1752 = vld [vmem:[#allocation9 + $0x98] sm:$0xff]
    %v1753 = vld [vmem:[#allocation9 + $0xa0] sm:$0xff]
    %v1754 = vld [vmem:[#allocation9 + $0xa8] sm:$0xff]
    %v1755 = vld [vmem:[#allocation9 + $0xb0] sm:$0xff]
    %v1756 = vld [vmem:[#allocation9 + $0xb8] sm:$0xff]
    %v1757 = vld [vmem:[#allocation9 + $0xc0] sm:$0xff]
    %v1758 = vld [vmem:[#allocation9 + $0xc8] sm:$0xff]
    %v1759 = vld [vmem:[#allocation9 + $0xd0] sm:$0xff]
    %v1760 = vld [vmem:[#allocation9 + $0xd8] sm:$0xff]
    %v1761 = vld [vmem:[#allocation9 + $0xe0] sm:$0xff]
    %v1762 = vld [vmem:[#allocation9 + $0xe8] sm:$0xff]
    %v1763 = vld [vmem:[#allocation9 + $0xf0] sm:$0xff]
    %v1764 = vld [vmem:[#allocation9 + $0xf8] sm:$0xff]
    %v1765 = vld [vmem:[#allocation9 + $0x100] sm:$0xff]
    %v1766 = vld [vmem:[#allocation9 + $0x108] sm:$0xff]
    %v1767 = vld [vmem:[#allocation9 + $0x110] sm:$0xff]
    %v1768 = vld [vmem:[#allocation9 + $0x118] sm:$0xff]
    %v1769 = vld [vmem:[#allocation9 + $0x120] sm:$0xff]
    %v1770 = vld [vmem:[#allocation9 + $0x128] sm:$0xff]
    %v1771 = vld [vmem:[#allocation9 + $0x130] sm:$0xff]
    %v1772 = vld [vmem:[#allocation9 + $0x138] sm:$0xff]
    %v1773 = vld [vmem:[#allocation9 + $0x140] sm:$0xff]
    %v1774 = vld [vmem:[#allocation9 + $0x148] sm:$0xff]
    %v1775 = vld [vmem:[#allocation9 + $0x150] sm:$0xff]
    %v1776 = vld [vmem:[#allocation9 + $0x158] sm:$0xff]
    %v1777 = vld [vmem:[#allocation9 + $0x160] sm:$0xff]
    %v1778 = vld [vmem:[#allocation9 + $0x168] sm:$0xff]
    %v1779 = vld [vmem:[#allocation9 + $0x170] sm:$0xff]
    %v1780 = vld [vmem:[#allocation9 + $0x178] sm:$0xff]
    %v1781 = vld [vmem:[#allocation9 + $0x180] sm:$0xff]
    %v1782 = vld [vmem:[#allocation9 + $0x188] sm:$0xff]
    %v1783 = vld [vmem:[#allocation9 + $0x190] sm:$0xff]
    %v1784 = vld [vmem:[#allocation9 + $0x198] sm:$0xff]
    %v1785 = vld [vmem:[#allocation9 + $0x1a0] sm:$0xff]
    %v1786 = vld [vmem:[#allocation9 + $0x1a8] sm:$0xff]
    %v1787 = vld [vmem:[#allocation9 + $0x1b0] sm:$0xff]
    %v1788 = vld [vmem:[#allocation9 + $0x1b8] sm:$0xff]
    %v1789 = vld [vmem:[#allocation9 + $0x1c0] sm:$0xff]
    %v1790 = vld [vmem:[#allocation9 + $0x1c8] sm:$0xff]
    %v1791 = vld [vmem:[#allocation9 + $0x1d0] sm:$0xff]
    %v1792 = vld [vmem:[#allocation9 + $0x1d8] sm:$0xff]
    %v1793 = vld [vmem:[#allocation9 + $0x1e0] sm:$0xff]
    %v1794 = vld [vmem:[#allocation9 + $0x1e8] sm:$0xff]
    %v1795 = vld [vmem:[#allocation9 + $0x1f0] sm:$0xff]
    %v1796 = vld [vmem:[#allocation9 + $0x1f8] sm:$0xff]
    %v1797 = vld [vmem:[#allocation9 + $0x200] sm:$0xff]
    %v1798 = vld [vmem:[#allocation9 + $0x208] sm:$0xff]
    %v1799 = vld [vmem:[#allocation9 + $0x210] sm:$0xff]
    %v1800 = vld [vmem:[#allocation9 + $0x218] sm:$0xff]
    %v1801 = vld [vmem:[#allocation9 + $0x220] sm:$0xff]
    %v1802 = vld [vmem:[#allocation9 + $0x228] sm:$0xff]
    %v1803 = vld [vmem:[#allocation9 + $0x230] sm:$0xff]
    %v1804 = vld [vmem:[#allocation9 + $0x238] sm:$0xff]
    %v1805 = vld [vmem:[#allocation9 + $0x240] sm:$0xff]
    %v1806 = vld [vmem:[#allocation9 + $0x248] sm:$0xff]
    %v1807 = vld [vmem:[#allocation9 + $0x250] sm:$0xff]
    %v1808 = vld [vmem:[#allocation9 + $0x258] sm:$0xff]
    %v1809 = vld [vmem:[#allocation9 + $0x260] sm:$0xff]
    %v1810 = vld [vmem:[#allocation9 + $0x268] sm:$0xff]
    %v1811 = vld [vmem:[#allocation9 + $0x270] sm:$0xff]
    %v1812 = vld [vmem:[#allocation9 + $0x278] sm:$0xff]
    %v1813 = vld [vmem:[#allocation9 + $0x280] sm:$0xff]
    %v1814 = vld [vmem:[#allocation9 + $0x288] sm:$0xff]
    %v1815 = vld [vmem:[#allocation9 + $0x290] sm:$0xff]
    %v1816 = vld [vmem:[#allocation9 + $0x298] sm:$0xff]
    %v1817 = vld [vmem:[#allocation9 + $0x2a0] sm:$0xff]
    %v1818 = vld [vmem:[#allocation9 + $0x2a8] sm:$0xff]
    %v1819 = vld [vmem:[#allocation9 + $0x2b0] sm:$0xff]
    %v1820 = vld [vmem:[#allocation9 + $0x2b8] sm:$0xff]
    %v1821 = vld [vmem:[#allocation9 + $0x2c0] sm:$0xff]
    %v1822 = vld [vmem:[#allocation9 + $0x2c8] sm:$0xff]
    %v1823 = vld [vmem:[#allocation9 + $0x2d0] sm:$0xff]
    %v1824 = vld [vmem:[#allocation9 + $0x2d8] sm:$0xff]
    %v1825 = vld [vmem:[#allocation9 + $0x2e0] sm:$0xff]
    %v1826 = vld [vmem:[#allocation9 + $0x2e8] sm:$0xff]
    %v1827 = vld [vmem:[#allocation9 + $0x2f0] sm:$0xff]
    %v1828 = vld [vmem:[#allocation9 + $0x2f8] sm:$0xff]
    %v1829 = vld [vmem:[#allocation9 + $0x300] sm:$0xff]
    %v1830 = vld [vmem:[#allocation9 + $0x308] sm:$0xff]
    %v1831 = vld [vmem:[#allocation9 + $0x310] sm:$0xff]
    %v1832 = vld [vmem:[#allocation9 + $0x318] sm:$0xff]
    %v1833 = vld [vmem:[#allocation9 + $0x320] sm:$0xff]
    %v1834 = vld [vmem:[#allocation9 + $0x328] sm:$0xff]
    %v1835 = vld [vmem:[#allocation9 + $0x330] sm:$0xff]
    %v1836 = vld [vmem:[#allocation9 + $0x338] sm:$0xff]
    %v1837 = vld [vmem:[#allocation9 + $0x340] sm:$0xff]
    %v1838 = vld [vmem:[#allocation9 + $0x348] sm:$0xff]
    %v1839 = vld [vmem:[#allocation9 + $0x350] sm:$0xff]
    %v1840 = vld [vmem:[#allocation9 + $0x358] sm:$0xff]
    %v1841 = vld [vmem:[#allocation9 + $0x360] sm:$0xff]
    %v1842 = vld [vmem:[#allocation9 + $0x368] sm:$0xff]
    %v1843 = vld [vmem:[#allocation9 + $0x370] sm:$0xff]
    %v1844 = vld [vmem:[#allocation9 + $0x378] sm:$0xff]
    %v1845 = vld [vmem:[#allocation9 + $0x380] sm:$0xff]
    %v1846 = vld [vmem:[#allocation9 + $0x388] sm:$0xff]
    %v1847 = vld [vmem:[#allocation9 + $0x390] sm:$0xff]
    %v1848 = vld [vmem:[#allocation9 + $0x398] sm:$0xff]
    %v1849 = vld [vmem:[#allocation9 + $0x3a0] sm:$0xff]
    %v1850 = vld [vmem:[#allocation9 + $0x3a8] sm:$0xff]
    %v1851 = vld [vmem:[#allocation9 + $0x3b0] sm:$0xff]
    %v1852 = vld [vmem:[#allocation9 + $0x3b8] sm:$0xff]
    %v1853 = vld [vmem:[#allocation9 + $0x3c0] sm:$0xff]
    %v1854 = vld [vmem:[#allocation9 + $0x3c8] sm:$0xff]
    %v1855 = vld [vmem:[#allocation9 + $0x3d0] sm:$0xff]
    %v1856 = vld [vmem:[#allocation9 + $0x3d8] sm:$0xff]
    %v1857 = vld [vmem:[#allocation9 + $0x3e0] sm:$0xff]
    %v1858 = vld [vmem:[#allocation9 + $0x3e8] sm:$0xff]
    %v1859 = vld [vmem:[#allocation9 + $0x3f0] sm:$0xff]
    %v1860 = vld [vmem:[#allocation9 + $0x3f8] sm:$0xff]
    %v1861 = vld [vmem:[#allocation12] sm:$0xff]
    %v1862 = vld [vmem:[#allocation12 + $0x8] sm:$0xff]
    %v1863 = vld [vmem:[#allocation12 + $0x10] sm:$0xff]
    %v1864 = vld [vmem:[#allocation12 + $0x18] sm:$0xff]
    %v1865 = vld [vmem:[#allocation12 + $0x20] sm:$0xff]
    %v1866 = vld [vmem:[#allocation12 + $0x28] sm:$0xff]
    %v1867 = vld [vmem:[#allocation12 + $0x30] sm:$0xff]
    %v1868 = vld [vmem:[#allocation12 + $0x38] sm:$0xff]
    %v1869 = vld [vmem:[#allocation12 + $0x40] sm:$0xff]
    %v1870 = vld [vmem:[#allocation12 + $0x48] sm:$0xff]
    %v1871 = vld [vmem:[#allocation12 + $0x50] sm:$0xff]
    %v1872 = vld [vmem:[#allocation12 + $0x58] sm:$0xff]
    %v1873 = vld [vmem:[#allocation12 + $0x60] sm:$0xff]
    %v1874 = vld [vmem:[#allocation12 + $0x68] sm:$0xff]
    %v1875 = vld [vmem:[#allocation12 + $0x70] sm:$0xff]
    %v1876 = vld [vmem:[#allocation12 + $0x78] sm:$0xff]
    %v1877 = vld [vmem:[#allocation12 + $0x80] sm:$0xff]
    %v1878 = vld [vmem:[#allocation12 + $0x88] sm:$0xff]
    %v1879 = vld [vmem:[#allocation12 + $0x90] sm:$0xff]
    %v1880 = vld [vmem:[#allocation12 + $0x98] sm:$0xff]
    %v1881 = vld [vmem:[#allocation12 + $0xa0] sm:$0xff]
    %v1882 = vld [vmem:[#allocation12 + $0xa8] sm:$0xff]
    %v1883 = vld [vmem:[#allocation12 + $0xb0] sm:$0xff]
    %v1884 = vld [vmem:[#allocation12 + $0xb8] sm:$0xff]
    %v1885 = vld [vmem:[#allocation12 + $0xc0] sm:$0xff]
    %v1886 = vld [vmem:[#allocation12 + $0xc8] sm:$0xff]
    %v1887 = vld [vmem:[#allocation12 + $0xd0] sm:$0xff]
    %v1888 = vld [vmem:[#allocation12 + $0xd8] sm:$0xff]
    %v1889 = vld [vmem:[#allocation12 + $0xe0] sm:$0xff]
    %v1890 = vld [vmem:[#allocation12 + $0xe8] sm:$0xff]
    %v1891 = vld [vmem:[#allocation12 + $0xf0] sm:$0xff]
    %v1892 = vld [vmem:[#allocation12 + $0xf8] sm:$0xff]
    %v1893 = vld [vmem:[#allocation12 + $0x100] sm:$0xff]
    %v1894 = vld [vmem:[#allocation12 + $0x108] sm:$0xff]
    %v1895 = vld [vmem:[#allocation12 + $0x110] sm:$0xff]
    %v1896 = vld [vmem:[#allocation12 + $0x118] sm:$0xff]
    %v1897 = vld [vmem:[#allocation12 + $0x120] sm:$0xff]
    %v1898 = vld [vmem:[#allocation12 + $0x128] sm:$0xff]
    %v1899 = vld [vmem:[#allocation12 + $0x130] sm:$0xff]
    %v1900 = vld [vmem:[#allocation12 + $0x138] sm:$0xff]
    %v1901 = vld [vmem:[#allocation12 + $0x140] sm:$0xff]
    %v1902 = vld [vmem:[#allocation12 + $0x148] sm:$0xff]
    %v1903 = vld [vmem:[#allocation12 + $0x150] sm:$0xff]
    %v1904 = vld [vmem:[#allocation12 + $0x158] sm:$0xff]
    %v1905 = vld [vmem:[#allocation12 + $0x160] sm:$0xff]
    %v1906 = vld [vmem:[#allocation12 + $0x168] sm:$0xff]
    %v1907 = vld [vmem:[#allocation12 + $0x170] sm:$0xff]
    %v1908 = vld [vmem:[#allocation12 + $0x178] sm:$0xff]
    %v1909 = vld [vmem:[#allocation12 + $0x180] sm:$0xff]
    %v1910 = vld [vmem:[#allocation12 + $0x188] sm:$0xff]
    %v1911 = vld [vmem:[#allocation12 + $0x190] sm:$0xff]
    %v1912 = vld [vmem:[#allocation12 + $0x198] sm:$0xff]
    %v1913 = vld [vmem:[#allocation12 + $0x1a0] sm:$0xff]
    %v1914 = vld [vmem:[#allocation12 + $0x1a8] sm:$0xff]
    %v1915 = vld [vmem:[#allocation12 + $0x1b0] sm:$0xff]
    %v1916 = vld [vmem:[#allocation12 + $0x1b8] sm:$0xff]
    %v1917 = vld [vmem:[#allocation12 + $0x1c0] sm:$0xff]
    %v1918 = vld [vmem:[#allocation12 + $0x1c8] sm:$0xff]
    %v1919 = vld [vmem:[#allocation12 + $0x1d0] sm:$0xff]
    %v1920 = vld [vmem:[#allocation12 + $0x1d8] sm:$0xff]
    %v1921 = vld [vmem:[#allocation12 + $0x1e0] sm:$0xff]
    %v1922 = vld [vmem:[#allocation12 + $0x1e8] sm:$0xff]
    %v1923 = vld [vmem:[#allocation12 + $0x1f0] sm:$0xff]
    %v1924 = vld [vmem:[#allocation12 + $0x1f8] sm:$0xff]
    %v1925 = vld [vmem:[#allocation12 + $0x200] sm:$0xff]
    %v1926 = vld [vmem:[#allocation12 + $0x208] sm:$0xff]
    %v1927 = vld [vmem:[#allocation12 + $0x210] sm:$0xff]
    %v1928 = vld [vmem:[#allocation12 + $0x218] sm:$0xff]
    %v1929 = vld [vmem:[#allocation12 + $0x220] sm:$0xff]
    %v1930 = vld [vmem:[#allocation12 + $0x228] sm:$0xff]
    %v1931 = vld [vmem:[#allocation12 + $0x230] sm:$0xff]
    %v1932 = vld [vmem:[#allocation12 + $0x238] sm:$0xff]
    %v1933 = vld [vmem:[#allocation12 + $0x240] sm:$0xff]
    %v1934 = vld [vmem:[#allocation12 + $0x248] sm:$0xff]
    %v1935 = vld [vmem:[#allocation12 + $0x250] sm:$0xff]
    %v1936 = vld [vmem:[#allocation12 + $0x258] sm:$0xff]
    %v1937 = vld [vmem:[#allocation12 + $0x260] sm:$0xff]
    %v1938 = vld [vmem:[#allocation12 + $0x268] sm:$0xff]
    %v1939 = vld [vmem:[#allocation12 + $0x270] sm:$0xff]
    %v1940 = vld [vmem:[#allocation12 + $0x278] sm:$0xff]
    %v1941 = vld [vmem:[#allocation12 + $0x280] sm:$0xff]
    %v1942 = vld [vmem:[#allocation12 + $0x288] sm:$0xff]
    %v1943 = vld [vmem:[#allocation12 + $0x290] sm:$0xff]
    %v1944 = vld [vmem:[#allocation12 + $0x298] sm:$0xff]
    %v1945 = vld [vmem:[#allocation12 + $0x2a0] sm:$0xff]
    %v1946 = vld [vmem:[#allocation12 + $0x2a8] sm:$0xff]
    %v1947 = vld [vmem:[#allocation12 + $0x2b0] sm:$0xff]
    %v1948 = vld [vmem:[#allocation12 + $0x2b8] sm:$0xff]
    %v1949 = vld [vmem:[#allocation12 + $0x2c0] sm:$0xff]
    %v1950 = vld [vmem:[#allocation12 + $0x2c8] sm:$0xff]
    %v1951 = vld [vmem:[#allocation12 + $0x2d0] sm:$0xff]
    %v1952 = vld [vmem:[#allocation12 + $0x2d8] sm:$0xff]
    %v1953 = vld [vmem:[#allocation12 + $0x2e0] sm:$0xff]
    %v1954 = vld [vmem:[#allocation12 + $0x2e8] sm:$0xff]
    %v1955 = vld [vmem:[#allocation12 + $0x2f0] sm:$0xff]
    %v1956 = vld [vmem:[#allocation12 + $0x2f8] sm:$0xff]
    %v1957 = vld [vmem:[#allocation12 + $0x300] sm:$0xff]
    %v1958 = vld [vmem:[#allocation12 + $0x308] sm:$0xff]
    %v1959 = vld [vmem:[#allocation12 + $0x310] sm:$0xff]
    %v1960 = vld [vmem:[#allocation12 + $0x318] sm:$0xff]
    %v1961 = vld [vmem:[#allocation12 + $0x320] sm:$0xff]
    %v1962 = vld [vmem:[#allocation12 + $0x328] sm:$0xff]
    %v1963 = vld [vmem:[#allocation12 + $0x330] sm:$0xff]
    %v1964 = vld [vmem:[#allocation12 + $0x338] sm:$0xff]
    %v1965 = vld [vmem:[#allocation12 + $0x340] sm:$0xff]
    %v1966 = vld [vmem:[#allocation12 + $0x348] sm:$0xff]
    %v1967 = vld [vmem:[#allocation12 + $0x350] sm:$0xff]
    %v1968 = vld [vmem:[#allocation12 + $0x358] sm:$0xff]
    %v1969 = vld [vmem:[#allocation12 + $0x360] sm:$0xff]
    %v1970 = vld [vmem:[#allocation12 + $0x368] sm:$0xff]
    %v1971 = vld [vmem:[#allocation12 + $0x370] sm:$0xff]
    %v1972 = vld [vmem:[#allocation12 + $0x378] sm:$0xff]
    %v1973 = vld [vmem:[#allocation12 + $0x380] sm:$0xff]
    %v1974 = vld [vmem:[#allocation12 + $0x388] sm:$0xff]
    %v1975 = vld [vmem:[#allocation12 + $0x390] sm:$0xff]
    %v1976 = vld [vmem:[#allocation12 + $0x398] sm:$0xff]
    %v1977 = vld [vmem:[#allocation12 + $0x3a0] sm:$0xff]
    %v1978 = vld [vmem:[#allocation12 + $0x3a8] sm:$0xff]
    %v1979 = vld [vmem:[#allocation12 + $0x3b0] sm:$0xff]
    %v1980 = vld [vmem:[#allocation12 + $0x3b8] sm:$0xff]
    %v1981 = vld [vmem:[#allocation12 + $0x3c0] sm:$0xff]
    %v1982 = vld [vmem:[#allocation12 + $0x3c8] sm:$0xff]
    %v1983 = vld [vmem:[#allocation12 + $0x3d0] sm:$0xff]
    %v1984 = vld [vmem:[#allocation12 + $0x3d8] sm:$0xff]
    %v1985 = vld [vmem:[#allocation12 + $0x3e0] sm:$0xff]
    %v1986 = vld [vmem:[#allocation12 + $0x3e8] sm:$0xff]
    %v1987 = vld [vmem:[#allocation12 + $0x3f0] sm:$0xff]
    %v1988 = vld [vmem:[#allocation12 + $0x3f8] sm:$0xff]
    %v1989 = vmul.f32 %v1533, 0.5
    %v1990 = vmul.f32 %v1561, 0.5
    %v1991 = vtanh.pop %v1989
    %v1992 = vtanh.pop %v1990
    %v1993 = vadd.f32 %v1991, 1.0
    %v1994 = vadd.f32 %v1992, 1.0
    %v1995 = vmul.f32 %v1993, 0.5
    %v1996 = vmul.f32 %v1994, 0.5
    %v1997 = vtanh.pop %v1645
    %v1998 = vtanh.pop %v1673
    %v1999 = vmul.f32 %v1701, 0.5
    %v2000 = vmul.f32 %v1729, 0.5
    %v2001 = vtanh.pop %v1999
    %v2002 = vtanh.pop %v2000
    %v2003 = vadd.f32 %v2001, 1.0
    %v2004 = vadd.f32 %v2002, 1.0
    %v2005 = vmul.f32 %v2003, 0.5
    %v2006 = vmul.f32 %v2004, 0.5
    %v2007 = vmul.f32 %v1995, %v1997
    %v2008 = vmul.f32 %v1996, %v1998
    %v2009 = vtanh.pop %v2007
    %v2010 = vtanh.pop %v2008
    %v2011 = vmul.f32 %v2005, %v2009
    %v2012 = vmul.f32 %v2006, %v2010
    %2013 = vst [vmem:[#allocation2] sm:$0x3] %v2011
    %2014 = vst [vmem:[#allocation2 + $0x8] sm:$0x3] %v2012
    %v2015 = vpack.c.bf16 %v2011, %v2011
    %v2016 = vpack.c.bf16 %v2012, %v2012
    %v2145 = vunpack.c.l.b16 %v1733
    %v2146 = vunpack.c.h.b16 %v1733
    %v2147 = vunpack.c.l.b16 %v1734
    %v2148 = vunpack.c.h.b16 %v1734
    %v2149 = vunpack.c.l.b16 %v1735
    %v2150 = vunpack.c.h.b16 %v1735
    %v2151 = vunpack.c.l.b16 %v1736
    %v2152 = vunpack.c.h.b16 %v1736
    %v2153 = vunpack.c.l.b16 %v1737
    %v2154 = vunpack.c.h.b16 %v1737
    %v2155 = vunpack.c.l.b16 %v1738
    %v2156 = vunpack.c.h.b16 %v1738
    %v2157 = vunpack.c.l.b16 %v1739
    %v2158 = vunpack.c.h.b16 %v1739
    %v2159 = vunpack.c.l.b16 %v1740
    %v2160 = vunpack.c.h.b16 %v1740
    %v2161 = vunpack.c.l.b16 %v1741
    %v2162 = vunpack.c.h.b16 %v1741
    %v2163 = vunpack.c.l.b16 %v1742
    %v2164 = vunpack.c.h.b16 %v1742
    %v2165 = vunpack.c.l.b16 %v1743
    %v2166 = vunpack.c.h.b16 %v1743
    %v2167 = vunpack.c.l.b16 %v1744
    %v2168 = vunpack.c.h.b16 %v1744
    %v2169 = vunpack.c.l.b16 %v1745
    %v2170 = vunpack.c.h.b16 %v1745
    %v2171 = vunpack.c.l.b16 %v1746
    %v2172 = vunpack.c.h.b16 %v1746
    %v2173 = vunpack.c.l.b16 %v1747
    %v2174 = vunpack.c.h.b16 %v1747
    %v2175 = vunpack.c.l.b16 %v1748
    %v2176 = vunpack.c.h.b16 %v1748
    %v2177 = vunpack.c.l.b16 %v1749
    %v2178 = vunpack.c.h.b16 %v1749
    %v2179 = vunpack.c.l.b16 %v1750
    %v2180 = vunpack.c.h.b16 %v1750
    %v2181 = vunpack.c.l.b16 %v1751
    %v2182 = vunpack.c.h.b16 %v1751
    %v2183 = vunpack.c.l.b16 %v1752
    %v2184 = vunpack.c.h.b16 %v1752
    %v2185 = vunpack.c.l.b16 %v1753
    %v2186 = vunpack.c.h.b16 %v1753
    %v2187 = vunpack.c.l.b16 %v1754
    %v2188 = vunpack.c.h.b16 %v1754
    %v2189 = vunpack.c.l.b16 %v1755
    %v2190 = vunpack.c.h.b16 %v1755
    %v2191 = vunpack.c.l.b16 %v1756
    %v2192 = vunpack.c.h.b16 %v1756
    %v2193 = vunpack.c.l.b16 %v1757
    %v2194 = vunpack.c.h.b16 %v1757
    %v2195 = vunpack.c.l.b16 %v1758
    %v2196 = vunpack.c.h.b16 %v1758
    %v2197 = vunpack.c.l.b16 %v1759
    %v2198 = vunpack.c.h.b16 %v1759
    %v2199 = vunpack.c.l.b16 %v1760
    %v2200 = vunpack.c.h.b16 %v1760
    %v2201 = vunpack.c.l.b16 %v1761
    %v2202 = vunpack.c.h.b16 %v1761
    %v2203 = vunpack.c.l.b16 %v1762
    %v2204 = vunpack.c.h.b16 %v1762
    %v2205 = vunpack.c.l.b16 %v1763
    %v2206 = vunpack.c.h.b16 %v1763
    %v2207 = vunpack.c.l.b16 %v1764
    %v2208 = vunpack.c.h.b16 %v1764
    %v2209 = vunpack.c.l.b16 %v1765
    %v2210 = vunpack.c.h.b16 %v1765
    %v2211 = vunpack.c.l.b16 %v1766
    %v2212 = vunpack.c.h.b16 %v1766
    %v2213 = vunpack.c.l.b16 %v1767
    %v2214 = vunpack.c.h.b16 %v1767
    %v2215 = vunpack.c.l.b16 %v1768
    %v2216 = vunpack.c.h.b16 %v1768
    %v2217 = vunpack.c.l.b16 %v1769
    %v2218 = vunpack.c.h.b16 %v1769
    %v2219 = vunpack.c.l.b16 %v1770
    %v2220 = vunpack.c.h.b16 %v1770
    %v2221 = vunpack.c.l.b16 %v1771
    %v2222 = vunpack.c.h.b16 %v1771
    %v2223 = vunpack.c.l.b16 %v1772
    %v2224 = vunpack.c.h.b16 %v1772
    %v2225 = vunpack.c.l.b16 %v1773
    %v2226 = vunpack.c.h.b16 %v1773
    %v2227 = vunpack.c.l.b16 %v1774
    %v2228 = vunpack.c.h.b16 %v1774
    %v2229 = vunpack.c.l.b16 %v1775
    %v2230 = vunpack.c.h.b16 %v1775
    %v2231 = vunpack.c.l.b16 %v1776
    %v2232 = vunpack.c.h.b16 %v1776
    %v2233 = vunpack.c.l.b16 %v1777
    %v2234 = vunpack.c.h.b16 %v1777
    %v2235 = vunpack.c.l.b16 %v1778
    %v2236 = vunpack.c.h.b16 %v1778
    %v2237 = vunpack.c.l.b16 %v1779
    %v2238 = vunpack.c.h.b16 %v1779
    %v2239 = vunpack.c.l.b16 %v1780
    %v2240 = vunpack.c.h.b16 %v1780
    %v2241 = vunpack.c.l.b16 %v1781
    %v2242 = vunpack.c.h.b16 %v1781
    %v2243 = vunpack.c.l.b16 %v1782
    %v2244 = vunpack.c.h.b16 %v1782
    %v2245 = vunpack.c.l.b16 %v1783
    %v2246 = vunpack.c.h.b16 %v1783
    %v2247 = vunpack.c.l.b16 %v1784
    %v2248 = vunpack.c.h.b16 %v1784
    %v2249 = vunpack.c.l.b16 %v1785
    %v2250 = vunpack.c.h.b16 %v1785
    %v2251 = vunpack.c.l.b16 %v1786
    %v2252 = vunpack.c.h.b16 %v1786
    %v2253 = vunpack.c.l.b16 %v1787
    %v2254 = vunpack.c.h.b16 %v1787
    %v2255 = vunpack.c.l.b16 %v1788
    %v2256 = vunpack.c.h.b16 %v1788
    %v2257 = vunpack.c.l.b16 %v1789
    %v2258 = vunpack.c.h.b16 %v1789
    %v2259 = vunpack.c.l.b16 %v1790
    %v2260 = vunpack.c.h.b16 %v1790
    %v2261 = vunpack.c.l.b16 %v1791
    %v2262 = vunpack.c.h.b16 %v1791
    %v2263 = vunpack.c.l.b16 %v1792
    %v2264 = vunpack.c.h.b16 %v1792
    %v2265 = vunpack.c.l.b16 %v1793
    %v2266 = vunpack.c.h.b16 %v1793
    %v2267 = vunpack.c.l.b16 %v1794
    %v2268 = vunpack.c.h.b16 %v1794
    %v2269 = vunpack.c.l.b16 %v1795
    %v2270 = vunpack.c.h.b16 %v1795
    %v2271 = vunpack.c.l.b16 %v1796
    %v2272 = vunpack.c.h.b16 %v1796
    %v2273 = vunpack.c.l.b16 %v1797
    %v2274 = vunpack.c.h.b16 %v1797
    %v2275 = vunpack.c.l.b16 %v1798
    %v2276 = vunpack.c.h.b16 %v1798
    %v2277 = vunpack.c.l.b16 %v1799
    %v2278 = vunpack.c.h.b16 %v1799
    %v2279 = vunpack.c.l.b16 %v1800
    %v2280 = vunpack.c.h.b16 %v1800
    %v2281 = vunpack.c.l.b16 %v1801
    %v2282 = vunpack.c.h.b16 %v1801
    %v2283 = vunpack.c.l.b16 %v1802
    %v2284 = vunpack.c.h.b16 %v1802
    %v2285 = vunpack.c.l.b16 %v1803
    %v2286 = vunpack.c.h.b16 %v1803
    %v2287 = vunpack.c.l.b16 %v1804
    %v2288 = vunpack.c.h.b16 %v1804
    %v2289 = vunpack.c.l.b16 %v1805
    %v2290 = vunpack.c.h.b16 %v1805
    %v2291 = vunpack.c.l.b16 %v1806
    %v2292 = vunpack.c.h.b16 %v1806
    %v2293 = vunpack.c.l.b16 %v1807
    %v2294 = vunpack.c.h.b16 %v1807
    %v2295 = vunpack.c.l.b16 %v1808
    %v2296 = vunpack.c.h.b16 %v1808
    %v2297 = vunpack.c.l.b16 %v1809
    %v2298 = vunpack.c.h.b16 %v1809
    %v2299 = vunpack.c.l.b16 %v1810
    %v2300 = vunpack.c.h.b16 %v1810
    %v2301 = vunpack.c.l.b16 %v1811
    %v2302 = vunpack.c.h.b16 %v1811
    %v2303 = vunpack.c.l.b16 %v1812
    %v2304 = vunpack.c.h.b16 %v1812
    %v2305 = vunpack.c.l.b16 %v1813
    %v2306 = vunpack.c.h.b16 %v1813
    %v2307 = vunpack.c.l.b16 %v1814
    %v2308 = vunpack.c.h.b16 %v1814
    %v2309 = vunpack.c.l.b16 %v1815
    %v2310 = vunpack.c.h.b16 %v1815
    %v2311 = vunpack.c.l.b16 %v1816
    %v2312 = vunpack.c.h.b16 %v1816
    %v2313 = vunpack.c.l.b16 %v1817
    %v2314 = vunpack.c.h.b16 %v1817
    %v2315 = vunpack.c.l.b16 %v1818
    %v2316 = vunpack.c.h.b16 %v1818
    %v2317 = vunpack.c.l.b16 %v1819
    %v2318 = vunpack.c.h.b16 %v1819
    %v2319 = vunpack.c.l.b16 %v1820
    %v2320 = vunpack.c.h.b16 %v1820
    %v2321 = vunpack.c.l.b16 %v1821
    %v2322 = vunpack.c.h.b16 %v1821
    %v2323 = vunpack.c.l.b16 %v1822
    %v2324 = vunpack.c.h.b16 %v1822
    %v2325 = vunpack.c.l.b16 %v1823
    %v2326 = vunpack.c.h.b16 %v1823
    %v2327 = vunpack.c.l.b16 %v1824
    %v2328 = vunpack.c.h.b16 %v1824
    %v2329 = vunpack.c.l.b16 %v1825
    %v2330 = vunpack.c.h.b16 %v1825
    %v2331 = vunpack.c.l.b16 %v1826
    %v2332 = vunpack.c.h.b16 %v1826
    %v2333 = vunpack.c.l.b16 %v1827
    %v2334 = vunpack.c.h.b16 %v1827
    %v2335 = vunpack.c.l.b16 %v1828
    %v2336 = vunpack.c.h.b16 %v1828
    %v2337 = vunpack.c.l.b16 %v1829
    %v2338 = vunpack.c.h.b16 %v1829
    %v2339 = vunpack.c.l.b16 %v1830
    %v2340 = vunpack.c.h.b16 %v1830
    %v2341 = vunpack.c.l.b16 %v1831
    %v2342 = vunpack.c.h.b16 %v1831
    %v2343 = vunpack.c.l.b16 %v1832
    %v2344 = vunpack.c.h.b16 %v1832
    %v2345 = vunpack.c.l.b16 %v1833
    %v2346 = vunpack.c.h.b16 %v1833
    %v2347 = vunpack.c.l.b16 %v1834
    %v2348 = vunpack.c.h.b16 %v1834
    %v2349 = vunpack.c.l.b16 %v1835
    %v2350 = vunpack.c.h.b16 %v1835
    %v2351 = vunpack.c.l.b16 %v1836
    %v2352 = vunpack.c.h.b16 %v1836
    %v2353 = vunpack.c.l.b16 %v1837
    %v2354 = vunpack.c.h.b16 %v1837
    %v2355 = vunpack.c.l.b16 %v1838
    %v2356 = vunpack.c.h.b16 %v1838
    %v2357 = vunpack.c.l.b16 %v1839
    %v2358 = vunpack.c.h.b16 %v1839
    %v2359 = vunpack.c.l.b16 %v1840
    %v2360 = vunpack.c.h.b16 %v1840
    %v2361 = vunpack.c.l.b16 %v1841
    %v2362 = vunpack.c.h.b16 %v1841
    %v2363 = vunpack.c.l.b16 %v1842
    %v2364 = vunpack.c.h.b16 %v1842
    %v2365 = vunpack.c.l.b16 %v1843
    %v2366 = vunpack.c.h.b16 %v1843
    %v2367 = vunpack.c.l.b16 %v1844
    %v2368 = vunpack.c.h.b16 %v1844
    %v2369 = vunpack.c.l.b16 %v1845
    %v2370 = vunpack.c.h.b16 %v1845
    %v2371 = vunpack.c.l.b16 %v1846
    %v2372 = vunpack.c.h.b16 %v1846
    %v2373 = vunpack.c.l.b16 %v1847
    %v2374 = vunpack.c.h.b16 %v1847
    %v2375 = vunpack.c.l.b16 %v1848
    %v2376 = vunpack.c.h.b16 %v1848
    %v2377 = vunpack.c.l.b16 %v1849
    %v2378 = vunpack.c.h.b16 %v1849
    %v2379 = vunpack.c.l.b16 %v1850
    %v2380 = vunpack.c.h.b16 %v1850
    %v2381 = vunpack.c.l.b16 %v1851
    %v2382 = vunpack.c.h.b16 %v1851
    %v2383 = vunpack.c.l.b16 %v1852
    %v2384 = vunpack.c.h.b16 %v1852
    %v2385 = vunpack.c.l.b16 %v1853
    %v2386 = vunpack.c.h.b16 %v1853
    %v2387 = vunpack.c.l.b16 %v1854
    %v2388 = vunpack.c.h.b16 %v1854
    %v2389 = vunpack.c.l.b16 %v1855
    %v2390 = vunpack.c.h.b16 %v1855
    %v2391 = vunpack.c.l.b16 %v1856
    %v2392 = vunpack.c.h.b16 %v1856
    %v2393 = vunpack.c.l.b16 %v1857
    %v2394 = vunpack.c.h.b16 %v1857
    %v2395 = vunpack.c.l.b16 %v1858
    %v2396 = vunpack.c.h.b16 %v1858
    %v2397 = vunpack.c.l.b16 %v1859
    %v2398 = vunpack.c.h.b16 %v1859
    %v2399 = vunpack.c.l.b16 %v1860
    %v2400 = vunpack.c.h.b16 %v1860
    %v2401 = vpack.c.b16 %v2153, %v2145
    %v2402 = vpack.c.b16 %v2154, %v2146
    %v2403 = vpack.c.b16 %v2155, %v2147
    %v2404 = vpack.c.b16 %v2156, %v2148
    %v2405 = vpack.c.b16 %v2157, %v2149
    %v2406 = vpack.c.b16 %v2158, %v2150
    %v2407 = vpack.c.b16 %v2159, %v2151
    %v2408 = vpack.c.b16 %v2160, %v2152
    %v2409 = vpack.c.b16 %v2169, %v2161
    %v2410 = vpack.c.b16 %v2170, %v2162
    %v2411 = vpack.c.b16 %v2171, %v2163
    %v2412 = vpack.c.b16 %v2172, %v2164
    %v2413 = vpack.c.b16 %v2173, %v2165
    %v2414 = vpack.c.b16 %v2174, %v2166
    %v2415 = vpack.c.b16 %v2175, %v2167
    %v2416 = vpack.c.b16 %v2176, %v2168
    %v2417 = vpack.c.b16 %v2185, %v2177
    %v2418 = vpack.c.b16 %v2186, %v2178
    %v2419 = vpack.c.b16 %v2187, %v2179
    %v2420 = vpack.c.b16 %v2188, %v2180
    %v2421 = vpack.c.b16 %v2189, %v2181
    %v2422 = vpack.c.b16 %v2190, %v2182
    %v2423 = vpack.c.b16 %v2191, %v2183
    %v2424 = vpack.c.b16 %v2192, %v2184
    %v2425 = vpack.c.b16 %v2201, %v2193
    %v2426 = vpack.c.b16 %v2202, %v2194
    %v2427 = vpack.c.b16 %v2203, %v2195
    %v2428 = vpack.c.b16 %v2204, %v2196
    %v2429 = vpack.c.b16 %v2205, %v2197
    %v2430 = vpack.c.b16 %v2206, %v2198
    %v2431 = vpack.c.b16 %v2207, %v2199
    %v2432 = vpack.c.b16 %v2208, %v2200
    %v2433 = vpack.c.b16 %v2217, %v2209
    %v2434 = vpack.c.b16 %v2218, %v2210
    %v2435 = vpack.c.b16 %v2219, %v2211
    %v2436 = vpack.c.b16 %v2220, %v2212
    %v2437 = vpack.c.b16 %v2221, %v2213
    %v2438 = vpack.c.b16 %v2222, %v2214
    %v2439 = vpack.c.b16 %v2223, %v2215
    %v2440 = vpack.c.b16 %v2224, %v2216
    %v2441 = vpack.c.b16 %v2233, %v2225
    %v2442 = vpack.c.b16 %v2234, %v2226
    %v2443 = vpack.c.b16 %v2235, %v2227
    %v2444 = vpack.c.b16 %v2236, %v2228
    %v2445 = vpack.c.b16 %v2237, %v2229
    %v2446 = vpack.c.b16 %v2238, %v2230
    %v2447 = vpack.c.b16 %v2239, %v2231
    %v2448 = vpack.c.b16 %v2240, %v2232
    %v2449 = vpack.c.b16 %v2249, %v2241
    %v2450 = vpack.c.b16 %v2250, %v2242
    %v2451 = vpack.c.b16 %v2251, %v2243
    %v2452 = vpack.c.b16 %v2252, %v2244
    %v2453 = vpack.c.b16 %v2253, %v2245
    %v2454 = vpack.c.b16 %v2254, %v2246
    %v2455 = vpack.c.b16 %v2255, %v2247
    %v2456 = vpack.c.b16 %v2256, %v2248
    %v2457 = vpack.c.b16 %v2265, %v2257
    %v2458 = vpack.c.b16 %v2266, %v2258
    %v2459 = vpack.c.b16 %v2267, %v2259
    %v2460 = vpack.c.b16 %v2268, %v2260
    %v2461 = vpack.c.b16 %v2269, %v2261
    %v2462 = vpack.c.b16 %v2270, %v2262
    %v2463 = vpack.c.b16 %v2271, %v2263
    %v2464 = vpack.c.b16 %v2272, %v2264
    %v2465 = vpack.c.b16 %v2281, %v2273
    %v2466 = vpack.c.b16 %v2282, %v2274
    %v2467 = vpack.c.b16 %v2283, %v2275
    %v2468 = vpack.c.b16 %v2284, %v2276
    %v2469 = vpack.c.b16 %v2285, %v2277
    %v2470 = vpack.c.b16 %v2286, %v2278
    %v2471 = vpack.c.b16 %v2287, %v2279
    %v2472 = vpack.c.b16 %v2288, %v2280
    %v2473 = vpack.c.b16 %v2297, %v2289
    %v2474 = vpack.c.b16 %v2298, %v2290
    %v2475 = vpack.c.b16 %v2299, %v2291
    %v2476 = vpack.c.b16 %v2300, %v2292
    %v2477 = vpack.c.b16 %v2301, %v2293
    %v2478 = vpack.c.b16 %v2302, %v2294
    %v2479 = vpack.c.b16 %v2303, %v2295
    %v2480 = vpack.c.b16 %v2304, %v2296
    %v2481 = vpack.c.b16 %v2313, %v2305
    %v2482 = vpack.c.b16 %v2314, %v2306
    %v2483 = vpack.c.b16 %v2315, %v2307
    %v2484 = vpack.c.b16 %v2316, %v2308
    %v2485 = vpack.c.b16 %v2317, %v2309
    %v2486 = vpack.c.b16 %v2318, %v2310
    %v2487 = vpack.c.b16 %v2319, %v2311
    %v2488 = vpack.c.b16 %v2320, %v2312
    %v2489 = vpack.c.b16 %v2329, %v2321
    %v2490 = vpack.c.b16 %v2330, %v2322
    %v2491 = vpack.c.b16 %v2331, %v2323
    %v2492 = vpack.c.b16 %v2332, %v2324
    %v2493 = vpack.c.b16 %v2333, %v2325
    %v2494 = vpack.c.b16 %v2334, %v2326
    %v2495 = vpack.c.b16 %v2335, %v2327
    %v2496 = vpack.c.b16 %v2336, %v2328
    %v2497 = vpack.c.b16 %v2345, %v2337
    %v2498 = vpack.c.b16 %v2346, %v2338
    %v2499 = vpack.c.b16 %v2347, %v2339
    %v2500 = vpack.c.b16 %v2348, %v2340
    %v2501 = vpack.c.b16 %v2349, %v2341
    %v2502 = vpack.c.b16 %v2350, %v2342
    %v2503 = vpack.c.b16 %v2351, %v2343
    %v2504 = vpack.c.b16 %v2352, %v2344
    %v2505 = vpack.c.b16 %v2361, %v2353
    %v2506 = vpack.c.b16 %v2362, %v2354
    %v2507 = vpack.c.b16 %v2363, %v2355
    %v2508 = vpack.c.b16 %v2364, %v2356
    %v2509 = vpack.c.b16 %v2365, %v2357
    %v2510 = vpack.c.b16 %v2366, %v2358
    %v2511 = vpack.c.b16 %v2367, %v2359
    %v2512 = vpack.c.b16 %v2368, %v2360
    %v2513 = vpack.c.b16 %v2377, %v2369
    %v2514 = vpack.c.b16 %v2378, %v2370
    %v2515 = vpack.c.b16 %v2379, %v2371
    %v2516 = vpack.c.b16 %v2380, %v2372
    %v2517 = vpack.c.b16 %v2381, %v2373
    %v2518 = vpack.c.b16 %v2382, %v2374
    %v2519 = vpack.c.b16 %v2383, %v2375
    %v2520 = vpack.c.b16 %v2384, %v2376
    %v2521 = vpack.c.b16 %v2393, %v2385
    %v2522 = vpack.c.b16 %v2394, %v2386
    %v2523 = vpack.c.b16 %v2395, %v2387
    %v2524 = vpack.c.b16 %v2396, %v2388
    %v2525 = vpack.c.b16 %v2397, %v2389
    %v2526 = vpack.c.b16 %v2398, %v2390
    %v2527 = vpack.c.b16 %v2399, %v2391
    %v2528 = vpack.c.b16 %v2400, %v2392
    %2657 = vmatpush.bf16.msra.mxu0 %v2457
    %2658 = vmatpush.bf16.msra.mxu0 %v2449
    %2659 = vmatpush.bf16.msra.mxu0 %v2441
    %2660 = vmatpush.bf16.msra.mxu0 %v2433
    %2661 = vmatpush.bf16.msra.mxu0 %v2425
    %2662 = vmatpush.bf16.msra.mxu0 %v2417
    %2663 = vmatpush.bf16.msra.mxu0 %v2409
    %2664 = vmatpush.bf16.msra.mxu0 %v2401
    %2665 = vmatmul.bf16.gmra.mxu0 %v2015
    %v2666 = vpop.f32.mrf.mxu0
    %v2667 = vadd.f32 0.0, %v2666
    %v2668 = vpop.f32.mrf.mxu0
    %2669 = vdwg.mxu0
    %2670 = vmatpush.bf16.msra.mxu0 %v2521
    %2671 = vmatpush.bf16.msra.mxu0 %v2513
    %2672 = vmatpush.bf16.msra.mxu0 %v2505
    %2673 = vmatpush.bf16.msra.mxu0 %v2497
    %2674 = vmatpush.bf16.msra.mxu0 %v2489
    %2675 = vmatpush.bf16.msra.mxu0 %v2481
    %2676 = vmatpush.bf16.msra.mxu0 %v2473
    %2677 = vmatpush.bf16.msra.mxu0 %v2465
    %2678 = vmatmul.bf16.gmra.mxu0 %v2016
    %v2679 = vpop.f32.mrf.mxu0
    %v2680 = vadd.f32 %v2667, %v2679
    %v2681 = vpop.f32.mrf.mxu0
    %2682 = vdwg.mxu0
    %2683 = vmatpush.bf16.msra.mxu0 %v2458
    %2684 = vmatpush.bf16.msra.mxu0 %v2450
    %2685 = vmatpush.bf16.msra.mxu0 %v2442
    %2686 = vmatpush.bf16.msra.mxu0 %v2434
    %2687 = vmatpush.bf16.msra.mxu0 %v2426
    %2688 = vmatpush.bf16.msra.mxu0 %v2418
    %2689 = vmatpush.bf16.msra.mxu0 %v2410
    %2690 = vmatpush.bf16.msra.mxu0 %v2402
    %2691 = vmatmul.bf16.gmra.mxu0 %v2015
    %v2692 = vpop.f32.mrf.mxu0
    %v2693 = vadd.f32 0.0, %v2692
    %v2694 = vpop.f32.mrf.mxu0
    %2695 = vdwg.mxu0
    %2696 = vmatpush.bf16.msra.mxu0 %v2522
    %2697 = vmatpush.bf16.msra.mxu0 %v2514
    %2698 = vmatpush.bf16.msra.mxu0 %v2506
    %2699 = vmatpush.bf16.msra.mxu0 %v2498
    %2700 = vmatpush.bf16.msra.mxu0 %v2490
    %2701 = vmatpush.bf16.msra.mxu0 %v2482
    %2702 = vmatpush.bf16.msra.mxu0 %v2474
    %2703 = vmatpush.bf16.msra.mxu0 %v2466
    %2704 = vmatmul.bf16.gmra.mxu0 %v2016
    %v2705 = vpop.f32.mrf.mxu0
    %v2706 = vadd.f32 %v2693, %v2705
    %v2707 = vpop.f32.mrf.mxu0
    %2708 = vdwg.mxu0
    %2709 = vmatpush.bf16.msra.mxu0 %v2459
    %2710 = vmatpush.bf16.msra.mxu0 %v2451
    %2711 = vmatpush.bf16.msra.mxu0 %v2443
    %2712 = vmatpush.bf16.msra.mxu0 %v2435
    %2713 = vmatpush.bf16.msra.mxu0 %v2427
    %2714 = vmatpush.bf16.msra.mxu0 %v2419
    %2715 = vmatpush.bf16.msra.mxu0 %v2411
    %2716 = vmatpush.bf16.msra.mxu0 %v2403
    %2717 = vmatmul.bf16.gmra.mxu0 %v2015
    %v2718 = vpop.f32.mrf.mxu0
    %v2719 = vadd.f32 0.0, %v2718
    %v2720 = vpop.f32.mrf.mxu0
    %2721 = vdwg.mxu0
    %2722 = vmatpush.bf16.msra.mxu0 %v2523
    %2723 = vmatpush.bf16.msra.mxu0 %v2515
    %2724 = vmatpush.bf16.msra.mxu0 %v2507
    %2725 = vmatpush.bf16.msra.mxu0 %v2499
    %2726 = vmatpush.bf16.msra.mxu0 %v2491
    %2727 = vmatpush.bf16.msra.mxu0 %v2483
    %2728 = vmatpush.bf16.msra.mxu0 %v2475
    %2729 = vmatpush.bf16.msra.mxu0 %v2467
    %2730 = vmatmul.bf16.gmra.mxu0 %v2016
    %v2731 = vpop.f32.mrf.mxu0
    %v2732 = vadd.f32 %v2719, %v2731
    %v2733 = vpop.f32.mrf.mxu0
    %2734 = vdwg.mxu0
    %2735 = vmatpush.bf16.msra.mxu0 %v2460
    %2736 = vmatpush.bf16.msra.mxu0 %v2452
    %2737 = vmatpush.bf16.msra.mxu0 %v2444
    %2738 = vmatpush.bf16.msra.mxu0 %v2436
    %2739 = vmatpush.bf16.msra.mxu0 %v2428
    %2740 = vmatpush.bf16.msra.mxu0 %v2420
    %2741 = vmatpush.bf16.msra.mxu0 %v2412
    %2742 = vmatpush.bf16.msra.mxu0 %v2404
    %2743 = vmatmul.bf16.gmra.mxu0 %v2015
    %v2744 = vpop.f32.mrf.mxu0
    %v2745 = vadd.f32 0.0, %v2744
    %v2746 = vpop.f32.mrf.mxu0
    %2747 = vdwg.mxu0
    %2748 = vmatpush.bf16.msra.mxu0 %v2524
    %2749 = vmatpush.bf16.msra.mxu0 %v2516
    %2750 = vmatpush.bf16.msra.mxu0 %v2508
    %2751 = vmatpush.bf16.msra.mxu0 %v2500
    %2752 = vmatpush.bf16.msra.mxu0 %v2492
    %2753 = vmatpush.bf16.msra.mxu0 %v2484
    %2754 = vmatpush.bf16.msra.mxu0 %v2476
    %2755 = vmatpush.bf16.msra.mxu0 %v2468
    %2756 = vmatmul.bf16.gmra.mxu0 %v2016
    %v2757 = vpop.f32.mrf.mxu0
    %v2758 = vadd.f32 %v2745, %v2757
    %v2759 = vpop.f32.mrf.mxu0
    %2760 = vdwg.mxu0
    %2761 = vmatpush.bf16.msra.mxu0 %v2461
    %2762 = vmatpush.bf16.msra.mxu0 %v2453
    %2763 = vmatpush.bf16.msra.mxu0 %v2445
    %2764 = vmatpush.bf16.msra.mxu0 %v2437
    %2765 = vmatpush.bf16.msra.mxu0 %v2429
    %2766 = vmatpush.bf16.msra.mxu0 %v2421
    %2767 = vmatpush.bf16.msra.mxu0 %v2413
    %2768 = vmatpush.bf16.msra.mxu0 %v2405
    %2769 = vmatmul.bf16.gmra.mxu0 %v2015
    %v2770 = vpop.f32.mrf.mxu0
    %v2771 = vadd.f32 0.0, %v2770
    %v2772 = vpop.f32.mrf.mxu0
    %2773 = vdwg.mxu0
    %2774 = vmatpush.bf16.msra.mxu0 %v2525
    %2775 = vmatpush.bf16.msra.mxu0 %v2517
    %2776 = vmatpush.bf16.msra.mxu0 %v2509
    %2777 = vmatpush.bf16.msra.mxu0 %v2501
    %2778 = vmatpush.bf16.msra.mxu0 %v2493
    %2779 = vmatpush.bf16.msra.mxu0 %v2485
    %2780 = vmatpush.bf16.msra.mxu0 %v2477
    %2781 = vmatpush.bf16.msra.mxu0 %v2469
    %2782 = vmatmul.bf16.gmra.mxu0 %v2016
    %v2783 = vpop.f32.mrf.mxu0
    %v2784 = vadd.f32 %v2771, %v2783
    %v2785 = vpop.f32.mrf.mxu0
    %2786 = vdwg.mxu0
    %2787 = vmatpush.bf16.msra.mxu0 %v2462
    %2788 = vmatpush.bf16.msra.mxu0 %v2454
    %2789 = vmatpush.bf16.msra.mxu0 %v2446
    %2790 = vmatpush.bf16.msra.mxu0 %v2438
    %2791 = vmatpush.bf16.msra.mxu0 %v2430
    %2792 = vmatpush.bf16.msra.mxu0 %v2422
    %2793 = vmatpush.bf16.msra.mxu0 %v2414
    %2794 = vmatpush.bf16.msra.mxu0 %v2406
    %2795 = vmatmul.bf16.gmra.mxu0 %v2015
    %v2796 = vpop.f32.mrf.mxu0
    %v2797 = vadd.f32 0.0, %v2796
    %v2798 = vpop.f32.mrf.mxu0
    %2799 = vdwg.mxu0
    %2800 = vmatpush.bf16.msra.mxu0 %v2526
    %2801 = vmatpush.bf16.msra.mxu0 %v2518
    %2802 = vmatpush.bf16.msra.mxu0 %v2510
    %2803 = vmatpush.bf16.msra.mxu0 %v2502
    %2804 = vmatpush.bf16.msra.mxu0 %v2494
    %2805 = vmatpush.bf16.msra.mxu0 %v2486
    %2806 = vmatpush.bf16.msra.mxu0 %v2478
    %2807 = vmatpush.bf16.msra.mxu0 %v2470
    %2808 = vmatmul.bf16.gmra.mxu0 %v2016
    %v2809 = vpop.f32.mrf.mxu0
    %v2810 = vadd.f32 %v2797, %v2809
    %v2811 = vpop.f32.mrf.mxu0
    %2812 = vdwg.mxu0
    %2813 = vmatpush.bf16.msra.mxu0 %v2463
    %2814 = vmatpush.bf16.msra.mxu0 %v2455
    %2815 = vmatpush.bf16.msra.mxu0 %v2447
    %2816 = vmatpush.bf16.msra.mxu0 %v2439
    %2817 = vmatpush.bf16.msra.mxu0 %v2431
    %2818 = vmatpush.bf16.msra.mxu0 %v2423
    %2819 = vmatpush.bf16.msra.mxu0 %v2415
    %2820 = vmatpush.bf16.msra.mxu0 %v2407
    %2821 = vmatmul.bf16.gmra.mxu0 %v2015
    %v2822 = vpop.f32.mrf.mxu0
    %v2823 = vadd.f32 0.0, %v2822
    %v2824 = vpop.f32.mrf.mxu0
    %2825 = vdwg.mxu0
    %2826 = vmatpush.bf16.msra.mxu0 %v2527
    %2827 = vmatpush.bf16.msra.mxu0 %v2519
    %2828 = vmatpush.bf16.msra.mxu0 %v2511
    %2829 = vmatpush.bf16.msra.mxu0 %v2503
    %2830 = vmatpush.bf16.msra.mxu0 %v2495
    %2831 = vmatpush.bf16.msra.mxu0 %v2487
    %2832 = vmatpush.bf16.msra.mxu0 %v2479
    %2833 = vmatpush.bf16.msra.mxu0 %v2471
    %2834 = vmatmul.bf16.gmra.mxu0 %v2016
    %v2835 = vpop.f32.mrf.mxu0
    %v2836 = vadd.f32 %v2823, %v2835
    %v2837 = vpop.f32.mrf.mxu0
    %2838 = vdwg.mxu0
    %2839 = vmatpush.bf16.msra.mxu0 %v2464
    %2840 = vmatpush.bf16.msra.mxu0 %v2456
    %2841 = vmatpush.bf16.msra.mxu0 %v2448
    %2842 = vmatpush.bf16.msra.mxu0 %v2440
    %2843 = vmatpush.bf16.msra.mxu0 %v2432
    %2844 = vmatpush.bf16.msra.mxu0 %v2424
    %2845 = vmatpush.bf16.msra.mxu0 %v2416
    %2846 = vmatpush.bf16.msra.mxu0 %v2408
    %2847 = vmatmul.bf16.gmra.mxu0 %v2015
    %v2848 = vpop.f32.mrf.mxu0
    %v2849 = vadd.f32 0.0, %v2848
    %v2850 = vpop.f32.mrf.mxu0
    %2851 = vdwg.mxu0
    %2852 = vmatpush.bf16.msra.mxu0 %v2528
    %2853 = vmatpush.bf16.msra.mxu0 %v2520
    %2854 = vmatpush.bf16.msra.mxu0 %v2512
    %2855 = vmatpush.bf16.msra.mxu0 %v2504
    %2856 = vmatpush.bf16.msra.mxu0 %v2496
    %2857 = vmatpush.bf16.msra.mxu0 %v2488
    %2858 = vmatpush.bf16.msra.mxu0 %v2480
    %2859 = vmatpush.bf16.msra.mxu0 %v2472
    %2860 = vmatmul.bf16.gmra.mxu0 %v2016
    %v2861 = vpop.f32.mrf.mxu0
    %v2862 = vadd.f32 %v2849, %v2861
    %v2863 = vpop.f32.mrf.mxu0
    %2864 = vdwg.mxu0
    %v2873 = vrot.slane %v2680, 6
    %v2874 = vrot.slane %v2706, 6
    %v2875 = vrot.slane %v2732, 6
    %v2876 = vrot.slane %v2758, 6
    %v2877 = vrot.slane %v2784, 6
    %v2878 = vrot.slane %v2810, 6
    %v2879 = vrot.slane %v2836, 6
    %v2880 = vrot.slane %v2862, 6
    %v2889 = vadd.f32 %v1533, %v2873
    %v2890 = vadd.f32 %v1561, %v2874
    %v2891 = vadd.f32 %v1589, %v2875
    %v2892 = vadd.f32 %v1617, %v2876
    %v2893 = vadd.f32 %v1645, %v2877
    %v2894 = vadd.f32 %v1673, %v2878
    %v2895 = vadd.f32 %v1701, %v2879
    %v2896 = vadd.f32 %v1729, %v2880
    %v2897 = vmul.f32 %v2889, 0.5
    %v2898 = vmul.f32 %v2890, 0.5
    %v2899 = vtanh.pop %v2897
    %v2900 = vtanh.pop %v2898
    %v2901 = vadd.f32 %v2899, 1.0
    %v2902 = vadd.f32 %v2900, 1.0
    %v2903 = vmul.f32 %v2901, 0.5
    %v2904 = vmul.f32 %v2902, 0.5
    %v2905 = vtanh.pop %v2893
    %v2906 = vtanh.pop %v2894
    %v2907 = vmul.f32 %v2895, 0.5
    %v2908 = vmul.f32 %v2896, 0.5
    %v2909 = vtanh.pop %v2907
    %v2910 = vtanh.pop %v2908
    %v2911 = vadd.f32 %v2909, 1.0
    %v2912 = vadd.f32 %v2910, 1.0
    %v2913 = vmul.f32 %v2911, 0.5
    %v2914 = vmul.f32 %v2912, 0.5
    %v2915 = vmul.f32 %v2891, 0.5
    %v2916 = vmul.f32 %v2892, 0.5
    %v2917 = vtanh.pop %v2915
    %v2918 = vtanh.pop %v2916
    %v2919 = vadd.f32 %v2917, 1.0
    %v2920 = vadd.f32 %v2918, 1.0
    %v2921 = vmul.f32 %v2919, 0.5
    %v2922 = vmul.f32 %v2920, 0.5
    %v2925 = vrot.slane %v2007, 6
    %v2926 = vrot.slane %v2008, 6
    %v2929 = vmul.f32 %v2921, %v2925
    %v2930 = vmul.f32 %v2922, %v2926
    %v2931 = vmul.f32 %v2903, %v2905
    %v2932 = vmul.f32 %v2904, %v2906
    %v2933 = vadd.f32 %v2929, %v2931
    %v2934 = vadd.f32 %v2930, %v2932
    %v2935 = vtanh.pop %v2933
    %v2936 = vtanh.pop %v2934
    %v2937 = vmul.f32 %v2913, %v2935
    %v2938 = vmul.f32 %v2914, %v2936
    %2939 = vst [vmem:[#allocation2] sm:$0xc] %v2937
    %2940 = vst [vmem:[#allocation2 + $0x8] sm:$0xc] %v2938
    %v2941 = vpack.c.bf16 %v2937, %v2937
    %v2942 = vpack.c.bf16 %v2938, %v2938
    %v2945 = vrot.slane %v2941, 1
    %v2946 = vrot.slane %v2942, 1
    %2949 = vmatpush.bf16.msra.mxu0 %v2457
    %2950 = vmatpush.bf16.msra.mxu0 %v2449
    %2951 = vmatpush.bf16.msra.mxu0 %v2441
    %2952 = vmatpush.bf16.msra.mxu0 %v2433
    %2953 = vmatpush.bf16.msra.mxu0 %v2425
    %2954 = vmatpush.bf16.msra.mxu0 %v2417
    %2955 = vmatpush.bf16.msra.mxu0 %v2409
    %2956 = vmatpush.bf16.msra.mxu0 %v2401
    %2957 = vmatmul.bf16.gmra.mxu0 %v2945
    %v2958 = vpop.f32.mrf.mxu0
    %v2959 = vadd.f32 0.0, %v2958
    %v2960 = vpop.f32.mrf.mxu0
    %2961 = vdwg.mxu0
    %2962 = vmatpush.bf16.msra.mxu0 %v2521
    %2963 = vmatpush.bf16.msra.mxu0 %v2513
    %2964 = vmatpush.bf16.msra.mxu0 %v2505
    %2965 = vmatpush.bf16.msra.mxu0 %v2497
    %2966 = vmatpush.bf16.msra.mxu0 %v2489
    %2967 = vmatpush.bf16.msra.mxu0 %v2481
    %2968 = vmatpush.bf16.msra.mxu0 %v2473
    %2969 = vmatpush.bf16.msra.mxu0 %v2465
    %2970 = vmatmul.bf16.gmra.mxu0 %v2946
    %v2971 = vpop.f32.mrf.mxu0
    %v2972 = vadd.f32 %v2959, %v2971
    %v2973 = vpop.f32.mrf.mxu0
    %2974 = vdwg.mxu0
    %2975 = vmatpush.bf16.msra.mxu0 %v2458
    %2976 = vmatpush.bf16.msra.mxu0 %v2450
    %2977 = vmatpush.bf16.msra.mxu0 %v2442
    %2978 = vmatpush.bf16.msra.mxu0 %v2434
    %2979 = vmatpush.bf16.msra.mxu0 %v2426
    %2980 = vmatpush.bf16.msra.mxu0 %v2418
    %2981 = vmatpush.bf16.msra.mxu0 %v2410
    %2982 = vmatpush.bf16.msra.mxu0 %v2402
    %2983 = vmatmul.bf16.gmra.mxu0 %v2945
    %v2984 = vpop.f32.mrf.mxu0
    %v2985 = vadd.f32 0.0, %v2984
    %v2986 = vpop.f32.mrf.mxu0
    %2987 = vdwg.mxu0
    %2988 = vmatpush.bf16.msra.mxu0 %v2522
    %2989 = vmatpush.bf16.msra.mxu0 %v2514
    %2990 = vmatpush.bf16.msra.mxu0 %v2506
    %2991 = vmatpush.bf16.msra.mxu0 %v2498
    %2992 = vmatpush.bf16.msra.mxu0 %v2490
    %2993 = vmatpush.bf16.msra.mxu0 %v2482
    %2994 = vmatpush.bf16.msra.mxu0 %v2474
    %2995 = vmatpush.bf16.msra.mxu0 %v2466
    %2996 = vmatmul.bf16.gmra.mxu0 %v2946
    %v2997 = vpop.f32.mrf.mxu0
    %v2998 = vadd.f32 %v2985, %v2997
    %v2999 = vpop.f32.mrf.mxu0
    %3000 = vdwg.mxu0
    %3001 = vmatpush.bf16.msra.mxu0 %v2459
    %3002 = vmatpush.bf16.msra.mxu0 %v2451
    %3003 = vmatpush.bf16.msra.mxu0 %v2443
    %3004 = vmatpush.bf16.msra.mxu0 %v2435
    %3005 = vmatpush.bf16.msra.mxu0 %v2427
    %3006 = vmatpush.bf16.msra.mxu0 %v2419
    %3007 = vmatpush.bf16.msra.mxu0 %v2411
    %3008 = vmatpush.bf16.msra.mxu0 %v2403
    %3009 = vmatmul.bf16.gmra.mxu0 %v2945
    %v3010 = vpop.f32.mrf.mxu0
    %v3011 = vadd.f32 0.0, %v3010
    %v3012 = vpop.f32.mrf.mxu0
    %3013 = vdwg.mxu0
    %3014 = vmatpush.bf16.msra.mxu0 %v2523
    %3015 = vmatpush.bf16.msra.mxu0 %v2515
    %3016 = vmatpush.bf16.msra.mxu0 %v2507
    %3017 = vmatpush.bf16.msra.mxu0 %v2499
    %3018 = vmatpush.bf16.msra.mxu0 %v2491
    %3019 = vmatpush.bf16.msra.mxu0 %v2483
    %3020 = vmatpush.bf16.msra.mxu0 %v2475
    %3021 = vmatpush.bf16.msra.mxu0 %v2467
    %3022 = vmatmul.bf16.gmra.mxu0 %v2946
    %v3023 = vpop.f32.mrf.mxu0
    %v3024 = vadd.f32 %v3011, %v3023
    %v3025 = vpop.f32.mrf.mxu0
    %3026 = vdwg.mxu0
    %3027 = vmatpush.bf16.msra.mxu0 %v2460
    %3028 = vmatpush.bf16.msra.mxu0 %v2452
    %3029 = vmatpush.bf16.msra.mxu0 %v2444
    %3030 = vmatpush.bf16.msra.mxu0 %v2436
    %3031 = vmatpush.bf16.msra.mxu0 %v2428
    %3032 = vmatpush.bf16.msra.mxu0 %v2420
    %3033 = vmatpush.bf16.msra.mxu0 %v2412
    %3034 = vmatpush.bf16.msra.mxu0 %v2404
    %3035 = vmatmul.bf16.gmra.mxu0 %v2945
    %v3036 = vpop.f32.mrf.mxu0
    %v3037 = vadd.f32 0.0, %v3036
    %v3038 = vpop.f32.mrf.mxu0
    %3039 = vdwg.mxu0
    %3040 = vmatpush.bf16.msra.mxu0 %v2524
    %3041 = vmatpush.bf16.msra.mxu0 %v2516
    %3042 = vmatpush.bf16.msra.mxu0 %v2508
    %3043 = vmatpush.bf16.msra.mxu0 %v2500
    %3044 = vmatpush.bf16.msra.mxu0 %v2492
    %3045 = vmatpush.bf16.msra.mxu0 %v2484
    %3046 = vmatpush.bf16.msra.mxu0 %v2476
    %3047 = vmatpush.bf16.msra.mxu0 %v2468
    %3048 = vmatmul.bf16.gmra.mxu0 %v2946
    %v3049 = vpop.f32.mrf.mxu0
    %v3050 = vadd.f32 %v3037, %v3049
    %v3051 = vpop.f32.mrf.mxu0
    %3052 = vdwg.mxu0
    %3053 = vmatpush.bf16.msra.mxu0 %v2461
    %3054 = vmatpush.bf16.msra.mxu0 %v2453
    %3055 = vmatpush.bf16.msra.mxu0 %v2445
    %3056 = vmatpush.bf16.msra.mxu0 %v2437
    %3057 = vmatpush.bf16.msra.mxu0 %v2429
    %3058 = vmatpush.bf16.msra.mxu0 %v2421
    %3059 = vmatpush.bf16.msra.mxu0 %v2413
    %3060 = vmatpush.bf16.msra.mxu0 %v2405
    %3061 = vmatmul.bf16.gmra.mxu0 %v2945
    %v3062 = vpop.f32.mrf.mxu0
    %v3063 = vadd.f32 0.0, %v3062
    %v3064 = vpop.f32.mrf.mxu0
    %3065 = vdwg.mxu0
    %3066 = vmatpush.bf16.msra.mxu0 %v2525
    %3067 = vmatpush.bf16.msra.mxu0 %v2517
    %3068 = vmatpush.bf16.msra.mxu0 %v2509
    %3069 = vmatpush.bf16.msra.mxu0 %v2501
    %3070 = vmatpush.bf16.msra.mxu0 %v2493
    %3071 = vmatpush.bf16.msra.mxu0 %v2485
    %3072 = vmatpush.bf16.msra.mxu0 %v2477
    %3073 = vmatpush.bf16.msra.mxu0 %v2469
    %3074 = vmatmul.bf16.gmra.mxu0 %v2946
    %v3075 = vpop.f32.mrf.mxu0
    %v3076 = vadd.f32 %v3063, %v3075
    %v3077 = vpop.f32.mrf.mxu0
    %3078 = vdwg.mxu0
    %3079 = vmatpush.bf16.msra.mxu0 %v2462
    %3080 = vmatpush.bf16.msra.mxu0 %v2454
    %3081 = vmatpush.bf16.msra.mxu0 %v2446
    %3082 = vmatpush.bf16.msra.mxu0 %v2438
    %3083 = vmatpush.bf16.msra.mxu0 %v2430
    %3084 = vmatpush.bf16.msra.mxu0 %v2422
    %3085 = vmatpush.bf16.msra.mxu0 %v2414
    %3086 = vmatpush.bf16.msra.mxu0 %v2406
    %3087 = vmatmul.bf16.gmra.mxu0 %v2945
    %v3088 = vpop.f32.mrf.mxu0
    %v3089 = vadd.f32 0.0, %v3088
    %v3090 = vpop.f32.mrf.mxu0
    %3091 = vdwg.mxu0
    %3092 = vmatpush.bf16.msra.mxu0 %v2526
    %3093 = vmatpush.bf16.msra.mxu0 %v2518
    %3094 = vmatpush.bf16.msra.mxu0 %v2510
    %3095 = vmatpush.bf16.msra.mxu0 %v2502
    %3096 = vmatpush.bf16.msra.mxu0 %v2494
    %3097 = vmatpush.bf16.msra.mxu0 %v2486
    %3098 = vmatpush.bf16.msra.mxu0 %v2478
    %3099 = vmatpush.bf16.msra.mxu0 %v2470
    %3100 = vmatmul.bf16.gmra.mxu0 %v2946
    %v3101 = vpop.f32.mrf.mxu0
    %v3102 = vadd.f32 %v3089, %v3101
    %v3103 = vpop.f32.mrf.mxu0
    %3104 = vdwg.mxu0
    %3105 = vmatpush.bf16.msra.mxu0 %v2463
    %3106 = vmatpush.bf16.msra.mxu0 %v2455
    %3107 = vmatpush.bf16.msra.mxu0 %v2447
    %3108 = vmatpush.bf16.msra.mxu0 %v2439
    %3109 = vmatpush.bf16.msra.mxu0 %v2431
    %3110 = vmatpush.bf16.msra.mxu0 %v2423
    %3111 = vmatpush.bf16.msra.mxu0 %v2415
    %3112 = vmatpush.bf16.msra.mxu0 %v2407
    %3113 = vmatmul.bf16.gmra.mxu0 %v2945
    %v3114 = vpop.f32.mrf.mxu0
    %v3115 = vadd.f32 0.0, %v3114
    %v3116 = vpop.f32.mrf.mxu0
    %3117 = vdwg.mxu0
    %3118 = vmatpush.bf16.msra.mxu0 %v2527
    %3119 = vmatpush.bf16.msra.mxu0 %v2519
    %3120 = vmatpush.bf16.msra.mxu0 %v2511
    %3121 = vmatpush.bf16.msra.mxu0 %v2503
    %3122 = vmatpush.bf16.msra.mxu0 %v2495
    %3123 = vmatpush.bf16.msra.mxu0 %v2487
    %3124 = vmatpush.bf16.msra.mxu0 %v2479
    %3125 = vmatpush.bf16.msra.mxu0 %v2471
    %3126 = vmatmul.bf16.gmra.mxu0 %v2946
    %v3127 = vpop.f32.mrf.mxu0
    %v3128 = vadd.f32 %v3115, %v3127
    %v3129 = vpop.f32.mrf.mxu0
    %3130 = vdwg.mxu0
    %3131 = vmatpush.bf16.msra.mxu0 %v2464
    %3132 = vmatpush.bf16.msra.mxu0 %v2456
    %3133 = vmatpush.bf16.msra.mxu0 %v2448
    %3134 = vmatpush.bf16.msra.mxu0 %v2440
    %3135 = vmatpush.bf16.msra.mxu0 %v2432
    %3136 = vmatpush.bf16.msra.mxu0 %v2424
    %3137 = vmatpush.bf16.msra.mxu0 %v2416
    %3138 = vmatpush.bf16.msra.mxu0 %v2408
    %3139 = vmatmul.bf16.gmra.mxu0 %v2945
    %v3140 = vpop.f32.mrf.mxu0
    %v3141 = vadd.f32 0.0, %v3140
    %v3142 = vpop.f32.mrf.mxu0
    %3143 = vdwg.mxu0
    %3144 = vmatpush.bf16.msra.mxu0 %v2528
    %3145 = vmatpush.bf16.msra.mxu0 %v2520
    %3146 = vmatpush.bf16.msra.mxu0 %v2512
    %3147 = vmatpush.bf16.msra.mxu0 %v2504
    %3148 = vmatpush.bf16.msra.mxu0 %v2496
    %3149 = vmatpush.bf16.msra.mxu0 %v2488
    %3150 = vmatpush.bf16.msra.mxu0 %v2480
    %3151 = vmatpush.bf16.msra.mxu0 %v2472
    %3152 = vmatmul.bf16.gmra.mxu0 %v2946
    %v3153 = vpop.f32.mrf.mxu0
    %v3154 = vadd.f32 %v3141, %v3153
    %v3155 = vpop.f32.mrf.mxu0
    %3156 = vdwg.mxu0
    %v3165 = vrot.slane %v2972, 4
    %v3166 = vrot.slane %v2998, 4
    %v3167 = vrot.slane %v3024, 4
    %v3168 = vrot.slane %v3050, 4
    %v3169 = vrot.slane %v3076, 4
    %v3170 = vrot.slane %v3102, 4
    %v3171 = vrot.slane %v3128, 4
    %v3172 = vrot.slane %v3154, 4
    %v3181 = vadd.f32 %v1533, %v3165
    %v3182 = vadd.f32 %v1561, %v3166
    %v3183 = vadd.f32 %v1589, %v3167
    %v3184 = vadd.f32 %v1617, %v3168
    %v3185 = vadd.f32 %v1645, %v3169
    %v3186 = vadd.f32 %v1673, %v3170
    %v3187 = vadd.f32 %v1701, %v3171
    %v3188 = vadd.f32 %v1729, %v3172
    %v3189 = vmul.f32 %v3181, 0.5
    %v3190 = vmul.f32 %v3182, 0.5
    %v3191 = vtanh.pop %v3189
    %v3192 = vtanh.pop %v3190
    %v3193 = vadd.f32 %v3191, 1.0
    %v3194 = vadd.f32 %v3192, 1.0
    %v3195 = vmul.f32 %v3193, 0.5
    %v3196 = vmul.f32 %v3194, 0.5
    %v3197 = vtanh.pop %v3185
    %v3198 = vtanh.pop %v3186
    %v3199 = vmul.f32 %v3187, 0.5
    %v3200 = vmul.f32 %v3188, 0.5
    %v3201 = vtanh.pop %v3199
    %v3202 = vtanh.pop %v3200
    %v3203 = vadd.f32 %v3201, 1.0
    %v3204 = vadd.f32 %v3202, 1.0
    %v3205 = vmul.f32 %v3203, 0.5
    %v3206 = vmul.f32 %v3204, 0.5
    %v3207 = vmul.f32 %v3183, 0.5
    %v3208 = vmul.f32 %v3184, 0.5
    %v3209 = vtanh.pop %v3207
    %v3210 = vtanh.pop %v3208
    %v3211 = vadd.f32 %v3209, 1.0
    %v3212 = vadd.f32 %v3210, 1.0
    %v3213 = vmul.f32 %v3211, 0.5
    %v3214 = vmul.f32 %v3212, 0.5
    %v3217 = vrot.slane %v2933, 6
    %v3218 = vrot.slane %v2934, 6
    %v3221 = vmul.f32 %v3213, %v3217
    %v3222 = vmul.f32 %v3214, %v3218
    %v3223 = vmul.f32 %v3195, %v3197
    %v3224 = vmul.f32 %v3196, %v3198
    %v3225 = vadd.f32 %v3221, %v3223
    %v3226 = vadd.f32 %v3222, %v3224
    %v3227 = vtanh.pop %v3225
    %v3228 = vtanh.pop %v3226
    %v3229 = vmul.f32 %v3205, %v3227
    %v3230 = vmul.f32 %v3206, %v3228
    %3231 = vst [vmem:[#allocation2] sm:$0x30] %v3229
    %3232 = vst [vmem:[#allocation2 + $0x8] sm:$0x30] %v3230
    %v3233 = vpack.c.bf16 %v3229, %v3229
    %v3234 = vpack.c.bf16 %v3230, %v3230
    %v3237 = vrot.slane %v3233, 2
    %v3238 = vrot.slane %v3234, 2
    %3241 = vmatpush.bf16.msra.mxu0 %v2457
    %3242 = vmatpush.bf16.msra.mxu0 %v2449
    %3243 = vmatpush.bf16.msra.mxu0 %v2441
    %3244 = vmatpush.bf16.msra.mxu0 %v2433
    %3245 = vmatpush.bf16.msra.mxu0 %v2425
    %3246 = vmatpush.bf16.msra.mxu0 %v2417
    %3247 = vmatpush.bf16.msra.mxu0 %v2409
    %3248 = vmatpush.bf16.msra.mxu0 %v2401
    %3249 = vmatmul.bf16.gmra.mxu0 %v3237
    %v3250 = vpop.f32.mrf.mxu0
    %v3251 = vadd.f32 0.0, %v3250
    %v3252 = vpop.f32.mrf.mxu0
    %3253 = vdwg.mxu0
    %3254 = vmatpush.bf16.msra.mxu0 %v2521
    %3255 = vmatpush.bf16.msra.mxu0 %v2513
    %3256 = vmatpush.bf16.msra.mxu0 %v2505
    %3257 = vmatpush.bf16.msra.mxu0 %v2497
    %3258 = vmatpush.bf16.msra.mxu0 %v2489
    %3259 = vmatpush.bf16.msra.mxu0 %v2481
    %3260 = vmatpush.bf16.msra.mxu0 %v2473
    %3261 = vmatpush.bf16.msra.mxu0 %v2465
    %3262 = vmatmul.bf16.gmra.mxu0 %v3238
    %v3263 = vpop.f32.mrf.mxu0
    %v3264 = vadd.f32 %v3251, %v3263
    %v3265 = vpop.f32.mrf.mxu0
    %3266 = vdwg.mxu0
    %3267 = vmatpush.bf16.msra.mxu0 %v2458
    %3268 = vmatpush.bf16.msra.mxu0 %v2450
    %3269 = vmatpush.bf16.msra.mxu0 %v2442
    %3270 = vmatpush.bf16.msra.mxu0 %v2434
    %3271 = vmatpush.bf16.msra.mxu0 %v2426
    %3272 = vmatpush.bf16.msra.mxu0 %v2418
    %3273 = vmatpush.bf16.msra.mxu0 %v2410
    %3274 = vmatpush.bf16.msra.mxu0 %v2402
    %3275 = vmatmul.bf16.gmra.mxu0 %v3237
    %v3276 = vpop.f32.mrf.mxu0
    %v3277 = vadd.f32 0.0, %v3276
    %v3278 = vpop.f32.mrf.mxu0
    %3279 = vdwg.mxu0
    %3280 = vmatpush.bf16.msra.mxu0 %v2522
    %3281 = vmatpush.bf16.msra.mxu0 %v2514
    %3282 = vmatpush.bf16.msra.mxu0 %v2506
    %3283 = vmatpush.bf16.msra.mxu0 %v2498
    %3284 = vmatpush.bf16.msra.mxu0 %v2490
    %3285 = vmatpush.bf16.msra.mxu0 %v2482
    %3286 = vmatpush.bf16.msra.mxu0 %v2474
    %3287 = vmatpush.bf16.msra.mxu0 %v2466
    %3288 = vmatmul.bf16.gmra.mxu0 %v3238
    %v3289 = vpop.f32.mrf.mxu0
    %v3290 = vadd.f32 %v3277, %v3289
    %v3291 = vpop.f32.mrf.mxu0
    %3292 = vdwg.mxu0
    %3293 = vmatpush.bf16.msra.mxu0 %v2459
    %3294 = vmatpush.bf16.msra.mxu0 %v2451
    %3295 = vmatpush.bf16.msra.mxu0 %v2443
    %3296 = vmatpush.bf16.msra.mxu0 %v2435
    %3297 = vmatpush.bf16.msra.mxu0 %v2427
    %3298 = vmatpush.bf16.msra.mxu0 %v2419
    %3299 = vmatpush.bf16.msra.mxu0 %v2411
    %3300 = vmatpush.bf16.msra.mxu0 %v2403
    %3301 = vmatmul.bf16.gmra.mxu0 %v3237
    %v3302 = vpop.f32.mrf.mxu0
    %v3303 = vadd.f32 0.0, %v3302
    %v3304 = vpop.f32.mrf.mxu0
    %3305 = vdwg.mxu0
    %3306 = vmatpush.bf16.msra.mxu0 %v2523
    %3307 = vmatpush.bf16.msra.mxu0 %v2515
    %3308 = vmatpush.bf16.msra.mxu0 %v2507
    %3309 = vmatpush.bf16.msra.mxu0 %v2499
    %3310 = vmatpush.bf16.msra.mxu0 %v2491
    %3311 = vmatpush.bf16.msra.mxu0 %v2483
    %3312 = vmatpush.bf16.msra.mxu0 %v2475
    %3313 = vmatpush.bf16.msra.mxu0 %v2467
    %3314 = vmatmul.bf16.gmra.mxu0 %v3238
    %v3315 = vpop.f32.mrf.mxu0
    %v3316 = vadd.f32 %v3303, %v3315
    %v3317 = vpop.f32.mrf.mxu0
    %3318 = vdwg.mxu0
    %3319 = vmatpush.bf16.msra.mxu0 %v2460
    %3320 = vmatpush.bf16.msra.mxu0 %v2452
    %3321 = vmatpush.bf16.msra.mxu0 %v2444
    %3322 = vmatpush.bf16.msra.mxu0 %v2436
    %3323 = vmatpush.bf16.msra.mxu0 %v2428
    %3324 = vmatpush.bf16.msra.mxu0 %v2420
    %3325 = vmatpush.bf16.msra.mxu0 %v2412
    %3326 = vmatpush.bf16.msra.mxu0 %v2404
    %3327 = vmatmul.bf16.gmra.mxu0 %v3237
    %v3328 = vpop.f32.mrf.mxu0
    %v3329 = vadd.f32 0.0, %v3328
    %v3330 = vpop.f32.mrf.mxu0
    %3331 = vdwg.mxu0
    %3332 = vmatpush.bf16.msra.mxu0 %v2524
    %3333 = vmatpush.bf16.msra.mxu0 %v2516
    %3334 = vmatpush.bf16.msra.mxu0 %v2508
    %3335 = vmatpush.bf16.msra.mxu0 %v2500
    %3336 = vmatpush.bf16.msra.mxu0 %v2492
    %3337 = vmatpush.bf16.msra.mxu0 %v2484
    %3338 = vmatpush.bf16.msra.mxu0 %v2476
    %3339 = vmatpush.bf16.msra.mxu0 %v2468
    %3340 = vmatmul.bf16.gmra.mxu0 %v3238
    %v3341 = vpop.f32.mrf.mxu0
    %v3342 = vadd.f32 %v3329, %v3341
    %v3343 = vpop.f32.mrf.mxu0
    %3344 = vdwg.mxu0
    %3345 = vmatpush.bf16.msra.mxu0 %v2461
    %3346 = vmatpush.bf16.msra.mxu0 %v2453
    %3347 = vmatpush.bf16.msra.mxu0 %v2445
    %3348 = vmatpush.bf16.msra.mxu0 %v2437
    %3349 = vmatpush.bf16.msra.mxu0 %v2429
    %3350 = vmatpush.bf16.msra.mxu0 %v2421
    %3351 = vmatpush.bf16.msra.mxu0 %v2413
    %3352 = vmatpush.bf16.msra.mxu0 %v2405
    %3353 = vmatmul.bf16.gmra.mxu0 %v3237
    %v3354 = vpop.f32.mrf.mxu0
    %v3355 = vadd.f32 0.0, %v3354
    %v3356 = vpop.f32.mrf.mxu0
    %3357 = vdwg.mxu0
    %3358 = vmatpush.bf16.msra.mxu0 %v2525
    %3359 = vmatpush.bf16.msra.mxu0 %v2517
    %3360 = vmatpush.bf16.msra.mxu0 %v2509
    %3361 = vmatpush.bf16.msra.mxu0 %v2501
    %3362 = vmatpush.bf16.msra.mxu0 %v2493
    %3363 = vmatpush.bf16.msra.mxu0 %v2485
    %3364 = vmatpush.bf16.msra.mxu0 %v2477
    %3365 = vmatpush.bf16.msra.mxu0 %v2469
    %3366 = vmatmul.bf16.gmra.mxu0 %v3238
    %v3367 = vpop.f32.mrf.mxu0
    %v3368 = vadd.f32 %v3355, %v3367
    %v3369 = vpop.f32.mrf.mxu0
    %3370 = vdwg.mxu0
    %3371 = vmatpush.bf16.msra.mxu0 %v2462
    %3372 = vmatpush.bf16.msra.mxu0 %v2454
    %3373 = vmatpush.bf16.msra.mxu0 %v2446
    %3374 = vmatpush.bf16.msra.mxu0 %v2438
    %3375 = vmatpush.bf16.msra.mxu0 %v2430
    %3376 = vmatpush.bf16.msra.mxu0 %v2422
    %3377 = vmatpush.bf16.msra.mxu0 %v2414
    %3378 = vmatpush.bf16.msra.mxu0 %v2406
    %3379 = vmatmul.bf16.gmra.mxu0 %v3237
    %v3380 = vpop.f32.mrf.mxu0
    %v3381 = vadd.f32 0.0, %v3380
    %v3382 = vpop.f32.mrf.mxu0
    %3383 = vdwg.mxu0
    %3384 = vmatpush.bf16.msra.mxu0 %v2526
    %3385 = vmatpush.bf16.msra.mxu0 %v2518
    %3386 = vmatpush.bf16.msra.mxu0 %v2510
    %3387 = vmatpush.bf16.msra.mxu0 %v2502
    %3388 = vmatpush.bf16.msra.mxu0 %v2494
    %3389 = vmatpush.bf16.msra.mxu0 %v2486
    %3390 = vmatpush.bf16.msra.mxu0 %v2478
    %3391 = vmatpush.bf16.msra.mxu0 %v2470
    %3392 = vmatmul.bf16.gmra.mxu0 %v3238
    %v3393 = vpop.f32.mrf.mxu0
    %v3394 = vadd.f32 %v3381, %v3393
    %v3395 = vpop.f32.mrf.mxu0
    %3396 = vdwg.mxu0
    %3397 = vmatpush.bf16.msra.mxu0 %v2463
    %3398 = vmatpush.bf16.msra.mxu0 %v2455
    %3399 = vmatpush.bf16.msra.mxu0 %v2447
    %3400 = vmatpush.bf16.msra.mxu0 %v2439
    %3401 = vmatpush.bf16.msra.mxu0 %v2431
    %3402 = vmatpush.bf16.msra.mxu0 %v2423
    %3403 = vmatpush.bf16.msra.mxu0 %v2415
    %3404 = vmatpush.bf16.msra.mxu0 %v2407
    %3405 = vmatmul.bf16.gmra.mxu0 %v3237
    %v3406 = vpop.f32.mrf.mxu0
    %v3407 = vadd.f32 0.0, %v3406
    %v3408 = vpop.f32.mrf.mxu0
    %3409 = vdwg.mxu0
    %3410 = vmatpush.bf16.msra.mxu0 %v2527
    %3411 = vmatpush.bf16.msra.mxu0 %v2519
    %3412 = vmatpush.bf16.msra.mxu0 %v2511
    %3413 = vmatpush.bf16.msra.mxu0 %v2503
    %3414 = vmatpush.bf16.msra.mxu0 %v2495
    %3415 = vmatpush.bf16.msra.mxu0 %v2487
    %3416 = vmatpush.bf16.msra.mxu0 %v2479
    %3417 = vmatpush.bf16.msra.mxu0 %v2471
    %3418 = vmatmul.bf16.gmra.mxu0 %v3238
    %v3419 = vpop.f32.mrf.mxu0
    %v3420 = vadd.f32 %v3407, %v3419
    %v3421 = vpop.f32.mrf.mxu0
    %3422 = vdwg.mxu0
    %3423 = vmatpush.bf16.msra.mxu0 %v2464
    %3424 = vmatpush.bf16.msra.mxu0 %v2456
    %3425 = vmatpush.bf16.msra.mxu0 %v2448
    %3426 = vmatpush.bf16.msra.mxu0 %v2440
    %3427 = vmatpush.bf16.msra.mxu0 %v2432
    %3428 = vmatpush.bf16.msra.mxu0 %v2424
    %3429 = vmatpush.bf16.msra.mxu0 %v2416
    %3430 = vmatpush.bf16.msra.mxu0 %v2408
    %3431 = vmatmul.bf16.gmra.mxu0 %v3237
    %v3432 = vpop.f32.mrf.mxu0
    %v3433 = vadd.f32 0.0, %v3432
    %v3434 = vpop.f32.mrf.mxu0
    %3435 = vdwg.mxu0
    %3436 = vmatpush.bf16.msra.mxu0 %v2528
    %3437 = vmatpush.bf16.msra.mxu0 %v2520
    %3438 = vmatpush.bf16.msra.mxu0 %v2512
    %3439 = vmatpush.bf16.msra.mxu0 %v2504
    %3440 = vmatpush.bf16.msra.mxu0 %v2496
    %3441 = vmatpush.bf16.msra.mxu0 %v2488
    %3442 = vmatpush.bf16.msra.mxu0 %v2480
    %3443 = vmatpush.bf16.msra.mxu0 %v2472
    %3444 = vmatmul.bf16.gmra.mxu0 %v3238
    %v3445 = vpop.f32.mrf.mxu0
    %v3446 = vadd.f32 %v3433, %v3445
    %v3447 = vpop.f32.mrf.mxu0
    %3448 = vdwg.mxu0
    %v3457 = vrot.slane %v3264, 2
    %v3458 = vrot.slane %v3290, 2
    %v3459 = vrot.slane %v3316, 2
    %v3460 = vrot.slane %v3342, 2
    %v3461 = vrot.slane %v3368, 2
    %v3462 = vrot.slane %v3394, 2
    %v3463 = vrot.slane %v3420, 2
    %v3464 = vrot.slane %v3446, 2
    %v3473 = vadd.f32 %v1533, %v3457
    %v3474 = vadd.f32 %v1561, %v3458
    %v3475 = vadd.f32 %v1589, %v3459
    %v3476 = vadd.f32 %v1617, %v3460
    %v3477 = vadd.f32 %v1645, %v3461
    %v3478 = vadd.f32 %v1673, %v3462
    %v3479 = vadd.f32 %v1701, %v3463
    %v3480 = vadd.f32 %v1729, %v3464
    %v3481 = vmul.f32 %v3473, 0.5
    %v3482 = vmul.f32 %v3474, 0.5
    %v3483 = vtanh.pop %v3481
    %v3484 = vtanh.pop %v3482
    %v3485 = vadd.f32 %v3483, 1.0
    %v3486 = vadd.f32 %v3484, 1.0
    %v3487 = vmul.f32 %v3485, 0.5
    %v3488 = vmul.f32 %v3486, 0.5
    %v3489 = vtanh.pop %v3477
    %v3490 = vtanh.pop %v3478
    %v3491 = vmul.f32 %v3479, 0.5
    %v3492 = vmul.f32 %v3480, 0.5
    %v3493 = vtanh.pop %v3491
    %v3494 = vtanh.pop %v3492
    %v3495 = vadd.f32 %v3493, 1.0
    %v3496 = vadd.f32 %v3494, 1.0
    %v3497 = vmul.f32 %v3495, 0.5
    %v3498 = vmul.f32 %v3496, 0.5
    %v3499 = vmul.f32 %v3475, 0.5
    %v3500 = vmul.f32 %v3476, 0.5
    %v3501 = vtanh.pop %v3499
    %v3502 = vtanh.pop %v3500
    %v3503 = vadd.f32 %v3501, 1.0
    %v3504 = vadd.f32 %v3502, 1.0
    %v3505 = vmul.f32 %v3503, 0.5
    %v3506 = vmul.f32 %v3504, 0.5
    %v3509 = vrot.slane %v3225, 6
    %v3510 = vrot.slane %v3226, 6
    %v3513 = vmul.f32 %v3505, %v3509
    %v3514 = vmul.f32 %v3506, %v3510
    %v3515 = vmul.f32 %v3487, %v3489
    %v3516 = vmul.f32 %v3488, %v3490
    %v3517 = vadd.f32 %v3513, %v3515
    %v3518 = vadd.f32 %v3514, %v3516
    %v3519 = vtanh.pop %v3517
    %v3520 = vtanh.pop %v3518
    %v3521 = vmul.f32 %v3497, %v3519
    %v3522 = vmul.f32 %v3498, %v3520
    %3523 = vst [vmem:[#allocation2] sm:$0xc0] %v3521
    %3524 = vst [vmem:[#allocation2 + $0x8] sm:$0xc0] %v3522
    %v3525 = vpack.c.bf16 %v3521, %v3521
    %v3526 = vpack.c.bf16 %v3522, %v3522
    %v3529 = vrot.slane %v3525, 3
    %v3530 = vrot.slane %v3526, 3
    %3533 = vmatpush.bf16.msra.mxu0 %v2457
    %3534 = vmatpush.bf16.msra.mxu0 %v2449
    %3535 = vmatpush.bf16.msra.mxu0 %v2441
    %3536 = vmatpush.bf16.msra.mxu0 %v2433
    %3537 = vmatpush.bf16.msra.mxu0 %v2425
    %3538 = vmatpush.bf16.msra.mxu0 %v2417
    %3539 = vmatpush.bf16.msra.mxu0 %v2409
    %3540 = vmatpush.bf16.msra.mxu0 %v2401
    %3541 = vmatmul.bf16.gmra.mxu0 %v3529
    %v3542 = vpop.f32.mrf.mxu0
    %v3543 = vadd.f32 0.0, %v3542
    %v3544 = vpop.f32.mrf.mxu0
    %3545 = vdwg.mxu0
    %3546 = vmatpush.bf16.msra.mxu0 %v2521
    %3547 = vmatpush.bf16.msra.mxu0 %v2513
    %3548 = vmatpush.bf16.msra.mxu0 %v2505
    %3549 = vmatpush.bf16.msra.mxu0 %v2497
    %3550 = vmatpush.bf16.msra.mxu0 %v2489
    %3551 = vmatpush.bf16.msra.mxu0 %v2481
    %3552 = vmatpush.bf16.msra.mxu0 %v2473
    %3553 = vmatpush.bf16.msra.mxu0 %v2465
    %3554 = vmatmul.bf16.gmra.mxu0 %v3530
    %v3555 = vpop.f32.mrf.mxu0
    %v3556 = vadd.f32 %v3543, %v3555
    %v3557 = vpop.f32.mrf.mxu0
    %3558 = vdwg.mxu0
    %3559 = vmatpush.bf16.msra.mxu0 %v2458
    %3560 = vmatpush.bf16.msra.mxu0 %v2450
    %3561 = vmatpush.bf16.msra.mxu0 %v2442
    %3562 = vmatpush.bf16.msra.mxu0 %v2434
    %3563 = vmatpush.bf16.msra.mxu0 %v2426
    %3564 = vmatpush.bf16.msra.mxu0 %v2418
    %3565 = vmatpush.bf16.msra.mxu0 %v2410
    %3566 = vmatpush.bf16.msra.mxu0 %v2402
    %3567 = vmatmul.bf16.gmra.mxu0 %v3529
    %v3568 = vpop.f32.mrf.mxu0
    %v3569 = vadd.f32 0.0, %v3568
    %v3570 = vpop.f32.mrf.mxu0
    %3571 = vdwg.mxu0
    %3572 = vmatpush.bf16.msra.mxu0 %v2522
    %3573 = vmatpush.bf16.msra.mxu0 %v2514
    %3574 = vmatpush.bf16.msra.mxu0 %v2506
    %3575 = vmatpush.bf16.msra.mxu0 %v2498
    %3576 = vmatpush.bf16.msra.mxu0 %v2490
    %3577 = vmatpush.bf16.msra.mxu0 %v2482
    %3578 = vmatpush.bf16.msra.mxu0 %v2474
    %3579 = vmatpush.bf16.msra.mxu0 %v2466
    %3580 = vmatmul.bf16.gmra.mxu0 %v3530
    %v3581 = vpop.f32.mrf.mxu0
    %v3582 = vadd.f32 %v3569, %v3581
    %v3583 = vpop.f32.mrf.mxu0
    %3584 = vdwg.mxu0
    %3585 = vmatpush.bf16.msra.mxu0 %v2459
    %3586 = vmatpush.bf16.msra.mxu0 %v2451
    %3587 = vmatpush.bf16.msra.mxu0 %v2443
    %3588 = vmatpush.bf16.msra.mxu0 %v2435
    %3589 = vmatpush.bf16.msra.mxu0 %v2427
    %3590 = vmatpush.bf16.msra.mxu0 %v2419
    %3591 = vmatpush.bf16.msra.mxu0 %v2411
    %3592 = vmatpush.bf16.msra.mxu0 %v2403
    %3593 = vmatmul.bf16.gmra.mxu0 %v3529
    %v3594 = vpop.f32.mrf.mxu0
    %v3595 = vadd.f32 0.0, %v3594
    %v3596 = vpop.f32.mrf.mxu0
    %3597 = vdwg.mxu0
    %3598 = vmatpush.bf16.msra.mxu0 %v2523
    %3599 = vmatpush.bf16.msra.mxu0 %v2515
    %3600 = vmatpush.bf16.msra.mxu0 %v2507
    %3601 = vmatpush.bf16.msra.mxu0 %v2499
    %3602 = vmatpush.bf16.msra.mxu0 %v2491
    %3603 = vmatpush.bf16.msra.mxu0 %v2483
    %3604 = vmatpush.bf16.msra.mxu0 %v2475
    %3605 = vmatpush.bf16.msra.mxu0 %v2467
    %3606 = vmatmul.bf16.gmra.mxu0 %v3530
    %v3607 = vpop.f32.mrf.mxu0
    %v3608 = vadd.f32 %v3595, %v3607
    %v3609 = vpop.f32.mrf.mxu0
    %3610 = vdwg.mxu0
    %3611 = vmatpush.bf16.msra.mxu0 %v2460
    %3612 = vmatpush.bf16.msra.mxu0 %v2452
    %3613 = vmatpush.bf16.msra.mxu0 %v2444
    %3614 = vmatpush.bf16.msra.mxu0 %v2436
    %3615 = vmatpush.bf16.msra.mxu0 %v2428
    %3616 = vmatpush.bf16.msra.mxu0 %v2420
    %3617 = vmatpush.bf16.msra.mxu0 %v2412
    %3618 = vmatpush.bf16.msra.mxu0 %v2404
    %3619 = vmatmul.bf16.gmra.mxu0 %v3529
    %v3620 = vpop.f32.mrf.mxu0
    %v3621 = vadd.f32 0.0, %v3620
    %v3622 = vpop.f32.mrf.mxu0
    %3623 = vdwg.mxu0
    %3624 = vmatpush.bf16.msra.mxu0 %v2524
    %3625 = vmatpush.bf16.msra.mxu0 %v2516
    %3626 = vmatpush.bf16.msra.mxu0 %v2508
    %3627 = vmatpush.bf16.msra.mxu0 %v2500
    %3628 = vmatpush.bf16.msra.mxu0 %v2492
    %3629 = vmatpush.bf16.msra.mxu0 %v2484
    %3630 = vmatpush.bf16.msra.mxu0 %v2476
    %3631 = vmatpush.bf16.msra.mxu0 %v2468
    %3632 = vmatmul.bf16.gmra.mxu0 %v3530
    %v3633 = vpop.f32.mrf.mxu0
    %v3634 = vadd.f32 %v3621, %v3633
    %v3635 = vpop.f32.mrf.mxu0
    %3636 = vdwg.mxu0
    %3637 = vmatpush.bf16.msra.mxu0 %v2461
    %3638 = vmatpush.bf16.msra.mxu0 %v2453
    %3639 = vmatpush.bf16.msra.mxu0 %v2445
    %3640 = vmatpush.bf16.msra.mxu0 %v2437
    %3641 = vmatpush.bf16.msra.mxu0 %v2429
    %3642 = vmatpush.bf16.msra.mxu0 %v2421
    %3643 = vmatpush.bf16.msra.mxu0 %v2413
    %3644 = vmatpush.bf16.msra.mxu0 %v2405
    %3645 = vmatmul.bf16.gmra.mxu0 %v3529
    %v3646 = vpop.f32.mrf.mxu0
    %v3647 = vadd.f32 0.0, %v3646
    %v3648 = vpop.f32.mrf.mxu0
    %3649 = vdwg.mxu0
    %3650 = vmatpush.bf16.msra.mxu0 %v2525
    %3651 = vmatpush.bf16.msra.mxu0 %v2517
    %3652 = vmatpush.bf16.msra.mxu0 %v2509
    %3653 = vmatpush.bf16.msra.mxu0 %v2501
    %3654 = vmatpush.bf16.msra.mxu0 %v2493
    %3655 = vmatpush.bf16.msra.mxu0 %v2485
    %3656 = vmatpush.bf16.msra.mxu0 %v2477
    %3657 = vmatpush.bf16.msra.mxu0 %v2469
    %3658 = vmatmul.bf16.gmra.mxu0 %v3530
    %v3659 = vpop.f32.mrf.mxu0
    %v3660 = vadd.f32 %v3647, %v3659
    %v3661 = vpop.f32.mrf.mxu0
    %3662 = vdwg.mxu0
    %3663 = vmatpush.bf16.msra.mxu0 %v2462
    %3664 = vmatpush.bf16.msra.mxu0 %v2454
    %3665 = vmatpush.bf16.msra.mxu0 %v2446
    %3666 = vmatpush.bf16.msra.mxu0 %v2438
    %3667 = vmatpush.bf16.msra.mxu0 %v2430
    %3668 = vmatpush.bf16.msra.mxu0 %v2422
    %3669 = vmatpush.bf16.msra.mxu0 %v2414
    %3670 = vmatpush.bf16.msra.mxu0 %v2406
    %3671 = vmatmul.bf16.gmra.mxu0 %v3529
    %v3672 = vpop.f32.mrf.mxu0
    %v3673 = vadd.f32 0.0, %v3672
    %v3674 = vpop.f32.mrf.mxu0
    %3675 = vdwg.mxu0
    %3676 = vmatpush.bf16.msra.mxu0 %v2526
    %3677 = vmatpush.bf16.msra.mxu0 %v2518
    %3678 = vmatpush.bf16.msra.mxu0 %v2510
    %3679 = vmatpush.bf16.msra.mxu0 %v2502
    %3680 = vmatpush.bf16.msra.mxu0 %v2494
    %3681 = vmatpush.bf16.msra.mxu0 %v2486
    %3682 = vmatpush.bf16.msra.mxu0 %v2478
    %3683 = vmatpush.bf16.msra.mxu0 %v2470
    %3684 = vmatmul.bf16.gmra.mxu0 %v3530
    %v3685 = vpop.f32.mrf.mxu0
    %v3686 = vadd.f32 %v3673, %v3685
    %v3687 = vpop.f32.mrf.mxu0
    %3688 = vdwg.mxu0
    %3689 = vmatpush.bf16.msra.mxu0 %v2463
    %3690 = vmatpush.bf16.msra.mxu0 %v2455
    %3691 = vmatpush.bf16.msra.mxu0 %v2447
    %3692 = vmatpush.bf16.msra.mxu0 %v2439
    %3693 = vmatpush.bf16.msra.mxu0 %v2431
    %3694 = vmatpush.bf16.msra.mxu0 %v2423
    %3695 = vmatpush.bf16.msra.mxu0 %v2415
    %3696 = vmatpush.bf16.msra.mxu0 %v2407
    %3697 = vmatmul.bf16.gmra.mxu0 %v3529
    %v3698 = vpop.f32.mrf.mxu0
    %v3699 = vadd.f32 0.0, %v3698
    %v3700 = vpop.f32.mrf.mxu0
    %3701 = vdwg.mxu0
    %3702 = vmatpush.bf16.msra.mxu0 %v2527
    %3703 = vmatpush.bf16.msra.mxu0 %v2519
    %3704 = vmatpush.bf16.msra.mxu0 %v2511
    %3705 = vmatpush.bf16.msra.mxu0 %v2503
    %3706 = vmatpush.bf16.msra.mxu0 %v2495
    %3707 = vmatpush.bf16.msra.mxu0 %v2487
    %3708 = vmatpush.bf16.msra.mxu0 %v2479
    %3709 = vmatpush.bf16.msra.mxu0 %v2471
    %3710 = vmatmul.bf16.gmra.mxu0 %v3530
    %v3711 = vpop.f32.mrf.mxu0
    %v3712 = vadd.f32 %v3699, %v3711
    %v3713 = vpop.f32.mrf.mxu0
    %3714 = vdwg.mxu0
    %3715 = vmatpush.bf16.msra.mxu0 %v2464
    %3716 = vmatpush.bf16.msra.mxu0 %v2456
    %3717 = vmatpush.bf16.msra.mxu0 %v2448
    %3718 = vmatpush.bf16.msra.mxu0 %v2440
    %3719 = vmatpush.bf16.msra.mxu0 %v2432
    %3720 = vmatpush.bf16.msra.mxu0 %v2424
    %3721 = vmatpush.bf16.msra.mxu0 %v2416
    %3722 = vmatpush.bf16.msra.mxu0 %v2408
    %3723 = vmatmul.bf16.gmra.mxu0 %v3529
    %v3724 = vpop.f32.mrf.mxu0
    %v3725 = vadd.f32 0.0, %v3724
    %v3726 = vpop.f32.mrf.mxu0
    %3727 = vdwg.mxu0
    %3728 = vmatpush.bf16.msra.mxu0 %v2528
    %3729 = vmatpush.bf16.msra.mxu0 %v2520
    %3730 = vmatpush.bf16.msra.mxu0 %v2512
    %3731 = vmatpush.bf16.msra.mxu0 %v2504
    %3732 = vmatpush.bf16.msra.mxu0 %v2496
    %3733 = vmatpush.bf16.msra.mxu0 %v2488
    %3734 = vmatpush.bf16.msra.mxu0 %v2480
    %3735 = vmatpush.bf16.msra.mxu0 %v2472
    %3736 = vmatmul.bf16.gmra.mxu0 %v3530
    %v3737 = vpop.f32.mrf.mxu0
    %v3738 = vadd.f32 %v3725, %v3737
    %v3739 = vpop.f32.mrf.mxu0
    %3740 = vdwg.mxu0
    %v3741 = vadd.f32 %v1535, %v3556
    %v3742 = vadd.f32 %v1563, %v3582
    %v3743 = vadd.f32 %v1591, %v3608
    %v3744 = vadd.f32 %v1619, %v3634
    %v3745 = vadd.f32 %v1647, %v3660
    %v3746 = vadd.f32 %v1675, %v3686
    %v3747 = vadd.f32 %v1703, %v3712
    %v3748 = vadd.f32 %v1731, %v3738
    %v3749 = vmul.f32 %v3741, 0.5
    %v3750 = vmul.f32 %v3742, 0.5
    %v3751 = vtanh.pop %v3749
    %v3752 = vtanh.pop %v3750
    %v3753 = vadd.f32 %v3751, 1.0
    %v3754 = vadd.f32 %v3752, 1.0
    %v3755 = vmul.f32 %v3753, 0.5
    %v3756 = vmul.f32 %v3754, 0.5
    %v3757 = vtanh.pop %v3745
    %v3758 = vtanh.pop %v3746
    %v3759 = vmul.f32 %v3747, 0.5
    %v3760 = vmul.f32 %v3748, 0.5
    %v3761 = vtanh.pop %v3759
    %v3762 = vtanh.pop %v3760
    %v3763 = vadd.f32 %v3761, 1.0
    %v3764 = vadd.f32 %v3762, 1.0
    %v3765 = vmul.f32 %v3763, 0.5
    %v3766 = vmul.f32 %v3764, 0.5
    %v3767 = vmul.f32 %v3743, 0.5
    %v3768 = vmul.f32 %v3744, 0.5
    %v3769 = vtanh.pop %v3767
    %v3770 = vtanh.pop %v3768
    %v3771 = vadd.f32 %v3769, 1.0
    %v3772 = vadd.f32 %v3770, 1.0
    %v3773 = vmul.f32 %v3771, 0.5
    %v3774 = vmul.f32 %v3772, 0.5
    %v3777 = vrot.slane %v3517, 6
    %v3778 = vrot.slane %v3518, 6
    %v3781 = vmul.f32 %v3773, %v3777
    %v3782 = vmul.f32 %v3774, %v3778
    %v3783 = vmul.f32 %v3755, %v3757
    %v3784 = vmul.f32 %v3756, %v3758
    %v3785 = vadd.f32 %v3781, %v3783
    %v3786 = vadd.f32 %v3782, %v3784
    %v3787 = vtanh.pop %v3785
    %v3788 = vtanh.pop %v3786
    %v3789 = vmul.f32 %v3765, %v3787
    %v3790 = vmul.f32 %v3766, %v3788
    %3791 = vst [vmem:[#allocation2 + $0x10] sm:$0x3] %v3789
    %3792 = vst [vmem:[#allocation2 + $0x18] sm:$0x3] %v3790
    %v3793 = vpack.c.bf16 %v3789, %v3789
    %v3794 = vpack.c.bf16 %v3790, %v3790
    %3795 = vmatpush.bf16.msra.mxu0 %v2457
    %3796 = vmatpush.bf16.msra.mxu0 %v2449
    %3797 = vmatpush.bf16.msra.mxu0 %v2441
    %3798 = vmatpush.bf16.msra.mxu0 %v2433
    %3799 = vmatpush.bf16.msra.mxu0 %v2425
    %3800 = vmatpush.bf16.msra.mxu0 %v2417
    %3801 = vmatpush.bf16.msra.mxu0 %v2409
    %3802 = vmatpush.bf16.msra.mxu0 %v2401
    %3803 = vmatmul.bf16.gmra.mxu0 %v3793
    %v3804 = vpop.f32.mrf.mxu0
    %v3805 = vadd.f32 0.0, %v3804
    %v3806 = vpop.f32.mrf.mxu0
    %3807 = vdwg.mxu0
    %3808 = vmatpush.bf16.msra.mxu0 %v2521
    %3809 = vmatpush.bf16.msra.mxu0 %v2513
    %3810 = vmatpush.bf16.msra.mxu0 %v2505
    %3811 = vmatpush.bf16.msra.mxu0 %v2497
    %3812 = vmatpush.bf16.msra.mxu0 %v2489
    %3813 = vmatpush.bf16.msra.mxu0 %v2481
    %3814 = vmatpush.bf16.msra.mxu0 %v2473
    %3815 = vmatpush.bf16.msra.mxu0 %v2465
    %3816 = vmatmul.bf16.gmra.mxu0 %v3794
    %v3817 = vpop.f32.mrf.mxu0
    %v3818 = vadd.f32 %v3805, %v3817
    %v3819 = vpop.f32.mrf.mxu0
    %3820 = vdwg.mxu0
    %3821 = vmatpush.bf16.msra.mxu0 %v2458
    %3822 = vmatpush.bf16.msra.mxu0 %v2450
    %3823 = vmatpush.bf16.msra.mxu0 %v2442
    %3824 = vmatpush.bf16.msra.mxu0 %v2434
    %3825 = vmatpush.bf16.msra.mxu0 %v2426
    %3826 = vmatpush.bf16.msra.mxu0 %v2418
    %3827 = vmatpush.bf16.msra.mxu0 %v2410
    %3828 = vmatpush.bf16.msra.mxu0 %v2402
    %3829 = vmatmul.bf16.gmra.mxu0 %v3793
    %v3830 = vpop.f32.mrf.mxu0
    %v3831 = vadd.f32 0.0, %v3830
    %v3832 = vpop.f32.mrf.mxu0
    %3833 = vdwg.mxu0
    %3834 = vmatpush.bf16.msra.mxu0 %v2522
    %3835 = vmatpush.bf16.msra.mxu0 %v2514
    %3836 = vmatpush.bf16.msra.mxu0 %v2506
    %3837 = vmatpush.bf16.msra.mxu0 %v2498
    %3838 = vmatpush.bf16.msra.mxu0 %v2490
    %3839 = vmatpush.bf16.msra.mxu0 %v2482
    %3840 = vmatpush.bf16.msra.mxu0 %v2474
    %3841 = vmatpush.bf16.msra.mxu0 %v2466
    %3842 = vmatmul.bf16.gmra.mxu0 %v3794
    %v3843 = vpop.f32.mrf.mxu0
    %v3844 = vadd.f32 %v3831, %v3843
    %v3845 = vpop.f32.mrf.mxu0
    %3846 = vdwg.mxu0
    %3847 = vmatpush.bf16.msra.mxu0 %v2459
    %3848 = vmatpush.bf16.msra.mxu0 %v2451
    %3849 = vmatpush.bf16.msra.mxu0 %v2443
    %3850 = vmatpush.bf16.msra.mxu0 %v2435
    %3851 = vmatpush.bf16.msra.mxu0 %v2427
    %3852 = vmatpush.bf16.msra.mxu0 %v2419
    %3853 = vmatpush.bf16.msra.mxu0 %v2411
    %3854 = vmatpush.bf16.msra.mxu0 %v2403
    %3855 = vmatmul.bf16.gmra.mxu0 %v3793
    %v3856 = vpop.f32.mrf.mxu0
    %v3857 = vadd.f32 0.0, %v3856
    %v3858 = vpop.f32.mrf.mxu0
    %3859 = vdwg.mxu0
    %3860 = vmatpush.bf16.msra.mxu0 %v2523
    %3861 = vmatpush.bf16.msra.mxu0 %v2515
    %3862 = vmatpush.bf16.msra.mxu0 %v2507
    %3863 = vmatpush.bf16.msra.mxu0 %v2499
    %3864 = vmatpush.bf16.msra.mxu0 %v2491
    %3865 = vmatpush.bf16.msra.mxu0 %v2483
    %3866 = vmatpush.bf16.msra.mxu0 %v2475
    %3867 = vmatpush.bf16.msra.mxu0 %v2467
    %3868 = vmatmul.bf16.gmra.mxu0 %v3794
    %v3869 = vpop.f32.mrf.mxu0
    %v3870 = vadd.f32 %v3857, %v3869
    %v3871 = vpop.f32.mrf.mxu0
    %3872 = vdwg.mxu0
    %3873 = vmatpush.bf16.msra.mxu0 %v2460
    %3874 = vmatpush.bf16.msra.mxu0 %v2452
    %3875 = vmatpush.bf16.msra.mxu0 %v2444
    %3876 = vmatpush.bf16.msra.mxu0 %v2436
    %3877 = vmatpush.bf16.msra.mxu0 %v2428
    %3878 = vmatpush.bf16.msra.mxu0 %v2420
    %3879 = vmatpush.bf16.msra.mxu0 %v2412
    %3880 = vmatpush.bf16.msra.mxu0 %v2404
    %3881 = vmatmul.bf16.gmra.mxu0 %v3793
    %v3882 = vpop.f32.mrf.mxu0
    %v3883 = vadd.f32 0.0, %v3882
    %v3884 = vpop.f32.mrf.mxu0
    %3885 = vdwg.mxu0
    %3886 = vmatpush.bf16.msra.mxu0 %v2524
    %3887 = vmatpush.bf16.msra.mxu0 %v2516
    %3888 = vmatpush.bf16.msra.mxu0 %v2508
    %3889 = vmatpush.bf16.msra.mxu0 %v2500
    %3890 = vmatpush.bf16.msra.mxu0 %v2492
    %3891 = vmatpush.bf16.msra.mxu0 %v2484
    %3892 = vmatpush.bf16.msra.mxu0 %v2476
    %3893 = vmatpush.bf16.msra.mxu0 %v2468
    %3894 = vmatmul.bf16.gmra.mxu0 %v3794
    %v3895 = vpop.f32.mrf.mxu0
    %v3896 = vadd.f32 %v3883, %v3895
    %v3897 = vpop.f32.mrf.mxu0
    %3898 = vdwg.mxu0
    %3899 = vmatpush.bf16.msra.mxu0 %v2461
    %3900 = vmatpush.bf16.msra.mxu0 %v2453
    %3901 = vmatpush.bf16.msra.mxu0 %v2445
    %3902 = vmatpush.bf16.msra.mxu0 %v2437
    %3903 = vmatpush.bf16.msra.mxu0 %v2429
    %3904 = vmatpush.bf16.msra.mxu0 %v2421
    %3905 = vmatpush.bf16.msra.mxu0 %v2413
    %3906 = vmatpush.bf16.msra.mxu0 %v2405
    %3907 = vmatmul.bf16.gmra.mxu0 %v3793
    %v3908 = vpop.f32.mrf.mxu0
    %v3909 = vadd.f32 0.0, %v3908
    %v3910 = vpop.f32.mrf.mxu0
    %3911 = vdwg.mxu0
    %3912 = vmatpush.bf16.msra.mxu0 %v2525
    %3913 = vmatpush.bf16.msra.mxu0 %v2517
    %3914 = vmatpush.bf16.msra.mxu0 %v2509
    %3915 = vmatpush.bf16.msra.mxu0 %v2501
    %3916 = vmatpush.bf16.msra.mxu0 %v2493
    %3917 = vmatpush.bf16.msra.mxu0 %v2485
    %3918 = vmatpush.bf16.msra.mxu0 %v2477
    %3919 = vmatpush.bf16.msra.mxu0 %v2469
    %3920 = vmatmul.bf16.gmra.mxu0 %v3794
    %v3921 = vpop.f32.mrf.mxu0
    %v3922 = vadd.f32 %v3909, %v3921
    %v3923 = vpop.f32.mrf.mxu0
    %3924 = vdwg.mxu0
    %3925 = vmatpush.bf16.msra.mxu0 %v2462
    %3926 = vmatpush.bf16.msra.mxu0 %v2454
    %3927 = vmatpush.bf16.msra.mxu0 %v2446
    %3928 = vmatpush.bf16.msra.mxu0 %v2438
    %3929 = vmatpush.bf16.msra.mxu0 %v2430
    %3930 = vmatpush.bf16.msra.mxu0 %v2422
    %3931 = vmatpush.bf16.msra.mxu0 %v2414
    %3932 = vmatpush.bf16.msra.mxu0 %v2406
    %3933 = vmatmul.bf16.gmra.mxu0 %v3793
    %v3934 = vpop.f32.mrf.mxu0
    %v3935 = vadd.f32 0.0, %v3934
    %v3936 = vpop.f32.mrf.mxu0
    %3937 = vdwg.mxu0
    %3938 = vmatpush.bf16.msra.mxu0 %v2526
    %3939 = vmatpush.bf16.msra.mxu0 %v2518
    %3940 = vmatpush.bf16.msra.mxu0 %v2510
    %3941 = vmatpush.bf16.msra.mxu0 %v2502
    %3942 = vmatpush.bf16.msra.mxu0 %v2494
    %3943 = vmatpush.bf16.msra.mxu0 %v2486
    %3944 = vmatpush.bf16.msra.mxu0 %v2478
    %3945 = vmatpush.bf16.msra.mxu0 %v2470
    %3946 = vmatmul.bf16.gmra.mxu0 %v3794
    %v3947 = vpop.f32.mrf.mxu0
    %v3948 = vadd.f32 %v3935, %v3947
    %v3949 = vpop.f32.mrf.mxu0
    %3950 = vdwg.mxu0
    %3951 = vmatpush.bf16.msra.mxu0 %v2463
    %3952 = vmatpush.bf16.msra.mxu0 %v2455
    %3953 = vmatpush.bf16.msra.mxu0 %v2447
    %3954 = vmatpush.bf16.msra.mxu0 %v2439
    %3955 = vmatpush.bf16.msra.mxu0 %v2431
    %3956 = vmatpush.bf16.msra.mxu0 %v2423
    %3957 = vmatpush.bf16.msra.mxu0 %v2415
    %3958 = vmatpush.bf16.msra.mxu0 %v2407
    %3959 = vmatmul.bf16.gmra.mxu0 %v3793
    %v3960 = vpop.f32.mrf.mxu0
    %v3961 = vadd.f32 0.0, %v3960
    %v3962 = vpop.f32.mrf.mxu0
    %3963 = vdwg.mxu0
    %3964 = vmatpush.bf16.msra.mxu0 %v2527
    %3965 = vmatpush.bf16.msra.mxu0 %v2519
    %3966 = vmatpush.bf16.msra.mxu0 %v2511
    %3967 = vmatpush.bf16.msra.mxu0 %v2503
    %3968 = vmatpush.bf16.msra.mxu0 %v2495
    %3969 = vmatpush.bf16.msra.mxu0 %v2487
    %3970 = vmatpush.bf16.msra.mxu0 %v2479
    %3971 = vmatpush.bf16.msra.mxu0 %v2471
    %3972 = vmatmul.bf16.gmra.mxu0 %v3794
    %v3973 = vpop.f32.mrf.mxu0
    %v3974 = vadd.f32 %v3961, %v3973
    %v3975 = vpop.f32.mrf.mxu0
    %3976 = vdwg.mxu0
    %3977 = vmatpush.bf16.msra.mxu0 %v2464
    %3978 = vmatpush.bf16.msra.mxu0 %v2456
    %3979 = vmatpush.bf16.msra.mxu0 %v2448
    %3980 = vmatpush.bf16.msra.mxu0 %v2440
    %3981 = vmatpush.bf16.msra.mxu0 %v2432
    %3982 = vmatpush.bf16.msra.mxu0 %v2424
    %3983 = vmatpush.bf16.msra.mxu0 %v2416
    %3984 = vmatpush.bf16.msra.mxu0 %v2408
    %3985 = vmatmul.bf16.gmra.mxu0 %v3793
    %v3986 = vpop.f32.mrf.mxu0
    %v3987 = vadd.f32 0.0, %v3986
    %v3988 = vpop.f32.mrf.mxu0
    %3989 = vdwg.mxu0
    %3990 = vmatpush.bf16.msra.mxu0 %v2528
    %3991 = vmatpush.bf16.msra.mxu0 %v2520
    %3992 = vmatpush.bf16.msra.mxu0 %v2512
    %3993 = vmatpush.bf16.msra.mxu0 %v2504
    %3994 = vmatpush.bf16.msra.mxu0 %v2496
    %3995 = vmatpush.bf16.msra.mxu0 %v2488
    %3996 = vmatpush.bf16.msra.mxu0 %v2480
    %3997 = vmatpush.bf16.msra.mxu0 %v2472
    %3998 = vmatmul.bf16.gmra.mxu0 %v3794
    %v3999 = vpop.f32.mrf.mxu0
    %v4000 = vadd.f32 %v3987, %v3999
    %v4001 = vpop.f32.mrf.mxu0
    %4002 = vdwg.mxu0
    %v4011 = vrot.slane %v3818, 6
    %v4012 = vrot.slane %v3844, 6
    %v4013 = vrot.slane %v3870, 6
    %v4014 = vrot.slane %v3896, 6
    %v4015 = vrot.slane %v3922, 6
    %v4016 = vrot.slane %v3948, 6
    %v4017 = vrot.slane %v3974, 6
    %v4018 = vrot.slane %v4000, 6
    %v4027 = vadd.f32 %v1535, %v4011
    %v4028 = vadd.f32 %v1563, %v4012
    %v4029 = vadd.f32 %v1591, %v4013
    %v4030 = vadd.f32 %v1619, %v4014
    %v4031 = vadd.f32 %v1647, %v4015
    %v4032 = vadd.f32 %v1675, %v4016
    %v4033 = vadd.f32 %v1703, %v4017
    %v4034 = vadd.f32 %v1731, %v4018
    %v4035 = vmul.f32 %v4027, 0.5
    %v4036 = vmul.f32 %v4028, 0.5
    %v4037 = vtanh.pop %v4035
    %v4038 = vtanh.pop %v4036
    %v4039 = vadd.f32 %v4037, 1.0
    %v4040 = vadd.f32 %v4038, 1.0
    %v4041 = vmul.f32 %v4039, 0.5
    %v4042 = vmul.f32 %v4040, 0.5
    %v4043 = vtanh.pop %v4031
    %v4044 = vtanh.pop %v4032
    %v4045 = vmul.f32 %v4033, 0.5
    %v4046 = vmul.f32 %v4034, 0.5
    %v4047 = vtanh.pop %v4045
    %v4048 = vtanh.pop %v4046
    %v4049 = vadd.f32 %v4047, 1.0
    %v4050 = vadd.f32 %v4048, 1.0
    %v4051 = vmul.f32 %v4049, 0.5
    %v4052 = vmul.f32 %v4050, 0.5
    %v4053 = vmul.f32 %v4029, 0.5
    %v4054 = vmul.f32 %v4030, 0.5
    %v4055 = vtanh.pop %v4053
    %v4056 = vtanh.pop %v4054
    %v4057 = vadd.f32 %v4055, 1.0
    %v4058 = vadd.f32 %v4056, 1.0
    %v4059 = vmul.f32 %v4057, 0.5
    %v4060 = vmul.f32 %v4058, 0.5
    %v4063 = vrot.slane %v3785, 6
    %v4064 = vrot.slane %v3786, 6
    %v4067 = vmul.f32 %v4059, %v4063
    %v4068 = vmul.f32 %v4060, %v4064
    %v4069 = vmul.f32 %v4041, %v4043
    %v4070 = vmul.f32 %v4042, %v4044
    %v4071 = vadd.f32 %v4067, %v4069
    %v4072 = vadd.f32 %v4068, %v4070
    %v4073 = vtanh.pop %v4071
    %v4074 = vtanh.pop %v4072
    %v4075 = vmul.f32 %v4051, %v4073
    %v4076 = vmul.f32 %v4052, %v4074
    %4077 = vst [vmem:[#allocation2 + $0x10] sm:$0xc] %v4075
    %4078 = vst [vmem:[#allocation2 + $0x18] sm:$0xc] %v4076
    %v4079 = vpack.c.bf16 %v4075, %v4075
    %v4080 = vpack.c.bf16 %v4076, %v4076
    %v4083 = vrot.slane %v4079, 1
    %v4084 = vrot.slane %v4080, 1
    %4087 = vmatpush.bf16.msra.mxu0 %v2457
    %4088 = vmatpush.bf16.msra.mxu0 %v2449
    %4089 = vmatpush.bf16.msra.mxu0 %v2441
    %4090 = vmatpush.bf16.msra.mxu0 %v2433
    %4091 = vmatpush.bf16.msra.mxu0 %v2425
    %4092 = vmatpush.bf16.msra.mxu0 %v2417
    %4093 = vmatpush.bf16.msra.mxu0 %v2409
    %4094 = vmatpush.bf16.msra.mxu0 %v2401
    %4095 = vmatmul.bf16.gmra.mxu0 %v4083
    %v4096 = vpop.f32.mrf.mxu0
    %v4097 = vadd.f32 0.0, %v4096
    %v4098 = vpop.f32.mrf.mxu0
    %4099 = vdwg.mxu0
    %4100 = vmatpush.bf16.msra.mxu0 %v2521
    %4101 = vmatpush.bf16.msra.mxu0 %v2513
    %4102 = vmatpush.bf16.msra.mxu0 %v2505
    %4103 = vmatpush.bf16.msra.mxu0 %v2497
    %4104 = vmatpush.bf16.msra.mxu0 %v2489
    %4105 = vmatpush.bf16.msra.mxu0 %v2481
    %4106 = vmatpush.bf16.msra.mxu0 %v2473
    %4107 = vmatpush.bf16.msra.mxu0 %v2465
    %4108 = vmatmul.bf16.gmra.mxu0 %v4084
    %v4109 = vpop.f32.mrf.mxu0
    %v4110 = vadd.f32 %v4097, %v4109
    %v4111 = vpop.f32.mrf.mxu0
    %4112 = vdwg.mxu0
    %4113 = vmatpush.bf16.msra.mxu0 %v2458
    %4114 = vmatpush.bf16.msra.mxu0 %v2450
    %4115 = vmatpush.bf16.msra.mxu0 %v2442
    %4116 = vmatpush.bf16.msra.mxu0 %v2434
    %4117 = vmatpush.bf16.msra.mxu0 %v2426
    %4118 = vmatpush.bf16.msra.mxu0 %v2418
    %4119 = vmatpush.bf16.msra.mxu0 %v2410
    %4120 = vmatpush.bf16.msra.mxu0 %v2402
    %4121 = vmatmul.bf16.gmra.mxu0 %v4083
    %v4122 = vpop.f32.mrf.mxu0
    %v4123 = vadd.f32 0.0, %v4122
    %v4124 = vpop.f32.mrf.mxu0
    %4125 = vdwg.mxu0
    %4126 = vmatpush.bf16.msra.mxu0 %v2522
    %4127 = vmatpush.bf16.msra.mxu0 %v2514
    %4128 = vmatpush.bf16.msra.mxu0 %v2506
    %4129 = vmatpush.bf16.msra.mxu0 %v2498
    %4130 = vmatpush.bf16.msra.mxu0 %v2490
    %4131 = vmatpush.bf16.msra.mxu0 %v2482
    %4132 = vmatpush.bf16.msra.mxu0 %v2474
    %4133 = vmatpush.bf16.msra.mxu0 %v2466
    %4134 = vmatmul.bf16.gmra.mxu0 %v4084
    %v4135 = vpop.f32.mrf.mxu0
    %v4136 = vadd.f32 %v4123, %v4135
    %v4137 = vpop.f32.mrf.mxu0
    %4138 = vdwg.mxu0
    %4139 = vmatpush.bf16.msra.mxu0 %v2459
    %4140 = vmatpush.bf16.msra.mxu0 %v2451
    %4141 = vmatpush.bf16.msra.mxu0 %v2443
    %4142 = vmatpush.bf16.msra.mxu0 %v2435
    %4143 = vmatpush.bf16.msra.mxu0 %v2427
    %4144 = vmatpush.bf16.msra.mxu0 %v2419
    %4145 = vmatpush.bf16.msra.mxu0 %v2411
    %4146 = vmatpush.bf16.msra.mxu0 %v2403
    %4147 = vmatmul.bf16.gmra.mxu0 %v4083
    %v4148 = vpop.f32.mrf.mxu0
    %v4149 = vadd.f32 0.0, %v4148
    %v4150 = vpop.f32.mrf.mxu0
    %4151 = vdwg.mxu0
    %4152 = vmatpush.bf16.msra.mxu0 %v2523
    %4153 = vmatpush.bf16.msra.mxu0 %v2515
    %4154 = vmatpush.bf16.msra.mxu0 %v2507
    %4155 = vmatpush.bf16.msra.mxu0 %v2499
    %4156 = vmatpush.bf16.msra.mxu0 %v2491
    %4157 = vmatpush.bf16.msra.mxu0 %v2483
    %4158 = vmatpush.bf16.msra.mxu0 %v2475
    %4159 = vmatpush.bf16.msra.mxu0 %v2467
    %4160 = vmatmul.bf16.gmra.mxu0 %v4084
    %v4161 = vpop.f32.mrf.mxu0
    %v4162 = vadd.f32 %v4149, %v4161
    %v4163 = vpop.f32.mrf.mxu0
    %4164 = vdwg.mxu0
    %4165 = vmatpush.bf16.msra.mxu0 %v2460
    %4166 = vmatpush.bf16.msra.mxu0 %v2452
    %4167 = vmatpush.bf16.msra.mxu0 %v2444
    %4168 = vmatpush.bf16.msra.mxu0 %v2436
    %4169 = vmatpush.bf16.msra.mxu0 %v2428
    %4170 = vmatpush.bf16.msra.mxu0 %v2420
    %4171 = vmatpush.bf16.msra.mxu0 %v2412
    %4172 = vmatpush.bf16.msra.mxu0 %v2404
    %4173 = vmatmul.bf16.gmra.mxu0 %v4083
    %v4174 = vpop.f32.mrf.mxu0
    %v4175 = vadd.f32 0.0, %v4174
    %v4176 = vpop.f32.mrf.mxu0
    %4177 = vdwg.mxu0
    %4178 = vmatpush.bf16.msra.mxu0 %v2524
    %4179 = vmatpush.bf16.msra.mxu0 %v2516
    %4180 = vmatpush.bf16.msra.mxu0 %v2508
    %4181 = vmatpush.bf16.msra.mxu0 %v2500
    %4182 = vmatpush.bf16.msra.mxu0 %v2492
    %4183 = vmatpush.bf16.msra.mxu0 %v2484
    %4184 = vmatpush.bf16.msra.mxu0 %v2476
    %4185 = vmatpush.bf16.msra.mxu0 %v2468
    %4186 = vmatmul.bf16.gmra.mxu0 %v4084
    %v4187 = vpop.f32.mrf.mxu0
    %v4188 = vadd.f32 %v4175, %v4187
    %v4189 = vpop.f32.mrf.mxu0
    %4190 = vdwg.mxu0
    %4191 = vmatpush.bf16.msra.mxu0 %v2461
    %4192 = vmatpush.bf16.msra.mxu0 %v2453
    %4193 = vmatpush.bf16.msra.mxu0 %v2445
    %4194 = vmatpush.bf16.msra.mxu0 %v2437
    %4195 = vmatpush.bf16.msra.mxu0 %v2429
    %4196 = vmatpush.bf16.msra.mxu0 %v2421
    %4197 = vmatpush.bf16.msra.mxu0 %v2413
    %4198 = vmatpush.bf16.msra.mxu0 %v2405
    %4199 = vmatmul.bf16.gmra.mxu0 %v4083
    %v4200 = vpop.f32.mrf.mxu0
    %v4201 = vadd.f32 0.0, %v4200
    %v4202 = vpop.f32.mrf.mxu0
    %4203 = vdwg.mxu0
    %4204 = vmatpush.bf16.msra.mxu0 %v2525
    %4205 = vmatpush.bf16.msra.mxu0 %v2517
    %4206 = vmatpush.bf16.msra.mxu0 %v2509
    %4207 = vmatpush.bf16.msra.mxu0 %v2501
    %4208 = vmatpush.bf16.msra.mxu0 %v2493
    %4209 = vmatpush.bf16.msra.mxu0 %v2485
    %4210 = vmatpush.bf16.msra.mxu0 %v2477
    %4211 = vmatpush.bf16.msra.mxu0 %v2469
    %4212 = vmatmul.bf16.gmra.mxu0 %v4084
    %v4213 = vpop.f32.mrf.mxu0
    %v4214 = vadd.f32 %v4201, %v4213
    %v4215 = vpop.f32.mrf.mxu0
    %4216 = vdwg.mxu0
    %4217 = vmatpush.bf16.msra.mxu0 %v2462
    %4218 = vmatpush.bf16.msra.mxu0 %v2454
    %4219 = vmatpush.bf16.msra.mxu0 %v2446
    %4220 = vmatpush.bf16.msra.mxu0 %v2438
    %4221 = vmatpush.bf16.msra.mxu0 %v2430
    %4222 = vmatpush.bf16.msra.mxu0 %v2422
    %4223 = vmatpush.bf16.msra.mxu0 %v2414
    %4224 = vmatpush.bf16.msra.mxu0 %v2406
    %4225 = vmatmul.bf16.gmra.mxu0 %v4083
    %v4226 = vpop.f32.mrf.mxu0
    %v4227 = vadd.f32 0.0, %v4226
    %v4228 = vpop.f32.mrf.mxu0
    %4229 = vdwg.mxu0
    %4230 = vmatpush.bf16.msra.mxu0 %v2526
    %4231 = vmatpush.bf16.msra.mxu0 %v2518
    %4232 = vmatpush.bf16.msra.mxu0 %v2510
    %4233 = vmatpush.bf16.msra.mxu0 %v2502
    %4234 = vmatpush.bf16.msra.mxu0 %v2494
    %4235 = vmatpush.bf16.msra.mxu0 %v2486
    %4236 = vmatpush.bf16.msra.mxu0 %v2478
    %4237 = vmatpush.bf16.msra.mxu0 %v2470
    %4238 = vmatmul.bf16.gmra.mxu0 %v4084
    %v4239 = vpop.f32.mrf.mxu0
    %v4240 = vadd.f32 %v4227, %v4239
    %v4241 = vpop.f32.mrf.mxu0
    %4242 = vdwg.mxu0
    %4243 = vmatpush.bf16.msra.mxu0 %v2463
    %4244 = vmatpush.bf16.msra.mxu0 %v2455
    %4245 = vmatpush.bf16.msra.mxu0 %v2447
    %4246 = vmatpush.bf16.msra.mxu0 %v2439
    %4247 = vmatpush.bf16.msra.mxu0 %v2431
    %4248 = vmatpush.bf16.msra.mxu0 %v2423
    %4249 = vmatpush.bf16.msra.mxu0 %v2415
    %4250 = vmatpush.bf16.msra.mxu0 %v2407
    %4251 = vmatmul.bf16.gmra.mxu0 %v4083
    %v4252 = vpop.f32.mrf.mxu0
    %v4253 = vadd.f32 0.0, %v4252
    %v4254 = vpop.f32.mrf.mxu0
    %4255 = vdwg.mxu0
    %4256 = vmatpush.bf16.msra.mxu0 %v2527
    %4257 = vmatpush.bf16.msra.mxu0 %v2519
    %4258 = vmatpush.bf16.msra.mxu0 %v2511
    %4259 = vmatpush.bf16.msra.mxu0 %v2503
    %4260 = vmatpush.bf16.msra.mxu0 %v2495
    %4261 = vmatpush.bf16.msra.mxu0 %v2487
    %4262 = vmatpush.bf16.msra.mxu0 %v2479
    %4263 = vmatpush.bf16.msra.mxu0 %v2471
    %4264 = vmatmul.bf16.gmra.mxu0 %v4084
    %v4265 = vpop.f32.mrf.mxu0
    %v4266 = vadd.f32 %v4253, %v4265
    %v4267 = vpop.f32.mrf.mxu0
    %4268 = vdwg.mxu0
    %4269 = vmatpush.bf16.msra.mxu0 %v2464
    %4270 = vmatpush.bf16.msra.mxu0 %v2456
    %4271 = vmatpush.bf16.msra.mxu0 %v2448
    %4272 = vmatpush.bf16.msra.mxu0 %v2440
    %4273 = vmatpush.bf16.msra.mxu0 %v2432
    %4274 = vmatpush.bf16.msra.mxu0 %v2424
    %4275 = vmatpush.bf16.msra.mxu0 %v2416
    %4276 = vmatpush.bf16.msra.mxu0 %v2408
    %4277 = vmatmul.bf16.gmra.mxu0 %v4083
    %v4278 = vpop.f32.mrf.mxu0
    %v4279 = vadd.f32 0.0, %v4278
    %v4280 = vpop.f32.mrf.mxu0
    %4281 = vdwg.mxu0
    %4282 = vmatpush.bf16.msra.mxu0 %v2528
    %4283 = vmatpush.bf16.msra.mxu0 %v2520
    %4284 = vmatpush.bf16.msra.mxu0 %v2512
    %4285 = vmatpush.bf16.msra.mxu0 %v2504
    %4286 = vmatpush.bf16.msra.mxu0 %v2496
    %4287 = vmatpush.bf16.msra.mxu0 %v2488
    %4288 = vmatpush.bf16.msra.mxu0 %v2480
    %4289 = vmatpush.bf16.msra.mxu0 %v2472
    %4290 = vmatmul.bf16.gmra.mxu0 %v4084
    %v4291 = vpop.f32.mrf.mxu0
    %v4292 = vadd.f32 %v4279, %v4291
    %v4293 = vpop.f32.mrf.mxu0
    %4294 = vdwg.mxu0
    %v4303 = vrot.slane %v4110, 4
    %v4304 = vrot.slane %v4136, 4
    %v4305 = vrot.slane %v4162, 4
    %v4306 = vrot.slane %v4188, 4
    %v4307 = vrot.slane %v4214, 4
    %v4308 = vrot.slane %v4240, 4
    %v4309 = vrot.slane %v4266, 4
    %v4310 = vrot.slane %v4292, 4
    %v4319 = vadd.f32 %v1535, %v4303
    %v4320 = vadd.f32 %v1563, %v4304
    %v4321 = vadd.f32 %v1591, %v4305
    %v4322 = vadd.f32 %v1619, %v4306
    %v4323 = vadd.f32 %v1647, %v4307
    %v4324 = vadd.f32 %v1675, %v4308
    %v4325 = vadd.f32 %v1703, %v4309
    %v4326 = vadd.f32 %v1731, %v4310
    %v4327 = vmul.f32 %v4319, 0.5
    %v4328 = vmul.f32 %v4320, 0.5
    %v4329 = vtanh.pop %v4327
    %v4330 = vtanh.pop %v4328
    %v4331 = vadd.f32 %v4329, 1.0
    %v4332 = vadd.f32 %v4330, 1.0
    %v4333 = vmul.f32 %v4331, 0.5
    %v4334 = vmul.f32 %v4332, 0.5
    %v4335 = vtanh.pop %v4323
    %v4336 = vtanh.pop %v4324
    %v4337 = vmul.f32 %v4325, 0.5
    %v4338 = vmul.f32 %v4326, 0.5
    %v4339 = vtanh.pop %v4337
    %v4340 = vtanh.pop %v4338
    %v4341 = vadd.f32 %v4339, 1.0
    %v4342 = vadd.f32 %v4340, 1.0
    %v4343 = vmul.f32 %v4341, 0.5
    %v4344 = vmul.f32 %v4342, 0.5
    %v4345 = vmul.f32 %v4321, 0.5
    %v4346 = vmul.f32 %v4322, 0.5
    %v4347 = vtanh.pop %v4345
    %v4348 = vtanh.pop %v4346
    %v4349 = vadd.f32 %v4347, 1.0
    %v4350 = vadd.f32 %v4348, 1.0
    %v4351 = vmul.f32 %v4349, 0.5
    %v4352 = vmul.f32 %v4350, 0.5
    %v4355 = vrot.slane %v4071, 6
    %v4356 = vrot.slane %v4072, 6
    %v4359 = vmul.f32 %v4351, %v4355
    %v4360 = vmul.f32 %v4352, %v4356
    %v4361 = vmul.f32 %v4333, %v4335
    %v4362 = vmul.f32 %v4334, %v4336
    %v4363 = vadd.f32 %v4359, %v4361
    %v4364 = vadd.f32 %v4360, %v4362
    %v4365 = vtanh.pop %v4363
    %v4366 = vtanh.pop %v4364
    %v4367 = vmul.f32 %v4343, %v4365
    %v4368 = vmul.f32 %v4344, %v4366
    %4369 = vst [vmem:[#allocation2 + $0x10] sm:$0x30] %v4367
    %4370 = vst [vmem:[#allocation2 + $0x18] sm:$0x30] %v4368
    %v4371 = vpack.c.bf16 %v4367, %v4367
    %v4372 = vpack.c.bf16 %v4368, %v4368
    %v4375 = vrot.slane %v4371, 2
    %v4376 = vrot.slane %v4372, 2
    %4379 = vmatpush.bf16.msra.mxu0 %v2457
    %4380 = vmatpush.bf16.msra.mxu0 %v2449
    %4381 = vmatpush.bf16.msra.mxu0 %v2441
    %4382 = vmatpush.bf16.msra.mxu0 %v2433
    %4383 = vmatpush.bf16.msra.mxu0 %v2425
    %4384 = vmatpush.bf16.msra.mxu0 %v2417
    %4385 = vmatpush.bf16.msra.mxu0 %v2409
    %4386 = vmatpush.bf16.msra.mxu0 %v2401
    %4387 = vmatmul.bf16.gmra.mxu0 %v4375
    %v4388 = vpop.f32.mrf.mxu0
    %v4389 = vadd.f32 0.0, %v4388
    %v4390 = vpop.f32.mrf.mxu0
    %4391 = vdwg.mxu0
    %4392 = vmatpush.bf16.msra.mxu0 %v2521
    %4393 = vmatpush.bf16.msra.mxu0 %v2513
    %4394 = vmatpush.bf16.msra.mxu0 %v2505
    %4395 = vmatpush.bf16.msra.mxu0 %v2497
    %4396 = vmatpush.bf16.msra.mxu0 %v2489
    %4397 = vmatpush.bf16.msra.mxu0 %v2481
    %4398 = vmatpush.bf16.msra.mxu0 %v2473
    %4399 = vmatpush.bf16.msra.mxu0 %v2465
    %4400 = vmatmul.bf16.gmra.mxu0 %v4376
    %v4401 = vpop.f32.mrf.mxu0
    %v4402 = vadd.f32 %v4389, %v4401
    %v4403 = vpop.f32.mrf.mxu0
    %4404 = vdwg.mxu0
    %4405 = vmatpush.bf16.msra.mxu0 %v2458
    %4406 = vmatpush.bf16.msra.mxu0 %v2450
    %4407 = vmatpush.bf16.msra.mxu0 %v2442
    %4408 = vmatpush.bf16.msra.mxu0 %v2434
    %4409 = vmatpush.bf16.msra.mxu0 %v2426
    %4410 = vmatpush.bf16.msra.mxu0 %v2418
    %4411 = vmatpush.bf16.msra.mxu0 %v2410
    %4412 = vmatpush.bf16.msra.mxu0 %v2402
    %4413 = vmatmul.bf16.gmra.mxu0 %v4375
    %v4414 = vpop.f32.mrf.mxu0
    %v4415 = vadd.f32 0.0, %v4414
    %v4416 = vpop.f32.mrf.mxu0
    %4417 = vdwg.mxu0
    %4418 = vmatpush.bf16.msra.mxu0 %v2522
    %4419 = vmatpush.bf16.msra.mxu0 %v2514
    %4420 = vmatpush.bf16.msra.mxu0 %v2506
    %4421 = vmatpush.bf16.msra.mxu0 %v2498
    %4422 = vmatpush.bf16.msra.mxu0 %v2490
    %4423 = vmatpush.bf16.msra.mxu0 %v2482
    %4424 = vmatpush.bf16.msra.mxu0 %v2474
    %4425 = vmatpush.bf16.msra.mxu0 %v2466
    %4426 = vmatmul.bf16.gmra.mxu0 %v4376
    %v4427 = vpop.f32.mrf.mxu0
    %v4428 = vadd.f32 %v4415, %v4427
    %v4429 = vpop.f32.mrf.mxu0
    %4430 = vdwg.mxu0
    %4431 = vmatpush.bf16.msra.mxu0 %v2459
    %4432 = vmatpush.bf16.msra.mxu0 %v2451
    %4433 = vmatpush.bf16.msra.mxu0 %v2443
    %4434 = vmatpush.bf16.msra.mxu0 %v2435
    %4435 = vmatpush.bf16.msra.mxu0 %v2427
    %4436 = vmatpush.bf16.msra.mxu0 %v2419
    %4437 = vmatpush.bf16.msra.mxu0 %v2411
    %4438 = vmatpush.bf16.msra.mxu0 %v2403
    %4439 = vmatmul.bf16.gmra.mxu0 %v4375
    %v4440 = vpop.f32.mrf.mxu0
    %v4441 = vadd.f32 0.0, %v4440
    %v4442 = vpop.f32.mrf.mxu0
    %4443 = vdwg.mxu0
    %4444 = vmatpush.bf16.msra.mxu0 %v2523
    %4445 = vmatpush.bf16.msra.mxu0 %v2515
    %4446 = vmatpush.bf16.msra.mxu0 %v2507
    %4447 = vmatpush.bf16.msra.mxu0 %v2499
    %4448 = vmatpush.bf16.msra.mxu0 %v2491
    %4449 = vmatpush.bf16.msra.mxu0 %v2483
    %4450 = vmatpush.bf16.msra.mxu0 %v2475
    %4451 = vmatpush.bf16.msra.mxu0 %v2467
    %4452 = vmatmul.bf16.gmra.mxu0 %v4376
    %v4453 = vpop.f32.mrf.mxu0
    %v4454 = vadd.f32 %v4441, %v4453
    %v4455 = vpop.f32.mrf.mxu0
    %4456 = vdwg.mxu0
    %4457 = vmatpush.bf16.msra.mxu0 %v2460
    %4458 = vmatpush.bf16.msra.mxu0 %v2452
    %4459 = vmatpush.bf16.msra.mxu0 %v2444
    %4460 = vmatpush.bf16.msra.mxu0 %v2436
    %4461 = vmatpush.bf16.msra.mxu0 %v2428
    %4462 = vmatpush.bf16.msra.mxu0 %v2420
    %4463 = vmatpush.bf16.msra.mxu0 %v2412
    %4464 = vmatpush.bf16.msra.mxu0 %v2404
    %4465 = vmatmul.bf16.gmra.mxu0 %v4375
    %v4466 = vpop.f32.mrf.mxu0
    %v4467 = vadd.f32 0.0, %v4466
    %v4468 = vpop.f32.mrf.mxu0
    %4469 = vdwg.mxu0
    %4470 = vmatpush.bf16.msra.mxu0 %v2524
    %4471 = vmatpush.bf16.msra.mxu0 %v2516
    %4472 = vmatpush.bf16.msra.mxu0 %v2508
    %4473 = vmatpush.bf16.msra.mxu0 %v2500
    %4474 = vmatpush.bf16.msra.mxu0 %v2492
    %4475 = vmatpush.bf16.msra.mxu0 %v2484
    %4476 = vmatpush.bf16.msra.mxu0 %v2476
    %4477 = vmatpush.bf16.msra.mxu0 %v2468
    %4478 = vmatmul.bf16.gmra.mxu0 %v4376
    %v4479 = vpop.f32.mrf.mxu0
    %v4480 = vadd.f32 %v4467, %v4479
    %v4481 = vpop.f32.mrf.mxu0
    %4482 = vdwg.mxu0
    %4483 = vmatpush.bf16.msra.mxu0 %v2461
    %4484 = vmatpush.bf16.msra.mxu0 %v2453
    %4485 = vmatpush.bf16.msra.mxu0 %v2445
    %4486 = vmatpush.bf16.msra.mxu0 %v2437
    %4487 = vmatpush.bf16.msra.mxu0 %v2429
    %4488 = vmatpush.bf16.msra.mxu0 %v2421
    %4489 = vmatpush.bf16.msra.mxu0 %v2413
    %4490 = vmatpush.bf16.msra.mxu0 %v2405
    %4491 = vmatmul.bf16.gmra.mxu0 %v4375
    %v4492 = vpop.f32.mrf.mxu0
    %v4493 = vadd.f32 0.0, %v4492
    %v4494 = vpop.f32.mrf.mxu0
    %4495 = vdwg.mxu0
    %4496 = vmatpush.bf16.msra.mxu0 %v2525
    %4497 = vmatpush.bf16.msra.mxu0 %v2517
    %4498 = vmatpush.bf16.msra.mxu0 %v2509
    %4499 = vmatpush.bf16.msra.mxu0 %v2501
    %4500 = vmatpush.bf16.msra.mxu0 %v2493
    %4501 = vmatpush.bf16.msra.mxu0 %v2485
    %4502 = vmatpush.bf16.msra.mxu0 %v2477
    %4503 = vmatpush.bf16.msra.mxu0 %v2469
    %4504 = vmatmul.bf16.gmra.mxu0 %v4376
    %v4505 = vpop.f32.mrf.mxu0
    %v4506 = vadd.f32 %v4493, %v4505
    %v4507 = vpop.f32.mrf.mxu0
    %4508 = vdwg.mxu0
    %4509 = vmatpush.bf16.msra.mxu0 %v2462
    %4510 = vmatpush.bf16.msra.mxu0 %v2454
    %4511 = vmatpush.bf16.msra.mxu0 %v2446
    %4512 = vmatpush.bf16.msra.mxu0 %v2438
    %4513 = vmatpush.bf16.msra.mxu0 %v2430
    %4514 = vmatpush.bf16.msra.mxu0 %v2422
    %4515 = vmatpush.bf16.msra.mxu0 %v2414
    %4516 = vmatpush.bf16.msra.mxu0 %v2406
    %4517 = vmatmul.bf16.gmra.mxu0 %v4375
    %v4518 = vpop.f32.mrf.mxu0
    %v4519 = vadd.f32 0.0, %v4518
    %v4520 = vpop.f32.mrf.mxu0
    %4521 = vdwg.mxu0
    %4522 = vmatpush.bf16.msra.mxu0 %v2526
    %4523 = vmatpush.bf16.msra.mxu0 %v2518
    %4524 = vmatpush.bf16.msra.mxu0 %v2510
    %4525 = vmatpush.bf16.msra.mxu0 %v2502
    %4526 = vmatpush.bf16.msra.mxu0 %v2494
    %4527 = vmatpush.bf16.msra.mxu0 %v2486
    %4528 = vmatpush.bf16.msra.mxu0 %v2478
    %4529 = vmatpush.bf16.msra.mxu0 %v2470
    %4530 = vmatmul.bf16.gmra.mxu0 %v4376
    %v4531 = vpop.f32.mrf.mxu0
    %v4532 = vadd.f32 %v4519, %v4531
    %v4533 = vpop.f32.mrf.mxu0
    %4534 = vdwg.mxu0
    %4535 = vmatpush.bf16.msra.mxu0 %v2463
    %4536 = vmatpush.bf16.msra.mxu0 %v2455
    %4537 = vmatpush.bf16.msra.mxu0 %v2447
    %4538 = vmatpush.bf16.msra.mxu0 %v2439
    %4539 = vmatpush.bf16.msra.mxu0 %v2431
    %4540 = vmatpush.bf16.msra.mxu0 %v2423
    %4541 = vmatpush.bf16.msra.mxu0 %v2415
    %4542 = vmatpush.bf16.msra.mxu0 %v2407
    %4543 = vmatmul.bf16.gmra.mxu0 %v4375
    %v4544 = vpop.f32.mrf.mxu0
    %v4545 = vadd.f32 0.0, %v4544
    %v4546 = vpop.f32.mrf.mxu0
    %4547 = vdwg.mxu0
    %4548 = vmatpush.bf16.msra.mxu0 %v2527
    %4549 = vmatpush.bf16.msra.mxu0 %v2519
    %4550 = vmatpush.bf16.msra.mxu0 %v2511
    %4551 = vmatpush.bf16.msra.mxu0 %v2503
    %4552 = vmatpush.bf16.msra.mxu0 %v2495
    %4553 = vmatpush.bf16.msra.mxu0 %v2487
    %4554 = vmatpush.bf16.msra.mxu0 %v2479
    %4555 = vmatpush.bf16.msra.mxu0 %v2471
    %4556 = vmatmul.bf16.gmra.mxu0 %v4376
    %v4557 = vpop.f32.mrf.mxu0
    %v4558 = vadd.f32 %v4545, %v4557
    %v4559 = vpop.f32.mrf.mxu0
    %4560 = vdwg.mxu0
    %4561 = vmatpush.bf16.msra.mxu0 %v2464
    %4562 = vmatpush.bf16.msra.mxu0 %v2456
    %4563 = vmatpush.bf16.msra.mxu0 %v2448
    %4564 = vmatpush.bf16.msra.mxu0 %v2440
    %4565 = vmatpush.bf16.msra.mxu0 %v2432
    %4566 = vmatpush.bf16.msra.mxu0 %v2424
    %4567 = vmatpush.bf16.msra.mxu0 %v2416
    %4568 = vmatpush.bf16.msra.mxu0 %v2408
    %4569 = vmatmul.bf16.gmra.mxu0 %v4375
    %v4570 = vpop.f32.mrf.mxu0
    %v4571 = vadd.f32 0.0, %v4570
    %v4572 = vpop.f32.mrf.mxu0
    %4573 = vdwg.mxu0
    %4574 = vmatpush.bf16.msra.mxu0 %v2528
    %4575 = vmatpush.bf16.msra.mxu0 %v2520
    %4576 = vmatpush.bf16.msra.mxu0 %v2512
    %4577 = vmatpush.bf16.msra.mxu0 %v2504
    %4578 = vmatpush.bf16.msra.mxu0 %v2496
    %4579 = vmatpush.bf16.msra.mxu0 %v2488
    %4580 = vmatpush.bf16.msra.mxu0 %v2480
    %4581 = vmatpush.bf16.msra.mxu0 %v2472
    %4582 = vmatmul.bf16.gmra.mxu0 %v4376
    %v4583 = vpop.f32.mrf.mxu0
    %v4584 = vadd.f32 %v4571, %v4583
    %v4585 = vpop.f32.mrf.mxu0
    %4586 = vdwg.mxu0
    %v4595 = vrot.slane %v4402, 2
    %v4596 = vrot.slane %v4428, 2
    %v4597 = vrot.slane %v4454, 2
    %v4598 = vrot.slane %v4480, 2
    %v4599 = vrot.slane %v4506, 2
    %v4600 = vrot.slane %v4532, 2
    %v4601 = vrot.slane %v4558, 2
    %v4602 = vrot.slane %v4584, 2
    %v4611 = vadd.f32 %v1535, %v4595
    %v4612 = vadd.f32 %v1563, %v4596
    %v4613 = vadd.f32 %v1591, %v4597
    %v4614 = vadd.f32 %v1619, %v4598
    %v4615 = vadd.f32 %v1647, %v4599
    %v4616 = vadd.f32 %v1675, %v4600
    %v4617 = vadd.f32 %v1703, %v4601
    %v4618 = vadd.f32 %v1731, %v4602
    %v4619 = vmul.f32 %v4611, 0.5
    %v4620 = vmul.f32 %v4612, 0.5
    %v4621 = vtanh.pop %v4619
    %v4622 = vtanh.pop %v4620
    %v4623 = vadd.f32 %v4621, 1.0
    %v4624 = vadd.f32 %v4622, 1.0
    %v4625 = vmul.f32 %v4623, 0.5
    %v4626 = vmul.f32 %v4624, 0.5
    %v4627 = vtanh.pop %v4615
    %v4628 = vtanh.pop %v4616
    %v4629 = vmul.f32 %v4617, 0.5
    %v4630 = vmul.f32 %v4618, 0.5
    %v4631 = vtanh.pop %v4629
    %v4632 = vtanh.pop %v4630
    %v4633 = vadd.f32 %v4631, 1.0
    %v4634 = vadd.f32 %v4632, 1.0
    %v4635 = vmul.f32 %v4633, 0.5
    %v4636 = vmul.f32 %v4634, 0.5
    %v4637 = vmul.f32 %v4613, 0.5
    %v4638 = vmul.f32 %v4614, 0.5
    %v4639 = vtanh.pop %v4637
    %v4640 = vtanh.pop %v4638
    %v4641 = vadd.f32 %v4639, 1.0
    %v4642 = vadd.f32 %v4640, 1.0
    %v4643 = vmul.f32 %v4641, 0.5
    %v4644 = vmul.f32 %v4642, 0.5
    %v4647 = vrot.slane %v4363, 6
    %v4648 = vrot.slane %v4364, 6
    %v4651 = vmul.f32 %v4643, %v4647
    %v4652 = vmul.f32 %v4644, %v4648
    %v4653 = vmul.f32 %v4625, %v4627
    %v4654 = vmul.f32 %v4626, %v4628
    %v4655 = vadd.f32 %v4651, %v4653
    %v4656 = vadd.f32 %v4652, %v4654
    %v4657 = vtanh.pop %v4655
    %v4658 = vtanh.pop %v4656
    %v4659 = vmul.f32 %v4635, %v4657
    %v4660 = vmul.f32 %v4636, %v4658
    %4661 = vst [vmem:[#allocation2 + $0x10] sm:$0xc0] %v4659
    %4662 = vst [vmem:[#allocation2 + $0x18] sm:$0xc0] %v4660
    %v4663 = vld [vmem:[#allocation2] sm:$0xff]
    %v4664 = vld [vmem:[#allocation2 + $0x8] sm:$0xff]
    %v4665 = vld [vmem:[#allocation2 + $0x10] sm:$0xff]
    %v4666 = vld [vmem:[#allocation2 + $0x18] sm:$0xff]
    %v4667 = vpack.c.bf16 %v4665, %v4663
    %v4668 = vpack.c.bf16 %v4666, %v4664
    %v4669 = vld [vmem:[#allocation11] sm:$0xff]
    %v4670 = vld [vmem:[#allocation11 + $0x8] sm:$0xff]
    %v4671 = vld [vmem:[#allocation11 + $0x10] sm:$0xff]
    %v4672 = vld [vmem:[#allocation11 + $0x18] sm:$0xff]
    %v4673 = vld [vmem:[#allocation11 + $0x20] sm:$0xff]
    %v4674 = vld [vmem:[#allocation11 + $0x28] sm:$0xff]
    %v4675 = vld [vmem:[#allocation11 + $0x30] sm:$0xff]
    %v4676 = vld [vmem:[#allocation11 + $0x38] sm:$0xff]
    %v4677 = vld [vmem:[#allocation11 + $0x40] sm:$0xff]
    %v4678 = vld [vmem:[#allocation11 + $0x48] sm:$0xff]
    %v4679 = vld [vmem:[#allocation11 + $0x50] sm:$0xff]
    %v4680 = vld [vmem:[#allocation11 + $0x58] sm:$0xff]
    %v4681 = vld [vmem:[#allocation11 + $0x60] sm:$0xff]
    %v4682 = vld [vmem:[#allocation11 + $0x68] sm:$0xff]
    %v4683 = vld [vmem:[#allocation11 + $0x70] sm:$0xff]
    %v4684 = vld [vmem:[#allocation11 + $0x78] sm:$0xff]
    %v4685 = vld [vmem:[#allocation11 + $0x80] sm:$0xff]
    %v4686 = vld [vmem:[#allocation11 + $0x88] sm:$0xff]
    %v4687 = vld [vmem:[#allocation11 + $0x90] sm:$0xff]
    %v4688 = vld [vmem:[#allocation11 + $0x98] sm:$0xff]
    %v4689 = vld [vmem:[#allocation11 + $0xa0] sm:$0xff]
    %v4690 = vld [vmem:[#allocation11 + $0xa8] sm:$0xff]
    %v4691 = vld [vmem:[#allocation11 + $0xb0] sm:$0xff]
    %v4692 = vld [vmem:[#allocation11 + $0xb8] sm:$0xff]
    %v4693 = vld [vmem:[#allocation11 + $0xc0] sm:$0xff]
    %v4694 = vld [vmem:[#allocation11 + $0xc8] sm:$0xff]
    %v4695 = vld [vmem:[#allocation11 + $0xd0] sm:$0xff]
    %v4696 = vld [vmem:[#allocation11 + $0xd8] sm:$0xff]
    %v4697 = vld [vmem:[#allocation11 + $0xe0] sm:$0xff]
    %v4698 = vld [vmem:[#allocation11 + $0xe8] sm:$0xff]
    %v4699 = vld [vmem:[#allocation11 + $0xf0] sm:$0xff]
    %v4700 = vld [vmem:[#allocation11 + $0xf8] sm:$0xff]
    %v4701 = vld [vmem:[#allocation11 + $0x100] sm:$0xff]
    %v4702 = vld [vmem:[#allocation11 + $0x108] sm:$0xff]
    %v4703 = vld [vmem:[#allocation11 + $0x110] sm:$0xff]
    %v4704 = vld [vmem:[#allocation11 + $0x118] sm:$0xff]
    %v4705 = vld [vmem:[#allocation11 + $0x120] sm:$0xff]
    %v4706 = vld [vmem:[#allocation11 + $0x128] sm:$0xff]
    %v4707 = vld [vmem:[#allocation11 + $0x130] sm:$0xff]
    %v4708 = vld [vmem:[#allocation11 + $0x138] sm:$0xff]
    %v4709 = vld [vmem:[#allocation11 + $0x140] sm:$0xff]
    %v4710 = vld [vmem:[#allocation11 + $0x148] sm:$0xff]
    %v4711 = vld [vmem:[#allocation11 + $0x150] sm:$0xff]
    %v4712 = vld [vmem:[#allocation11 + $0x158] sm:$0xff]
    %v4713 = vld [vmem:[#allocation11 + $0x160] sm:$0xff]
    %v4714 = vld [vmem:[#allocation11 + $0x168] sm:$0xff]
    %v4715 = vld [vmem:[#allocation11 + $0x170] sm:$0xff]
    %v4716 = vld [vmem:[#allocation11 + $0x178] sm:$0xff]
    %v4717 = vld [vmem:[#allocation11 + $0x180] sm:$0xff]
    %v4718 = vld [vmem:[#allocation11 + $0x188] sm:$0xff]
    %v4719 = vld [vmem:[#allocation11 + $0x190] sm:$0xff]
    %v4720 = vld [vmem:[#allocation11 + $0x198] sm:$0xff]
    %v4721 = vld [vmem:[#allocation11 + $0x1a0] sm:$0xff]
    %v4722 = vld [vmem:[#allocation11 + $0x1a8] sm:$0xff]
    %v4723 = vld [vmem:[#allocation11 + $0x1b0] sm:$0xff]
    %v4724 = vld [vmem:[#allocation11 + $0x1b8] sm:$0xff]
    %v4725 = vld [vmem:[#allocation11 + $0x1c0] sm:$0xff]
    %v4726 = vld [vmem:[#allocation11 + $0x1c8] sm:$0xff]
    %v4727 = vld [vmem:[#allocation11 + $0x1d0] sm:$0xff]
    %v4728 = vld [vmem:[#allocation11 + $0x1d8] sm:$0xff]
    %v4729 = vld [vmem:[#allocation11 + $0x1e0] sm:$0xff]
    %v4730 = vld [vmem:[#allocation11 + $0x1e8] sm:$0xff]
    %v4731 = vld [vmem:[#allocation11 + $0x1f0] sm:$0xff]
    %v4732 = vld [vmem:[#allocation11 + $0x1f8] sm:$0xff]
    %v4733 = vld [vmem:[#allocation11 + $0x200] sm:$0xff]
    %v4734 = vld [vmem:[#allocation11 + $0x208] sm:$0xff]
    %v4735 = vld [vmem:[#allocation11 + $0x210] sm:$0xff]
    %v4736 = vld [vmem:[#allocation11 + $0x218] sm:$0xff]
    %v4737 = vld [vmem:[#allocation11 + $0x220] sm:$0xff]
    %v4738 = vld [vmem:[#allocation11 + $0x228] sm:$0xff]
    %v4739 = vld [vmem:[#allocation11 + $0x230] sm:$0xff]
    %v4740 = vld [vmem:[#allocation11 + $0x238] sm:$0xff]
    %v4741 = vld [vmem:[#allocation11 + $0x240] sm:$0xff]
    %v4742 = vld [vmem:[#allocation11 + $0x248] sm:$0xff]
    %v4743 = vld [vmem:[#allocation11 + $0x250] sm:$0xff]
    %v4744 = vld [vmem:[#allocation11 + $0x258] sm:$0xff]
    %v4745 = vld [vmem:[#allocation11 + $0x260] sm:$0xff]
    %v4746 = vld [vmem:[#allocation11 + $0x268] sm:$0xff]
    %v4747 = vld [vmem:[#allocation11 + $0x270] sm:$0xff]
    %v4748 = vld [vmem:[#allocation11 + $0x278] sm:$0xff]
    %v4749 = vld [vmem:[#allocation11 + $0x280] sm:$0xff]
    %v4750 = vld [vmem:[#allocation11 + $0x288] sm:$0xff]
    %v4751 = vld [vmem:[#allocation11 + $0x290] sm:$0xff]
    %v4752 = vld [vmem:[#allocation11 + $0x298] sm:$0xff]
    %v4753 = vld [vmem:[#allocation11 + $0x2a0] sm:$0xff]
    %v4754 = vld [vmem:[#allocation11 + $0x2a8] sm:$0xff]
    %v4755 = vld [vmem:[#allocation11 + $0x2b0] sm:$0xff]
    %v4756 = vld [vmem:[#allocation11 + $0x2b8] sm:$0xff]
    %v4757 = vld [vmem:[#allocation11 + $0x2c0] sm:$0xff]
    %v4758 = vld [vmem:[#allocation11 + $0x2c8] sm:$0xff]
    %v4759 = vld [vmem:[#allocation11 + $0x2d0] sm:$0xff]
    %v4760 = vld [vmem:[#allocation11 + $0x2d8] sm:$0xff]
    %v4761 = vld [vmem:[#allocation11 + $0x2e0] sm:$0xff]
    %v4762 = vld [vmem:[#allocation11 + $0x2e8] sm:$0xff]
    %v4763 = vld [vmem:[#allocation11 + $0x2f0] sm:$0xff]
    %v4764 = vld [vmem:[#allocation11 + $0x2f8] sm:$0xff]
    %v4765 = vld [vmem:[#allocation11 + $0x300] sm:$0xff]
    %v4766 = vld [vmem:[#allocation11 + $0x308] sm:$0xff]
    %v4767 = vld [vmem:[#allocation11 + $0x310] sm:$0xff]
    %v4768 = vld [vmem:[#allocation11 + $0x318] sm:$0xff]
    %v4769 = vld [vmem:[#allocation11 + $0x320] sm:$0xff]
    %v4770 = vld [vmem:[#allocation11 + $0x328] sm:$0xff]
    %v4771 = vld [vmem:[#allocation11 + $0x330] sm:$0xff]
    %v4772 = vld [vmem:[#allocation11 + $0x338] sm:$0xff]
    %v4773 = vld [vmem:[#allocation11 + $0x340] sm:$0xff]
    %v4774 = vld [vmem:[#allocation11 + $0x348] sm:$0xff]
    %v4775 = vld [vmem:[#allocation11 + $0x350] sm:$0xff]
    %v4776 = vld [vmem:[#allocation11 + $0x358] sm:$0xff]
    %v4777 = vld [vmem:[#allocation11 + $0x360] sm:$0xff]
    %v4778 = vld [vmem:[#allocation11 + $0x368] sm:$0xff]
    %v4779 = vld [vmem:[#allocation11 + $0x370] sm:$0xff]
    %v4780 = vld [vmem:[#allocation11 + $0x378] sm:$0xff]
    %v4781 = vld [vmem:[#allocation11 + $0x380] sm:$0xff]
    %v4782 = vld [vmem:[#allocation11 + $0x388] sm:$0xff]
    %v4783 = vld [vmem:[#allocation11 + $0x390] sm:$0xff]
    %v4784 = vld [vmem:[#allocation11 + $0x398] sm:$0xff]
    %v4785 = vld [vmem:[#allocation11 + $0x3a0] sm:$0xff]
    %v4786 = vld [vmem:[#allocation11 + $0x3a8] sm:$0xff]
    %v4787 = vld [vmem:[#allocation11 + $0x3b0] sm:$0xff]
    %v4788 = vld [vmem:[#allocation11 + $0x3b8] sm:$0xff]
    %v4789 = vld [vmem:[#allocation11 + $0x3c0] sm:$0xff]
    %v4790 = vld [vmem:[#allocation11 + $0x3c8] sm:$0xff]
    %v4791 = vld [vmem:[#allocation11 + $0x3d0] sm:$0xff]
    %v4792 = vld [vmem:[#allocation11 + $0x3d8] sm:$0xff]
    %v4793 = vld [vmem:[#allocation11 + $0x3e0] sm:$0xff]
    %v4794 = vld [vmem:[#allocation11 + $0x3e8] sm:$0xff]
    %v4795 = vld [vmem:[#allocation11 + $0x3f0] sm:$0xff]
    %v4796 = vld [vmem:[#allocation11 + $0x3f8] sm:$0xff]
    %v4797 = vld [vmem:[%s12] sm:$0xff]
    %v4799 = vperm.slane %v4797, 0
    %v4800 = vperm.slane %v4797, 1
    %v4801 = vperm.slane %v4797, 2
    %v4802 = vperm.slane %v4797, 3
    %v4803 = vperm.slane %v4797, 4
    %v4804 = vperm.slane %v4797, 5
    %v4805 = vperm.slane %v4797, 6
    %v4806 = vperm.slane %v4797, 7
    %v4943 = vunpack.c.l.b16 %v4669
    %v4944 = vunpack.c.h.b16 %v4669
    %v4945 = vunpack.c.l.b16 %v4670
    %v4946 = vunpack.c.h.b16 %v4670
    %v4947 = vunpack.c.l.b16 %v4671
    %v4948 = vunpack.c.h.b16 %v4671
    %v4949 = vunpack.c.l.b16 %v4672
    %v4950 = vunpack.c.h.b16 %v4672
    %v4951 = vunpack.c.l.b16 %v4673
    %v4952 = vunpack.c.h.b16 %v4673
    %v4953 = vunpack.c.l.b16 %v4674
    %v4954 = vunpack.c.h.b16 %v4674
    %v4955 = vunpack.c.l.b16 %v4675
    %v4956 = vunpack.c.h.b16 %v4675
    %v4957 = vunpack.c.l.b16 %v4676
    %v4958 = vunpack.c.h.b16 %v4676
    %v4959 = vunpack.c.l.b16 %v4677
    %v4960 = vunpack.c.h.b16 %v4677
    %v4961 = vunpack.c.l.b16 %v4678
    %v4962 = vunpack.c.h.b16 %v4678
    %v4963 = vunpack.c.l.b16 %v4679
    %v4964 = vunpack.c.h.b16 %v4679
    %v4965 = vunpack.c.l.b16 %v4680
    %v4966 = vunpack.c.h.b16 %v4680
    %v4967 = vunpack.c.l.b16 %v4681
    %v4968 = vunpack.c.h.b16 %v4681
    %v4969 = vunpack.c.l.b16 %v4682
    %v4970 = vunpack.c.h.b16 %v4682
    %v4971 = vunpack.c.l.b16 %v4683
    %v4972 = vunpack.c.h.b16 %v4683
    %v4973 = vunpack.c.l.b16 %v4684
    %v4974 = vunpack.c.h.b16 %v4684
    %v4975 = vunpack.c.l.b16 %v4685
    %v4976 = vunpack.c.h.b16 %v4685
    %v4977 = vunpack.c.l.b16 %v4686
    %v4978 = vunpack.c.h.b16 %v4686
    %v4979 = vunpack.c.l.b16 %v4687
    %v4980 = vunpack.c.h.b16 %v4687
    %v4981 = vunpack.c.l.b16 %v4688
    %v4982 = vunpack.c.h.b16 %v4688
    %v4983 = vunpack.c.l.b16 %v4689
    %v4984 = vunpack.c.h.b16 %v4689
    %v4985 = vunpack.c.l.b16 %v4690
    %v4986 = vunpack.c.h.b16 %v4690
    %v4987 = vunpack.c.l.b16 %v4691
    %v4988 = vunpack.c.h.b16 %v4691
    %v4989 = vunpack.c.l.b16 %v4692
    %v4990 = vunpack.c.h.b16 %v4692
    %v4991 = vunpack.c.l.b16 %v4693
    %v4992 = vunpack.c.h.b16 %v4693
    %v4993 = vunpack.c.l.b16 %v4694
    %v4994 = vunpack.c.h.b16 %v4694
    %v4995 = vunpack.c.l.b16 %v4695
    %v4996 = vunpack.c.h.b16 %v4695
    %v4997 = vunpack.c.l.b16 %v4696
    %v4998 = vunpack.c.h.b16 %v4696
    %v4999 = vunpack.c.l.b16 %v4697
    %v5000 = vunpack.c.h.b16 %v4697
    %v5001 = vunpack.c.l.b16 %v4698
    %v5002 = vunpack.c.h.b16 %v4698
    %v5003 = vunpack.c.l.b16 %v4699
    %v5004 = vunpack.c.h.b16 %v4699
    %v5005 = vunpack.c.l.b16 %v4700
    %v5006 = vunpack.c.h.b16 %v4700
    %v5007 = vunpack.c.l.b16 %v4701
    %v5008 = vunpack.c.h.b16 %v4701
    %v5009 = vunpack.c.l.b16 %v4702
    %v5010 = vunpack.c.h.b16 %v4702
    %v5011 = vunpack.c.l.b16 %v4703
    %v5012 = vunpack.c.h.b16 %v4703
    %v5013 = vunpack.c.l.b16 %v4704
    %v5014 = vunpack.c.h.b16 %v4704
    %v5015 = vunpack.c.l.b16 %v4705
    %v5016 = vunpack.c.h.b16 %v4705
    %v5017 = vunpack.c.l.b16 %v4706
    %v5018 = vunpack.c.h.b16 %v4706
    %v5019 = vunpack.c.l.b16 %v4707
    %v5020 = vunpack.c.h.b16 %v4707
    %v5021 = vunpack.c.l.b16 %v4708
    %v5022 = vunpack.c.h.b16 %v4708
    %v5023 = vunpack.c.l.b16 %v4709
    %v5024 = vunpack.c.h.b16 %v4709
    %v5025 = vunpack.c.l.b16 %v4710
    %v5026 = vunpack.c.h.b16 %v4710
    %v5027 = vunpack.c.l.b16 %v4711
    %v5028 = vunpack.c.h.b16 %v4711
    %v5029 = vunpack.c.l.b16 %v4712
    %v5030 = vunpack.c.h.b16 %v4712
    %v5031 = vunpack.c.l.b16 %v4713
    %v5032 = vunpack.c.h.b16 %v4713
    %v5033 = vunpack.c.l.b16 %v4714
    %v5034 = vunpack.c.h.b16 %v4714
    %v5035 = vunpack.c.l.b16 %v4715
    %v5036 = vunpack.c.h.b16 %v4715
    %v5037 = vunpack.c.l.b16 %v4716
    %v5038 = vunpack.c.h.b16 %v4716
    %v5039 = vunpack.c.l.b16 %v4717
    %v5040 = vunpack.c.h.b16 %v4717
    %v5041 = vunpack.c.l.b16 %v4718
    %v5042 = vunpack.c.h.b16 %v4718
    %v5043 = vunpack.c.l.b16 %v4719
    %v5044 = vunpack.c.h.b16 %v4719
    %v5045 = vunpack.c.l.b16 %v4720
    %v5046 = vunpack.c.h.b16 %v4720
    %v5047 = vunpack.c.l.b16 %v4721
    %v5048 = vunpack.c.h.b16 %v4721
    %v5049 = vunpack.c.l.b16 %v4722
    %v5050 = vunpack.c.h.b16 %v4722
    %v5051 = vunpack.c.l.b16 %v4723
    %v5052 = vunpack.c.h.b16 %v4723
    %v5053 = vunpack.c.l.b16 %v4724
    %v5054 = vunpack.c.h.b16 %v4724
    %v5055 = vunpack.c.l.b16 %v4725
    %v5056 = vunpack.c.h.b16 %v4725
    %v5057 = vunpack.c.l.b16 %v4726
    %v5058 = vunpack.c.h.b16 %v4726
    %v5059 = vunpack.c.l.b16 %v4727
    %v5060 = vunpack.c.h.b16 %v4727
    %v5061 = vunpack.c.l.b16 %v4728
    %v5062 = vunpack.c.h.b16 %v4728
    %v5063 = vunpack.c.l.b16 %v4729
    %v5064 = vunpack.c.h.b16 %v4729
    %v5065 = vunpack.c.l.b16 %v4730
    %v5066 = vunpack.c.h.b16 %v4730
    %v5067 = vunpack.c.l.b16 %v4731
    %v5068 = vunpack.c.h.b16 %v4731
    %v5069 = vunpack.c.l.b16 %v4732
    %v5070 = vunpack.c.h.b16 %v4732
    %v5071 = vunpack.c.l.b16 %v4733
    %v5072 = vunpack.c.h.b16 %v4733
    %v5073 = vunpack.c.l.b16 %v4734
    %v5074 = vunpack.c.h.b16 %v4734
    %v5075 = vunpack.c.l.b16 %v4735
    %v5076 = vunpack.c.h.b16 %v4735
    %v5077 = vunpack.c.l.b16 %v4736
    %v5078 = vunpack.c.h.b16 %v4736
    %v5079 = vunpack.c.l.b16 %v4737
    %v5080 = vunpack.c.h.b16 %v4737
    %v5081 = vunpack.c.l.b16 %v4738
    %v5082 = vunpack.c.h.b16 %v4738
    %v5083 = vunpack.c.l.b16 %v4739
    %v5084 = vunpack.c.h.b16 %v4739
    %v5085 = vunpack.c.l.b16 %v4740
    %v5086 = vunpack.c.h.b16 %v4740
    %v5087 = vunpack.c.l.b16 %v4741
    %v5088 = vunpack.c.h.b16 %v4741
    %v5089 = vunpack.c.l.b16 %v4742
    %v5090 = vunpack.c.h.b16 %v4742
    %v5091 = vunpack.c.l.b16 %v4743
    %v5092 = vunpack.c.h.b16 %v4743
    %v5093 = vunpack.c.l.b16 %v4744
    %v5094 = vunpack.c.h.b16 %v4744
    %v5095 = vunpack.c.l.b16 %v4745
    %v5096 = vunpack.c.h.b16 %v4745
    %v5097 = vunpack.c.l.b16 %v4746
    %v5098 = vunpack.c.h.b16 %v4746
    %v5099 = vunpack.c.l.b16 %v4747
    %v5100 = vunpack.c.h.b16 %v4747
    %v5101 = vunpack.c.l.b16 %v4748
    %v5102 = vunpack.c.h.b16 %v4748
    %v5103 = vunpack.c.l.b16 %v4749
    %v5104 = vunpack.c.h.b16 %v4749
    %v5105 = vunpack.c.l.b16 %v4750
    %v5106 = vunpack.c.h.b16 %v4750
    %v5107 = vunpack.c.l.b16 %v4751
    %v5108 = vunpack.c.h.b16 %v4751
    %v5109 = vunpack.c.l.b16 %v4752
    %v5110 = vunpack.c.h.b16 %v4752
    %v5111 = vunpack.c.l.b16 %v4753
    %v5112 = vunpack.c.h.b16 %v4753
    %v5113 = vunpack.c.l.b16 %v4754
    %v5114 = vunpack.c.h.b16 %v4754
    %v5115 = vunpack.c.l.b16 %v4755
    %v5116 = vunpack.c.h.b16 %v4755
    %v5117 = vunpack.c.l.b16 %v4756
    %v5118 = vunpack.c.h.b16 %v4756
    %v5119 = vunpack.c.l.b16 %v4757
    %v5120 = vunpack.c.h.b16 %v4757
    %v5121 = vunpack.c.l.b16 %v4758
    %v5122 = vunpack.c.h.b16 %v4758
    %v5123 = vunpack.c.l.b16 %v4759
    %v5124 = vunpack.c.h.b16 %v4759
    %v5125 = vunpack.c.l.b16 %v4760
    %v5126 = vunpack.c.h.b16 %v4760
    %v5127 = vunpack.c.l.b16 %v4761
    %v5128 = vunpack.c.h.b16 %v4761
    %v5129 = vunpack.c.l.b16 %v4762
    %v5130 = vunpack.c.h.b16 %v4762
    %v5131 = vunpack.c.l.b16 %v4763
    %v5132 = vunpack.c.h.b16 %v4763
    %v5133 = vunpack.c.l.b16 %v4764
    %v5134 = vunpack.c.h.b16 %v4764
    %v5135 = vunpack.c.l.b16 %v4765
    %v5136 = vunpack.c.h.b16 %v4765
    %v5137 = vunpack.c.l.b16 %v4766
    %v5138 = vunpack.c.h.b16 %v4766
    %v5139 = vunpack.c.l.b16 %v4767
    %v5140 = vunpack.c.h.b16 %v4767
    %v5141 = vunpack.c.l.b16 %v4768
    %v5142 = vunpack.c.h.b16 %v4768
    %v5143 = vunpack.c.l.b16 %v4769
    %v5144 = vunpack.c.h.b16 %v4769
    %v5145 = vunpack.c.l.b16 %v4770
    %v5146 = vunpack.c.h.b16 %v4770
    %v5147 = vunpack.c.l.b16 %v4771
    %v5148 = vunpack.c.h.b16 %v4771
    %v5149 = vunpack.c.l.b16 %v4772
    %v5150 = vunpack.c.h.b16 %v4772
    %v5151 = vunpack.c.l.b16 %v4773
    %v5152 = vunpack.c.h.b16 %v4773
    %v5153 = vunpack.c.l.b16 %v4774
    %v5154 = vunpack.c.h.b16 %v4774
    %v5155 = vunpack.c.l.b16 %v4775
    %v5156 = vunpack.c.h.b16 %v4775
    %v5157 = vunpack.c.l.b16 %v4776
    %v5158 = vunpack.c.h.b16 %v4776
    %v5159 = vunpack.c.l.b16 %v4777
    %v5160 = vunpack.c.h.b16 %v4777
    %v5161 = vunpack.c.l.b16 %v4778
    %v5162 = vunpack.c.h.b16 %v4778
    %v5163 = vunpack.c.l.b16 %v4779
    %v5164 = vunpack.c.h.b16 %v4779
    %v5165 = vunpack.c.l.b16 %v4780
    %v5166 = vunpack.c.h.b16 %v4780
    %v5167 = vunpack.c.l.b16 %v4781
    %v5168 = vunpack.c.h.b16 %v4781
    %v5169 = vunpack.c.l.b16 %v4782
    %v5170 = vunpack.c.h.b16 %v4782
    %v5171 = vunpack.c.l.b16 %v4783
    %v5172 = vunpack.c.h.b16 %v4783
    %v5173 = vunpack.c.l.b16 %v4784
    %v5174 = vunpack.c.h.b16 %v4784
    %v5175 = vunpack.c.l.b16 %v4785
    %v5176 = vunpack.c.h.b16 %v4785
    %v5177 = vunpack.c.l.b16 %v4786
    %v5178 = vunpack.c.h.b16 %v4786
    %v5179 = vunpack.c.l.b16 %v4787
    %v5180 = vunpack.c.h.b16 %v4787
    %v5181 = vunpack.c.l.b16 %v4788
    %v5182 = vunpack.c.h.b16 %v4788
    %v5183 = vunpack.c.l.b16 %v4789
    %v5184 = vunpack.c.h.b16 %v4789
    %v5185 = vunpack.c.l.b16 %v4790
    %v5186 = vunpack.c.h.b16 %v4790
    %v5187 = vunpack.c.l.b16 %v4791
    %v5188 = vunpack.c.h.b16 %v4791
    %v5189 = vunpack.c.l.b16 %v4792
    %v5190 = vunpack.c.h.b16 %v4792
    %v5191 = vunpack.c.l.b16 %v4793
    %v5192 = vunpack.c.h.b16 %v4793
    %v5193 = vunpack.c.l.b16 %v4794
    %v5194 = vunpack.c.h.b16 %v4794
    %v5195 = vunpack.c.l.b16 %v4795
    %v5196 = vunpack.c.h.b16 %v4795
    %v5197 = vunpack.c.l.b16 %v4796
    %v5198 = vunpack.c.h.b16 %v4796
    %v5199 = vpack.c.b16 %v4951, %v4943
    %v5200 = vpack.c.b16 %v4952, %v4944
    %v5201 = vpack.c.b16 %v4953, %v4945
    %v5202 = vpack.c.b16 %v4954, %v4946
    %v5203 = vpack.c.b16 %v4955, %v4947
    %v5204 = vpack.c.b16 %v4956, %v4948
    %v5205 = vpack.c.b16 %v4957, %v4949
    %v5206 = vpack.c.b16 %v4958, %v4950
    %v5207 = vpack.c.b16 %v4967, %v4959
    %v5208 = vpack.c.b16 %v4968, %v4960
    %v5209 = vpack.c.b16 %v4969, %v4961
    %v5210 = vpack.c.b16 %v4970, %v4962
    %v5211 = vpack.c.b16 %v4971, %v4963
    %v5212 = vpack.c.b16 %v4972, %v4964
    %v5213 = vpack.c.b16 %v4973, %v4965
    %v5214 = vpack.c.b16 %v4974, %v4966
    %v5215 = vpack.c.b16 %v4983, %v4975
    %v5216 = vpack.c.b16 %v4984, %v4976
    %v5217 = vpack.c.b16 %v4985, %v4977
    %v5218 = vpack.c.b16 %v4986, %v4978
    %v5219 = vpack.c.b16 %v4987, %v4979
    %v5220 = vpack.c.b16 %v4988, %v4980
    %v5221 = vpack.c.b16 %v4989, %v4981
    %v5222 = vpack.c.b16 %v4990, %v4982
    %v5223 = vpack.c.b16 %v4999, %v4991
    %v5224 = vpack.c.b16 %v5000, %v4992
    %v5225 = vpack.c.b16 %v5001, %v4993
    %v5226 = vpack.c.b16 %v5002, %v4994
    %v5227 = vpack.c.b16 %v5003, %v4995
    %v5228 = vpack.c.b16 %v5004, %v4996
    %v5229 = vpack.c.b16 %v5005, %v4997
    %v5230 = vpack.c.b16 %v5006, %v4998
    %v5231 = vpack.c.b16 %v5015, %v5007
    %v5232 = vpack.c.b16 %v5016, %v5008
    %v5233 = vpack.c.b16 %v5017, %v5009
    %v5234 = vpack.c.b16 %v5018, %v5010
    %v5235 = vpack.c.b16 %v5019, %v5011
    %v5236 = vpack.c.b16 %v5020, %v5012
    %v5237 = vpack.c.b16 %v5021, %v5013
    %v5238 = vpack.c.b16 %v5022, %v5014
    %v5239 = vpack.c.b16 %v5031, %v5023
    %v5240 = vpack.c.b16 %v5032, %v5024
    %v5241 = vpack.c.b16 %v5033, %v5025
    %v5242 = vpack.c.b16 %v5034, %v5026
    %v5243 = vpack.c.b16 %v5035, %v5027
    %v5244 = vpack.c.b16 %v5036, %v5028
    %v5245 = vpack.c.b16 %v5037, %v5029
    %v5246 = vpack.c.b16 %v5038, %v5030
    %v5247 = vpack.c.b16 %v5047, %v5039
    %v5248 = vpack.c.b16 %v5048, %v5040
    %v5249 = vpack.c.b16 %v5049, %v5041
    %v5250 = vpack.c.b16 %v5050, %v5042
    %v5251 = vpack.c.b16 %v5051, %v5043
    %v5252 = vpack.c.b16 %v5052, %v5044
    %v5253 = vpack.c.b16 %v5053, %v5045
    %v5254 = vpack.c.b16 %v5054, %v5046
    %v5255 = vpack.c.b16 %v5063, %v5055
    %v5256 = vpack.c.b16 %v5064, %v5056
    %v5257 = vpack.c.b16 %v5065, %v5057
    %v5258 = vpack.c.b16 %v5066, %v5058
    %v5259 = vpack.c.b16 %v5067, %v5059
    %v5260 = vpack.c.b16 %v5068, %v5060
    %v5261 = vpack.c.b16 %v5069, %v5061
    %v5262 = vpack.c.b16 %v5070, %v5062
    %v5263 = vpack.c.b16 %v5079, %v5071
    %v5264 = vpack.c.b16 %v5080, %v5072
    %v5265 = vpack.c.b16 %v5081, %v5073
    %v5266 = vpack.c.b16 %v5082, %v5074
    %v5267 = vpack.c.b16 %v5083, %v5075
    %v5268 = vpack.c.b16 %v5084, %v5076
    %v5269 = vpack.c.b16 %v5085, %v5077
    %v5270 = vpack.c.b16 %v5086, %v5078
    %v5271 = vpack.c.b16 %v5095, %v5087
    %v5272 = vpack.c.b16 %v5096, %v5088
    %v5273 = vpack.c.b16 %v5097, %v5089
    %v5274 = vpack.c.b16 %v5098, %v5090
    %v5275 = vpack.c.b16 %v5099, %v5091
    %v5276 = vpack.c.b16 %v5100, %v5092
    %v5277 = vpack.c.b16 %v5101, %v5093
    %v5278 = vpack.c.b16 %v5102, %v5094
    %v5279 = vpack.c.b16 %v5111, %v5103
    %v5280 = vpack.c.b16 %v5112, %v5104
    %v5281 = vpack.c.b16 %v5113, %v5105
    %v5282 = vpack.c.b16 %v5114, %v5106
    %v5283 = vpack.c.b16 %v5115, %v5107
    %v5284 = vpack.c.b16 %v5116, %v5108
    %v5285 = vpack.c.b16 %v5117, %v5109
    %v5286 = vpack.c.b16 %v5118, %v5110
    %v5287 = vpack.c.b16 %v5127, %v5119
    %v5288 = vpack.c.b16 %v5128, %v5120
    %v5289 = vpack.c.b16 %v5129, %v5121
    %v5290 = vpack.c.b16 %v5130, %v5122
    %v5291 = vpack.c.b16 %v5131, %v5123
    %v5292 = vpack.c.b16 %v5132, %v5124
    %v5293 = vpack.c.b16 %v5133, %v5125
    %v5294 = vpack.c.b16 %v5134, %v5126
    %v5295 = vpack.c.b16 %v5143, %v5135
    %v5296 = vpack.c.b16 %v5144, %v5136
    %v5297 = vpack.c.b16 %v5145, %v5137
    %v5298 = vpack.c.b16 %v5146, %v5138
    %v5299 = vpack.c.b16 %v5147, %v5139
    %v5300 = vpack.c.b16 %v5148, %v5140
    %v5301 = vpack.c.b16 %v5149, %v5141
    %v5302 = vpack.c.b16 %v5150, %v5142
    %v5303 = vpack.c.b16 %v5159, %v5151
    %v5304 = vpack.c.b16 %v5160, %v5152
    %v5305 = vpack.c.b16 %v5161, %v5153
    %v5306 = vpack.c.b16 %v5162, %v5154
    %v5307 = vpack.c.b16 %v5163, %v5155
    %v5308 = vpack.c.b16 %v5164, %v5156
    %v5309 = vpack.c.b16 %v5165, %v5157
    %v5310 = vpack.c.b16 %v5166, %v5158
    %v5311 = vpack.c.b16 %v5175, %v5167
    %v5312 = vpack.c.b16 %v5176, %v5168
    %v5313 = vpack.c.b16 %v5177, %v5169
    %v5314 = vpack.c.b16 %v5178, %v5170
    %v5315 = vpack.c.b16 %v5179, %v5171
    %v5316 = vpack.c.b16 %v5180, %v5172
    %v5317 = vpack.c.b16 %v5181, %v5173
    %v5318 = vpack.c.b16 %v5182, %v5174
    %v5319 = vpack.c.b16 %v5191, %v5183
    %v5320 = vpack.c.b16 %v5192, %v5184
    %v5321 = vpack.c.b16 %v5193, %v5185
    %v5322 = vpack.c.b16 %v5194, %v5186
    %v5323 = vpack.c.b16 %v5195, %v5187
    %v5324 = vpack.c.b16 %v5196, %v5188
    %v5325 = vpack.c.b16 %v5197, %v5189
    %v5326 = vpack.c.b16 %v5198, %v5190
    %5455 = vmatpush.bf16.msra.mxu0 %v5255
    %5456 = vmatpush.bf16.msra.mxu0 %v5247
    %5457 = vmatpush.bf16.msra.mxu0 %v5239
    %5458 = vmatpush.bf16.msra.mxu0 %v5231
    %5459 = vmatpush.bf16.msra.mxu0 %v5223
    %5460 = vmatpush.bf16.msra.mxu0 %v5215
    %5461 = vmatpush.bf16.msra.mxu0 %v5207
    %5462 = vmatpush.bf16.msra.mxu0 %v5199
    %5463 = vmatmul.bf16.gmra.mxu0 %v4667
    %v5464 = vpop.f32.mrf.mxu0
    %v5465 = vadd.f32 %v4799, %v5464
    %v5466 = vpop.f32.mrf.mxu0
    %v5467 = vadd.f32 %v4799, %v5466
    %5468 = vdwg.mxu0
    %5469 = vmatpush.bf16.msra.mxu0 %v5319
    %5470 = vmatpush.bf16.msra.mxu0 %v5311
    %5471 = vmatpush.bf16.msra.mxu0 %v5303
    %5472 = vmatpush.bf16.msra.mxu0 %v5295
    %5473 = vmatpush.bf16.msra.mxu0 %v5287
    %5474 = vmatpush.bf16.msra.mxu0 %v5279
    %5475 = vmatpush.bf16.msra.mxu0 %v5271
    %5476 = vmatpush.bf16.msra.mxu0 %v5263
    %5477 = vmatmul.bf16.gmra.mxu0 %v4668
    %v5478 = vpop.f32.mrf.mxu0
    %v5479 = vadd.f32 %v5465, %v5478
    %v5480 = vpop.f32.mrf.mxu0
    %v5481 = vadd.f32 %v5467, %v5480
    %5482 = vdwg.mxu0
    %5483 = vmatpush.bf16.msra.mxu0 %v5256
    %5484 = vmatpush.bf16.msra.mxu0 %v5248
    %5485 = vmatpush.bf16.msra.mxu0 %v5240
    %5486 = vmatpush.bf16.msra.mxu0 %v5232
    %5487 = vmatpush.bf16.msra.mxu0 %v5224
    %5488 = vmatpush.bf16.msra.mxu0 %v5216
    %5489 = vmatpush.bf16.msra.mxu0 %v5208
    %5490 = vmatpush.bf16.msra.mxu0 %v5200
    %5491 = vmatmul.bf16.gmra.mxu0 %v4667
    %v5492 = vpop.f32.mrf.mxu0
    %v5493 = vadd.f32 %v4800, %v5492
    %v5494 = vpop.f32.mrf.mxu0
    %v5495 = vadd.f32 %v4800, %v5494
    %5496 = vdwg.mxu0
    %5497 = vmatpush.bf16.msra.mxu0 %v5320
    %5498 = vmatpush.bf16.msra.mxu0 %v5312
    %5499 = vmatpush.bf16.msra.mxu0 %v5304
    %5500 = vmatpush.bf16.msra.mxu0 %v5296
    %5501 = vmatpush.bf16.msra.mxu0 %v5288
    %5502 = vmatpush.bf16.msra.mxu0 %v5280
    %5503 = vmatpush.bf16.msra.mxu0 %v5272
    %5504 = vmatpush.bf16.msra.mxu0 %v5264
    %5505 = vmatmul.bf16.gmra.mxu0 %v4668
    %v5506 = vpop.f32.mrf.mxu0
    %v5507 = vadd.f32 %v5493, %v5506
    %v5508 = vpop.f32.mrf.mxu0
    %v5509 = vadd.f32 %v5495, %v5508
    %5510 = vdwg.mxu0
    %5511 = vmatpush.bf16.msra.mxu0 %v5257
    %5512 = vmatpush.bf16.msra.mxu0 %v5249
    %5513 = vmatpush.bf16.msra.mxu0 %v5241
    %5514 = vmatpush.bf16.msra.mxu0 %v5233
    %5515 = vmatpush.bf16.msra.mxu0 %v5225
    %5516 = vmatpush.bf16.msra.mxu0 %v5217
    %5517 = vmatpush.bf16.msra.mxu0 %v5209
    %5518 = vmatpush.bf16.msra.mxu0 %v5201
    %5519 = vmatmul.bf16.gmra.mxu0 %v4667
    %v5520 = vpop.f32.mrf.mxu0
    %v5521 = vadd.f32 %v4801, %v5520
    %v5522 = vpop.f32.mrf.mxu0
    %v5523 = vadd.f32 %v4801, %v5522
    %5524 = vdwg.mxu0
    %5525 = vmatpush.bf16.msra.mxu0 %v5321
    %5526 = vmatpush.bf16.msra.mxu0 %v5313
    %5527 = vmatpush.bf16.msra.mxu0 %v5305
    %5528 = vmatpush.bf16.msra.mxu0 %v5297
    %5529 = vmatpush.bf16.msra.mxu0 %v5289
    %5530 = vmatpush.bf16.msra.mxu0 %v5281
    %5531 = vmatpush.bf16.msra.mxu0 %v5273
    %5532 = vmatpush.bf16.msra.mxu0 %v5265
    %5533 = vmatmul.bf16.gmra.mxu0 %v4668
    %v5534 = vpop.f32.mrf.mxu0
    %v5535 = vadd.f32 %v5521, %v5534
    %v5536 = vpop.f32.mrf.mxu0
    %v5537 = vadd.f32 %v5523, %v5536
    %5538 = vdwg.mxu0
    %5539 = vmatpush.bf16.msra.mxu0 %v5258
    %5540 = vmatpush.bf16.msra.mxu0 %v5250
    %5541 = vmatpush.bf16.msra.mxu0 %v5242
    %5542 = vmatpush.bf16.msra.mxu0 %v5234
    %5543 = vmatpush.bf16.msra.mxu0 %v5226
    %5544 = vmatpush.bf16.msra.mxu0 %v5218
    %5545 = vmatpush.bf16.msra.mxu0 %v5210
    %5546 = vmatpush.bf16.msra.mxu0 %v5202
    %5547 = vmatmul.bf16.gmra.mxu0 %v4667
    %v5548 = vpop.f32.mrf.mxu0
    %v5549 = vadd.f32 %v4802, %v5548
    %v5550 = vpop.f32.mrf.mxu0
    %v5551 = vadd.f32 %v4802, %v5550
    %5552 = vdwg.mxu0
    %5553 = vmatpush.bf16.msra.mxu0 %v5322
    %5554 = vmatpush.bf16.msra.mxu0 %v5314
    %5555 = vmatpush.bf16.msra.mxu0 %v5306
    %5556 = vmatpush.bf16.msra.mxu0 %v5298
    %5557 = vmatpush.bf16.msra.mxu0 %v5290
    %5558 = vmatpush.bf16.msra.mxu0 %v5282
    %5559 = vmatpush.bf16.msra.mxu0 %v5274
    %5560 = vmatpush.bf16.msra.mxu0 %v5266
    %5561 = vmatmul.bf16.gmra.mxu0 %v4668
    %v5562 = vpop.f32.mrf.mxu0
    %v5563 = vadd.f32 %v5549, %v5562
    %v5564 = vpop.f32.mrf.mxu0
    %v5565 = vadd.f32 %v5551, %v5564
    %5566 = vdwg.mxu0
    %5567 = vmatpush.bf16.msra.mxu0 %v5259
    %5568 = vmatpush.bf16.msra.mxu0 %v5251
    %5569 = vmatpush.bf16.msra.mxu0 %v5243
    %5570 = vmatpush.bf16.msra.mxu0 %v5235
    %5571 = vmatpush.bf16.msra.mxu0 %v5227
    %5572 = vmatpush.bf16.msra.mxu0 %v5219
    %5573 = vmatpush.bf16.msra.mxu0 %v5211
    %5574 = vmatpush.bf16.msra.mxu0 %v5203
    %5575 = vmatmul.bf16.gmra.mxu0 %v4667
    %v5576 = vpop.f32.mrf.mxu0
    %v5577 = vadd.f32 %v4803, %v5576
    %v5578 = vpop.f32.mrf.mxu0
    %v5579 = vadd.f32 %v4803, %v5578
    %5580 = vdwg.mxu0
    %5581 = vmatpush.bf16.msra.mxu0 %v5323
    %5582 = vmatpush.bf16.msra.mxu0 %v5315
    %5583 = vmatpush.bf16.msra.mxu0 %v5307
    %5584 = vmatpush.bf16.msra.mxu0 %v5299
    %5585 = vmatpush.bf16.msra.mxu0 %v5291
    %5586 = vmatpush.bf16.msra.mxu0 %v5283
    %5587 = vmatpush.bf16.msra.mxu0 %v5275
    %5588 = vmatpush.bf16.msra.mxu0 %v5267
    %5589 = vmatmul.bf16.gmra.mxu0 %v4668
    %v5590 = vpop.f32.mrf.mxu0
    %v5591 = vadd.f32 %v5577, %v5590
    %v5592 = vpop.f32.mrf.mxu0
    %v5593 = vadd.f32 %v5579, %v5592
    %5594 = vdwg.mxu0
    %5595 = vmatpush.bf16.msra.mxu0 %v5260
    %5596 = vmatpush.bf16.msra.mxu0 %v5252
    %5597 = vmatpush.bf16.msra.mxu0 %v5244
    %5598 = vmatpush.bf16.msra.mxu0 %v5236
    %5599 = vmatpush.bf16.msra.mxu0 %v5228
    %5600 = vmatpush.bf16.msra.mxu0 %v5220
    %5601 = vmatpush.bf16.msra.mxu0 %v5212
    %5602 = vmatpush.bf16.msra.mxu0 %v5204
    %5603 = vmatmul.bf16.gmra.mxu0 %v4667
    %v5604 = vpop.f32.mrf.mxu0
    %v5605 = vadd.f32 %v4804, %v5604
    %v5606 = vpop.f32.mrf.mxu0
    %v5607 = vadd.f32 %v4804, %v5606
    %5608 = vdwg.mxu0
    %5609 = vmatpush.bf16.msra.mxu0 %v5324
    %5610 = vmatpush.bf16.msra.mxu0 %v5316
    %5611 = vmatpush.bf16.msra.mxu0 %v5308
    %5612 = vmatpush.bf16.msra.mxu0 %v5300
    %5613 = vmatpush.bf16.msra.mxu0 %v5292
    %5614 = vmatpush.bf16.msra.mxu0 %v5284
    %5615 = vmatpush.bf16.msra.mxu0 %v5276
    %5616 = vmatpush.bf16.msra.mxu0 %v5268
    %5617 = vmatmul.bf16.gmra.mxu0 %v4668
    %v5618 = vpop.f32.mrf.mxu0
    %v5619 = vadd.f32 %v5605, %v5618
    %v5620 = vpop.f32.mrf.mxu0
    %v5621 = vadd.f32 %v5607, %v5620
    %5622 = vdwg.mxu0
    %5623 = vmatpush.bf16.msra.mxu0 %v5261
    %5624 = vmatpush.bf16.msra.mxu0 %v5253
    %5625 = vmatpush.bf16.msra.mxu0 %v5245
    %5626 = vmatpush.bf16.msra.mxu0 %v5237
    %5627 = vmatpush.bf16.msra.mxu0 %v5229
    %5628 = vmatpush.bf16.msra.mxu0 %v5221
    %5629 = vmatpush.bf16.msra.mxu0 %v5213
    %5630 = vmatpush.bf16.msra.mxu0 %v5205
    %5631 = vmatmul.bf16.gmra.mxu0 %v4667
    %v5632 = vpop.f32.mrf.mxu0
    %v5633 = vadd.f32 %v4805, %v5632
    %v5634 = vpop.f32.mrf.mxu0
    %v5635 = vadd.f32 %v4805, %v5634
    %5636 = vdwg.mxu0
    %5637 = vmatpush.bf16.msra.mxu0 %v5325
    %5638 = vmatpush.bf16.msra.mxu0 %v5317
    %5639 = vmatpush.bf16.msra.mxu0 %v5309
    %5640 = vmatpush.bf16.msra.mxu0 %v5301
    %5641 = vmatpush.bf16.msra.mxu0 %v5293
    %5642 = vmatpush.bf16.msra.mxu0 %v5285
    %5643 = vmatpush.bf16.msra.mxu0 %v5277
    %5644 = vmatpush.bf16.msra.mxu0 %v5269
    %5645 = vmatmul.bf16.gmra.mxu0 %v4668
    %v5646 = vpop.f32.mrf.mxu0
    %v5647 = vadd.f32 %v5633, %v5646
    %v5648 = vpop.f32.mrf.mxu0
    %v5649 = vadd.f32 %v5635, %v5648
    %5650 = vdwg.mxu0
    %5651 = vmatpush.bf16.msra.mxu0 %v5262
    %5652 = vmatpush.bf16.msra.mxu0 %v5254
    %5653 = vmatpush.bf16.msra.mxu0 %v5246
    %5654 = vmatpush.bf16.msra.mxu0 %v5238
    %5655 = vmatpush.bf16.msra.mxu0 %v5230
    %5656 = vmatpush.bf16.msra.mxu0 %v5222
    %5657 = vmatpush.bf16.msra.mxu0 %v5214
    %5658 = vmatpush.bf16.msra.mxu0 %v5206
    %5659 = vmatmul.bf16.gmra.mxu0 %v4667
    %v5660 = vpop.f32.mrf.mxu0
    %v5661 = vadd.f32 %v4806, %v5660
    %v5662 = vpop.f32.mrf.mxu0
    %v5663 = vadd.f32 %v4806, %v5662
    %5664 = vdwg.mxu0
    %5665 = vmatpush.bf16.msra.mxu0 %v5326
    %5666 = vmatpush.bf16.msra.mxu0 %v5318
    %5667 = vmatpush.bf16.msra.mxu0 %v5310
    %5668 = vmatpush.bf16.msra.mxu0 %v5302
    %5669 = vmatpush.bf16.msra.mxu0 %v5294
    %5670 = vmatpush.bf16.msra.mxu0 %v5286
    %5671 = vmatpush.bf16.msra.mxu0 %v5278
    %5672 = vmatpush.bf16.msra.mxu0 %v5270
    %5673 = vmatmul.bf16.gmra.mxu0 %v4668
    %v5674 = vpop.f32.mrf.mxu0
    %v5675 = vadd.f32 %v5661, %v5674
    %v5676 = vpop.f32.mrf.mxu0
    %v5677 = vadd.f32 %v5663, %v5676
    %5678 = vdwg.mxu0
    %v5679 = vmul.f32 %v5479, 0.5
    %v5680 = vmul.f32 %v5507, 0.5
    %v5681 = vtanh.pop %v5679
    %v5682 = vtanh.pop %v5680
    %v5683 = vadd.f32 %v5681, 1.0
    %v5684 = vadd.f32 %v5682, 1.0
    %v5685 = vmul.f32 %v5683, 0.5
    %v5686 = vmul.f32 %v5684, 0.5
    %v5687 = vtanh.pop %v5591
    %v5688 = vtanh.pop %v5619
    %v5689 = vmul.f32 %v5647, 0.5
    %v5690 = vmul.f32 %v5675, 0.5
    %v5691 = vtanh.pop %v5689
    %v5692 = vtanh.pop %v5690
    %v5693 = vadd.f32 %v5691, 1.0
    %v5694 = vadd.f32 %v5692, 1.0
    %v5695 = vmul.f32 %v5693, 0.5
    %v5696 = vmul.f32 %v5694, 0.5
    %v5697 = vmul.f32 %v5685, %v5687
    %v5698 = vmul.f32 %v5686, %v5688
    %v5699 = vtanh.pop %v5697
    %v5700 = vtanh.pop %v5698
    %v5701 = vmul.f32 %v5695, %v5699
    %v5702 = vmul.f32 %v5696, %v5700
    %v5703 = vpack.c.bf16 %v5701, %v5701
    %v5704 = vpack.c.bf16 %v5702, %v5702
    %v5833 = vunpack.c.l.b16 %v1861
    %v5834 = vunpack.c.h.b16 %v1861
    %v5835 = vunpack.c.l.b16 %v1862
    %v5836 = vunpack.c.h.b16 %v1862
    %v5837 = vunpack.c.l.b16 %v1863
    %v5838 = vunpack.c.h.b16 %v1863
    %v5839 = vunpack.c.l.b16 %v1864
    %v5840 = vunpack.c.h.b16 %v1864
    %v5841 = vunpack.c.l.b16 %v1865
    %v5842 = vunpack.c.h.b16 %v1865
    %v5843 = vunpack.c.l.b16 %v1866
    %v5844 = vunpack.c.h.b16 %v1866
    %v5845 = vunpack.c.l.b16 %v1867
    %v5846 = vunpack.c.h.b16 %v1867
    %v5847 = vunpack.c.l.b16 %v1868
    %v5848 = vunpack.c.h.b16 %v1868
    %v5849 = vunpack.c.l.b16 %v1869
    %v5850 = vunpack.c.h.b16 %v1869
    %v5851 = vunpack.c.l.b16 %v1870
    %v5852 = vunpack.c.h.b16 %v1870
    %v5853 = vunpack.c.l.b16 %v1871
    %v5854 = vunpack.c.h.b16 %v1871
    %v5855 = vunpack.c.l.b16 %v1872
    %v5856 = vunpack.c.h.b16 %v1872
    %v5857 = vunpack.c.l.b16 %v1873
    %v5858 = vunpack.c.h.b16 %v1873
    %v5859 = vunpack.c.l.b16 %v1874
    %v5860 = vunpack.c.h.b16 %v1874
    %v5861 = vunpack.c.l.b16 %v1875
    %v5862 = vunpack.c.h.b16 %v1875
    %v5863 = vunpack.c.l.b16 %v1876
    %v5864 = vunpack.c.h.b16 %v1876
    %v5865 = vunpack.c.l.b16 %v1877
    %v5866 = vunpack.c.h.b16 %v1877
    %v5867 = vunpack.c.l.b16 %v1878
    %v5868 = vunpack.c.h.b16 %v1878
    %v5869 = vunpack.c.l.b16 %v1879
    %v5870 = vunpack.c.h.b16 %v1879
    %v5871 = vunpack.c.l.b16 %v1880
    %v5872 = vunpack.c.h.b16 %v1880
    %v5873 = vunpack.c.l.b16 %v1881
    %v5874 = vunpack.c.h.b16 %v1881
    %v5875 = vunpack.c.l.b16 %v1882
    %v5876 = vunpack.c.h.b16 %v1882
    %v5877 = vunpack.c.l.b16 %v1883
    %v5878 = vunpack.c.h.b16 %v1883
    %v5879 = vunpack.c.l.b16 %v1884
    %v5880 = vunpack.c.h.b16 %v1884
    %v5881 = vunpack.c.l.b16 %v1885
    %v5882 = vunpack.c.h.b16 %v1885
    %v5883 = vunpack.c.l.b16 %v1886
    %v5884 = vunpack.c.h.b16 %v1886
    %v5885 = vunpack.c.l.b16 %v1887
    %v5886 = vunpack.c.h.b16 %v1887
    %v5887 = vunpack.c.l.b16 %v1888
    %v5888 = vunpack.c.h.b16 %v1888
    %v5889 = vunpack.c.l.b16 %v1889
    %v5890 = vunpack.c.h.b16 %v1889
    %v5891 = vunpack.c.l.b16 %v1890
    %v5892 = vunpack.c.h.b16 %v1890
    %v5893 = vunpack.c.l.b16 %v1891
    %v5894 = vunpack.c.h.b16 %v1891
    %v5895 = vunpack.c.l.b16 %v1892
    %v5896 = vunpack.c.h.b16 %v1892
    %v5897 = vunpack.c.l.b16 %v1893
    %v5898 = vunpack.c.h.b16 %v1893
    %v5899 = vunpack.c.l.b16 %v1894
    %v5900 = vunpack.c.h.b16 %v1894
    %v5901 = vunpack.c.l.b16 %v1895
    %v5902 = vunpack.c.h.b16 %v1895
    %v5903 = vunpack.c.l.b16 %v1896
    %v5904 = vunpack.c.h.b16 %v1896
    %v5905 = vunpack.c.l.b16 %v1897
    %v5906 = vunpack.c.h.b16 %v1897
    %v5907 = vunpack.c.l.b16 %v1898
    %v5908 = vunpack.c.h.b16 %v1898
    %v5909 = vunpack.c.l.b16 %v1899
    %v5910 = vunpack.c.h.b16 %v1899
    %v5911 = vunpack.c.l.b16 %v1900
    %v5912 = vunpack.c.h.b16 %v1900
    %v5913 = vunpack.c.l.b16 %v1901
    %v5914 = vunpack.c.h.b16 %v1901
    %v5915 = vunpack.c.l.b16 %v1902
    %v5916 = vunpack.c.h.b16 %v1902
    %v5917 = vunpack.c.l.b16 %v1903
    %v5918 = vunpack.c.h.b16 %v1903
    %v5919 = vunpack.c.l.b16 %v1904
    %v5920 = vunpack.c.h.b16 %v1904
    %v5921 = vunpack.c.l.b16 %v1905
    %v5922 = vunpack.c.h.b16 %v1905
    %v5923 = vunpack.c.l.b16 %v1906
    %v5924 = vunpack.c.h.b16 %v1906
    %v5925 = vunpack.c.l.b16 %v1907
    %v5926 = vunpack.c.h.b16 %v1907
    %v5927 = vunpack.c.l.b16 %v1908
    %v5928 = vunpack.c.h.b16 %v1908
    %v5929 = vunpack.c.l.b16 %v1909
    %v5930 = vunpack.c.h.b16 %v1909
    %v5931 = vunpack.c.l.b16 %v1910
    %v5932 = vunpack.c.h.b16 %v1910
    %v5933 = vunpack.c.l.b16 %v1911
    %v5934 = vunpack.c.h.b16 %v1911
    %v5935 = vunpack.c.l.b16 %v1912
    %v5936 = vunpack.c.h.b16 %v1912
    %v5937 = vunpack.c.l.b16 %v1913
    %v5938 = vunpack.c.h.b16 %v1913
    %v5939 = vunpack.c.l.b16 %v1914
    %v5940 = vunpack.c.h.b16 %v1914
    %v5941 = vunpack.c.l.b16 %v1915
    %v5942 = vunpack.c.h.b16 %v1915
    %v5943 = vunpack.c.l.b16 %v1916
    %v5944 = vunpack.c.h.b16 %v1916
    %v5945 = vunpack.c.l.b16 %v1917
    %v5946 = vunpack.c.h.b16 %v1917
    %v5947 = vunpack.c.l.b16 %v1918
    %v5948 = vunpack.c.h.b16 %v1918
    %v5949 = vunpack.c.l.b16 %v1919
    %v5950 = vunpack.c.h.b16 %v1919
    %v5951 = vunpack.c.l.b16 %v1920
    %v5952 = vunpack.c.h.b16 %v1920
    %v5953 = vunpack.c.l.b16 %v1921
    %v5954 = vunpack.c.h.b16 %v1921
    %v5955 = vunpack.c.l.b16 %v1922
    %v5956 = vunpack.c.h.b16 %v1922
    %v5957 = vunpack.c.l.b16 %v1923
    %v5958 = vunpack.c.h.b16 %v1923
    %v5959 = vunpack.c.l.b16 %v1924
    %v5960 = vunpack.c.h.b16 %v1924
    %v5961 = vunpack.c.l.b16 %v1925
    %v5962 = vunpack.c.h.b16 %v1925
    %v5963 = vunpack.c.l.b16 %v1926
    %v5964 = vunpack.c.h.b16 %v1926
    %v5965 = vunpack.c.l.b16 %v1927
    %v5966 = vunpack.c.h.b16 %v1927
    %v5967 = vunpack.c.l.b16 %v1928
    %v5968 = vunpack.c.h.b16 %v1928
    %v5969 = vunpack.c.l.b16 %v1929
    %v5970 = vunpack.c.h.b16 %v1929
    %v5971 = vunpack.c.l.b16 %v1930
    %v5972 = vunpack.c.h.b16 %v1930
    %v5973 = vunpack.c.l.b16 %v1931
    %v5974 = vunpack.c.h.b16 %v1931
    %v5975 = vunpack.c.l.b16 %v1932
    %v5976 = vunpack.c.h.b16 %v1932
    %v5977 = vunpack.c.l.b16 %v1933
    %v5978 = vunpack.c.h.b16 %v1933
    %v5979 = vunpack.c.l.b16 %v1934
    %v5980 = vunpack.c.h.b16 %v1934
    %v5981 = vunpack.c.l.b16 %v1935
    %v5982 = vunpack.c.h.b16 %v1935
    %v5983 = vunpack.c.l.b16 %v1936
    %v5984 = vunpack.c.h.b16 %v1936
    %v5985 = vunpack.c.l.b16 %v1937
    %v5986 = vunpack.c.h.b16 %v1937
    %v5987 = vunpack.c.l.b16 %v1938
    %v5988 = vunpack.c.h.b16 %v1938
    %v5989 = vunpack.c.l.b16 %v1939
    %v5990 = vunpack.c.h.b16 %v1939
    %v5991 = vunpack.c.l.b16 %v1940
    %v5992 = vunpack.c.h.b16 %v1940
    %v5993 = vunpack.c.l.b16 %v1941
    %v5994 = vunpack.c.h.b16 %v1941
    %v5995 = vunpack.c.l.b16 %v1942
    %v5996 = vunpack.c.h.b16 %v1942
    %v5997 = vunpack.c.l.b16 %v1943
    %v5998 = vunpack.c.h.b16 %v1943
    %v5999 = vunpack.c.l.b16 %v1944
    %v6000 = vunpack.c.h.b16 %v1944
    %v6001 = vunpack.c.l.b16 %v1945
    %v6002 = vunpack.c.h.b16 %v1945
    %v6003 = vunpack.c.l.b16 %v1946
    %v6004 = vunpack.c.h.b16 %v1946
    %v6005 = vunpack.c.l.b16 %v1947
    %v6006 = vunpack.c.h.b16 %v1947
    %v6007 = vunpack.c.l.b16 %v1948
    %v6008 = vunpack.c.h.b16 %v1948
    %v6009 = vunpack.c.l.b16 %v1949
    %v6010 = vunpack.c.h.b16 %v1949
    %v6011 = vunpack.c.l.b16 %v1950
    %v6012 = vunpack.c.h.b16 %v1950
    %v6013 = vunpack.c.l.b16 %v1951
    %v6014 = vunpack.c.h.b16 %v1951
    %v6015 = vunpack.c.l.b16 %v1952
    %v6016 = vunpack.c.h.b16 %v1952
    %v6017 = vunpack.c.l.b16 %v1953
    %v6018 = vunpack.c.h.b16 %v1953
    %v6019 = vunpack.c.l.b16 %v1954
    %v6020 = vunpack.c.h.b16 %v1954
    %v6021 = vunpack.c.l.b16 %v1955
    %v6022 = vunpack.c.h.b16 %v1955
    %v6023 = vunpack.c.l.b16 %v1956
    %v6024 = vunpack.c.h.b16 %v1956
    %v6025 = vunpack.c.l.b16 %v1957
    %v6026 = vunpack.c.h.b16 %v1957
    %v6027 = vunpack.c.l.b16 %v1958
    %v6028 = vunpack.c.h.b16 %v1958
    %v6029 = vunpack.c.l.b16 %v1959
    %v6030 = vunpack.c.h.b16 %v1959
    %v6031 = vunpack.c.l.b16 %v1960
    %v6032 = vunpack.c.h.b16 %v1960
    %v6033 = vunpack.c.l.b16 %v1961
    %v6034 = vunpack.c.h.b16 %v1961
    %v6035 = vunpack.c.l.b16 %v1962
    %v6036 = vunpack.c.h.b16 %v1962
    %v6037 = vunpack.c.l.b16 %v1963
    %v6038 = vunpack.c.h.b16 %v1963
    %v6039 = vunpack.c.l.b16 %v1964
    %v6040 = vunpack.c.h.b16 %v1964
    %v6041 = vunpack.c.l.b16 %v1965
    %v6042 = vunpack.c.h.b16 %v1965
    %v6043 = vunpack.c.l.b16 %v1966
    %v6044 = vunpack.c.h.b16 %v1966
    %v6045 = vunpack.c.l.b16 %v1967
    %v6046 = vunpack.c.h.b16 %v1967
    %v6047 = vunpack.c.l.b16 %v1968
    %v6048 = vunpack.c.h.b16 %v1968
    %v6049 = vunpack.c.l.b16 %v1969
    %v6050 = vunpack.c.h.b16 %v1969
    %v6051 = vunpack.c.l.b16 %v1970
    %v6052 = vunpack.c.h.b16 %v1970
    %v6053 = vunpack.c.l.b16 %v1971
    %v6054 = vunpack.c.h.b16 %v1971
    %v6055 = vunpack.c.l.b16 %v1972
    %v6056 = vunpack.c.h.b16 %v1972
    %v6057 = vunpack.c.l.b16 %v1973
    %v6058 = vunpack.c.h.b16 %v1973
    %v6059 = vunpack.c.l.b16 %v1974
    %v6060 = vunpack.c.h.b16 %v1974
    %v6061 = vunpack.c.l.b16 %v1975
    %v6062 = vunpack.c.h.b16 %v1975
    %v6063 = vunpack.c.l.b16 %v1976
    %v6064 = vunpack.c.h.b16 %v1976
    %v6065 = vunpack.c.l.b16 %v1977
    %v6066 = vunpack.c.h.b16 %v1977
    %v6067 = vunpack.c.l.b16 %v1978
    %v6068 = vunpack.c.h.b16 %v1978
    %v6069 = vunpack.c.l.b16 %v1979
    %v6070 = vunpack.c.h.b16 %v1979
    %v6071 = vunpack.c.l.b16 %v1980
    %v6072 = vunpack.c.h.b16 %v1980
    %v6073 = vunpack.c.l.b16 %v1981
    %v6074 = vunpack.c.h.b16 %v1981
    %v6075 = vunpack.c.l.b16 %v1982
    %v6076 = vunpack.c.h.b16 %v1982
    %v6077 = vunpack.c.l.b16 %v1983
    %v6078 = vunpack.c.h.b16 %v1983
    %v6079 = vunpack.c.l.b16 %v1984
    %v6080 = vunpack.c.h.b16 %v1984
    %v6081 = vunpack.c.l.b16 %v1985
    %v6082 = vunpack.c.h.b16 %v1985
    %v6083 = vunpack.c.l.b16 %v1986
    %v6084 = vunpack.c.h.b16 %v1986
    %v6085 = vunpack.c.l.b16 %v1987
    %v6086 = vunpack.c.h.b16 %v1987
    %v6087 = vunpack.c.l.b16 %v1988
    %v6088 = vunpack.c.h.b16 %v1988
    %v6089 = vpack.c.b16 %v5841, %v5833
    %v6090 = vpack.c.b16 %v5842, %v5834
    %v6091 = vpack.c.b16 %v5843, %v5835
    %v6092 = vpack.c.b16 %v5844, %v5836
    %v6093 = vpack.c.b16 %v5845, %v5837
    %v6094 = vpack.c.b16 %v5846, %v5838
    %v6095 = vpack.c.b16 %v5847, %v5839
    %v6096 = vpack.c.b16 %v5848, %v5840
    %v6097 = vpack.c.b16 %v5857, %v5849
    %v6098 = vpack.c.b16 %v5858, %v5850
    %v6099 = vpack.c.b16 %v5859, %v5851
    %v6100 = vpack.c.b16 %v5860, %v5852
    %v6101 = vpack.c.b16 %v5861, %v5853
    %v6102 = vpack.c.b16 %v5862, %v5854
    %v6103 = vpack.c.b16 %v5863, %v5855
    %v6104 = vpack.c.b16 %v5864, %v5856
    %v6105 = vpack.c.b16 %v5873, %v5865
    %v6106 = vpack.c.b16 %v5874, %v5866
    %v6107 = vpack.c.b16 %v5875, %v5867
    %v6108 = vpack.c.b16 %v5876, %v5868
    %v6109 = vpack.c.b16 %v5877, %v5869
    %v6110 = vpack.c.b16 %v5878, %v5870
    %v6111 = vpack.c.b16 %v5879, %v5871
    %v6112 = vpack.c.b16 %v5880, %v5872
    %v6113 = vpack.c.b16 %v5889, %v5881
    %v6114 = vpack.c.b16 %v5890, %v5882
    %v6115 = vpack.c.b16 %v5891, %v5883
    %v6116 = vpack.c.b16 %v5892, %v5884
    %v6117 = vpack.c.b16 %v5893, %v5885
    %v6118 = vpack.c.b16 %v5894, %v5886
    %v6119 = vpack.c.b16 %v5895, %v5887
    %v6120 = vpack.c.b16 %v5896, %v5888
    %v6121 = vpack.c.b16 %v5905, %v5897
    %v6122 = vpack.c.b16 %v5906, %v5898
    %v6123 = vpack.c.b16 %v5907, %v5899
    %v6124 = vpack.c.b16 %v5908, %v5900
    %v6125 = vpack.c.b16 %v5909, %v5901
    %v6126 = vpack.c.b16 %v5910, %v5902
    %v6127 = vpack.c.b16 %v5911, %v5903
    %v6128 = vpack.c.b16 %v5912, %v5904
    %v6129 = vpack.c.b16 %v5921, %v5913
    %v6130 = vpack.c.b16 %v5922, %v5914
    %v6131 = vpack.c.b16 %v5923, %v5915
    %v6132 = vpack.c.b16 %v5924, %v5916
    %v6133 = vpack.c.b16 %v5925, %v5917
    %v6134 = vpack.c.b16 %v5926, %v5918
    %v6135 = vpack.c.b16 %v5927, %v5919
    %v6136 = vpack.c.b16 %v5928, %v5920
    %v6137 = vpack.c.b16 %v5937, %v5929
    %v6138 = vpack.c.b16 %v5938, %v5930
    %v6139 = vpack.c.b16 %v5939, %v5931
    %v6140 = vpack.c.b16 %v5940, %v5932
    %v6141 = vpack.c.b16 %v5941, %v5933
    %v6142 = vpack.c.b16 %v5942, %v5934
    %v6143 = vpack.c.b16 %v5943, %v5935
    %v6144 = vpack.c.b16 %v5944, %v5936
    %v6145 = vpack.c.b16 %v5953, %v5945
    %v6146 = vpack.c.b16 %v5954, %v5946
    %v6147 = vpack.c.b16 %v5955, %v5947
    %v6148 = vpack.c.b16 %v5956, %v5948
    %v6149 = vpack.c.b16 %v5957, %v5949
    %v6150 = vpack.c.b16 %v5958, %v5950
    %v6151 = vpack.c.b16 %v5959, %v5951
    %v6152 = vpack.c.b16 %v5960, %v5952
    %v6153 = vpack.c.b16 %v5969, %v5961
    %v6154 = vpack.c.b16 %v5970, %v5962
    %v6155 = vpack.c.b16 %v5971, %v5963
    %v6156 = vpack.c.b16 %v5972, %v5964
    %v6157 = vpack.c.b16 %v5973, %v5965
    %v6158 = vpack.c.b16 %v5974, %v5966
    %v6159 = vpack.c.b16 %v5975, %v5967
    %v6160 = vpack.c.b16 %v5976, %v5968
    %v6161 = vpack.c.b16 %v5985, %v5977
    %v6162 = vpack.c.b16 %v5986, %v5978
    %v6163 = vpack.c.b16 %v5987, %v5979
    %v6164 = vpack.c.b16 %v5988, %v5980
    %v6165 = vpack.c.b16 %v5989, %v5981
    %v6166 = vpack.c.b16 %v5990, %v5982
    %v6167 = vpack.c.b16 %v5991, %v5983
    %v6168 = vpack.c.b16 %v5992, %v5984
    %v6169 = vpack.c.b16 %v6001, %v5993
    %v6170 = vpack.c.b16 %v6002, %v5994
    %v6171 = vpack.c.b16 %v6003, %v5995
    %v6172 = vpack.c.b16 %v6004, %v5996
    %v6173 = vpack.c.b16 %v6005, %v5997
    %v6174 = vpack.c.b16 %v6006, %v5998
    %v6175 = vpack.c.b16 %v6007, %v5999
    %v6176 = vpack.c.b16 %v6008, %v6000
    %v6177 = vpack.c.b16 %v6017, %v6009
    %v6178 = vpack.c.b16 %v6018, %v6010
    %v6179 = vpack.c.b16 %v6019, %v6011
    %v6180 = vpack.c.b16 %v6020, %v6012
    %v6181 = vpack.c.b16 %v6021, %v6013
    %v6182 = vpack.c.b16 %v6022, %v6014
    %v6183 = vpack.c.b16 %v6023, %v6015
    %v6184 = vpack.c.b16 %v6024, %v6016
    %v6185 = vpack.c.b16 %v6033, %v6025
    %v6186 = vpack.c.b16 %v6034, %v6026
    %v6187 = vpack.c.b16 %v6035, %v6027
    %v6188 = vpack.c.b16 %v6036, %v6028
    %v6189 = vpack.c.b16 %v6037, %v6029
    %v6190 = vpack.c.b16 %v6038, %v6030
    %v6191 = vpack.c.b16 %v6039, %v6031
    %v6192 = vpack.c.b16 %v6040, %v6032
    %v6193 = vpack.c.b16 %v6049, %v6041
    %v6194 = vpack.c.b16 %v6050, %v6042
    %v6195 = vpack.c.b16 %v6051, %v6043
    %v6196 = vpack.c.b16 %v6052, %v6044
    %v6197 = vpack.c.b16 %v6053, %v6045
    %v6198 = vpack.c.b16 %v6054, %v6046
    %v6199 = vpack.c.b16 %v6055, %v6047
    %v6200 = vpack.c.b16 %v6056, %v6048
    %v6201 = vpack.c.b16 %v6065, %v6057
    %v6202 = vpack.c.b16 %v6066, %v6058
    %v6203 = vpack.c.b16 %v6067, %v6059
    %v6204 = vpack.c.b16 %v6068, %v6060
    %v6205 = vpack.c.b16 %v6069, %v6061
    %v6206 = vpack.c.b16 %v6070, %v6062
    %v6207 = vpack.c.b16 %v6071, %v6063
    %v6208 = vpack.c.b16 %v6072, %v6064
    %v6209 = vpack.c.b16 %v6081, %v6073
    %v6210 = vpack.c.b16 %v6082, %v6074
    %v6211 = vpack.c.b16 %v6083, %v6075
    %v6212 = vpack.c.b16 %v6084, %v6076
    %v6213 = vpack.c.b16 %v6085, %v6077
    %v6214 = vpack.c.b16 %v6086, %v6078
    %v6215 = vpack.c.b16 %v6087, %v6079
    %v6216 = vpack.c.b16 %v6088, %v6080
    %6345 = vmatpush.bf16.msra.mxu0 %v6145
    %6346 = vmatpush.bf16.msra.mxu0 %v6137
    %6347 = vmatpush.bf16.msra.mxu0 %v6129
    %6348 = vmatpush.bf16.msra.mxu0 %v6121
    %6349 = vmatpush.bf16.msra.mxu0 %v6113
    %6350 = vmatpush.bf16.msra.mxu0 %v6105
    %6351 = vmatpush.bf16.msra.mxu0 %v6097
    %6352 = vmatpush.bf16.msra.mxu0 %v6089
    %6353 = vmatmul.bf16.gmra.mxu0 %v5703
    %v6354 = vpop.f32.mrf.mxu0
    %v6355 = vadd.f32 0.0, %v6354
    %v6356 = vpop.f32.mrf.mxu0
    %6357 = vdwg.mxu0
    %6358 = vmatpush.bf16.msra.mxu0 %v6209
    %6359 = vmatpush.bf16.msra.mxu0 %v6201
    %6360 = vmatpush.bf16.msra.mxu0 %v6193
    %6361 = vmatpush.bf16.msra.mxu0 %v6185
    %6362 = vmatpush.bf16.msra.mxu0 %v6177
    %6363 = vmatpush.bf16.msra.mxu0 %v6169
    %6364 = vmatpush.bf16.msra.mxu0 %v6161
    %6365 = vmatpush.bf16.msra.mxu0 %v6153
    %6366 = vmatmul.bf16.gmra.mxu0 %v5704
    %v6367 = vpop.f32.mrf.mxu0
    %v6368 = vadd.f32 %v6355, %v6367
    %v6369 = vpop.f32.mrf.mxu0
    %6370 = vdwg.mxu0
    %6371 = vmatpush.bf16.msra.mxu0 %v6146
    %6372 = vmatpush.bf16.msra.mxu0 %v6138
    %6373 = vmatpush.bf16.msra.mxu0 %v6130
    %6374 = vmatpush.bf16.msra.mxu0 %v6122
    %6375 = vmatpush.bf16.msra.mxu0 %v6114
    %6376 = vmatpush.bf16.msra.mxu0 %v6106
    %6377 = vmatpush.bf16.msra.mxu0 %v6098
    %6378 = vmatpush.bf16.msra.mxu0 %v6090
    %6379 = vmatmul.bf16.gmra.mxu0 %v5703
    %v6380 = vpop.f32.mrf.mxu0
    %v6381 = vadd.f32 0.0, %v6380
    %v6382 = vpop.f32.mrf.mxu0
    %6383 = vdwg.mxu0
    %6384 = vmatpush.bf16.msra.mxu0 %v6210
    %6385 = vmatpush.bf16.msra.mxu0 %v6202
    %6386 = vmatpush.bf16.msra.mxu0 %v6194
    %6387 = vmatpush.bf16.msra.mxu0 %v6186
    %6388 = vmatpush.bf16.msra.mxu0 %v6178
    %6389 = vmatpush.bf16.msra.mxu0 %v6170
    %6390 = vmatpush.bf16.msra.mxu0 %v6162
    %6391 = vmatpush.bf16.msra.mxu0 %v6154
    %6392 = vmatmul.bf16.gmra.mxu0 %v5704
    %v6393 = vpop.f32.mrf.mxu0
    %v6394 = vadd.f32 %v6381, %v6393
    %v6395 = vpop.f32.mrf.mxu0
    %6396 = vdwg.mxu0
    %6397 = vmatpush.bf16.msra.mxu0 %v6147
    %6398 = vmatpush.bf16.msra.mxu0 %v6139
    %6399 = vmatpush.bf16.msra.mxu0 %v6131
    %6400 = vmatpush.bf16.msra.mxu0 %v6123
    %6401 = vmatpush.bf16.msra.mxu0 %v6115
    %6402 = vmatpush.bf16.msra.mxu0 %v6107
    %6403 = vmatpush.bf16.msra.mxu0 %v6099
    %6404 = vmatpush.bf16.msra.mxu0 %v6091
    %6405 = vmatmul.bf16.gmra.mxu0 %v5703
    %v6406 = vpop.f32.mrf.mxu0
    %v6407 = vadd.f32 0.0, %v6406
    %v6408 = vpop.f32.mrf.mxu0
    %6409 = vdwg.mxu0
    %6410 = vmatpush.bf16.msra.mxu0 %v6211
    %6411 = vmatpush.bf16.msra.mxu0 %v6203
    %6412 = vmatpush.bf16.msra.mxu0 %v6195
    %6413 = vmatpush.bf16.msra.mxu0 %v6187
    %6414 = vmatpush.bf16.msra.mxu0 %v6179
    %6415 = vmatpush.bf16.msra.mxu0 %v6171
    %6416 = vmatpush.bf16.msra.mxu0 %v6163
    %6417 = vmatpush.bf16.msra.mxu0 %v6155
    %6418 = vmatmul.bf16.gmra.mxu0 %v5704
    %v6419 = vpop.f32.mrf.mxu0
    %v6420 = vadd.f32 %v6407, %v6419
    %v6421 = vpop.f32.mrf.mxu0
    %6422 = vdwg.mxu0
    %6423 = vmatpush.bf16.msra.mxu0 %v6148
    %6424 = vmatpush.bf16.msra.mxu0 %v6140
    %6425 = vmatpush.bf16.msra.mxu0 %v6132
    %6426 = vmatpush.bf16.msra.mxu0 %v6124
    %6427 = vmatpush.bf16.msra.mxu0 %v6116
    %6428 = vmatpush.bf16.msra.mxu0 %v6108
    %6429 = vmatpush.bf16.msra.mxu0 %v6100
    %6430 = vmatpush.bf16.msra.mxu0 %v6092
    %6431 = vmatmul.bf16.gmra.mxu0 %v5703
    %v6432 = vpop.f32.mrf.mxu0
    %v6433 = vadd.f32 0.0, %v6432
    %v6434 = vpop.f32.mrf.mxu0
    %6435 = vdwg.mxu0
    %6436 = vmatpush.bf16.msra.mxu0 %v6212
    %6437 = vmatpush.bf16.msra.mxu0 %v6204
    %6438 = vmatpush.bf16.msra.mxu0 %v6196
    %6439 = vmatpush.bf16.msra.mxu0 %v6188
    %6440 = vmatpush.bf16.msra.mxu0 %v6180
    %6441 = vmatpush.bf16.msra.mxu0 %v6172
    %6442 = vmatpush.bf16.msra.mxu0 %v6164
    %6443 = vmatpush.bf16.msra.mxu0 %v6156
    %6444 = vmatmul.bf16.gmra.mxu0 %v5704
    %v6445 = vpop.f32.mrf.mxu0
    %v6446 = vadd.f32 %v6433, %v6445
    %v6447 = vpop.f32.mrf.mxu0
    %6448 = vdwg.mxu0
    %6449 = vmatpush.bf16.msra.mxu0 %v6149
    %6450 = vmatpush.bf16.msra.mxu0 %v6141
    %6451 = vmatpush.bf16.msra.mxu0 %v6133
    %6452 = vmatpush.bf16.msra.mxu0 %v6125
    %6453 = vmatpush.bf16.msra.mxu0 %v6117
    %6454 = vmatpush.bf16.msra.mxu0 %v6109
    %6455 = vmatpush.bf16.msra.mxu0 %v6101
    %6456 = vmatpush.bf16.msra.mxu0 %v6093
    %6457 = vmatmul.bf16.gmra.mxu0 %v5703
    %v6458 = vpop.f32.mrf.mxu0
    %v6459 = vadd.f32 0.0, %v6458
    %v6460 = vpop.f32.mrf.mxu0
    %6461 = vdwg.mxu0
    %6462 = vmatpush.bf16.msra.mxu0 %v6213
    %6463 = vmatpush.bf16.msra.mxu0 %v6205
    %6464 = vmatpush.bf16.msra.mxu0 %v6197
    %6465 = vmatpush.bf16.msra.mxu0 %v6189
    %6466 = vmatpush.bf16.msra.mxu0 %v6181
    %6467 = vmatpush.bf16.msra.mxu0 %v6173
    %6468 = vmatpush.bf16.msra.mxu0 %v6165
    %6469 = vmatpush.bf16.msra.mxu0 %v6157
    %6470 = vmatmul.bf16.gmra.mxu0 %v5704
    %v6471 = vpop.f32.mrf.mxu0
    %v6472 = vadd.f32 %v6459, %v6471
    %v6473 = vpop.f32.mrf.mxu0
    %6474 = vdwg.mxu0
    %6475 = vmatpush.bf16.msra.mxu0 %v6150
    %6476 = vmatpush.bf16.msra.mxu0 %v6142
    %6477 = vmatpush.bf16.msra.mxu0 %v6134
    %6478 = vmatpush.bf16.msra.mxu0 %v6126
    %6479 = vmatpush.bf16.msra.mxu0 %v6118
    %6480 = vmatpush.bf16.msra.mxu0 %v6110
    %6481 = vmatpush.bf16.msra.mxu0 %v6102
    %6482 = vmatpush.bf16.msra.mxu0 %v6094
    %6483 = vmatmul.bf16.gmra.mxu0 %v5703
    %v6484 = vpop.f32.mrf.mxu0
    %v6485 = vadd.f32 0.0, %v6484
    %v6486 = vpop.f32.mrf.mxu0
    %6487 = vdwg.mxu0
    %6488 = vmatpush.bf16.msra.mxu0 %v6214
    %6489 = vmatpush.bf16.msra.mxu0 %v6206
    %6490 = vmatpush.bf16.msra.mxu0 %v6198
    %6491 = vmatpush.bf16.msra.mxu0 %v6190
    %6492 = vmatpush.bf16.msra.mxu0 %v6182
    %6493 = vmatpush.bf16.msra.mxu0 %v6174
    %6494 = vmatpush.bf16.msra.mxu0 %v6166
    %6495 = vmatpush.bf16.msra.mxu0 %v6158
    %6496 = vmatmul.bf16.gmra.mxu0 %v5704
    %v6497 = vpop.f32.mrf.mxu0
    %v6498 = vadd.f32 %v6485, %v6497
    %v6499 = vpop.f32.mrf.mxu0
    %6500 = vdwg.mxu0
    %6501 = vmatpush.bf16.msra.mxu0 %v6151
    %6502 = vmatpush.bf16.msra.mxu0 %v6143
    %6503 = vmatpush.bf16.msra.mxu0 %v6135
    %6504 = vmatpush.bf16.msra.mxu0 %v6127
    %6505 = vmatpush.bf16.msra.mxu0 %v6119
    %6506 = vmatpush.bf16.msra.mxu0 %v6111
    %6507 = vmatpush.bf16.msra.mxu0 %v6103
    %6508 = vmatpush.bf16.msra.mxu0 %v6095
    %6509 = vmatmul.bf16.gmra.mxu0 %v5703
    %v6510 = vpop.f32.mrf.mxu0
    %v6511 = vadd.f32 0.0, %v6510
    %v6512 = vpop.f32.mrf.mxu0
    %6513 = vdwg.mxu0
    %6514 = vmatpush.bf16.msra.mxu0 %v6215
    %6515 = vmatpush.bf16.msra.mxu0 %v6207
    %6516 = vmatpush.bf16.msra.mxu0 %v6199
    %6517 = vmatpush.bf16.msra.mxu0 %v6191
    %6518 = vmatpush.bf16.msra.mxu0 %v6183
    %6519 = vmatpush.bf16.msra.mxu0 %v6175
    %6520 = vmatpush.bf16.msra.mxu0 %v6167
    %6521 = vmatpush.bf16.msra.mxu0 %v6159
    %6522 = vmatmul.bf16.gmra.mxu0 %v5704
    %v6523 = vpop.f32.mrf.mxu0
    %v6524 = vadd.f32 %v6511, %v6523
    %v6525 = vpop.f32.mrf.mxu0
    %6526 = vdwg.mxu0
    %6527 = vmatpush.bf16.msra.mxu0 %v6152
    %6528 = vmatpush.bf16.msra.mxu0 %v6144
    %6529 = vmatpush.bf16.msra.mxu0 %v6136
    %6530 = vmatpush.bf16.msra.mxu0 %v6128
    %6531 = vmatpush.bf16.msra.mxu0 %v6120
    %6532 = vmatpush.bf16.msra.mxu0 %v6112
    %6533 = vmatpush.bf16.msra.mxu0 %v6104
    %6534 = vmatpush.bf16.msra.mxu0 %v6096
    %6535 = vmatmul.bf16.gmra.mxu0 %v5703
    %v6536 = vpop.f32.mrf.mxu0
    %v6537 = vadd.f32 0.0, %v6536
    %v6538 = vpop.f32.mrf.mxu0
    %6539 = vdwg.mxu0
    %6540 = vmatpush.bf16.msra.mxu0 %v6216
    %6541 = vmatpush.bf16.msra.mxu0 %v6208
    %6542 = vmatpush.bf16.msra.mxu0 %v6200
    %6543 = vmatpush.bf16.msra.mxu0 %v6192
    %6544 = vmatpush.bf16.msra.mxu0 %v6184
    %6545 = vmatpush.bf16.msra.mxu0 %v6176
    %6546 = vmatpush.bf16.msra.mxu0 %v6168
    %6547 = vmatpush.bf16.msra.mxu0 %v6160
    %6548 = vmatmul.bf16.gmra.mxu0 %v5704
    %v6549 = vpop.f32.mrf.mxu0
    %v6550 = vadd.f32 %v6537, %v6549
    %v6551 = vpop.f32.mrf.mxu0
    %6552 = vdwg.mxu0
    %v6561 = vrot.slane %v6368, 6
    %v6562 = vrot.slane %v6394, 6
    %v6563 = vrot.slane %v6420, 6
    %v6564 = vrot.slane %v6446, 6
    %v6565 = vrot.slane %v6472, 6
    %v6566 = vrot.slane %v6498, 6
    %v6567 = vrot.slane %v6524, 6
    %v6568 = vrot.slane %v6550, 6
    %v6577 = vadd.f32 %v5479, %v6561
    %v6578 = vadd.f32 %v5507, %v6562
    %v6579 = vadd.f32 %v5535, %v6563
    %v6580 = vadd.f32 %v5563, %v6564
    %v6581 = vadd.f32 %v5591, %v6565
    %v6582 = vadd.f32 %v5619, %v6566
    %v6583 = vadd.f32 %v5647, %v6567
    %v6584 = vadd.f32 %v5675, %v6568
    %v6585 = vmul.f32 %v6577, 0.5
    %v6586 = vmul.f32 %v6578, 0.5
    %v6587 = vtanh.pop %v6585
    %v6588 = vtanh.pop %v6586
    %v6589 = vadd.f32 %v6587, 1.0
    %v6590 = vadd.f32 %v6588, 1.0
    %v6591 = vmul.f32 %v6589, 0.5
    %v6592 = vmul.f32 %v6590, 0.5
    %v6593 = vtanh.pop %v6581
    %v6594 = vtanh.pop %v6582
    %v6595 = vmul.f32 %v6583, 0.5
    %v6596 = vmul.f32 %v6584, 0.5
    %v6597 = vtanh.pop %v6595
    %v6598 = vtanh.pop %v6596
    %v6599 = vadd.f32 %v6597, 1.0
    %v6600 = vadd.f32 %v6598, 1.0
    %v6601 = vmul.f32 %v6599, 0.5
    %v6602 = vmul.f32 %v6600, 0.5
    %v6603 = vmul.f32 %v6579, 0.5
    %v6604 = vmul.f32 %v6580, 0.5
    %v6605 = vtanh.pop %v6603
    %v6606 = vtanh.pop %v6604
    %v6607 = vadd.f32 %v6605, 1.0
    %v6608 = vadd.f32 %v6606, 1.0
    %v6609 = vmul.f32 %v6607, 0.5
    %v6610 = vmul.f32 %v6608, 0.5
    %v6613 = vrot.slane %v5697, 6
    %v6614 = vrot.slane %v5698, 6
    %v6617 = vmul.f32 %v6609, %v6613
    %v6618 = vmul.f32 %v6610, %v6614
    %v6619 = vmul.f32 %v6591, %v6593
    %v6620 = vmul.f32 %v6592, %v6594
    %v6621 = vadd.f32 %v6617, %v6619
    %v6622 = vadd.f32 %v6618, %v6620
    %v6623 = vtanh.pop %v6621
    %v6624 = vtanh.pop %v6622
    %v6625 = vmul.f32 %v6601, %v6623
    %v6626 = vmul.f32 %v6602, %v6624
    %v6627 = vpack.c.bf16 %v6625, %v6625
    %v6628 = vpack.c.bf16 %v6626, %v6626
    %v6631 = vrot.slane %v6627, 1
    %v6632 = vrot.slane %v6628, 1
    %6635 = vmatpush.bf16.msra.mxu0 %v6145
    %6636 = vmatpush.bf16.msra.mxu0 %v6137
    %6637 = vmatpush.bf16.msra.mxu0 %v6129
    %6638 = vmatpush.bf16.msra.mxu0 %v6121
    %6639 = vmatpush.bf16.msra.mxu0 %v6113
    %6640 = vmatpush.bf16.msra.mxu0 %v6105
    %6641 = vmatpush.bf16.msra.mxu0 %v6097
    %6642 = vmatpush.bf16.msra.mxu0 %v6089
    %6643 = vmatmul.bf16.gmra.mxu0 %v6631
    %v6644 = vpop.f32.mrf.mxu0
    %v6645 = vadd.f32 0.0, %v6644
    %v6646 = vpop.f32.mrf.mxu0
    %6647 = vdwg.mxu0
    %6648 = vmatpush.bf16.msra.mxu0 %v6209
    %6649 = vmatpush.bf16.msra.mxu0 %v6201
    %6650 = vmatpush.bf16.msra.mxu0 %v6193
    %6651 = vmatpush.bf16.msra.mxu0 %v6185
    %6652 = vmatpush.bf16.msra.mxu0 %v6177
    %6653 = vmatpush.bf16.msra.mxu0 %v6169
    %6654 = vmatpush.bf16.msra.mxu0 %v6161
    %6655 = vmatpush.bf16.msra.mxu0 %v6153
    %6656 = vmatmul.bf16.gmra.mxu0 %v6632
    %v6657 = vpop.f32.mrf.mxu0
    %v6658 = vadd.f32 %v6645, %v6657
    %v6659 = vpop.f32.mrf.mxu0
    %6660 = vdwg.mxu0
    %6661 = vmatpush.bf16.msra.mxu0 %v6146
    %6662 = vmatpush.bf16.msra.mxu0 %v6138
    %6663 = vmatpush.bf16.msra.mxu0 %v6130
    %6664 = vmatpush.bf16.msra.mxu0 %v6122
    %6665 = vmatpush.bf16.msra.mxu0 %v6114
    %6666 = vmatpush.bf16.msra.mxu0 %v6106
    %6667 = vmatpush.bf16.msra.mxu0 %v6098
    %6668 = vmatpush.bf16.msra.mxu0 %v6090
    %6669 = vmatmul.bf16.gmra.mxu0 %v6631
    %v6670 = vpop.f32.mrf.mxu0
    %v6671 = vadd.f32 0.0, %v6670
    %v6672 = vpop.f32.mrf.mxu0
    %6673 = vdwg.mxu0
    %6674 = vmatpush.bf16.msra.mxu0 %v6210
    %6675 = vmatpush.bf16.msra.mxu0 %v6202
    %6676 = vmatpush.bf16.msra.mxu0 %v6194
    %6677 = vmatpush.bf16.msra.mxu0 %v6186
    %6678 = vmatpush.bf16.msra.mxu0 %v6178
    %6679 = vmatpush.bf16.msra.mxu0 %v6170
    %6680 = vmatpush.bf16.msra.mxu0 %v6162
    %6681 = vmatpush.bf16.msra.mxu0 %v6154
    %6682 = vmatmul.bf16.gmra.mxu0 %v6632
    %v6683 = vpop.f32.mrf.mxu0
    %v6684 = vadd.f32 %v6671, %v6683
    %v6685 = vpop.f32.mrf.mxu0
    %6686 = vdwg.mxu0
    %6687 = vmatpush.bf16.msra.mxu0 %v6147
    %6688 = vmatpush.bf16.msra.mxu0 %v6139
    %6689 = vmatpush.bf16.msra.mxu0 %v6131
    %6690 = vmatpush.bf16.msra.mxu0 %v6123
    %6691 = vmatpush.bf16.msra.mxu0 %v6115
    %6692 = vmatpush.bf16.msra.mxu0 %v6107
    %6693 = vmatpush.bf16.msra.mxu0 %v6099
    %6694 = vmatpush.bf16.msra.mxu0 %v6091
    %6695 = vmatmul.bf16.gmra.mxu0 %v6631
    %v6696 = vpop.f32.mrf.mxu0
    %v6697 = vadd.f32 0.0, %v6696
    %v6698 = vpop.f32.mrf.mxu0
    %6699 = vdwg.mxu0
    %6700 = vmatpush.bf16.msra.mxu0 %v6211
    %6701 = vmatpush.bf16.msra.mxu0 %v6203
    %6702 = vmatpush.bf16.msra.mxu0 %v6195
    %6703 = vmatpush.bf16.msra.mxu0 %v6187
    %6704 = vmatpush.bf16.msra.mxu0 %v6179
    %6705 = vmatpush.bf16.msra.mxu0 %v6171
    %6706 = vmatpush.bf16.msra.mxu0 %v6163
    %6707 = vmatpush.bf16.msra.mxu0 %v6155
    %6708 = vmatmul.bf16.gmra.mxu0 %v6632
    %v6709 = vpop.f32.mrf.mxu0
    %v6710 = vadd.f32 %v6697, %v6709
    %v6711 = vpop.f32.mrf.mxu0
    %6712 = vdwg.mxu0
    %6713 = vmatpush.bf16.msra.mxu0 %v6148
    %6714 = vmatpush.bf16.msra.mxu0 %v6140
    %6715 = vmatpush.bf16.msra.mxu0 %v6132
    %6716 = vmatpush.bf16.msra.mxu0 %v6124
    %6717 = vmatpush.bf16.msra.mxu0 %v6116
    %6718 = vmatpush.bf16.msra.mxu0 %v6108
    %6719 = vmatpush.bf16.msra.mxu0 %v6100
    %6720 = vmatpush.bf16.msra.mxu0 %v6092
    %6721 = vmatmul.bf16.gmra.mxu0 %v6631
    %v6722 = vpop.f32.mrf.mxu0
    %v6723 = vadd.f32 0.0, %v6722
    %v6724 = vpop.f32.mrf.mxu0
    %6725 = vdwg.mxu0
    %6726 = vmatpush.bf16.msra.mxu0 %v6212
    %6727 = vmatpush.bf16.msra.mxu0 %v6204
    %6728 = vmatpush.bf16.msra.mxu0 %v6196
    %6729 = vmatpush.bf16.msra.mxu0 %v6188
    %6730 = vmatpush.bf16.msra.mxu0 %v6180
    %6731 = vmatpush.bf16.msra.mxu0 %v6172
    %6732 = vmatpush.bf16.msra.mxu0 %v6164
    %6733 = vmatpush.bf16.msra.mxu0 %v6156
    %6734 = vmatmul.bf16.gmra.mxu0 %v6632
    %v6735 = vpop.f32.mrf.mxu0
    %v6736 = vadd.f32 %v6723, %v6735
    %v6737 = vpop.f32.mrf.mxu0
    %6738 = vdwg.mxu0
    %6739 = vmatpush.bf16.msra.mxu0 %v6149
    %6740 = vmatpush.bf16.msra.mxu0 %v6141
    %6741 = vmatpush.bf16.msra.mxu0 %v6133
    %6742 = vmatpush.bf16.msra.mxu0 %v6125
    %6743 = vmatpush.bf16.msra.mxu0 %v6117
    %6744 = vmatpush.bf16.msra.mxu0 %v6109
    %6745 = vmatpush.bf16.msra.mxu0 %v6101
    %6746 = vmatpush.bf16.msra.mxu0 %v6093
    %6747 = vmatmul.bf16.gmra.mxu0 %v6631
    %v6748 = vpop.f32.mrf.mxu0
    %v6749 = vadd.f32 0.0, %v6748
    %v6750 = vpop.f32.mrf.mxu0
    %6751 = vdwg.mxu0
    %6752 = vmatpush.bf16.msra.mxu0 %v6213
    %6753 = vmatpush.bf16.msra.mxu0 %v6205
    %6754 = vmatpush.bf16.msra.mxu0 %v6197
    %6755 = vmatpush.bf16.msra.mxu0 %v6189
    %6756 = vmatpush.bf16.msra.mxu0 %v6181
    %6757 = vmatpush.bf16.msra.mxu0 %v6173
    %6758 = vmatpush.bf16.msra.mxu0 %v6165
    %6759 = vmatpush.bf16.msra.mxu0 %v6157
    %6760 = vmatmul.bf16.gmra.mxu0 %v6632
    %v6761 = vpop.f32.mrf.mxu0
    %v6762 = vadd.f32 %v6749, %v6761
    %v6763 = vpop.f32.mrf.mxu0
    %6764 = vdwg.mxu0
    %6765 = vmatpush.bf16.msra.mxu0 %v6150
    %6766 = vmatpush.bf16.msra.mxu0 %v6142
    %6767 = vmatpush.bf16.msra.mxu0 %v6134
    %6768 = vmatpush.bf16.msra.mxu0 %v6126
    %6769 = vmatpush.bf16.msra.mxu0 %v6118
    %6770 = vmatpush.bf16.msra.mxu0 %v6110
    %6771 = vmatpush.bf16.msra.mxu0 %v6102
    %6772 = vmatpush.bf16.msra.mxu0 %v6094
    %6773 = vmatmul.bf16.gmra.mxu0 %v6631
    %v6774 = vpop.f32.mrf.mxu0
    %v6775 = vadd.f32 0.0, %v6774
    %v6776 = vpop.f32.mrf.mxu0
    %6777 = vdwg.mxu0
    %6778 = vmatpush.bf16.msra.mxu0 %v6214
    %6779 = vmatpush.bf16.msra.mxu0 %v6206
    %6780 = vmatpush.bf16.msra.mxu0 %v6198
    %6781 = vmatpush.bf16.msra.mxu0 %v6190
    %6782 = vmatpush.bf16.msra.mxu0 %v6182
    %6783 = vmatpush.bf16.msra.mxu0 %v6174
    %6784 = vmatpush.bf16.msra.mxu0 %v6166
    %6785 = vmatpush.bf16.msra.mxu0 %v6158
    %6786 = vmatmul.bf16.gmra.mxu0 %v6632
    %v6787 = vpop.f32.mrf.mxu0
    %v6788 = vadd.f32 %v6775, %v6787
    %v6789 = vpop.f32.mrf.mxu0
    %6790 = vdwg.mxu0
    %6791 = vmatpush.bf16.msra.mxu0 %v6151
    %6792 = vmatpush.bf16.msra.mxu0 %v6143
    %6793 = vmatpush.bf16.msra.mxu0 %v6135
    %6794 = vmatpush.bf16.msra.mxu0 %v6127
    %6795 = vmatpush.bf16.msra.mxu0 %v6119
    %6796 = vmatpush.bf16.msra.mxu0 %v6111
    %6797 = vmatpush.bf16.msra.mxu0 %v6103
    %6798 = vmatpush.bf16.msra.mxu0 %v6095
    %6799 = vmatmul.bf16.gmra.mxu0 %v6631
    %v6800 = vpop.f32.mrf.mxu0
    %v6801 = vadd.f32 0.0, %v6800
    %v6802 = vpop.f32.mrf.mxu0
    %6803 = vdwg.mxu0
    %6804 = vmatpush.bf16.msra.mxu0 %v6215
    %6805 = vmatpush.bf16.msra.mxu0 %v6207
    %6806 = vmatpush.bf16.msra.mxu0 %v6199
    %6807 = vmatpush.bf16.msra.mxu0 %v6191
    %6808 = vmatpush.bf16.msra.mxu0 %v6183
    %6809 = vmatpush.bf16.msra.mxu0 %v6175
    %6810 = vmatpush.bf16.msra.mxu0 %v6167
    %6811 = vmatpush.bf16.msra.mxu0 %v6159
    %6812 = vmatmul.bf16.gmra.mxu0 %v6632
    %v6813 = vpop.f32.mrf.mxu0
    %v6814 = vadd.f32 %v6801, %v6813
    %v6815 = vpop.f32.mrf.mxu0
    %6816 = vdwg.mxu0
    %6817 = vmatpush.bf16.msra.mxu0 %v6152
    %6818 = vmatpush.bf16.msra.mxu0 %v6144
    %6819 = vmatpush.bf16.msra.mxu0 %v6136
    %6820 = vmatpush.bf16.msra.mxu0 %v6128
    %6821 = vmatpush.bf16.msra.mxu0 %v6120
    %6822 = vmatpush.bf16.msra.mxu0 %v6112
    %6823 = vmatpush.bf16.msra.mxu0 %v6104
    %6824 = vmatpush.bf16.msra.mxu0 %v6096
    %6825 = vmatmul.bf16.gmra.mxu0 %v6631
    %v6826 = vpop.f32.mrf.mxu0
    %v6827 = vadd.f32 0.0, %v6826
    %v6828 = vpop.f32.mrf.mxu0
    %6829 = vdwg.mxu0
    %6830 = vmatpush.bf16.msra.mxu0 %v6216
    %6831 = vmatpush.bf16.msra.mxu0 %v6208
    %6832 = vmatpush.bf16.msra.mxu0 %v6200
    %6833 = vmatpush.bf16.msra.mxu0 %v6192
    %6834 = vmatpush.bf16.msra.mxu0 %v6184
    %6835 = vmatpush.bf16.msra.mxu0 %v6176
    %6836 = vmatpush.bf16.msra.mxu0 %v6168
    %6837 = vmatpush.bf16.msra.mxu0 %v6160
    %6838 = vmatmul.bf16.gmra.mxu0 %v6632
    %v6839 = vpop.f32.mrf.mxu0
    %v6840 = vadd.f32 %v6827, %v6839
    %v6841 = vpop.f32.mrf.mxu0
    %6842 = vdwg.mxu0
    %v6851 = vrot.slane %v6658, 4
    %v6852 = vrot.slane %v6684, 4
    %v6853 = vrot.slane %v6710, 4
    %v6854 = vrot.slane %v6736, 4
    %v6855 = vrot.slane %v6762, 4
    %v6856 = vrot.slane %v6788, 4
    %v6857 = vrot.slane %v6814, 4
    %v6858 = vrot.slane %v6840, 4
    %v6867 = vadd.f32 %v5479, %v6851
    %v6868 = vadd.f32 %v5507, %v6852
    %v6869 = vadd.f32 %v5535, %v6853
    %v6870 = vadd.f32 %v5563, %v6854
    %v6871 = vadd.f32 %v5591, %v6855
    %v6872 = vadd.f32 %v5619, %v6856
    %v6873 = vadd.f32 %v5647, %v6857
    %v6874 = vadd.f32 %v5675, %v6858
    %v6875 = vmul.f32 %v6867, 0.5
    %v6876 = vmul.f32 %v6868, 0.5
    %v6877 = vtanh.pop %v6875
    %v6878 = vtanh.pop %v6876
    %v6879 = vadd.f32 %v6877, 1.0
    %v6880 = vadd.f32 %v6878, 1.0
    %v6881 = vmul.f32 %v6879, 0.5
    %v6882 = vmul.f32 %v6880, 0.5
    %v6883 = vtanh.pop %v6871
    %v6884 = vtanh.pop %v6872
    %v6885 = vmul.f32 %v6873, 0.5
    %v6886 = vmul.f32 %v6874, 0.5
    %v6887 = vtanh.pop %v6885
    %v6888 = vtanh.pop %v6886
    %v6889 = vadd.f32 %v6887, 1.0
    %v6890 = vadd.f32 %v6888, 1.0
    %v6891 = vmul.f32 %v6889, 0.5
    %v6892 = vmul.f32 %v6890, 0.5
    %v6893 = vmul.f32 %v6869, 0.5
    %v6894 = vmul.f32 %v6870, 0.5
    %v6895 = vtanh.pop %v6893
    %v6896 = vtanh.pop %v6894
    %v6897 = vadd.f32 %v6895, 1.0
    %v6898 = vadd.f32 %v6896, 1.0
    %v6899 = vmul.f32 %v6897, 0.5
    %v6900 = vmul.f32 %v6898, 0.5
    %v6903 = vrot.slane %v6621, 6
    %v6904 = vrot.slane %v6622, 6
    %v6907 = vmul.f32 %v6899, %v6903
    %v6908 = vmul.f32 %v6900, %v6904
    %v6909 = vmul.f32 %v6881, %v6883
    %v6910 = vmul.f32 %v6882, %v6884
    %v6911 = vadd.f32 %v6907, %v6909
    %v6912 = vadd.f32 %v6908, %v6910
    %v6913 = vtanh.pop %v6911
    %v6914 = vtanh.pop %v6912
    %v6915 = vmul.f32 %v6891, %v6913
    %v6916 = vmul.f32 %v6892, %v6914
    %v6917 = vpack.c.bf16 %v6915, %v6915
    %v6918 = vpack.c.bf16 %v6916, %v6916
    %v6921 = vrot.slane %v6917, 2
    %v6922 = vrot.slane %v6918, 2
    %6925 = vmatpush.bf16.msra.mxu0 %v6145
    %6926 = vmatpush.bf16.msra.mxu0 %v6137
    %6927 = vmatpush.bf16.msra.mxu0 %v6129
    %6928 = vmatpush.bf16.msra.mxu0 %v6121
    %6929 = vmatpush.bf16.msra.mxu0 %v6113
    %6930 = vmatpush.bf16.msra.mxu0 %v6105
    %6931 = vmatpush.bf16.msra.mxu0 %v6097
    %6932 = vmatpush.bf16.msra.mxu0 %v6089
    %6933 = vmatmul.bf16.gmra.mxu0 %v6921
    %v6934 = vpop.f32.mrf.mxu0
    %v6935 = vadd.f32 0.0, %v6934
    %v6936 = vpop.f32.mrf.mxu0
    %6937 = vdwg.mxu0
    %6938 = vmatpush.bf16.msra.mxu0 %v6209
    %6939 = vmatpush.bf16.msra.mxu0 %v6201
    %6940 = vmatpush.bf16.msra.mxu0 %v6193
    %6941 = vmatpush.bf16.msra.mxu0 %v6185
    %6942 = vmatpush.bf16.msra.mxu0 %v6177
    %6943 = vmatpush.bf16.msra.mxu0 %v6169
    %6944 = vmatpush.bf16.msra.mxu0 %v6161
    %6945 = vmatpush.bf16.msra.mxu0 %v6153
    %6946 = vmatmul.bf16.gmra.mxu0 %v6922
    %v6947 = vpop.f32.mrf.mxu0
    %v6948 = vadd.f32 %v6935, %v6947
    %v6949 = vpop.f32.mrf.mxu0
    %6950 = vdwg.mxu0
    %6951 = vmatpush.bf16.msra.mxu0 %v6146
    %6952 = vmatpush.bf16.msra.mxu0 %v6138
    %6953 = vmatpush.bf16.msra.mxu0 %v6130
    %6954 = vmatpush.bf16.msra.mxu0 %v6122
    %6955 = vmatpush.bf16.msra.mxu0 %v6114
    %6956 = vmatpush.bf16.msra.mxu0 %v6106
    %6957 = vmatpush.bf16.msra.mxu0 %v6098
    %6958 = vmatpush.bf16.msra.mxu0 %v6090
    %6959 = vmatmul.bf16.gmra.mxu0 %v6921
    %v6960 = vpop.f32.mrf.mxu0
    %v6961 = vadd.f32 0.0, %v6960
    %v6962 = vpop.f32.mrf.mxu0
    %6963 = vdwg.mxu0
    %6964 = vmatpush.bf16.msra.mxu0 %v6210
    %6965 = vmatpush.bf16.msra.mxu0 %v6202
    %6966 = vmatpush.bf16.msra.mxu0 %v6194
    %6967 = vmatpush.bf16.msra.mxu0 %v6186
    %6968 = vmatpush.bf16.msra.mxu0 %v6178
    %6969 = vmatpush.bf16.msra.mxu0 %v6170
    %6970 = vmatpush.bf16.msra.mxu0 %v6162
    %6971 = vmatpush.bf16.msra.mxu0 %v6154
    %6972 = vmatmul.bf16.gmra.mxu0 %v6922
    %v6973 = vpop.f32.mrf.mxu0
    %v6974 = vadd.f32 %v6961, %v6973
    %v6975 = vpop.f32.mrf.mxu0
    %6976 = vdwg.mxu0
    %6977 = vmatpush.bf16.msra.mxu0 %v6147
    %6978 = vmatpush.bf16.msra.mxu0 %v6139
    %6979 = vmatpush.bf16.msra.mxu0 %v6131
    %6980 = vmatpush.bf16.msra.mxu0 %v6123
    %6981 = vmatpush.bf16.msra.mxu0 %v6115
    %6982 = vmatpush.bf16.msra.mxu0 %v6107
    %6983 = vmatpush.bf16.msra.mxu0 %v6099
    %6984 = vmatpush.bf16.msra.mxu0 %v6091
    %6985 = vmatmul.bf16.gmra.mxu0 %v6921
    %v6986 = vpop.f32.mrf.mxu0
    %v6987 = vadd.f32 0.0, %v6986
    %v6988 = vpop.f32.mrf.mxu0
    %6989 = vdwg.mxu0
    %6990 = vmatpush.bf16.msra.mxu0 %v6211
    %6991 = vmatpush.bf16.msra.mxu0 %v6203
    %6992 = vmatpush.bf16.msra.mxu0 %v6195
    %6993 = vmatpush.bf16.msra.mxu0 %v6187
    %6994 = vmatpush.bf16.msra.mxu0 %v6179
    %6995 = vmatpush.bf16.msra.mxu0 %v6171
    %6996 = vmatpush.bf16.msra.mxu0 %v6163
    %6997 = vmatpush.bf16.msra.mxu0 %v6155
    %6998 = vmatmul.bf16.gmra.mxu0 %v6922
    %v6999 = vpop.f32.mrf.mxu0
    %v7000 = vadd.f32 %v6987, %v6999
    %v7001 = vpop.f32.mrf.mxu0
    %7002 = vdwg.mxu0
    %7003 = vmatpush.bf16.msra.mxu0 %v6148
    %7004 = vmatpush.bf16.msra.mxu0 %v6140
    %7005 = vmatpush.bf16.msra.mxu0 %v6132
    %7006 = vmatpush.bf16.msra.mxu0 %v6124
    %7007 = vmatpush.bf16.msra.mxu0 %v6116
    %7008 = vmatpush.bf16.msra.mxu0 %v6108
    %7009 = vmatpush.bf16.msra.mxu0 %v6100
    %7010 = vmatpush.bf16.msra.mxu0 %v6092
    %7011 = vmatmul.bf16.gmra.mxu0 %v6921
    %v7012 = vpop.f32.mrf.mxu0
    %v7013 = vadd.f32 0.0, %v7012
    %v7014 = vpop.f32.mrf.mxu0
    %7015 = vdwg.mxu0
    %7016 = vmatpush.bf16.msra.mxu0 %v6212
    %7017 = vmatpush.bf16.msra.mxu0 %v6204
    %7018 = vmatpush.bf16.msra.mxu0 %v6196
    %7019 = vmatpush.bf16.msra.mxu0 %v6188
    %7020 = vmatpush.bf16.msra.mxu0 %v6180
    %7021 = vmatpush.bf16.msra.mxu0 %v6172
    %7022 = vmatpush.bf16.msra.mxu0 %v6164
    %7023 = vmatpush.bf16.msra.mxu0 %v6156
    %7024 = vmatmul.bf16.gmra.mxu0 %v6922
    %v7025 = vpop.f32.mrf.mxu0
    %v7026 = vadd.f32 %v7013, %v7025
    %v7027 = vpop.f32.mrf.mxu0
    %7028 = vdwg.mxu0
    %7029 = vmatpush.bf16.msra.mxu0 %v6149
    %7030 = vmatpush.bf16.msra.mxu0 %v6141
    %7031 = vmatpush.bf16.msra.mxu0 %v6133
    %7032 = vmatpush.bf16.msra.mxu0 %v6125
    %7033 = vmatpush.bf16.msra.mxu0 %v6117
    %7034 = vmatpush.bf16.msra.mxu0 %v6109
    %7035 = vmatpush.bf16.msra.mxu0 %v6101
    %7036 = vmatpush.bf16.msra.mxu0 %v6093
    %7037 = vmatmul.bf16.gmra.mxu0 %v6921
    %v7038 = vpop.f32.mrf.mxu0
    %v7039 = vadd.f32 0.0, %v7038
    %v7040 = vpop.f32.mrf.mxu0
    %7041 = vdwg.mxu0
    %7042 = vmatpush.bf16.msra.mxu0 %v6213
    %7043 = vmatpush.bf16.msra.mxu0 %v6205
    %7044 = vmatpush.bf16.msra.mxu0 %v6197
    %7045 = vmatpush.bf16.msra.mxu0 %v6189
    %7046 = vmatpush.bf16.msra.mxu0 %v6181
    %7047 = vmatpush.bf16.msra.mxu0 %v6173
    %7048 = vmatpush.bf16.msra.mxu0 %v6165
    %7049 = vmatpush.bf16.msra.mxu0 %v6157
    %7050 = vmatmul.bf16.gmra.mxu0 %v6922
    %v7051 = vpop.f32.mrf.mxu0
    %v7052 = vadd.f32 %v7039, %v7051
    %v7053 = vpop.f32.mrf.mxu0
    %7054 = vdwg.mxu0
    %7055 = vmatpush.bf16.msra.mxu0 %v6150
    %7056 = vmatpush.bf16.msra.mxu0 %v6142
    %7057 = vmatpush.bf16.msra.mxu0 %v6134
    %7058 = vmatpush.bf16.msra.mxu0 %v6126
    %7059 = vmatpush.bf16.msra.mxu0 %v6118
    %7060 = vmatpush.bf16.msra.mxu0 %v6110
    %7061 = vmatpush.bf16.msra.mxu0 %v6102
    %7062 = vmatpush.bf16.msra.mxu0 %v6094
    %7063 = vmatmul.bf16.gmra.mxu0 %v6921
    %v7064 = vpop.f32.mrf.mxu0
    %v7065 = vadd.f32 0.0, %v7064
    %v7066 = vpop.f32.mrf.mxu0
    %7067 = vdwg.mxu0
    %7068 = vmatpush.bf16.msra.mxu0 %v6214
    %7069 = vmatpush.bf16.msra.mxu0 %v6206
    %7070 = vmatpush.bf16.msra.mxu0 %v6198
    %7071 = vmatpush.bf16.msra.mxu0 %v6190
    %7072 = vmatpush.bf16.msra.mxu0 %v6182
    %7073 = vmatpush.bf16.msra.mxu0 %v6174
    %7074 = vmatpush.bf16.msra.mxu0 %v6166
    %7075 = vmatpush.bf16.msra.mxu0 %v6158
    %7076 = vmatmul.bf16.gmra.mxu0 %v6922
    %v7077 = vpop.f32.mrf.mxu0
    %v7078 = vadd.f32 %v7065, %v7077
    %v7079 = vpop.f32.mrf.mxu0
    %7080 = vdwg.mxu0
    %7081 = vmatpush.bf16.msra.mxu0 %v6151
    %7082 = vmatpush.bf16.msra.mxu0 %v6143
    %7083 = vmatpush.bf16.msra.mxu0 %v6135
    %7084 = vmatpush.bf16.msra.mxu0 %v6127
    %7085 = vmatpush.bf16.msra.mxu0 %v6119
    %7086 = vmatpush.bf16.msra.mxu0 %v6111
    %7087 = vmatpush.bf16.msra.mxu0 %v6103
    %7088 = vmatpush.bf16.msra.mxu0 %v6095
    %7089 = vmatmul.bf16.gmra.mxu0 %v6921
    %v7090 = vpop.f32.mrf.mxu0
    %v7091 = vadd.f32 0.0, %v7090
    %v7092 = vpop.f32.mrf.mxu0
    %7093 = vdwg.mxu0
    %7094 = vmatpush.bf16.msra.mxu0 %v6215
    %7095 = vmatpush.bf16.msra.mxu0 %v6207
    %7096 = vmatpush.bf16.msra.mxu0 %v6199
    %7097 = vmatpush.bf16.msra.mxu0 %v6191
    %7098 = vmatpush.bf16.msra.mxu0 %v6183
    %7099 = vmatpush.bf16.msra.mxu0 %v6175
    %7100 = vmatpush.bf16.msra.mxu0 %v6167
    %7101 = vmatpush.bf16.msra.mxu0 %v6159
    %7102 = vmatmul.bf16.gmra.mxu0 %v6922
    %v7103 = vpop.f32.mrf.mxu0
    %v7104 = vadd.f32 %v7091, %v7103
    %v7105 = vpop.f32.mrf.mxu0
    %7106 = vdwg.mxu0
    %7107 = vmatpush.bf16.msra.mxu0 %v6152
    %7108 = vmatpush.bf16.msra.mxu0 %v6144
    %7109 = vmatpush.bf16.msra.mxu0 %v6136
    %7110 = vmatpush.bf16.msra.mxu0 %v6128
    %7111 = vmatpush.bf16.msra.mxu0 %v6120
    %7112 = vmatpush.bf16.msra.mxu0 %v6112
    %7113 = vmatpush.bf16.msra.mxu0 %v6104
    %7114 = vmatpush.bf16.msra.mxu0 %v6096
    %7115 = vmatmul.bf16.gmra.mxu0 %v6921
    %v7116 = vpop.f32.mrf.mxu0
    %v7117 = vadd.f32 0.0, %v7116
    %v7118 = vpop.f32.mrf.mxu0
    %7119 = vdwg.mxu0
    %7120 = vmatpush.bf16.msra.mxu0 %v6216
    %7121 = vmatpush.bf16.msra.mxu0 %v6208
    %7122 = vmatpush.bf16.msra.mxu0 %v6200
    %7123 = vmatpush.bf16.msra.mxu0 %v6192
    %7124 = vmatpush.bf16.msra.mxu0 %v6184
    %7125 = vmatpush.bf16.msra.mxu0 %v6176
    %7126 = vmatpush.bf16.msra.mxu0 %v6168
    %7127 = vmatpush.bf16.msra.mxu0 %v6160
    %7128 = vmatmul.bf16.gmra.mxu0 %v6922
    %v7129 = vpop.f32.mrf.mxu0
    %v7130 = vadd.f32 %v7117, %v7129
    %v7131 = vpop.f32.mrf.mxu0
    %7132 = vdwg.mxu0
    %v7141 = vrot.slane %v6948, 2
    %v7142 = vrot.slane %v6974, 2
    %v7143 = vrot.slane %v7000, 2
    %v7144 = vrot.slane %v7026, 2
    %v7145 = vrot.slane %v7052, 2
    %v7146 = vrot.slane %v7078, 2
    %v7147 = vrot.slane %v7104, 2
    %v7148 = vrot.slane %v7130, 2
    %v7157 = vadd.f32 %v5479, %v7141
    %v7158 = vadd.f32 %v5507, %v7142
    %v7159 = vadd.f32 %v5535, %v7143
    %v7160 = vadd.f32 %v5563, %v7144
    %v7161 = vadd.f32 %v5591, %v7145
    %v7162 = vadd.f32 %v5619, %v7146
    %v7163 = vadd.f32 %v5647, %v7147
    %v7164 = vadd.f32 %v5675, %v7148
    %v7165 = vmul.f32 %v7157, 0.5
    %v7166 = vmul.f32 %v7158, 0.5
    %v7167 = vtanh.pop %v7165
    %v7168 = vtanh.pop %v7166
    %v7169 = vadd.f32 %v7167, 1.0
    %v7170 = vadd.f32 %v7168, 1.0
    %v7171 = vmul.f32 %v7169, 0.5
    %v7172 = vmul.f32 %v7170, 0.5
    %v7173 = vtanh.pop %v7161
    %v7174 = vtanh.pop %v7162
    %v7175 = vmul.f32 %v7163, 0.5
    %v7176 = vmul.f32 %v7164, 0.5
    %v7177 = vtanh.pop %v7175
    %v7178 = vtanh.pop %v7176
    %v7179 = vadd.f32 %v7177, 1.0
    %v7180 = vadd.f32 %v7178, 1.0
    %v7181 = vmul.f32 %v7179, 0.5
    %v7182 = vmul.f32 %v7180, 0.5
    %v7183 = vmul.f32 %v7159, 0.5
    %v7184 = vmul.f32 %v7160, 0.5
    %v7185 = vtanh.pop %v7183
    %v7186 = vtanh.pop %v7184
    %v7187 = vadd.f32 %v7185, 1.0
    %v7188 = vadd.f32 %v7186, 1.0
    %v7189 = vmul.f32 %v7187, 0.5
    %v7190 = vmul.f32 %v7188, 0.5
    %v7193 = vrot.slane %v6911, 6
    %v7194 = vrot.slane %v6912, 6
    %v7197 = vmul.f32 %v7189, %v7193
    %v7198 = vmul.f32 %v7190, %v7194
    %v7199 = vmul.f32 %v7171, %v7173
    %v7200 = vmul.f32 %v7172, %v7174
    %v7201 = vadd.f32 %v7197, %v7199
    %v7202 = vadd.f32 %v7198, %v7200
    %v7203 = vtanh.pop %v7201
    %v7204 = vtanh.pop %v7202
    %v7205 = vmul.f32 %v7181, %v7203
    %v7206 = vmul.f32 %v7182, %v7204
    %v7207 = vpack.c.bf16 %v7205, %v7205
    %v7208 = vpack.c.bf16 %v7206, %v7206
    %v7211 = vrot.slane %v7207, 3
    %v7212 = vrot.slane %v7208, 3
    %7215 = vmatpush.bf16.msra.mxu0 %v6145
    %7216 = vmatpush.bf16.msra.mxu0 %v6137
    %7217 = vmatpush.bf16.msra.mxu0 %v6129
    %7218 = vmatpush.bf16.msra.mxu0 %v6121
    %7219 = vmatpush.bf16.msra.mxu0 %v6113
    %7220 = vmatpush.bf16.msra.mxu0 %v6105
    %7221 = vmatpush.bf16.msra.mxu0 %v6097
    %7222 = vmatpush.bf16.msra.mxu0 %v6089
    %7223 = vmatmul.bf16.gmra.mxu0 %v7211
    %v7224 = vpop.f32.mrf.mxu0
    %v7225 = vadd.f32 0.0, %v7224
    %v7226 = vpop.f32.mrf.mxu0
    %7227 = vdwg.mxu0
    %7228 = vmatpush.bf16.msra.mxu0 %v6209
    %7229 = vmatpush.bf16.msra.mxu0 %v6201
    %7230 = vmatpush.bf16.msra.mxu0 %v6193
    %7231 = vmatpush.bf16.msra.mxu0 %v6185
    %7232 = vmatpush.bf16.msra.mxu0 %v6177
    %7233 = vmatpush.bf16.msra.mxu0 %v6169
    %7234 = vmatpush.bf16.msra.mxu0 %v6161
    %7235 = vmatpush.bf16.msra.mxu0 %v6153
    %7236 = vmatmul.bf16.gmra.mxu0 %v7212
    %v7237 = vpop.f32.mrf.mxu0
    %v7238 = vadd.f32 %v7225, %v7237
    %v7239 = vpop.f32.mrf.mxu0
    %7240 = vdwg.mxu0
    %7241 = vmatpush.bf16.msra.mxu0 %v6146
    %7242 = vmatpush.bf16.msra.mxu0 %v6138
    %7243 = vmatpush.bf16.msra.mxu0 %v6130
    %7244 = vmatpush.bf16.msra.mxu0 %v6122
    %7245 = vmatpush.bf16.msra.mxu0 %v6114
    %7246 = vmatpush.bf16.msra.mxu0 %v6106
    %7247 = vmatpush.bf16.msra.mxu0 %v6098
    %7248 = vmatpush.bf16.msra.mxu0 %v6090
    %7249 = vmatmul.bf16.gmra.mxu0 %v7211
    %v7250 = vpop.f32.mrf.mxu0
    %v7251 = vadd.f32 0.0, %v7250
    %v7252 = vpop.f32.mrf.mxu0
    %7253 = vdwg.mxu0
    %7254 = vmatpush.bf16.msra.mxu0 %v6210
    %7255 = vmatpush.bf16.msra.mxu0 %v6202
    %7256 = vmatpush.bf16.msra.mxu0 %v6194
    %7257 = vmatpush.bf16.msra.mxu0 %v6186
    %7258 = vmatpush.bf16.msra.mxu0 %v6178
    %7259 = vmatpush.bf16.msra.mxu0 %v6170
    %7260 = vmatpush.bf16.msra.mxu0 %v6162
    %7261 = vmatpush.bf16.msra.mxu0 %v6154
    %7262 = vmatmul.bf16.gmra.mxu0 %v7212
    %v7263 = vpop.f32.mrf.mxu0
    %v7264 = vadd.f32 %v7251, %v7263
    %v7265 = vpop.f32.mrf.mxu0
    %7266 = vdwg.mxu0
    %7267 = vmatpush.bf16.msra.mxu0 %v6147
    %7268 = vmatpush.bf16.msra.mxu0 %v6139
    %7269 = vmatpush.bf16.msra.mxu0 %v6131
    %7270 = vmatpush.bf16.msra.mxu0 %v6123
    %7271 = vmatpush.bf16.msra.mxu0 %v6115
    %7272 = vmatpush.bf16.msra.mxu0 %v6107
    %7273 = vmatpush.bf16.msra.mxu0 %v6099
    %7274 = vmatpush.bf16.msra.mxu0 %v6091
    %7275 = vmatmul.bf16.gmra.mxu0 %v7211
    %v7276 = vpop.f32.mrf.mxu0
    %v7277 = vadd.f32 0.0, %v7276
    %v7278 = vpop.f32.mrf.mxu0
    %7279 = vdwg.mxu0
    %7280 = vmatpush.bf16.msra.mxu0 %v6211
    %7281 = vmatpush.bf16.msra.mxu0 %v6203
    %7282 = vmatpush.bf16.msra.mxu0 %v6195
    %7283 = vmatpush.bf16.msra.mxu0 %v6187
    %7284 = vmatpush.bf16.msra.mxu0 %v6179
    %7285 = vmatpush.bf16.msra.mxu0 %v6171
    %7286 = vmatpush.bf16.msra.mxu0 %v6163
    %7287 = vmatpush.bf16.msra.mxu0 %v6155
    %7288 = vmatmul.bf16.gmra.mxu0 %v7212
    %v7289 = vpop.f32.mrf.mxu0
    %v7290 = vadd.f32 %v7277, %v7289
    %v7291 = vpop.f32.mrf.mxu0
    %7292 = vdwg.mxu0
    %7293 = vmatpush.bf16.msra.mxu0 %v6148
    %7294 = vmatpush.bf16.msra.mxu0 %v6140
    %7295 = vmatpush.bf16.msra.mxu0 %v6132
    %7296 = vmatpush.bf16.msra.mxu0 %v6124
    %7297 = vmatpush.bf16.msra.mxu0 %v6116
    %7298 = vmatpush.bf16.msra.mxu0 %v6108
    %7299 = vmatpush.bf16.msra.mxu0 %v6100
    %7300 = vmatpush.bf16.msra.mxu0 %v6092
    %7301 = vmatmul.bf16.gmra.mxu0 %v7211
    %v7302 = vpop.f32.mrf.mxu0
    %v7303 = vadd.f32 0.0, %v7302
    %v7304 = vpop.f32.mrf.mxu0
    %7305 = vdwg.mxu0
    %7306 = vmatpush.bf16.msra.mxu0 %v6212
    %7307 = vmatpush.bf16.msra.mxu0 %v6204
    %7308 = vmatpush.bf16.msra.mxu0 %v6196
    %7309 = vmatpush.bf16.msra.mxu0 %v6188
    %7310 = vmatpush.bf16.msra.mxu0 %v6180
    %7311 = vmatpush.bf16.msra.mxu0 %v6172
    %7312 = vmatpush.bf16.msra.mxu0 %v6164
    %7313 = vmatpush.bf16.msra.mxu0 %v6156
    %7314 = vmatmul.bf16.gmra.mxu0 %v7212
    %v7315 = vpop.f32.mrf.mxu0
    %v7316 = vadd.f32 %v7303, %v7315
    %v7317 = vpop.f32.mrf.mxu0
    %7318 = vdwg.mxu0
    %7319 = vmatpush.bf16.msra.mxu0 %v6149
    %7320 = vmatpush.bf16.msra.mxu0 %v6141
    %7321 = vmatpush.bf16.msra.mxu0 %v6133
    %7322 = vmatpush.bf16.msra.mxu0 %v6125
    %7323 = vmatpush.bf16.msra.mxu0 %v6117
    %7324 = vmatpush.bf16.msra.mxu0 %v6109
    %7325 = vmatpush.bf16.msra.mxu0 %v6101
    %7326 = vmatpush.bf16.msra.mxu0 %v6093
    %7327 = vmatmul.bf16.gmra.mxu0 %v7211
    %v7328 = vpop.f32.mrf.mxu0
    %v7329 = vadd.f32 0.0, %v7328
    %v7330 = vpop.f32.mrf.mxu0
    %7331 = vdwg.mxu0
    %7332 = vmatpush.bf16.msra.mxu0 %v6213
    %7333 = vmatpush.bf16.msra.mxu0 %v6205
    %7334 = vmatpush.bf16.msra.mxu0 %v6197
    %7335 = vmatpush.bf16.msra.mxu0 %v6189
    %7336 = vmatpush.bf16.msra.mxu0 %v6181
    %7337 = vmatpush.bf16.msra.mxu0 %v6173
    %7338 = vmatpush.bf16.msra.mxu0 %v6165
    %7339 = vmatpush.bf16.msra.mxu0 %v6157
    %7340 = vmatmul.bf16.gmra.mxu0 %v7212
    %v7341 = vpop.f32.mrf.mxu0
    %v7342 = vadd.f32 %v7329, %v7341
    %v7343 = vpop.f32.mrf.mxu0
    %7344 = vdwg.mxu0
    %7345 = vmatpush.bf16.msra.mxu0 %v6150
    %7346 = vmatpush.bf16.msra.mxu0 %v6142
    %7347 = vmatpush.bf16.msra.mxu0 %v6134
    %7348 = vmatpush.bf16.msra.mxu0 %v6126
    %7349 = vmatpush.bf16.msra.mxu0 %v6118
    %7350 = vmatpush.bf16.msra.mxu0 %v6110
    %7351 = vmatpush.bf16.msra.mxu0 %v6102
    %7352 = vmatpush.bf16.msra.mxu0 %v6094
    %7353 = vmatmul.bf16.gmra.mxu0 %v7211
    %v7354 = vpop.f32.mrf.mxu0
    %v7355 = vadd.f32 0.0, %v7354
    %v7356 = vpop.f32.mrf.mxu0
    %7357 = vdwg.mxu0
    %7358 = vmatpush.bf16.msra.mxu0 %v6214
    %7359 = vmatpush.bf16.msra.mxu0 %v6206
    %7360 = vmatpush.bf16.msra.mxu0 %v6198
    %7361 = vmatpush.bf16.msra.mxu0 %v6190
    %7362 = vmatpush.bf16.msra.mxu0 %v6182
    %7363 = vmatpush.bf16.msra.mxu0 %v6174
    %7364 = vmatpush.bf16.msra.mxu0 %v6166
    %7365 = vmatpush.bf16.msra.mxu0 %v6158
    %7366 = vmatmul.bf16.gmra.mxu0 %v7212
    %v7367 = vpop.f32.mrf.mxu0
    %v7368 = vadd.f32 %v7355, %v7367
    %v7369 = vpop.f32.mrf.mxu0
    %7370 = vdwg.mxu0
    %7371 = vmatpush.bf16.msra.mxu0 %v6151
    %7372 = vmatpush.bf16.msra.mxu0 %v6143
    %7373 = vmatpush.bf16.msra.mxu0 %v6135
    %7374 = vmatpush.bf16.msra.mxu0 %v6127
    %7375 = vmatpush.bf16.msra.mxu0 %v6119
    %7376 = vmatpush.bf16.msra.mxu0 %v6111
    %7377 = vmatpush.bf16.msra.mxu0 %v6103
    %7378 = vmatpush.bf16.msra.mxu0 %v6095
    %7379 = vmatmul.bf16.gmra.mxu0 %v7211
    %v7380 = vpop.f32.mrf.mxu0
    %v7381 = vadd.f32 0.0, %v7380
    %v7382 = vpop.f32.mrf.mxu0
    %7383 = vdwg.mxu0
    %7384 = vmatpush.bf16.msra.mxu0 %v6215
    %7385 = vmatpush.bf16.msra.mxu0 %v6207
    %7386 = vmatpush.bf16.msra.mxu0 %v6199
    %7387 = vmatpush.bf16.msra.mxu0 %v6191
    %7388 = vmatpush.bf16.msra.mxu0 %v6183
    %7389 = vmatpush.bf16.msra.mxu0 %v6175
    %7390 = vmatpush.bf16.msra.mxu0 %v6167
    %7391 = vmatpush.bf16.msra.mxu0 %v6159
    %7392 = vmatmul.bf16.gmra.mxu0 %v7212
    %v7393 = vpop.f32.mrf.mxu0
    %v7394 = vadd.f32 %v7381, %v7393
    %v7395 = vpop.f32.mrf.mxu0
    %7396 = vdwg.mxu0
    %7397 = vmatpush.bf16.msra.mxu0 %v6152
    %7398 = vmatpush.bf16.msra.mxu0 %v6144
    %7399 = vmatpush.bf16.msra.mxu0 %v6136
    %7400 = vmatpush.bf16.msra.mxu0 %v6128
    %7401 = vmatpush.bf16.msra.mxu0 %v6120
    %7402 = vmatpush.bf16.msra.mxu0 %v6112
    %7403 = vmatpush.bf16.msra.mxu0 %v6104
    %7404 = vmatpush.bf16.msra.mxu0 %v6096
    %7405 = vmatmul.bf16.gmra.mxu0 %v7211
    %v7406 = vpop.f32.mrf.mxu0
    %v7407 = vadd.f32 0.0, %v7406
    %v7408 = vpop.f32.mrf.mxu0
    %7409 = vdwg.mxu0
    %7410 = vmatpush.bf16.msra.mxu0 %v6216
    %7411 = vmatpush.bf16.msra.mxu0 %v6208
    %7412 = vmatpush.bf16.msra.mxu0 %v6200
    %7413 = vmatpush.bf16.msra.mxu0 %v6192
    %7414 = vmatpush.bf16.msra.mxu0 %v6184
    %7415 = vmatpush.bf16.msra.mxu0 %v6176
    %7416 = vmatpush.bf16.msra.mxu0 %v6168
    %7417 = vmatpush.bf16.msra.mxu0 %v6160
    %7418 = vmatmul.bf16.gmra.mxu0 %v7212
    %v7419 = vpop.f32.mrf.mxu0
    %v7420 = vadd.f32 %v7407, %v7419
    %v7421 = vpop.f32.mrf.mxu0
    %7422 = vdwg.mxu0
    %v7423 = vadd.f32 %v5481, %v7238
    %v7424 = vadd.f32 %v5509, %v7264
    %v7425 = vadd.f32 %v5537, %v7290
    %v7426 = vadd.f32 %v5565, %v7316
    %v7427 = vadd.f32 %v5593, %v7342
    %v7428 = vadd.f32 %v5621, %v7368
    %v7429 = vadd.f32 %v5649, %v7394
    %v7430 = vadd.f32 %v5677, %v7420
    %v7431 = vmul.f32 %v7423, 0.5
    %v7432 = vmul.f32 %v7424, 0.5
    %v7433 = vtanh.pop %v7431
    %v7434 = vtanh.pop %v7432
    %v7435 = vadd.f32 %v7433, 1.0
    %v7436 = vadd.f32 %v7434, 1.0
    %v7437 = vmul.f32 %v7435, 0.5
    %v7438 = vmul.f32 %v7436, 0.5
    %v7439 = vtanh.pop %v7427
    %v7440 = vtanh.pop %v7428
    %v7441 = vmul.f32 %v7429, 0.5
    %v7442 = vmul.f32 %v7430, 0.5
    %v7443 = vtanh.pop %v7441
    %v7444 = vtanh.pop %v7442
    %v7445 = vadd.f32 %v7443, 1.0
    %v7446 = vadd.f32 %v7444, 1.0
    %v7447 = vmul.f32 %v7445, 0.5
    %v7448 = vmul.f32 %v7446, 0.5
    %v7449 = vmul.f32 %v7425, 0.5
    %v7450 = vmul.f32 %v7426, 0.5
    %v7451 = vtanh.pop %v7449
    %v7452 = vtanh.pop %v7450
    %v7453 = vadd.f32 %v7451, 1.0
    %v7454 = vadd.f32 %v7452, 1.0
    %v7455 = vmul.f32 %v7453, 0.5
    %v7456 = vmul.f32 %v7454, 0.5
    %v7459 = vrot.slane %v7201, 6
    %v7460 = vrot.slane %v7202, 6
    %v7463 = vmul.f32 %v7455, %v7459
    %v7464 = vmul.f32 %v7456, %v7460
    %v7465 = vmul.f32 %v7437, %v7439
    %v7466 = vmul.f32 %v7438, %v7440
    %v7467 = vadd.f32 %v7463, %v7465
    %v7468 = vadd.f32 %v7464, %v7466
    %v7469 = vtanh.pop %v7467
    %v7470 = vtanh.pop %v7468
    %v7471 = vmul.f32 %v7447, %v7469
    %v7472 = vmul.f32 %v7448, %v7470
    %v7473 = vpack.c.bf16 %v7471, %v7471
    %v7474 = vpack.c.bf16 %v7472, %v7472
    %7475 = vmatpush.bf16.msra.mxu0 %v6145
    %7476 = vmatpush.bf16.msra.mxu0 %v6137
    %7477 = vmatpush.bf16.msra.mxu0 %v6129
    %7478 = vmatpush.bf16.msra.mxu0 %v6121
    %7479 = vmatpush.bf16.msra.mxu0 %v6113
    %7480 = vmatpush.bf16.msra.mxu0 %v6105
    %7481 = vmatpush.bf16.msra.mxu0 %v6097
    %7482 = vmatpush.bf16.msra.mxu0 %v6089
    %7483 = vmatmul.bf16.gmra.mxu0 %v7473
    %v7484 = vpop.f32.mrf.mxu0
    %v7485 = vadd.f32 0.0, %v7484
    %v7486 = vpop.f32.mrf.mxu0
    %7487 = vdwg.mxu0
    %7488 = vmatpush.bf16.msra.mxu0 %v6209
    %7489 = vmatpush.bf16.msra.mxu0 %v6201
    %7490 = vmatpush.bf16.msra.mxu0 %v6193
    %7491 = vmatpush.bf16.msra.mxu0 %v6185
    %7492 = vmatpush.bf16.msra.mxu0 %v6177
    %7493 = vmatpush.bf16.msra.mxu0 %v6169
    %7494 = vmatpush.bf16.msra.mxu0 %v6161
    %7495 = vmatpush.bf16.msra.mxu0 %v6153
    %7496 = vmatmul.bf16.gmra.mxu0 %v7474
    %v7497 = vpop.f32.mrf.mxu0
    %v7498 = vadd.f32 %v7485, %v7497
    %v7499 = vpop.f32.mrf.mxu0
    %7500 = vdwg.mxu0
    %7501 = vmatpush.bf16.msra.mxu0 %v6146
    %7502 = vmatpush.bf16.msra.mxu0 %v6138
    %7503 = vmatpush.bf16.msra.mxu0 %v6130
    %7504 = vmatpush.bf16.msra.mxu0 %v6122
    %7505 = vmatpush.bf16.msra.mxu0 %v6114
    %7506 = vmatpush.bf16.msra.mxu0 %v6106
    %7507 = vmatpush.bf16.msra.mxu0 %v6098
    %7508 = vmatpush.bf16.msra.mxu0 %v6090
    %7509 = vmatmul.bf16.gmra.mxu0 %v7473
    %v7510 = vpop.f32.mrf.mxu0
    %v7511 = vadd.f32 0.0, %v7510
    %v7512 = vpop.f32.mrf.mxu0
    %7513 = vdwg.mxu0
    %7514 = vmatpush.bf16.msra.mxu0 %v6210
    %7515 = vmatpush.bf16.msra.mxu0 %v6202
    %7516 = vmatpush.bf16.msra.mxu0 %v6194
    %7517 = vmatpush.bf16.msra.mxu0 %v6186
    %7518 = vmatpush.bf16.msra.mxu0 %v6178
    %7519 = vmatpush.bf16.msra.mxu0 %v6170
    %7520 = vmatpush.bf16.msra.mxu0 %v6162
    %7521 = vmatpush.bf16.msra.mxu0 %v6154
    %7522 = vmatmul.bf16.gmra.mxu0 %v7474
    %v7523 = vpop.f32.mrf.mxu0
    %v7524 = vadd.f32 %v7511, %v7523
    %v7525 = vpop.f32.mrf.mxu0
    %7526 = vdwg.mxu0
    %7527 = vmatpush.bf16.msra.mxu0 %v6147
    %7528 = vmatpush.bf16.msra.mxu0 %v6139
    %7529 = vmatpush.bf16.msra.mxu0 %v6131
    %7530 = vmatpush.bf16.msra.mxu0 %v6123
    %7531 = vmatpush.bf16.msra.mxu0 %v6115
    %7532 = vmatpush.bf16.msra.mxu0 %v6107
    %7533 = vmatpush.bf16.msra.mxu0 %v6099
    %7534 = vmatpush.bf16.msra.mxu0 %v6091
    %7535 = vmatmul.bf16.gmra.mxu0 %v7473
    %v7536 = vpop.f32.mrf.mxu0
    %v7537 = vadd.f32 0.0, %v7536
    %v7538 = vpop.f32.mrf.mxu0
    %7539 = vdwg.mxu0
    %7540 = vmatpush.bf16.msra.mxu0 %v6211
    %7541 = vmatpush.bf16.msra.mxu0 %v6203
    %7542 = vmatpush.bf16.msra.mxu0 %v6195
    %7543 = vmatpush.bf16.msra.mxu0 %v6187
    %7544 = vmatpush.bf16.msra.mxu0 %v6179
    %7545 = vmatpush.bf16.msra.mxu0 %v6171
    %7546 = vmatpush.bf16.msra.mxu0 %v6163
    %7547 = vmatpush.bf16.msra.mxu0 %v6155
    %7548 = vmatmul.bf16.gmra.mxu0 %v7474
    %v7549 = vpop.f32.mrf.mxu0
    %v7550 = vadd.f32 %v7537, %v7549
    %v7551 = vpop.f32.mrf.mxu0
    %7552 = vdwg.mxu0
    %7553 = vmatpush.bf16.msra.mxu0 %v6148
    %7554 = vmatpush.bf16.msra.mxu0 %v6140
    %7555 = vmatpush.bf16.msra.mxu0 %v6132
    %7556 = vmatpush.bf16.msra.mxu0 %v6124
    %7557 = vmatpush.bf16.msra.mxu0 %v6116
    %7558 = vmatpush.bf16.msra.mxu0 %v6108
    %7559 = vmatpush.bf16.msra.mxu0 %v6100
    %7560 = vmatpush.bf16.msra.mxu0 %v6092
    %7561 = vmatmul.bf16.gmra.mxu0 %v7473
    %v7562 = vpop.f32.mrf.mxu0
    %v7563 = vadd.f32 0.0, %v7562
    %v7564 = vpop.f32.mrf.mxu0
    %7565 = vdwg.mxu0
    %7566 = vmatpush.bf16.msra.mxu0 %v6212
    %7567 = vmatpush.bf16.msra.mxu0 %v6204
    %7568 = vmatpush.bf16.msra.mxu0 %v6196
    %7569 = vmatpush.bf16.msra.mxu0 %v6188
    %7570 = vmatpush.bf16.msra.mxu0 %v6180
    %7571 = vmatpush.bf16.msra.mxu0 %v6172
    %7572 = vmatpush.bf16.msra.mxu0 %v6164
    %7573 = vmatpush.bf16.msra.mxu0 %v6156
    %7574 = vmatmul.bf16.gmra.mxu0 %v7474
    %v7575 = vpop.f32.mrf.mxu0
    %v7576 = vadd.f32 %v7563, %v7575
    %v7577 = vpop.f32.mrf.mxu0
    %7578 = vdwg.mxu0
    %7579 = vmatpush.bf16.msra.mxu0 %v6149
    %7580 = vmatpush.bf16.msra.mxu0 %v6141
    %7581 = vmatpush.bf16.msra.mxu0 %v6133
    %7582 = vmatpush.bf16.msra.mxu0 %v6125
    %7583 = vmatpush.bf16.msra.mxu0 %v6117
    %7584 = vmatpush.bf16.msra.mxu0 %v6109
    %7585 = vmatpush.bf16.msra.mxu0 %v6101
    %7586 = vmatpush.bf16.msra.mxu0 %v6093
    %7587 = vmatmul.bf16.gmra.mxu0 %v7473
    %v7588 = vpop.f32.mrf.mxu0
    %v7589 = vadd.f32 0.0, %v7588
    %v7590 = vpop.f32.mrf.mxu0
    %7591 = vdwg.mxu0
    %7592 = vmatpush.bf16.msra.mxu0 %v6213
    %7593 = vmatpush.bf16.msra.mxu0 %v6205
    %7594 = vmatpush.bf16.msra.mxu0 %v6197
    %7595 = vmatpush.bf16.msra.mxu0 %v6189
    %7596 = vmatpush.bf16.msra.mxu0 %v6181
    %7597 = vmatpush.bf16.msra.mxu0 %v6173
    %7598 = vmatpush.bf16.msra.mxu0 %v6165
    %7599 = vmatpush.bf16.msra.mxu0 %v6157
    %7600 = vmatmul.bf16.gmra.mxu0 %v7474
    %v7601 = vpop.f32.mrf.mxu0
    %v7602 = vadd.f32 %v7589, %v7601
    %v7603 = vpop.f32.mrf.mxu0
    %7604 = vdwg.mxu0
    %7605 = vmatpush.bf16.msra.mxu0 %v6150
    %7606 = vmatpush.bf16.msra.mxu0 %v6142
    %7607 = vmatpush.bf16.msra.mxu0 %v6134
    %7608 = vmatpush.bf16.msra.mxu0 %v6126
    %7609 = vmatpush.bf16.msra.mxu0 %v6118
    %7610 = vmatpush.bf16.msra.mxu0 %v6110
    %7611 = vmatpush.bf16.msra.mxu0 %v6102
    %7612 = vmatpush.bf16.msra.mxu0 %v6094
    %7613 = vmatmul.bf16.gmra.mxu0 %v7473
    %v7614 = vpop.f32.mrf.mxu0
    %v7615 = vadd.f32 0.0, %v7614
    %v7616 = vpop.f32.mrf.mxu0
    %7617 = vdwg.mxu0
    %7618 = vmatpush.bf16.msra.mxu0 %v6214
    %7619 = vmatpush.bf16.msra.mxu0 %v6206
    %7620 = vmatpush.bf16.msra.mxu0 %v6198
    %7621 = vmatpush.bf16.msra.mxu0 %v6190
    %7622 = vmatpush.bf16.msra.mxu0 %v6182
    %7623 = vmatpush.bf16.msra.mxu0 %v6174
    %7624 = vmatpush.bf16.msra.mxu0 %v6166
    %7625 = vmatpush.bf16.msra.mxu0 %v6158
    %7626 = vmatmul.bf16.gmra.mxu0 %v7474
    %v7627 = vpop.f32.mrf.mxu0
    %v7628 = vadd.f32 %v7615, %v7627
    %v7629 = vpop.f32.mrf.mxu0
    %7630 = vdwg.mxu0
    %7631 = vmatpush.bf16.msra.mxu0 %v6151
    %7632 = vmatpush.bf16.msra.mxu0 %v6143
    %7633 = vmatpush.bf16.msra.mxu0 %v6135
    %7634 = vmatpush.bf16.msra.mxu0 %v6127
    %7635 = vmatpush.bf16.msra.mxu0 %v6119
    %7636 = vmatpush.bf16.msra.mxu0 %v6111
    %7637 = vmatpush.bf16.msra.mxu0 %v6103
    %7638 = vmatpush.bf16.msra.mxu0 %v6095
    %7639 = vmatmul.bf16.gmra.mxu0 %v7473
    %v7640 = vpop.f32.mrf.mxu0
    %v7641 = vadd.f32 0.0, %v7640
    %v7642 = vpop.f32.mrf.mxu0
    %7643 = vdwg.mxu0
    %7644 = vmatpush.bf16.msra.mxu0 %v6215
    %7645 = vmatpush.bf16.msra.mxu0 %v6207
    %7646 = vmatpush.bf16.msra.mxu0 %v6199
    %7647 = vmatpush.bf16.msra.mxu0 %v6191
    %7648 = vmatpush.bf16.msra.mxu0 %v6183
    %7649 = vmatpush.bf16.msra.mxu0 %v6175
    %7650 = vmatpush.bf16.msra.mxu0 %v6167
    %7651 = vmatpush.bf16.msra.mxu0 %v6159
    %7652 = vmatmul.bf16.gmra.mxu0 %v7474
    %v7653 = vpop.f32.mrf.mxu0
    %v7654 = vadd.f32 %v7641, %v7653
    %v7655 = vpop.f32.mrf.mxu0
    %7656 = vdwg.mxu0
    %7657 = vmatpush.bf16.msra.mxu0 %v6152
    %7658 = vmatpush.bf16.msra.mxu0 %v6144
    %7659 = vmatpush.bf16.msra.mxu0 %v6136
    %7660 = vmatpush.bf16.msra.mxu0 %v6128
    %7661 = vmatpush.bf16.msra.mxu0 %v6120
    %7662 = vmatpush.bf16.msra.mxu0 %v6112
    %7663 = vmatpush.bf16.msra.mxu0 %v6104
    %7664 = vmatpush.bf16.msra.mxu0 %v6096
    %7665 = vmatmul.bf16.gmra.mxu0 %v7473
    %v7666 = vpop.f32.mrf.mxu0
    %v7667 = vadd.f32 0.0, %v7666
    %v7668 = vpop.f32.mrf.mxu0
    %7669 = vdwg.mxu0
    %7670 = vmatpush.bf16.msra.mxu0 %v6216
    %7671 = vmatpush.bf16.msra.mxu0 %v6208
    %7672 = vmatpush.bf16.msra.mxu0 %v6200
    %7673 = vmatpush.bf16.msra.mxu0 %v6192
    %7674 = vmatpush.bf16.msra.mxu0 %v6184
    %7675 = vmatpush.bf16.msra.mxu0 %v6176
    %7676 = vmatpush.bf16.msra.mxu0 %v6168
    %7677 = vmatpush.bf16.msra.mxu0 %v6160
    %7678 = vmatmul.bf16.gmra.mxu0 %v7474
    %v7679 = vpop.f32.mrf.mxu0
    %v7680 = vadd.f32 %v7667, %v7679
    %v7681 = vpop.f32.mrf.mxu0
    %7682 = vdwg.mxu0
    %v7691 = vrot.slane %v7498, 6
    %v7692 = vrot.slane %v7524, 6
    %v7693 = vrot.slane %v7550, 6
    %v7694 = vrot.slane %v7576, 6
    %v7695 = vrot.slane %v7602, 6
    %v7696 = vrot.slane %v7628, 6
    %v7697 = vrot.slane %v7654, 6
    %v7698 = vrot.slane %v7680, 6
    %v7707 = vadd.f32 %v5481, %v7691
    %v7708 = vadd.f32 %v5509, %v7692
    %v7709 = vadd.f32 %v5537, %v7693
    %v7710 = vadd.f32 %v5565, %v7694
    %v7711 = vadd.f32 %v5593, %v7695
    %v7712 = vadd.f32 %v5621, %v7696
    %v7713 = vadd.f32 %v5649, %v7697
    %v7714 = vadd.f32 %v5677, %v7698
    %v7715 = vmul.f32 %v7707, 0.5
    %v7716 = vmul.f32 %v7708, 0.5
    %v7717 = vtanh.pop %v7715
    %v7718 = vtanh.pop %v7716
    %v7719 = vadd.f32 %v7717, 1.0
    %v7720 = vadd.f32 %v7718, 1.0
    %v7721 = vmul.f32 %v7719, 0.5
    %v7722 = vmul.f32 %v7720, 0.5
    %v7723 = vtanh.pop %v7711
    %v7724 = vtanh.pop %v7712
    %v7725 = vmul.f32 %v7713, 0.5
    %v7726 = vmul.f32 %v7714, 0.5
    %v7727 = vtanh.pop %v7725
    %v7728 = vtanh.pop %v7726
    %v7729 = vadd.f32 %v7727, 1.0
    %v7730 = vadd.f32 %v7728, 1.0
    %v7731 = vmul.f32 %v7729, 0.5
    %v7732 = vmul.f32 %v7730, 0.5
    %v7733 = vmul.f32 %v7709, 0.5
    %v7734 = vmul.f32 %v7710, 0.5
    %v7735 = vtanh.pop %v7733
    %v7736 = vtanh.pop %v7734
    %v7737 = vadd.f32 %v7735, 1.0
    %v7738 = vadd.f32 %v7736, 1.0
    %v7739 = vmul.f32 %v7737, 0.5
    %v7740 = vmul.f32 %v7738, 0.5
    %v7743 = vrot.slane %v7467, 6
    %v7744 = vrot.slane %v7468, 6
    %v7747 = vmul.f32 %v7739, %v7743
    %v7748 = vmul.f32 %v7740, %v7744
    %v7749 = vmul.f32 %v7721, %v7723
    %v7750 = vmul.f32 %v7722, %v7724
    %v7751 = vadd.f32 %v7747, %v7749
    %v7752 = vadd.f32 %v7748, %v7750
    %v7753 = vtanh.pop %v7751
    %v7754 = vtanh.pop %v7752
    %v7755 = vmul.f32 %v7731, %v7753
    %v7756 = vmul.f32 %v7732, %v7754
    %v7757 = vpack.c.bf16 %v7755, %v7755
    %v7758 = vpack.c.bf16 %v7756, %v7756
    %v7761 = vrot.slane %v7757, 1
    %v7762 = vrot.slane %v7758, 1
    %7765 = vmatpush.bf16.msra.mxu0 %v6145
    %7766 = vmatpush.bf16.msra.mxu0 %v6137
    %7767 = vmatpush.bf16.msra.mxu0 %v6129
    %7768 = vmatpush.bf16.msra.mxu0 %v6121
    %7769 = vmatpush.bf16.msra.mxu0 %v6113
    %7770 = vmatpush.bf16.msra.mxu0 %v6105
    %7771 = vmatpush.bf16.msra.mxu0 %v6097
    %7772 = vmatpush.bf16.msra.mxu0 %v6089
    %7773 = vmatmul.bf16.gmra.mxu0 %v7761
    %v7774 = vpop.f32.mrf.mxu0
    %v7775 = vadd.f32 0.0, %v7774
    %v7776 = vpop.f32.mrf.mxu0
    %7777 = vdwg.mxu0
    %7778 = vmatpush.bf16.msra.mxu0 %v6209
    %7779 = vmatpush.bf16.msra.mxu0 %v6201
    %7780 = vmatpush.bf16.msra.mxu0 %v6193
    %7781 = vmatpush.bf16.msra.mxu0 %v6185
    %7782 = vmatpush.bf16.msra.mxu0 %v6177
    %7783 = vmatpush.bf16.msra.mxu0 %v6169
    %7784 = vmatpush.bf16.msra.mxu0 %v6161
    %7785 = vmatpush.bf16.msra.mxu0 %v6153
    %7786 = vmatmul.bf16.gmra.mxu0 %v7762
    %v7787 = vpop.f32.mrf.mxu0
    %v7788 = vadd.f32 %v7775, %v7787
    %v7789 = vpop.f32.mrf.mxu0
    %7790 = vdwg.mxu0
    %7791 = vmatpush.bf16.msra.mxu0 %v6146
    %7792 = vmatpush.bf16.msra.mxu0 %v6138
    %7793 = vmatpush.bf16.msra.mxu0 %v6130
    %7794 = vmatpush.bf16.msra.mxu0 %v6122
    %7795 = vmatpush.bf16.msra.mxu0 %v6114
    %7796 = vmatpush.bf16.msra.mxu0 %v6106
    %7797 = vmatpush.bf16.msra.mxu0 %v6098
    %7798 = vmatpush.bf16.msra.mxu0 %v6090
    %7799 = vmatmul.bf16.gmra.mxu0 %v7761
    %v7800 = vpop.f32.mrf.mxu0
    %v7801 = vadd.f32 0.0, %v7800
    %v7802 = vpop.f32.mrf.mxu0
    %7803 = vdwg.mxu0
    %7804 = vmatpush.bf16.msra.mxu0 %v6210
    %7805 = vmatpush.bf16.msra.mxu0 %v6202
    %7806 = vmatpush.bf16.msra.mxu0 %v6194
    %7807 = vmatpush.bf16.msra.mxu0 %v6186
    %7808 = vmatpush.bf16.msra.mxu0 %v6178
    %7809 = vmatpush.bf16.msra.mxu0 %v6170
    %7810 = vmatpush.bf16.msra.mxu0 %v6162
    %7811 = vmatpush.bf16.msra.mxu0 %v6154
    %7812 = vmatmul.bf16.gmra.mxu0 %v7762
    %v7813 = vpop.f32.mrf.mxu0
    %v7814 = vadd.f32 %v7801, %v7813
    %v7815 = vpop.f32.mrf.mxu0
    %7816 = vdwg.mxu0
    %7817 = vmatpush.bf16.msra.mxu0 %v6147
    %7818 = vmatpush.bf16.msra.mxu0 %v6139
    %7819 = vmatpush.bf16.msra.mxu0 %v6131
    %7820 = vmatpush.bf16.msra.mxu0 %v6123
    %7821 = vmatpush.bf16.msra.mxu0 %v6115
    %7822 = vmatpush.bf16.msra.mxu0 %v6107
    %7823 = vmatpush.bf16.msra.mxu0 %v6099
    %7824 = vmatpush.bf16.msra.mxu0 %v6091
    %7825 = vmatmul.bf16.gmra.mxu0 %v7761
    %v7826 = vpop.f32.mrf.mxu0
    %v7827 = vadd.f32 0.0, %v7826
    %v7828 = vpop.f32.mrf.mxu0
    %7829 = vdwg.mxu0
    %7830 = vmatpush.bf16.msra.mxu0 %v6211
    %7831 = vmatpush.bf16.msra.mxu0 %v6203
    %7832 = vmatpush.bf16.msra.mxu0 %v6195
    %7833 = vmatpush.bf16.msra.mxu0 %v6187
    %7834 = vmatpush.bf16.msra.mxu0 %v6179
    %7835 = vmatpush.bf16.msra.mxu0 %v6171
    %7836 = vmatpush.bf16.msra.mxu0 %v6163
    %7837 = vmatpush.bf16.msra.mxu0 %v6155
    %7838 = vmatmul.bf16.gmra.mxu0 %v7762
    %v7839 = vpop.f32.mrf.mxu0
    %v7840 = vadd.f32 %v7827, %v7839
    %v7841 = vpop.f32.mrf.mxu0
    %7842 = vdwg.mxu0
    %7843 = vmatpush.bf16.msra.mxu0 %v6148
    %7844 = vmatpush.bf16.msra.mxu0 %v6140
    %7845 = vmatpush.bf16.msra.mxu0 %v6132
    %7846 = vmatpush.bf16.msra.mxu0 %v6124
    %7847 = vmatpush.bf16.msra.mxu0 %v6116
    %7848 = vmatpush.bf16.msra.mxu0 %v6108
    %7849 = vmatpush.bf16.msra.mxu0 %v6100
    %7850 = vmatpush.bf16.msra.mxu0 %v6092
    %7851 = vmatmul.bf16.gmra.mxu0 %v7761
    %v7852 = vpop.f32.mrf.mxu0
    %v7853 = vadd.f32 0.0, %v7852
    %v7854 = vpop.f32.mrf.mxu0
    %7855 = vdwg.mxu0
    %7856 = vmatpush.bf16.msra.mxu0 %v6212
    %7857 = vmatpush.bf16.msra.mxu0 %v6204
    %7858 = vmatpush.bf16.msra.mxu0 %v6196
    %7859 = vmatpush.bf16.msra.mxu0 %v6188
    %7860 = vmatpush.bf16.msra.mxu0 %v6180
    %7861 = vmatpush.bf16.msra.mxu0 %v6172
    %7862 = vmatpush.bf16.msra.mxu0 %v6164
    %7863 = vmatpush.bf16.msra.mxu0 %v6156
    %7864 = vmatmul.bf16.gmra.mxu0 %v7762
    %v7865 = vpop.f32.mrf.mxu0
    %v7866 = vadd.f32 %v7853, %v7865
    %v7867 = vpop.f32.mrf.mxu0
    %7868 = vdwg.mxu0
    %7869 = vmatpush.bf16.msra.mxu0 %v6149
    %7870 = vmatpush.bf16.msra.mxu0 %v6141
    %7871 = vmatpush.bf16.msra.mxu0 %v6133
    %7872 = vmatpush.bf16.msra.mxu0 %v6125
    %7873 = vmatpush.bf16.msra.mxu0 %v6117
    %7874 = vmatpush.bf16.msra.mxu0 %v6109
    %7875 = vmatpush.bf16.msra.mxu0 %v6101
    %7876 = vmatpush.bf16.msra.mxu0 %v6093
    %7877 = vmatmul.bf16.gmra.mxu0 %v7761
    %v7878 = vpop.f32.mrf.mxu0
    %v7879 = vadd.f32 0.0, %v7878
    %v7880 = vpop.f32.mrf.mxu0
    %7881 = vdwg.mxu0
    %7882 = vmatpush.bf16.msra.mxu0 %v6213
    %7883 = vmatpush.bf16.msra.mxu0 %v6205
    %7884 = vmatpush.bf16.msra.mxu0 %v6197
    %7885 = vmatpush.bf16.msra.mxu0 %v6189
    %7886 = vmatpush.bf16.msra.mxu0 %v6181
    %7887 = vmatpush.bf16.msra.mxu0 %v6173
    %7888 = vmatpush.bf16.msra.mxu0 %v6165
    %7889 = vmatpush.bf16.msra.mxu0 %v6157
    %7890 = vmatmul.bf16.gmra.mxu0 %v7762
    %v7891 = vpop.f32.mrf.mxu0
    %v7892 = vadd.f32 %v7879, %v7891
    %v7893 = vpop.f32.mrf.mxu0
    %7894 = vdwg.mxu0
    %7895 = vmatpush.bf16.msra.mxu0 %v6150
    %7896 = vmatpush.bf16.msra.mxu0 %v6142
    %7897 = vmatpush.bf16.msra.mxu0 %v6134
    %7898 = vmatpush.bf16.msra.mxu0 %v6126
    %7899 = vmatpush.bf16.msra.mxu0 %v6118
    %7900 = vmatpush.bf16.msra.mxu0 %v6110
    %7901 = vmatpush.bf16.msra.mxu0 %v6102
    %7902 = vmatpush.bf16.msra.mxu0 %v6094
    %7903 = vmatmul.bf16.gmra.mxu0 %v7761
    %v7904 = vpop.f32.mrf.mxu0
    %v7905 = vadd.f32 0.0, %v7904
    %v7906 = vpop.f32.mrf.mxu0
    %7907 = vdwg.mxu0
    %7908 = vmatpush.bf16.msra.mxu0 %v6214
    %7909 = vmatpush.bf16.msra.mxu0 %v6206
    %7910 = vmatpush.bf16.msra.mxu0 %v6198
    %7911 = vmatpush.bf16.msra.mxu0 %v6190
    %7912 = vmatpush.bf16.msra.mxu0 %v6182
    %7913 = vmatpush.bf16.msra.mxu0 %v6174
    %7914 = vmatpush.bf16.msra.mxu0 %v6166
    %7915 = vmatpush.bf16.msra.mxu0 %v6158
    %7916 = vmatmul.bf16.gmra.mxu0 %v7762
    %v7917 = vpop.f32.mrf.mxu0
    %v7918 = vadd.f32 %v7905, %v7917
    %v7919 = vpop.f32.mrf.mxu0
    %7920 = vdwg.mxu0
    %7921 = vmatpush.bf16.msra.mxu0 %v6151
    %7922 = vmatpush.bf16.msra.mxu0 %v6143
    %7923 = vmatpush.bf16.msra.mxu0 %v6135
    %7924 = vmatpush.bf16.msra.mxu0 %v6127
    %7925 = vmatpush.bf16.msra.mxu0 %v6119
    %7926 = vmatpush.bf16.msra.mxu0 %v6111
    %7927 = vmatpush.bf16.msra.mxu0 %v6103
    %7928 = vmatpush.bf16.msra.mxu0 %v6095
    %7929 = vmatmul.bf16.gmra.mxu0 %v7761
    %v7930 = vpop.f32.mrf.mxu0
    %v7931 = vadd.f32 0.0, %v7930
    %v7932 = vpop.f32.mrf.mxu0
    %7933 = vdwg.mxu0
    %7934 = vmatpush.bf16.msra.mxu0 %v6215
    %7935 = vmatpush.bf16.msra.mxu0 %v6207
    %7936 = vmatpush.bf16.msra.mxu0 %v6199
    %7937 = vmatpush.bf16.msra.mxu0 %v6191
    %7938 = vmatpush.bf16.msra.mxu0 %v6183
    %7939 = vmatpush.bf16.msra.mxu0 %v6175
    %7940 = vmatpush.bf16.msra.mxu0 %v6167
    %7941 = vmatpush.bf16.msra.mxu0 %v6159
    %7942 = vmatmul.bf16.gmra.mxu0 %v7762
    %v7943 = vpop.f32.mrf.mxu0
    %v7944 = vadd.f32 %v7931, %v7943
    %v7945 = vpop.f32.mrf.mxu0
    %7946 = vdwg.mxu0
    %7947 = vmatpush.bf16.msra.mxu0 %v6152
    %7948 = vmatpush.bf16.msra.mxu0 %v6144
    %7949 = vmatpush.bf16.msra.mxu0 %v6136
    %7950 = vmatpush.bf16.msra.mxu0 %v6128
    %7951 = vmatpush.bf16.msra.mxu0 %v6120
    %7952 = vmatpush.bf16.msra.mxu0 %v6112
    %7953 = vmatpush.bf16.msra.mxu0 %v6104
    %7954 = vmatpush.bf16.msra.mxu0 %v6096
    %7955 = vmatmul.bf16.gmra.mxu0 %v7761
    %v7956 = vpop.f32.mrf.mxu0
    %v7957 = vadd.f32 0.0, %v7956
    %v7958 = vpop.f32.mrf.mxu0
    %7959 = vdwg.mxu0
    %7960 = vmatpush.bf16.msra.mxu0 %v6216
    %7961 = vmatpush.bf16.msra.mxu0 %v6208
    %7962 = vmatpush.bf16.msra.mxu0 %v6200
    %7963 = vmatpush.bf16.msra.mxu0 %v6192
    %7964 = vmatpush.bf16.msra.mxu0 %v6184
    %7965 = vmatpush.bf16.msra.mxu0 %v6176
    %7966 = vmatpush.bf16.msra.mxu0 %v6168
    %7967 = vmatpush.bf16.msra.mxu0 %v6160
    %7968 = vmatmul.bf16.gmra.mxu0 %v7762
    %v7969 = vpop.f32.mrf.mxu0
    %v7970 = vadd.f32 %v7957, %v7969
    %v7971 = vpop.f32.mrf.mxu0
    %7972 = vdwg.mxu0
    %v7981 = vrot.slane %v7788, 4
    %v7982 = vrot.slane %v7814, 4
    %v7983 = vrot.slane %v7840, 4
    %v7984 = vrot.slane %v7866, 4
    %v7985 = vrot.slane %v7892, 4
    %v7986 = vrot.slane %v7918, 4
    %v7987 = vrot.slane %v7944, 4
    %v7988 = vrot.slane %v7970, 4
    %v7997 = vadd.f32 %v5481, %v7981
    %v7998 = vadd.f32 %v5509, %v7982
    %v7999 = vadd.f32 %v5537, %v7983
    %v8000 = vadd.f32 %v5565, %v7984
    %v8001 = vadd.f32 %v5593, %v7985
    %v8002 = vadd.f32 %v5621, %v7986
    %v8003 = vadd.f32 %v5649, %v7987
    %v8004 = vadd.f32 %v5677, %v7988
    %v8005 = vmul.f32 %v7997, 0.5
    %v8006 = vmul.f32 %v7998, 0.5
    %v8007 = vtanh.pop %v8005
    %v8008 = vtanh.pop %v8006
    %v8009 = vadd.f32 %v8007, 1.0
    %v8010 = vadd.f32 %v8008, 1.0
    %v8011 = vmul.f32 %v8009, 0.5
    %v8012 = vmul.f32 %v8010, 0.5
    %v8013 = vtanh.pop %v8001
    %v8014 = vtanh.pop %v8002
    %v8015 = vmul.f32 %v8003, 0.5
    %v8016 = vmul.f32 %v8004, 0.5
    %v8017 = vtanh.pop %v8015
    %v8018 = vtanh.pop %v8016
    %v8019 = vadd.f32 %v8017, 1.0
    %v8020 = vadd.f32 %v8018, 1.0
    %v8021 = vmul.f32 %v8019, 0.5
    %v8022 = vmul.f32 %v8020, 0.5
    %v8023 = vmul.f32 %v7999, 0.5
    %v8024 = vmul.f32 %v8000, 0.5
    %v8025 = vtanh.pop %v8023
    %v8026 = vtanh.pop %v8024
    %v8027 = vadd.f32 %v8025, 1.0
    %v8028 = vadd.f32 %v8026, 1.0
    %v8029 = vmul.f32 %v8027, 0.5
    %v8030 = vmul.f32 %v8028, 0.5
    %v8033 = vrot.slane %v7751, 6
    %v8034 = vrot.slane %v7752, 6
    %v8037 = vmul.f32 %v8029, %v8033
    %v8038 = vmul.f32 %v8030, %v8034
    %v8039 = vmul.f32 %v8011, %v8013
    %v8040 = vmul.f32 %v8012, %v8014
    %v8041 = vadd.f32 %v8037, %v8039
    %v8042 = vadd.f32 %v8038, %v8040
    %v8043 = vtanh.pop %v8041
    %v8044 = vtanh.pop %v8042
    %v8045 = vmul.f32 %v8021, %v8043
    %v8046 = vmul.f32 %v8022, %v8044
    %v8047 = vpack.c.bf16 %v8045, %v8045
    %v8048 = vpack.c.bf16 %v8046, %v8046
    %v8051 = vrot.slane %v8047, 2
    %v8052 = vrot.slane %v8048, 2
    %8055 = vmatpush.bf16.msra.mxu0 %v6145
    %8056 = vmatpush.bf16.msra.mxu0 %v6137
    %8057 = vmatpush.bf16.msra.mxu0 %v6129
    %8058 = vmatpush.bf16.msra.mxu0 %v6121
    %8059 = vmatpush.bf16.msra.mxu0 %v6113
    %8060 = vmatpush.bf16.msra.mxu0 %v6105
    %8061 = vmatpush.bf16.msra.mxu0 %v6097
    %8062 = vmatpush.bf16.msra.mxu0 %v6089
    %8063 = vmatmul.bf16.gmra.mxu0 %v8051
    %v8064 = vpop.f32.mrf.mxu0
    %v8065 = vadd.f32 0.0, %v8064
    %v8066 = vpop.f32.mrf.mxu0
    %8067 = vdwg.mxu0
    %8068 = vmatpush.bf16.msra.mxu0 %v6209
    %8069 = vmatpush.bf16.msra.mxu0 %v6201
    %8070 = vmatpush.bf16.msra.mxu0 %v6193
    %8071 = vmatpush.bf16.msra.mxu0 %v6185
    %8072 = vmatpush.bf16.msra.mxu0 %v6177
    %8073 = vmatpush.bf16.msra.mxu0 %v6169
    %8074 = vmatpush.bf16.msra.mxu0 %v6161
    %8075 = vmatpush.bf16.msra.mxu0 %v6153
    %8076 = vmatmul.bf16.gmra.mxu0 %v8052
    %v8077 = vpop.f32.mrf.mxu0
    %v8078 = vadd.f32 %v8065, %v8077
    %v8079 = vpop.f32.mrf.mxu0
    %8080 = vdwg.mxu0
    %8081 = vmatpush.bf16.msra.mxu0 %v6146
    %8082 = vmatpush.bf16.msra.mxu0 %v6138
    %8083 = vmatpush.bf16.msra.mxu0 %v6130
    %8084 = vmatpush.bf16.msra.mxu0 %v6122
    %8085 = vmatpush.bf16.msra.mxu0 %v6114
    %8086 = vmatpush.bf16.msra.mxu0 %v6106
    %8087 = vmatpush.bf16.msra.mxu0 %v6098
    %8088 = vmatpush.bf16.msra.mxu0 %v6090
    %8089 = vmatmul.bf16.gmra.mxu0 %v8051
    %v8090 = vpop.f32.mrf.mxu0
    %v8091 = vadd.f32 0.0, %v8090
    %v8092 = vpop.f32.mrf.mxu0
    %8093 = vdwg.mxu0
    %8094 = vmatpush.bf16.msra.mxu0 %v6210
    %8095 = vmatpush.bf16.msra.mxu0 %v6202
    %8096 = vmatpush.bf16.msra.mxu0 %v6194
    %8097 = vmatpush.bf16.msra.mxu0 %v6186
    %8098 = vmatpush.bf16.msra.mxu0 %v6178
    %8099 = vmatpush.bf16.msra.mxu0 %v6170
    %8100 = vmatpush.bf16.msra.mxu0 %v6162
    %8101 = vmatpush.bf16.msra.mxu0 %v6154
    %8102 = vmatmul.bf16.gmra.mxu0 %v8052
    %v8103 = vpop.f32.mrf.mxu0
    %v8104 = vadd.f32 %v8091, %v8103
    %v8105 = vpop.f32.mrf.mxu0
    %8106 = vdwg.mxu0
    %8107 = vmatpush.bf16.msra.mxu0 %v6147
    %8108 = vmatpush.bf16.msra.mxu0 %v6139
    %8109 = vmatpush.bf16.msra.mxu0 %v6131
    %8110 = vmatpush.bf16.msra.mxu0 %v6123
    %8111 = vmatpush.bf16.msra.mxu0 %v6115
    %8112 = vmatpush.bf16.msra.mxu0 %v6107
    %8113 = vmatpush.bf16.msra.mxu0 %v6099
    %8114 = vmatpush.bf16.msra.mxu0 %v6091
    %8115 = vmatmul.bf16.gmra.mxu0 %v8051
    %v8116 = vpop.f32.mrf.mxu0
    %v8117 = vadd.f32 0.0, %v8116
    %v8118 = vpop.f32.mrf.mxu0
    %8119 = vdwg.mxu0
    %8120 = vmatpush.bf16.msra.mxu0 %v6211
    %8121 = vmatpush.bf16.msra.mxu0 %v6203
    %8122 = vmatpush.bf16.msra.mxu0 %v6195
    %8123 = vmatpush.bf16.msra.mxu0 %v6187
    %8124 = vmatpush.bf16.msra.mxu0 %v6179
    %8125 = vmatpush.bf16.msra.mxu0 %v6171
    %8126 = vmatpush.bf16.msra.mxu0 %v6163
    %8127 = vmatpush.bf16.msra.mxu0 %v6155
    %8128 = vmatmul.bf16.gmra.mxu0 %v8052
    %v8129 = vpop.f32.mrf.mxu0
    %v8130 = vadd.f32 %v8117, %v8129
    %v8131 = vpop.f32.mrf.mxu0
    %8132 = vdwg.mxu0
    %8133 = vmatpush.bf16.msra.mxu0 %v6148
    %8134 = vmatpush.bf16.msra.mxu0 %v6140
    %8135 = vmatpush.bf16.msra.mxu0 %v6132
    %8136 = vmatpush.bf16.msra.mxu0 %v6124
    %8137 = vmatpush.bf16.msra.mxu0 %v6116
    %8138 = vmatpush.bf16.msra.mxu0 %v6108
    %8139 = vmatpush.bf16.msra.mxu0 %v6100
    %8140 = vmatpush.bf16.msra.mxu0 %v6092
    %8141 = vmatmul.bf16.gmra.mxu0 %v8051
    %v8142 = vpop.f32.mrf.mxu0
    %v8143 = vadd.f32 0.0, %v8142
    %v8144 = vpop.f32.mrf.mxu0
    %8145 = vdwg.mxu0
    %8146 = vmatpush.bf16.msra.mxu0 %v6212
    %8147 = vmatpush.bf16.msra.mxu0 %v6204
    %8148 = vmatpush.bf16.msra.mxu0 %v6196
    %8149 = vmatpush.bf16.msra.mxu0 %v6188
    %8150 = vmatpush.bf16.msra.mxu0 %v6180
    %8151 = vmatpush.bf16.msra.mxu0 %v6172
    %8152 = vmatpush.bf16.msra.mxu0 %v6164
    %8153 = vmatpush.bf16.msra.mxu0 %v6156
    %8154 = vmatmul.bf16.gmra.mxu0 %v8052
    %v8155 = vpop.f32.mrf.mxu0
    %v8156 = vadd.f32 %v8143, %v8155
    %v8157 = vpop.f32.mrf.mxu0
    %8158 = vdwg.mxu0
    %8159 = vmatpush.bf16.msra.mxu0 %v6149
    %8160 = vmatpush.bf16.msra.mxu0 %v6141
    %8161 = vmatpush.bf16.msra.mxu0 %v6133
    %8162 = vmatpush.bf16.msra.mxu0 %v6125
    %8163 = vmatpush.bf16.msra.mxu0 %v6117
    %8164 = vmatpush.bf16.msra.mxu0 %v6109
    %8165 = vmatpush.bf16.msra.mxu0 %v6101
    %8166 = vmatpush.bf16.msra.mxu0 %v6093
    %8167 = vmatmul.bf16.gmra.mxu0 %v8051
    %v8168 = vpop.f32.mrf.mxu0
    %v8169 = vadd.f32 0.0, %v8168
    %v8170 = vpop.f32.mrf.mxu0
    %8171 = vdwg.mxu0
    %8172 = vmatpush.bf16.msra.mxu0 %v6213
    %8173 = vmatpush.bf16.msra.mxu0 %v6205
    %8174 = vmatpush.bf16.msra.mxu0 %v6197
    %8175 = vmatpush.bf16.msra.mxu0 %v6189
    %8176 = vmatpush.bf16.msra.mxu0 %v6181
    %8177 = vmatpush.bf16.msra.mxu0 %v6173
    %8178 = vmatpush.bf16.msra.mxu0 %v6165
    %8179 = vmatpush.bf16.msra.mxu0 %v6157
    %8180 = vmatmul.bf16.gmra.mxu0 %v8052
    %v8181 = vpop.f32.mrf.mxu0
    %v8182 = vadd.f32 %v8169, %v8181
    %v8183 = vpop.f32.mrf.mxu0
    %8184 = vdwg.mxu0
    %8185 = vmatpush.bf16.msra.mxu0 %v6150
    %8186 = vmatpush.bf16.msra.mxu0 %v6142
    %8187 = vmatpush.bf16.msra.mxu0 %v6134
    %8188 = vmatpush.bf16.msra.mxu0 %v6126
    %8189 = vmatpush.bf16.msra.mxu0 %v6118
    %8190 = vmatpush.bf16.msra.mxu0 %v6110
    %8191 = vmatpush.bf16.msra.mxu0 %v6102
    %8192 = vmatpush.bf16.msra.mxu0 %v6094
    %8193 = vmatmul.bf16.gmra.mxu0 %v8051
    %v8194 = vpop.f32.mrf.mxu0
    %v8195 = vadd.f32 0.0, %v8194
    %v8196 = vpop.f32.mrf.mxu0
    %8197 = vdwg.mxu0
    %8198 = vmatpush.bf16.msra.mxu0 %v6214
    %8199 = vmatpush.bf16.msra.mxu0 %v6206
    %8200 = vmatpush.bf16.msra.mxu0 %v6198
    %8201 = vmatpush.bf16.msra.mxu0 %v6190
    %8202 = vmatpush.bf16.msra.mxu0 %v6182
    %8203 = vmatpush.bf16.msra.mxu0 %v6174
    %8204 = vmatpush.bf16.msra.mxu0 %v6166
    %8205 = vmatpush.bf16.msra.mxu0 %v6158
    %8206 = vmatmul.bf16.gmra.mxu0 %v8052
    %v8207 = vpop.f32.mrf.mxu0
    %v8208 = vadd.f32 %v8195, %v8207
    %v8209 = vpop.f32.mrf.mxu0
    %8210 = vdwg.mxu0
    %8211 = vmatpush.bf16.msra.mxu0 %v6151
    %8212 = vmatpush.bf16.msra.mxu0 %v6143
    %8213 = vmatpush.bf16.msra.mxu0 %v6135
    %8214 = vmatpush.bf16.msra.mxu0 %v6127
    %8215 = vmatpush.bf16.msra.mxu0 %v6119
    %8216 = vmatpush.bf16.msra.mxu0 %v6111
    %8217 = vmatpush.bf16.msra.mxu0 %v6103
    %8218 = vmatpush.bf16.msra.mxu0 %v6095
    %8219 = vmatmul.bf16.gmra.mxu0 %v8051
    %v8220 = vpop.f32.mrf.mxu0
    %v8221 = vadd.f32 0.0, %v8220
    %v8222 = vpop.f32.mrf.mxu0
    %8223 = vdwg.mxu0
    %8224 = vmatpush.bf16.msra.mxu0 %v6215
    %8225 = vmatpush.bf16.msra.mxu0 %v6207
    %8226 = vmatpush.bf16.msra.mxu0 %v6199
    %8227 = vmatpush.bf16.msra.mxu0 %v6191
    %8228 = vmatpush.bf16.msra.mxu0 %v6183
    %8229 = vmatpush.bf16.msra.mxu0 %v6175
    %8230 = vmatpush.bf16.msra.mxu0 %v6167
    %8231 = vmatpush.bf16.msra.mxu0 %v6159
    %8232 = vmatmul.bf16.gmra.mxu0 %v8052
    %v8233 = vpop.f32.mrf.mxu0
    %v8234 = vadd.f32 %v8221, %v8233
    %v8235 = vpop.f32.mrf.mxu0
    %8236 = vdwg.mxu0
    %8237 = vmatpush.bf16.msra.mxu0 %v6152
    %8238 = vmatpush.bf16.msra.mxu0 %v6144
    %8239 = vmatpush.bf16.msra.mxu0 %v6136
    %8240 = vmatpush.bf16.msra.mxu0 %v6128
    %8241 = vmatpush.bf16.msra.mxu0 %v6120
    %8242 = vmatpush.bf16.msra.mxu0 %v6112
    %8243 = vmatpush.bf16.msra.mxu0 %v6104
    %8244 = vmatpush.bf16.msra.mxu0 %v6096
    %8245 = vmatmul.bf16.gmra.mxu0 %v8051
    %v8246 = vpop.f32.mrf.mxu0
    %v8247 = vadd.f32 0.0, %v8246
    %v8248 = vpop.f32.mrf.mxu0
    %8249 = vdwg.mxu0
    %8250 = vmatpush.bf16.msra.mxu0 %v6216
    %8251 = vmatpush.bf16.msra.mxu0 %v6208
    %8252 = vmatpush.bf16.msra.mxu0 %v6200
    %8253 = vmatpush.bf16.msra.mxu0 %v6192
    %8254 = vmatpush.bf16.msra.mxu0 %v6184
    %8255 = vmatpush.bf16.msra.mxu0 %v6176
    %8256 = vmatpush.bf16.msra.mxu0 %v6168
    %8257 = vmatpush.bf16.msra.mxu0 %v6160
    %8258 = vmatmul.bf16.gmra.mxu0 %v8052
    %v8259 = vpop.f32.mrf.mxu0
    %v8260 = vadd.f32 %v8247, %v8259
    %v8261 = vpop.f32.mrf.mxu0
    %8262 = vdwg.mxu0
    %v8271 = vrot.slane %v8078, 2
    %v8272 = vrot.slane %v8104, 2
    %v8273 = vrot.slane %v8130, 2
    %v8274 = vrot.slane %v8156, 2
    %v8275 = vrot.slane %v8182, 2
    %v8276 = vrot.slane %v8208, 2
    %v8277 = vrot.slane %v8234, 2
    %v8278 = vrot.slane %v8260, 2
    %v8287 = vadd.f32 %v5481, %v8271
    %v8288 = vadd.f32 %v5509, %v8272
    %v8289 = vadd.f32 %v5537, %v8273
    %v8290 = vadd.f32 %v5565, %v8274
    %v8291 = vadd.f32 %v5593, %v8275
    %v8292 = vadd.f32 %v5621, %v8276
    %v8293 = vadd.f32 %v5649, %v8277
    %v8294 = vadd.f32 %v5677, %v8278
    %v8295 = vmul.f32 %v8287, 0.5
    %v8296 = vmul.f32 %v8288, 0.5
    %v8297 = vtanh.pop %v8295
    %v8298 = vtanh.pop %v8296
    %v8299 = vadd.f32 %v8297, 1.0
    %v8300 = vadd.f32 %v8298, 1.0
    %v8301 = vmul.f32 %v8299, 0.5
    %v8302 = vmul.f32 %v8300, 0.5
    %v8303 = vtanh.pop %v8291
    %v8304 = vtanh.pop %v8292
    %v8305 = vmul.f32 %v8293, 0.5
    %v8306 = vmul.f32 %v8294, 0.5
    %v8307 = vtanh.pop %v8305
    %v8308 = vtanh.pop %v8306
    %v8309 = vadd.f32 %v8307, 1.0
    %v8310 = vadd.f32 %v8308, 1.0
    %v8311 = vmul.f32 %v8309, 0.5
    %v8312 = vmul.f32 %v8310, 0.5
    %v8313 = vmul.f32 %v8289, 0.5
    %v8314 = vmul.f32 %v8290, 0.5
    %v8315 = vtanh.pop %v8313
    %v8316 = vtanh.pop %v8314
    %v8317 = vadd.f32 %v8315, 1.0
    %v8318 = vadd.f32 %v8316, 1.0
    %v8319 = vmul.f32 %v8317, 0.5
    %v8320 = vmul.f32 %v8318, 0.5
    %v8323 = vrot.slane %v8041, 6
    %v8324 = vrot.slane %v8042, 6
    %v8327 = vmul.f32 %v8319, %v8323
    %v8328 = vmul.f32 %v8320, %v8324
    %v8329 = vmul.f32 %v8301, %v8303
    %v8330 = vmul.f32 %v8302, %v8304
    %v8331 = vadd.f32 %v8327, %v8329
    %v8332 = vadd.f32 %v8328, %v8330
    %v8333 = vtanh.pop %v8331
    %v8334 = vtanh.pop %v8332
    %v8335 = vmul.f32 %v8311, %v8333
    %v8336 = vmul.f32 %v8312, %v8334
    %8339 = vst.sshfl [vmem:[#allocation1] sm:$0xff pattern:$0x73625140] %v4659
    %8340 = vst.sshfl [vmem:[#allocation1 + $0x8] sm:$0xff pattern:$0x73625140] %v4660
    %s8341 = scalar_lea.vmem [#allocation1], 3
    %v8342 = vld [vmem:[%s8341] ss:$4 sm:$0xff]
    %8344 = vst [vmem:[#allocation14] sm:$0xf] %v8342
    %8347 = vst.sshfl [vmem:[#allocation1] sm:$0xff pattern:$0x73625140] %v8335
    %8348 = vst.sshfl [vmem:[#allocation1 + $0x8] sm:$0xff pattern:$0x73625140] %v8336
    %s8349 = scalar_lea.vmem [#allocation1], 3
    %v8350 = vld [vmem:[%s8349] ss:$4 sm:$0xff]
    %s8352 = scalar_lea.vmem [#allocation14], 4
    %8353 = vst [vmem:[%s8352] sm:$0xf] %v8350
    %8356 = vst.sshfl [vmem:[#allocation1] sm:$0xff pattern:$0x73625140] %v4655
    %8357 = vst.sshfl [vmem:[#allocation1 + $0x8] sm:$0xff pattern:$0x73625140] %v4656
    %s8358 = scalar_lea.vmem [#allocation1], 3
    %v8359 = vld [vmem:[%s8358] ss:$4 sm:$0xff]
    %8361 = vst [vmem:[#allocation15] sm:$0xf] %v8359
    %8364 = vst.sshfl [vmem:[#allocation1] sm:$0xff pattern:$0x73625140] %v8331
    %8365 = vst.sshfl [vmem:[#allocation1 + $0x8] sm:$0xff pattern:$0x73625140] %v8332
    %s8366 = scalar_lea.vmem [#allocation1], 3
    %v8367 = vld [vmem:[%s8366] ss:$4 sm:$0xff]
    %s8369 = scalar_lea.vmem [#allocation15], 4
    %8370 = vst [vmem:[%s8369] sm:$0xf] %v8367
    // Predicated region
    $region78: #{encoder_forward.1} parent=1 // pred_check
      _
    $region79: #{encoder_forward.1} parent=1 // pred_check_branch
      %8372 = sbr.rel (0) target = $region81
    $region80: #{encoder_forward.1} parent=1 // pred_region
      %8374 = vsyncadd [#allocation5], 0
      %s8375 = sshll.u32 [#allocation14], 4
      %s8376 = int_to_ptr.vmem [resolvable:$true] %s8375
      %s8377 = sshll.u32 %s13, 4
      %s8378 = int_to_ptr.hbm [resolvable:$true] %s8377
      %8383 = dma.vmem_to_hbm [thread:$0]  %s8376, 128, %s8378, [#allocation5], 64, 64, 4
    $region81: #{encoder_forward.1} parent=1 // pred_fallthru
      _
    // Predicated region
    $region82: #{encoder_forward.1} parent=1 // pred_check
      _
    $region83: #{encoder_forward.1} parent=1 // pred_check_branch
      %8385 = sbr.rel (0) target = $region85
    $region84: #{encoder_forward.1} parent=1 // pred_region
      %8387 = vsyncadd [#allocation16], 0
      %s8388 = sshll.u32 [#allocation15], 4
      %s8389 = int_to_ptr.vmem [resolvable:$true] %s8388
      %s8390 = sshll.u32 %s14, 4
      %s8391 = int_to_ptr.hbm [resolvable:$true] %s8390
      %8396 = dma.vmem_to_hbm [thread:$0]  %s8389, 128, %s8391, [#allocation16], 64, 64, 4
    $region85: #{encoder_forward.1} parent=1 // pred_fallthru
      _
    // Predicated region
    $region86: #{encoder_forward.1} parent=1 // pred_check
      _
    $region87: #{encoder_forward.1} parent=1 // pred_check_branch
      %8398 = sbr.rel (0) target = $region89
    $region88: #{encoder_forward.1} parent=1 // pred_region
      %8400 = dma.done [#allocation5], 128
    $region89: #{encoder_forward.1} parent=1 // pred_fallthru
      _
    // Predicated region
    $region90: #{encoder_forward.1} parent=1 // pred_check
      _
    $region91: #{encoder_forward.1} parent=1 // pred_check_branch
      %8402 = sbr.rel (0) target = $region93
    $region92: #{encoder_forward.1} parent=1 // pred_region
      %8404 = dma.done [#allocation16], 128
    $region93: #{encoder_forward.1} parent=1 // pred_fallthru
      _
    %8405 = vsyncpa [#allocation4], 1
    %8406 = vsyncpa [#allocation7], 1
    %8407 = vsyncpa [#allocation10], 1
    %8408 = vsyncpa [#allocation13], 1
    %8409 = vsyncpa [#allocation5], 1
    %8410 = vsyncpa [#allocation16], 1

</llo_original>
